<compile_context>
chip_gen: v7x
topology: tpu7x:2x2x1
jax: 0.10.0
libtpu: 0.0.40
codegen_flags: <defaults>
</compile_context>

<pallas_src>
import functools

import jax
import jax.numpy as jnp
from jax import lax
from jax.experimental import pallas as pl
from jax.experimental.pallas import tpu as pltpu

NEG_INF = -1e30

# Order of the stacked weight arrays passed to the fused kernel.
_WEIGHT_ORDER = (
    "wq_s", "bq_s", "wk_s", "bk_s", "wv_s", "bv_s", "wo_s", "bo_s",
    "wq_c", "bq_c", "wk_c", "bk_c", "wv_c", "bv_c", "wo_c", "bo_c",
    "w1", "b1", "w2", "b2",
    "ln1g", "ln1b", "ln2g", "ln2b", "ln3g", "ln3b",
    "w_out", "b_out",
)


# ----------------------------- in-kernel helpers -----------------------------

def _layer_norm(y, g, b, eps=1e-5):
    mean = jnp.mean(y, axis=-1, keepdims=True)
    var = jnp.mean((y - mean) ** 2, axis=-1, keepdims=True)
    return (y - mean) * lax.rsqrt(var + eps) * g + b


def _mha(xq16, xkv16, mask_add, wq, bq, wk, bk, wv, bv, wo, heads):
    """Multi-head attention with per-head weight layout.

    xq16:  (Rq, E)  bf16 query rows (batch folded into rows)
    xkv16: (Rk, E)  bf16 key/value rows
    mask_add: (Rq, Rk) f32 additive mask (block-diagonal over batch)
    wq/wk/wv: (H, E, dh) bf16 (1/sqrt(dh) already folded into wq)
    bq/bk/bv: (H, 1, dh) f32, wo: (H, dh, E) bf16.
    Returns the (Rq, E) f32 attention output *before* the output-proj bias.
    Heads are a short static loop; head extraction is major-axis indexing, so
    no lane-axis slicing / concatenation happens (XLU relayout was the
    bottleneck in the previous per-layer kernel).
    """
    acc = jnp.zeros((xq16.shape[0], wo.shape[-1]), jnp.float32)
    for hd in range(heads):
        q = jnp.dot(xq16, wq[hd], preferred_element_type=jnp.float32) + bq[hd]
        k = jnp.dot(xkv16, wk[hd], preferred_element_type=jnp.float32) + bk[hd]
        v = jnp.dot(xkv16, wv[hd], preferred_element_type=jnp.float32) + bv[hd]
        # scores: contract over the head dim of both operands -> (Rq, Rk)
        s = lax.dot_general(q.astype(jnp.bfloat16), k.astype(jnp.bfloat16),
                            (((1,), (1,)), ((), ())),
                            preferred_element_type=jnp.float32)
        s = s + mask_add
        s = s - jnp.max(s, axis=-1, keepdims=True)
        p = jnp.exp(s)
        p = p * pl.reciprocal(jnp.sum(p, axis=-1, keepdims=True), approx=True)
        pv = jnp.dot(p.astype(jnp.bfloat16), v.astype(jnp.bfloat16),
                     preferred_element_type=jnp.float32)          # (Rq, dh)
        # fold the head concat into the output projection: accumulate through
        # the per-head row-block of Wo (8-sublane aligned, cheap).
        acc = acc + jnp.dot(pv.astype(jnp.bfloat16), wo[hd],
                            preferred_element_type=jnp.float32)
    return acc


# ----------------------------- fused kernel -----------------------------

def _fused_decoder_kernel(
        h_ref, enc_ref, tmask_ref, smask_ref,
        wq_s_ref, bq_s_ref, wk_s_ref, bk_s_ref, wv_s_ref, bv_s_ref,
        wo_s_ref, bo_s_ref,
        wq_c_ref, bq_c_ref, wk_c_ref, bk_c_ref, wv_c_ref, bv_c_ref,
        wo_c_ref, bo_c_ref,
        w1_ref, b1_ref, w2_ref, b2_ref,
        ln1g_ref, ln1b_ref, ln2g_ref, ln2b_ref, ln3g_ref, ln3b_ref,
        wout_ref, bout_ref,
        o_ref, *, n_layers, heads):
    h = h_ref[...]                      # (R, E) f32, R = batch*seq
    tmask = tmask_ref[...]              # (R, R)   additive, block-diag
    smask = smask_ref[...]              # (R, Rk)  additive, block-diag
    enc16 = enc_ref[...].astype(jnp.bfloat16)   # (Rk, E)

    for l in range(n_layers):           # static unroll; everything stays in VMEM
        # --- masked self-attention + Add & LN ---
        h16 = h.astype(jnp.bfloat16)
        a = _mha(h16, h16, tmask,
                 wq_s_ref[l], bq_s_ref[l], wk_s_ref[l], bk_s_ref[l],
                 wv_s_ref[l], bv_s_ref[l], wo_s_ref[l], heads)
        h1 = _layer_norm(a + bo_s_ref[l] + h, ln1g_ref[l], ln1b_ref[l])

        # --- cross-attention over encoder output + Add & LN ---
        h1_16 = h1.astype(jnp.bfloat16)
        c = _mha(h1_16, enc16, smask,
                 wq_c_ref[l], bq_c_ref[l], wk_c_ref[l], bk_c_ref[l],
                 wv_c_ref[l], bv_c_ref[l], wo_c_ref[l], heads)
        h2 = _layer_norm(c + bo_c_ref[l] + h1, ln2g_ref[l], ln2b_ref[l])

        # --- position-wise FFN + Add & LN ---
        f = jnp.maximum(
            jnp.dot(h2.astype(jnp.bfloat16), w1_ref[l],
                    preferred_element_type=jnp.float32) + b1_ref[l], 0.0)
        f = jnp.dot(f.astype(jnp.bfloat16), w2_ref[l],
                    preferred_element_type=jnp.float32) + b2_ref[l]
        h = _layer_norm(f + h2, ln3g_ref[l], ln3b_ref[l])

    # --- output head: only HBM store, lane-dense (R, vpad=128k) ---
    o_ref[...] = (jnp.dot(h.astype(jnp.bfloat16), wout_ref[...],
                          preferred_element_type=jnp.float32) + bout_ref[...])


def _fused_call(params, h, enc, tmask, smask, *, heads, n_layers):
    R, _ = h.shape
    vpad = params["w_out"].shape[1]
    weights = [params[name] for name in _WEIGHT_ORDER]
    kern = functools.partial(_fused_decoder_kernel, n_layers=n_layers, heads=heads)
    vmem = pl.BlockSpec(memory_space=pltpu.MemorySpace.VMEM)
    # Gridless call: total footprint is tiny (<1 MiB), everything is resident
    # in VMEM for the whole forward. (Add S/hidden tiling + an explicit
    # vmem_limit_bytes before scaling E/S/expansion, esp. on v7x's 64 MiB.)
    return pl.pallas_call(
        kern,
        out_shape=jax.ShapeDtypeStruct((R, vpad), jnp.float32),
        in_specs=[vmem] * (4 + len(weights)),
        out_specs=vmem,
    )(h, enc, tmask, smask, *weights)


# ----------------------------- parameter setup -----------------------------

def init_params(key, vocab, embed, heads, n_layers, max_len, forward_expansion):
    assert embed % heads == 0
    dh = embed // heads
    hidden = forward_expansion * embed
    vpad = pl.cdiv(vocab, 128) * 128
    qscale = 1.0 / (dh ** 0.5)          # folded into Wq (bias is zero anyway)
    L, H = n_layers, heads

    def nrm(k, shape, scale=0.02):
        return scale * jax.random.normal(k, shape, dtype=jnp.float32)

    ks = jax.random.split(key, 13)
    bf16 = lambda a: a.astype(jnp.bfloat16)
    zeros = lambda s: jnp.zeros(s, jnp.float32)
    ones = lambda s: jnp.ones(s, jnp.float32)

    p = {
        "word_emb": nrm(ks[0], (vocab, embed), 1.0),
        "pos_emb": nrm(ks[1], (max_len, embed), 1.0),
        # attention projections, per-head layout (no lane slicing in-kernel)
        "wq_s": bf16(nrm(ks[2], (L, H, embed, dh)) * qscale),
        "wk_s": bf16(nrm(ks[3], (L, H, embed, dh))),
        "wv_s": bf16(nrm(ks[4], (L, H, embed, dh))),
        "wo_s": bf16(nrm(ks[5], (L, H, dh, embed))),
        "wq_c": bf16(nrm(ks[6], (L, H, embed, dh)) * qscale),
        "wk_c": bf16(nrm(ks[7], (L, H, embed, dh))),
        "wv_c": bf16(nrm(ks[8], (L, H, embed, dh))),
        "wo_c": bf16(nrm(ks[9], (L, H, dh, embed))),
        "w1": bf16(nrm(ks[10], (L, embed, hidden))),
        "w2": bf16(nrm(ks[11], (L, hidden, embed))),
        # biases / LN params stay f32
        "bq_s": zeros((L, H, 1, dh)), "bk_s": zeros((L, H, 1, dh)),
        "bv_s": zeros((L, H, 1, dh)), "bo_s": zeros((L, 1, embed)),
        "bq_c": zeros((L, H, 1, dh)), "bk_c": zeros((L, H, 1, dh)),
        "bv_c": zeros((L, H, 1, dh)), "bo_c": zeros((L, 1, embed)),
        "b1": zeros((L, 1, hidden)), "b2": zeros((L, 1, embed)),
        "ln1g": ones((L, 1, embed)), "ln1b": zeros((L, 1, embed)),
        "ln2g": ones((L, 1, embed)), "ln2b": zeros((L, 1, embed)),
        "ln3g": ones((L, 1, embed)), "ln3b": zeros((L, 1, embed)),
    }
    # output head: pad vocab to a 128-lane multiple ONCE here (lane-dense store)
    w_out = nrm(ks[12], (embed, vocab))
    p["w_out"] = bf16(jnp.zeros((embed, vpad), jnp.float32).at[:, :vocab].set(w_out))
    p["b_out"] = zeros((1, vpad))
    return p


# ----------------------------- forward pass -----------------------------

def decoder_forward(params, x_tokens, enc_out, tgt_mask, src_mask, *,
                    heads, n_layers, vocab):
    N, S = x_tokens.shape
    Ssrc = enc_out.shape[1]
    E = params["word_emb"].shape[1]

    # embedding gather + positional add (+ dropout == identity): jnp glue.
    we = jnp.take(params["word_emb"], x_tokens, axis=0)          # (N, S, E)
    pe = params["pos_emb"][:S][None, :, :]
    h = (we + pe).astype(jnp.float32).reshape(N * S, E)
    # TODO(synk): nn.Dropout(p=0.5) on the embeddings is identity (eval mode).

    # Block-diagonal additive masks over the flattened batch*seq rows: the
    # fused kernel never loops over batch — cross-batch scores are masked out.
    tadd = jnp.where(tgt_mask.reshape(N, S, S) > 0, 0.0, NEG_INF).astype(jnp.float32)
    if src_mask is None:
        sadd = jnp.zeros((N, S, Ssrc), jnp.float32)
    else:
        sm = jnp.broadcast_to(src_mask.reshape(N, -1, Ssrc), (N, S, Ssrc))
        sadd = jnp.where(sm > 0, 0.0, NEG_INF).astype(jnp.float32)

    tmask_full = jnp.full((N * S, N * S), NEG_INF, jnp.float32)
    smask_full = jnp.full((N * S, N * Ssrc), NEG_INF, jnp.float32)
    for b in range(N):   # static, tiny; runs once at trace time
        tmask_full = lax.dynamic_update_slice(tmask_full, tadd[b], (b * S, b * S))
        smask_full = lax.dynamic_update_slice(smask_full, sadd[b], (b * S, b * Ssrc))

    enc_flat = enc_out.astype(jnp.float32).reshape(N * Ssrc, E)

    logits_pad = _fused_call(params, h, enc_flat, tmask_full, smask_full,
                             heads=heads, n_layers=n_layers)      # (N*S, vpad)
    return logits_pad.reshape(N, S, -1)[..., :vocab]


# ----------------------------- main -----------------------------

if __name__ == "__main__":
    tgt_vocab_size = 50
    embed_size = 32
    heads = 4
    n_layers = 2
    max_len = 16
    forward_expansion = 2
    N = 2
    S_tgt = 8
    S_src = 10

    key = jax.random.PRNGKey(0)
    kp, kx, ke = jax.random.split(key, 3)
    params = init_params(kp, tgt_vocab_size, embed_size, heads, n_layers,
                         max_len, forward_expansion)

    x = jax.random.randint(kx, (N, S_tgt), 0, tgt_vocab_size, dtype=jnp.int32)
    enc_out = jax.random.normal(ke, (N, S_src, embed_size), dtype=jnp.float32)
    tgt_mask = jnp.tile(jnp.tril(jnp.ones((S_tgt, S_tgt), jnp.float32))[None],
                        (N, 1, 1))
    src_mask = None  # matches the default in the PyTorch forward signature

    fwd = jax.jit(functools.partial(decoder_forward, heads=heads,
                                    n_layers=n_layers, vocab=tgt_vocab_size))
    out = fwd(params, x, enc_out, tgt_mask, src_mask)
    jax.block_until_ready(out)
    assert out.shape == (N, S_tgt, tgt_vocab_size)
    assert out.dtype == jnp.float32
    assert bool(jnp.all(jnp.isfinite(out)))
    print("KERNEL_OK")
</pallas_src>

<mosaic_0001>
module attributes {stable_mosaic.version = 11 : i64} {
  func.func @_fused_decoder_kernel(%arg0: memref<16x32xf32, #tpu.memory_space<vmem>>, %arg1: memref<20x32xf32, #tpu.memory_space<vmem>>, %arg2: memref<16x16xf32, #tpu.memory_space<vmem>>, %arg3: memref<16x20xf32, #tpu.memory_space<vmem>>, %arg4: memref<2x4x32x8xbf16, #tpu.memory_space<vmem>>, %arg5: memref<2x4x1x8xf32, #tpu.memory_space<vmem>>, %arg6: memref<2x4x32x8xbf16, #tpu.memory_space<vmem>>, %arg7: memref<2x4x1x8xf32, #tpu.memory_space<vmem>>, %arg8: memref<2x4x32x8xbf16, #tpu.memory_space<vmem>>, %arg9: memref<2x4x1x8xf32, #tpu.memory_space<vmem>>, %arg10: memref<2x4x8x32xbf16, #tpu.memory_space<vmem>>, %arg11: memref<2x1x32xf32, #tpu.memory_space<vmem>>, %arg12: memref<2x4x32x8xbf16, #tpu.memory_space<vmem>>, %arg13: memref<2x4x1x8xf32, #tpu.memory_space<vmem>>, %arg14: memref<2x4x32x8xbf16, #tpu.memory_space<vmem>>, %arg15: memref<2x4x1x8xf32, #tpu.memory_space<vmem>>, %arg16: memref<2x4x32x8xbf16, #tpu.memory_space<vmem>>, %arg17: memref<2x4x1x8xf32, #tpu.memory_space<vmem>>, %arg18: memref<2x4x8x32xbf16, #tpu.memory_space<vmem>>, %arg19: memref<2x1x32xf32, #tpu.memory_space<vmem>>, %arg20: memref<2x32x64xbf16, #tpu.memory_space<vmem>>, %arg21: memref<2x1x64xf32, #tpu.memory_space<vmem>>, %arg22: memref<2x64x32xbf16, #tpu.memory_space<vmem>>, %arg23: memref<2x1x32xf32, #tpu.memory_space<vmem>>, %arg24: memref<2x1x32xf32, #tpu.memory_space<vmem>>, %arg25: memref<2x1x32xf32, #tpu.memory_space<vmem>>, %arg26: memref<2x1x32xf32, #tpu.memory_space<vmem>>, %arg27: memref<2x1x32xf32, #tpu.memory_space<vmem>>, %arg28: memref<2x1x32xf32, #tpu.memory_space<vmem>>, %arg29: memref<2x1x32xf32, #tpu.memory_space<vmem>>, %arg30: memref<32x128xbf16, #tpu.memory_space<vmem>>, %arg31: memref<1x128xf32, #tpu.memory_space<vmem>>, %arg32: memref<16x128xf32, #tpu.memory_space<vmem>>) attributes {dimension_semantics = [], scalar_prefetch = 0 : i64, scratch_operands = 0 : i64, tpu.core_type = #tpu.core_type<tc>} {
    %c0 = arith.constant 0 : index
    %c0_0 = arith.constant 0 : index
    %0 = vector.load %arg0[%c0, %c0_0] : memref<16x32xf32, #tpu.memory_space<vmem>>, vector<16x32xf32>
    %c0_1 = arith.constant 0 : index
    %c0_2 = arith.constant 0 : index
    %1 = vector.load %arg2[%c0_1, %c0_2] : memref<16x16xf32, #tpu.memory_space<vmem>>, vector<16x16xf32>
    %c0_3 = arith.constant 0 : index
    %c0_4 = arith.constant 0 : index
    %2 = vector.load %arg3[%c0_3, %c0_4] : memref<16x20xf32, #tpu.memory_space<vmem>>, vector<16x20xf32>
    %c0_5 = arith.constant 0 : index
    %c0_6 = arith.constant 0 : index
    %3 = vector.load %arg1[%c0_5, %c0_6] : memref<20x32xf32, #tpu.memory_space<vmem>>, vector<20x32xf32>
    %4 = arith.truncf %3 : vector<20x32xf32> to vector<20x32xbf16>
    %5 = arith.truncf %0 : vector<16x32xf32> to vector<16x32xbf16>
    %c0_7 = arith.constant 0 : index
    %c0_8 = arith.constant 0 : index
    %c0_9 = arith.constant 0 : index
    %c0_10 = arith.constant 0 : index
    %6 = vector.load %arg4[%c0_7, %c0_8, %c0_9, %c0_10] : memref<2x4x32x8xbf16, #tpu.memory_space<vmem>>, vector<1x4x32x8xbf16>
    %7 = vector.shape_cast %6 : vector<1x4x32x8xbf16> to vector<4x32x8xbf16>
    %c0_11 = arith.constant 0 : index
    %c0_12 = arith.constant 0 : index
    %c0_13 = arith.constant 0 : index
    %c0_14 = arith.constant 0 : index
    %8 = vector.load %arg5[%c0_11, %c0_12, %c0_13, %c0_14] : memref<2x4x1x8xf32, #tpu.memory_space<vmem>>, vector<1x4x1x8xf32>
    %9 = vector.shape_cast %8 : vector<1x4x1x8xf32> to vector<4x1x8xf32>
    %c0_15 = arith.constant 0 : index
    %c0_16 = arith.constant 0 : index
    %c0_17 = arith.constant 0 : index
    %c0_18 = arith.constant 0 : index
    %10 = vector.load %arg6[%c0_15, %c0_16, %c0_17, %c0_18] : memref<2x4x32x8xbf16, #tpu.memory_space<vmem>>, vector<1x4x32x8xbf16>
    %11 = vector.shape_cast %10 : vector<1x4x32x8xbf16> to vector<4x32x8xbf16>
    %c0_19 = arith.constant 0 : index
    %c0_20 = arith.constant 0 : index
    %c0_21 = arith.constant 0 : index
    %c0_22 = arith.constant 0 : index
    %12 = vector.load %arg7[%c0_19, %c0_20, %c0_21, %c0_22] : memref<2x4x1x8xf32, #tpu.memory_space<vmem>>, vector<1x4x1x8xf32>
    %13 = vector.shape_cast %12 : vector<1x4x1x8xf32> to vector<4x1x8xf32>
    %c0_23 = arith.constant 0 : index
    %c0_24 = arith.constant 0 : index
    %c0_25 = arith.constant 0 : index
    %c0_26 = arith.constant 0 : index
    %14 = vector.load %arg8[%c0_23, %c0_24, %c0_25, %c0_26] : memref<2x4x32x8xbf16, #tpu.memory_space<vmem>>, vector<1x4x32x8xbf16>
    %15 = vector.shape_cast %14 : vector<1x4x32x8xbf16> to vector<4x32x8xbf16>
    %c0_27 = arith.constant 0 : index
    %c0_28 = arith.constant 0 : index
    %c0_29 = arith.constant 0 : index
    %c0_30 = arith.constant 0 : index
    %16 = vector.load %arg9[%c0_27, %c0_28, %c0_29, %c0_30] : memref<2x4x1x8xf32, #tpu.memory_space<vmem>>, vector<1x4x1x8xf32>
    %17 = vector.shape_cast %16 : vector<1x4x1x8xf32> to vector<4x1x8xf32>
    %c0_31 = arith.constant 0 : index
    %c0_32 = arith.constant 0 : index
    %c0_33 = arith.constant 0 : index
    %c0_34 = arith.constant 0 : index
    %18 = vector.load %arg10[%c0_31, %c0_32, %c0_33, %c0_34] : memref<2x4x8x32xbf16, #tpu.memory_space<vmem>>, vector<1x4x8x32xbf16>
    %19 = vector.shape_cast %18 : vector<1x4x8x32xbf16> to vector<4x8x32xbf16>
    %cst = arith.constant 0.000000e+00 : f32
    %20 = vector.broadcast %cst : f32 to vector<16x32xf32>
    %21 = vector.extract_strided_slice %7 {offsets = [0, 0, 0], sizes = [1, 32, 8], strides = [1, 1, 1]} : vector<4x32x8xbf16> to vector<1x32x8xbf16>
    %22 = vector.shape_cast %21 : vector<1x32x8xbf16> to vector<32x8xbf16>
    %cst_35 = arith.constant dense<0.000000e+00> : vector<16x8xf32>
    %23 = tpu.matmul %5, %22, %cst_35 {dimension_numbers = #tpu.dot_dimension_numbers<[1], [0], [0], [1], [0, 0, 1, 1], [], []>} : vector<16x32xbf16>, vector<32x8xbf16>, vector<16x8xf32> -> vector<16x8xf32>
    %24 = vector.extract_strided_slice %9 {offsets = [0, 0, 0], sizes = [1, 1, 8], strides = [1, 1, 1]} : vector<4x1x8xf32> to vector<1x1x8xf32>
    %25 = vector.shape_cast %24 : vector<1x1x8xf32> to vector<1x8xf32>
    %26 = vector.broadcast %25 : vector<1x8xf32> to vector<16x8xf32>
    %27 = arith.addf %23, %26 : vector<16x8xf32>
    %28 = vector.extract_strided_slice %11 {offsets = [0, 0, 0], sizes = [1, 32, 8], strides = [1, 1, 1]} : vector<4x32x8xbf16> to vector<1x32x8xbf16>
    %29 = vector.shape_cast %28 : vector<1x32x8xbf16> to vector<32x8xbf16>
    %cst_36 = arith.constant dense<0.000000e+00> : vector<16x8xf32>
    %30 = tpu.matmul %5, %29, %cst_36 {dimension_numbers = #tpu.dot_dimension_numbers<[1], [0], [0], [1], [0, 0, 1, 1], [], []>} : vector<16x32xbf16>, vector<32x8xbf16>, vector<16x8xf32> -> vector<16x8xf32>
    %31 = vector.extract_strided_slice %13 {offsets = [0, 0, 0], sizes = [1, 1, 8], strides = [1, 1, 1]} : vector<4x1x8xf32> to vector<1x1x8xf32>
    %32 = vector.shape_cast %31 : vector<1x1x8xf32> to vector<1x8xf32>
    %33 = vector.broadcast %32 : vector<1x8xf32> to vector<16x8xf32>
    %34 = arith.addf %30, %33 : vector<16x8xf32>
    %35 = vector.extract_strided_slice %15 {offsets = [0, 0, 0], sizes = [1, 32, 8], strides = [1, 1, 1]} : vector<4x32x8xbf16> to vector<1x32x8xbf16>
    %36 = vector.shape_cast %35 : vector<1x32x8xbf16> to vector<32x8xbf16>
    %cst_37 = arith.constant dense<0.000000e+00> : vector<16x8xf32>
    %37 = tpu.matmul %5, %36, %cst_37 {dimension_numbers = #tpu.dot_dimension_numbers<[1], [0], [0], [1], [0, 0, 1, 1], [], []>} : vector<16x32xbf16>, vector<32x8xbf16>, vector<16x8xf32> -> vector<16x8xf32>
    %38 = vector.extract_strided_slice %17 {offsets = [0, 0, 0], sizes = [1, 1, 8], strides = [1, 1, 1]} : vector<4x1x8xf32> to vector<1x1x8xf32>
    %39 = vector.shape_cast %38 : vector<1x1x8xf32> to vector<1x8xf32>
    %40 = vector.broadcast %39 : vector<1x8xf32> to vector<16x8xf32>
    %41 = arith.addf %37, %40 : vector<16x8xf32>
    %42 = arith.truncf %27 : vector<16x8xf32> to vector<16x8xbf16>
    %43 = arith.truncf %34 : vector<16x8xf32> to vector<16x8xbf16>
    %cst_38 = arith.constant dense<0.000000e+00> : vector<16x16xf32>
    %44 = tpu.matmul %42, %43, %cst_38 {dimension_numbers = #tpu.dot_dimension_numbers<[1], [1], [0], [0], [0, 0, 1, 0], [], []>} : vector<16x8xbf16>, vector<16x8xbf16>, vector<16x16xf32> -> vector<16x16xf32>
    %45 = arith.addf %44, %1 : vector<16x16xf32>
    %cst_39 = arith.constant dense<0xFF800000> : vector<16xf32>
    %46 = vector.multi_reduction <maximumf>, %45, %cst_39 [1] : vector<16x16xf32> to vector<16xf32>
    %47 = vector.shape_cast %46 : vector<16xf32> to vector<16x1xf32>
    %48 = vector.broadcast %47 : vector<16x1xf32> to vector<16x16xf32>
    %49 = arith.subf %45, %48 : vector<16x16xf32>
    %50 = math.exp %49 : vector<16x16xf32>
    %cst_40 = arith.constant dense<0.000000e+00> : vector<16xf32>
    %51 = vector.multi_reduction <add>, %50, %cst_40 [1] : vector<16x16xf32> to vector<16xf32>
    %52 = vector.shape_cast %51 : vector<16xf32> to vector<16x1xf32>
    %53 = tpu.reciprocal %52 {approx = true} : vector<16x1xf32> -> vector<16x1xf32>
    %54 = vector.broadcast %53 : vector<16x1xf32> to vector<16x16xf32>
    %55 = arith.mulf %50, %54 : vector<16x16xf32>
    %56 = arith.truncf %55 : vector<16x16xf32> to vector<16x16xbf16>
    %57 = arith.truncf %41 : vector<16x8xf32> to vector<16x8xbf16>
    %cst_41 = arith.constant dense<0.000000e+00> : vector<16x8xf32>
    %58 = tpu.matmul %56, %57, %cst_41 {dimension_numbers = #tpu.dot_dimension_numbers<[1], [0], [0], [1], [0, 0, 1, 1], [], []>} : vector<16x16xbf16>, vector<16x8xbf16>, vector<16x8xf32> -> vector<16x8xf32>
    %59 = arith.truncf %58 : vector<16x8xf32> to vector<16x8xbf16>
    %60 = vector.extract_strided_slice %19 {offsets = [0, 0, 0], sizes = [1, 8, 32], strides = [1, 1, 1]} : vector<4x8x32xbf16> to vector<1x8x32xbf16>
    %61 = vector.shape_cast %60 : vector<1x8x32xbf16> to vector<8x32xbf16>
    %cst_42 = arith.constant dense<0.000000e+00> : vector<16x32xf32>
    %62 = tpu.matmul %59, %61, %cst_42 {dimension_numbers = #tpu.dot_dimension_numbers<[1], [0], [0], [1], [0, 0, 1, 1], [], []>} : vector<16x8xbf16>, vector<8x32xbf16>, vector<16x32xf32> -> vector<16x32xf32>
    %63 = arith.addf %20, %62 : vector<16x32xf32>
    %64 = vector.extract_strided_slice %7 {offsets = [1, 0, 0], sizes = [1, 32, 8], strides = [1, 1, 1]} : vector<4x32x8xbf16> to vector<1x32x8xbf16>
    %65 = vector.shape_cast %64 : vector<1x32x8xbf16> to vector<32x8xbf16>
    %cst_43 = arith.constant dense<0.000000e+00> : vector<16x8xf32>
    %66 = tpu.matmul %5, %65, %cst_43 {dimension_numbers = #tpu.dot_dimension_numbers<[1], [0], [0], [1], [0, 0, 1, 1], [], []>} : vector<16x32xbf16>, vector<32x8xbf16>, vector<16x8xf32> -> vector<16x8xf32>
    %67 = vector.extract_strided_slice %9 {offsets = [1, 0, 0], sizes = [1, 1, 8], strides = [1, 1, 1]} : vector<4x1x8xf32> to vector<1x1x8xf32>
    %68 = vector.shape_cast %67 : vector<1x1x8xf32> to vector<1x8xf32>
    %69 = vector.broadcast %68 : vector<1x8xf32> to vector<16x8xf32>
    %70 = arith.addf %66, %69 : vector<16x8xf32>
    %71 = vector.extract_strided_slice %11 {offsets = [1, 0, 0], sizes = [1, 32, 8], strides = [1, 1, 1]} : vector<4x32x8xbf16> to vector<1x32x8xbf16>
    %72 = vector.shape_cast %71 : vector<1x32x8xbf16> to vector<32x8xbf16>
    %cst_44 = arith.constant dense<0.000000e+00> : vector<16x8xf32>
    %73 = tpu.matmul %5, %72, %cst_44 {dimension_numbers = #tpu.dot_dimension_numbers<[1], [0], [0], [1], [0, 0, 1, 1], [], []>} : vector<16x32xbf16>, vector<32x8xbf16>, vector<16x8xf32> -> vector<16x8xf32>
    %74 = vector.extract_strided_slice %13 {offsets = [1, 0, 0], sizes = [1, 1, 8], strides = [1, 1, 1]} : vector<4x1x8xf32> to vector<1x1x8xf32>
    %75 = vector.shape_cast %74 : vector<1x1x8xf32> to vector<1x8xf32>
    %76 = vector.broadcast %75 : vector<1x8xf32> to vector<16x8xf32>
    %77 = arith.addf %73, %76 : vector<16x8xf32>
    %78 = vector.extract_strided_slice %15 {offsets = [1, 0, 0], sizes = [1, 32, 8], strides = [1, 1, 1]} : vector<4x32x8xbf16> to vector<1x32x8xbf16>
    %79 = vector.shape_cast %78 : vector<1x32x8xbf16> to vector<32x8xbf16>
    %cst_45 = arith.constant dense<0.000000e+00> : vector<16x8xf32>
    %80 = tpu.matmul %5, %79, %cst_45 {dimension_numbers = #tpu.dot_dimension_numbers<[1], [0], [0], [1], [0, 0, 1, 1], [], []>} : vector<16x32xbf16>, vector<32x8xbf16>, vector<16x8xf32> -> vector<16x8xf32>
    %81 = vector.extract_strided_slice %17 {offsets = [1, 0, 0], sizes = [1, 1, 8], strides = [1, 1, 1]} : vector<4x1x8xf32> to vector<1x1x8xf32>
    %82 = vector.shape_cast %81 : vector<1x1x8xf32> to vector<1x8xf32>
    %83 = vector.broadcast %82 : vector<1x8xf32> to vector<16x8xf32>
    %84 = arith.addf %80, %83 : vector<16x8xf32>
    %85 = arith.truncf %70 : vector<16x8xf32> to vector<16x8xbf16>
    %86 = arith.truncf %77 : vector<16x8xf32> to vector<16x8xbf16>
    %cst_46 = arith.constant dense<0.000000e+00> : vector<16x16xf32>
    %87 = tpu.matmul %85, %86, %cst_46 {dimension_numbers = #tpu.dot_dimension_numbers<[1], [1], [0], [0], [0, 0, 1, 0], [], []>} : vector<16x8xbf16>, vector<16x8xbf16>, vector<16x16xf32> -> vector<16x16xf32>
    %88 = arith.addf %87, %1 : vector<16x16xf32>
    %cst_47 = arith.constant dense<0xFF800000> : vector<16xf32>
    %89 = vector.multi_reduction <maximumf>, %88, %cst_47 [1] : vector<16x16xf32> to vector<16xf32>
    %90 = vector.shape_cast %89 : vector<16xf32> to vector<16x1xf32>
    %91 = vector.broadcast %90 : vector<16x1xf32> to vector<16x16xf32>
    %92 = arith.subf %88, %91 : vector<16x16xf32>
    %93 = math.exp %92 : vector<16x16xf32>
    %cst_48 = arith.constant dense<0.000000e+00> : vector<16xf32>
    %94 = vector.multi_reduction <add>, %93, %cst_48 [1] : vector<16x16xf32> to vector<16xf32>
    %95 = vector.shape_cast %94 : vector<16xf32> to vector<16x1xf32>
    %96 = tpu.reciprocal %95 {approx = true} : vector<16x1xf32> -> vector<16x1xf32>
    %97 = vector.broadcast %96 : vector<16x1xf32> to vector<16x16xf32>
    %98 = arith.mulf %93, %97 : vector<16x16xf32>
    %99 = arith.truncf %98 : vector<16x16xf32> to vector<16x16xbf16>
    %100 = arith.truncf %84 : vector<16x8xf32> to vector<16x8xbf16>
    %cst_49 = arith.constant dense<0.000000e+00> : vector<16x8xf32>
    %101 = tpu.matmul %99, %100, %cst_49 {dimension_numbers = #tpu.dot_dimension_numbers<[1], [0], [0], [1], [0, 0, 1, 1], [], []>} : vector<16x16xbf16>, vector<16x8xbf16>, vector<16x8xf32> -> vector<16x8xf32>
    %102 = arith.truncf %101 : vector<16x8xf32> to vector<16x8xbf16>
    %103 = vector.extract_strided_slice %19 {offsets = [1, 0, 0], sizes = [1, 8, 32], strides = [1, 1, 1]} : vector<4x8x32xbf16> to vector<1x8x32xbf16>
    %104 = vector.shape_cast %103 : vector<1x8x32xbf16> to vector<8x32xbf16>
    %cst_50 = arith.constant dense<0.000000e+00> : vector<16x32xf32>
    %105 = tpu.matmul %102, %104, %cst_50 {dimension_numbers = #tpu.dot_dimension_numbers<[1], [0], [0], [1], [0, 0, 1, 1], [], []>} : vector<16x8xbf16>, vector<8x32xbf16>, vector<16x32xf32> -> vector<16x32xf32>
    %106 = arith.addf %63, %105 : vector<16x32xf32>
    %107 = vector.extract_strided_slice %7 {offsets = [2, 0, 0], sizes = [1, 32, 8], strides = [1, 1, 1]} : vector<4x32x8xbf16> to vector<1x32x8xbf16>
    %108 = vector.shape_cast %107 : vector<1x32x8xbf16> to vector<32x8xbf16>
    %cst_51 = arith.constant dense<0.000000e+00> : vector<16x8xf32>
    %109 = tpu.matmul %5, %108, %cst_51 {dimension_numbers = #tpu.dot_dimension_numbers<[1], [0], [0], [1], [0, 0, 1, 1], [], []>} : vector<16x32xbf16>, vector<32x8xbf16>, vector<16x8xf32> -> vector<16x8xf32>
    %110 = vector.extract_strided_slice %9 {offsets = [2, 0, 0], sizes = [1, 1, 8], strides = [1, 1, 1]} : vector<4x1x8xf32> to vector<1x1x8xf32>
    %111 = vector.shape_cast %110 : vector<1x1x8xf32> to vector<1x8xf32>
    %112 = vector.broadcast %111 : vector<1x8xf32> to vector<16x8xf32>
    %113 = arith.addf %109, %112 : vector<16x8xf32>
    %114 = vector.extract_strided_slice %11 {offsets = [2, 0, 0], sizes = [1, 32, 8], strides = [1, 1, 1]} : vector<4x32x8xbf16> to vector<1x32x8xbf16>
    %115 = vector.shape_cast %114 : vector<1x32x8xbf16> to vector<32x8xbf16>
    %cst_52 = arith.constant dense<0.000000e+00> : vector<16x8xf32>
    %116 = tpu.matmul %5, %115, %cst_52 {dimension_numbers = #tpu.dot_dimension_numbers<[1], [0], [0], [1], [0, 0, 1, 1], [], []>} : vector<16x32xbf16>, vector<32x8xbf16>, vector<16x8xf32> -> vector<16x8xf32>
    %117 = vector.extract_strided_slice %13 {offsets = [2, 0, 0], sizes = [1, 1, 8], strides = [1, 1, 1]} : vector<4x1x8xf32> to vector<1x1x8xf32>
    %118 = vector.shape_cast %117 : vector<1x1x8xf32> to vector<1x8xf32>
    %119 = vector.broadcast %118 : vector<1x8xf32> to vector<16x8xf32>
    %120 = arith.addf %116, %119 : vector<16x8xf32>
    %121 = vector.extract_strided_slice %15 {offsets = [2, 0, 0], sizes = [1, 32, 8], strides = [1, 1, 1]} : vector<4x32x8xbf16> to vector<1x32x8xbf16>
    %122 = vector.shape_cast %121 : vector<1x32x8xbf16> to vector<32x8xbf16>
    %cst_53 = arith.constant dense<0.000000e+00> : vector<16x8xf32>
    %123 = tpu.matmul %5, %122, %cst_53 {dimension_numbers = #tpu.dot_dimension_numbers<[1], [0], [0], [1], [0, 0, 1, 1], [], []>} : vector<16x32xbf16>, vector<32x8xbf16>, vector<16x8xf32> -> vector<16x8xf32>
    %124 = vector.extract_strided_slice %17 {offsets = [2, 0, 0], sizes = [1, 1, 8], strides = [1, 1, 1]} : vector<4x1x8xf32> to vector<1x1x8xf32>
    %125 = vector.shape_cast %124 : vector<1x1x8xf32> to vector<1x8xf32>
    %126 = vector.broadcast %125 : vector<1x8xf32> to vector<16x8xf32>
    %127 = arith.addf %123, %126 : vector<16x8xf32>
    %128 = arith.truncf %113 : vector<16x8xf32> to vector<16x8xbf16>
    %129 = arith.truncf %120 : vector<16x8xf32> to vector<16x8xbf16>
    %cst_54 = arith.constant dense<0.000000e+00> : vector<16x16xf32>
    %130 = tpu.matmul %128, %129, %cst_54 {dimension_numbers = #tpu.dot_dimension_numbers<[1], [1], [0], [0], [0, 0, 1, 0], [], []>} : vector<16x8xbf16>, vector<16x8xbf16>, vector<16x16xf32> -> vector<16x16xf32>
    %131 = arith.addf %130, %1 : vector<16x16xf32>
    %cst_55 = arith.constant dense<0xFF800000> : vector<16xf32>
    %132 = vector.multi_reduction <maximumf>, %131, %cst_55 [1] : vector<16x16xf32> to vector<16xf32>
    %133 = vector.shape_cast %132 : vector<16xf32> to vector<16x1xf32>
    %134 = vector.broadcast %133 : vector<16x1xf32> to vector<16x16xf32>
    %135 = arith.subf %131, %134 : vector<16x16xf32>
    %136 = math.exp %135 : vector<16x16xf32>
    %cst_56 = arith.constant dense<0.000000e+00> : vector<16xf32>
    %137 = vector.multi_reduction <add>, %136, %cst_56 [1] : vector<16x16xf32> to vector<16xf32>
    %138 = vector.shape_cast %137 : vector<16xf32> to vector<16x1xf32>
    %139 = tpu.reciprocal %138 {approx = true} : vector<16x1xf32> -> vector<16x1xf32>
    %140 = vector.broadcast %139 : vector<16x1xf32> to vector<16x16xf32>
    %141 = arith.mulf %136, %140 : vector<16x16xf32>
    %142 = arith.truncf %141 : vector<16x16xf32> to vector<16x16xbf16>
    %143 = arith.truncf %127 : vector<16x8xf32> to vector<16x8xbf16>
    %cst_57 = arith.constant dense<0.000000e+00> : vector<16x8xf32>
    %144 = tpu.matmul %142, %143, %cst_57 {dimension_numbers = #tpu.dot_dimension_numbers<[1], [0], [0], [1], [0, 0, 1, 1], [], []>} : vector<16x16xbf16>, vector<16x8xbf16>, vector<16x8xf32> -> vector<16x8xf32>
    %145 = arith.truncf %144 : vector<16x8xf32> to vector<16x8xbf16>
    %146 = vector.extract_strided_slice %19 {offsets = [2, 0, 0], sizes = [1, 8, 32], strides = [1, 1, 1]} : vector<4x8x32xbf16> to vector<1x8x32xbf16>
    %147 = vector.shape_cast %146 : vector<1x8x32xbf16> to vector<8x32xbf16>
    %cst_58 = arith.constant dense<0.000000e+00> : vector<16x32xf32>
    %148 = tpu.matmul %145, %147, %cst_58 {dimension_numbers = #tpu.dot_dimension_numbers<[1], [0], [0], [1], [0, 0, 1, 1], [], []>} : vector<16x8xbf16>, vector<8x32xbf16>, vector<16x32xf32> -> vector<16x32xf32>
    %149 = arith.addf %106, %148 : vector<16x32xf32>
    %150 = vector.extract_strided_slice %7 {offsets = [3, 0, 0], sizes = [1, 32, 8], strides = [1, 1, 1]} : vector<4x32x8xbf16> to vector<1x32x8xbf16>
    %151 = vector.shape_cast %150 : vector<1x32x8xbf16> to vector<32x8xbf16>
    %cst_59 = arith.constant dense<0.000000e+00> : vector<16x8xf32>
    %152 = tpu.matmul %5, %151, %cst_59 {dimension_numbers = #tpu.dot_dimension_numbers<[1], [0], [0], [1], [0, 0, 1, 1], [], []>} : vector<16x32xbf16>, vector<32x8xbf16>, vector<16x8xf32> -> vector<16x8xf32>
    %153 = vector.extract_strided_slice %9 {offsets = [3, 0, 0], sizes = [1, 1, 8], strides = [1, 1, 1]} : vector<4x1x8xf32> to vector<1x1x8xf32>
    %154 = vector.shape_cast %153 : vector<1x1x8xf32> to vector<1x8xf32>
    %155 = vector.broadcast %154 : vector<1x8xf32> to vector<16x8xf32>
    %156 = arith.addf %152, %155 : vector<16x8xf32>
    %157 = vector.extract_strided_slice %11 {offsets = [3, 0, 0], sizes = [1, 32, 8], strides = [1, 1, 1]} : vector<4x32x8xbf16> to vector<1x32x8xbf16>
    %158 = vector.shape_cast %157 : vector<1x32x8xbf16> to vector<32x8xbf16>
    %cst_60 = arith.constant dense<0.000000e+00> : vector<16x8xf32>
    %159 = tpu.matmul %5, %158, %cst_60 {dimension_numbers = #tpu.dot_dimension_numbers<[1], [0], [0], [1], [0, 0, 1, 1], [], []>} : vector<16x32xbf16>, vector<32x8xbf16>, vector<16x8xf32> -> vector<16x8xf32>
    %160 = vector.extract_strided_slice %13 {offsets = [3, 0, 0], sizes = [1, 1, 8], strides = [1, 1, 1]} : vector<4x1x8xf32> to vector<1x1x8xf32>
    %161 = vector.shape_cast %160 : vector<1x1x8xf32> to vector<1x8xf32>
    %162 = vector.broadcast %161 : vector<1x8xf32> to vector<16x8xf32>
    %163 = arith.addf %159, %162 : vector<16x8xf32>
    %164 = vector.extract_strided_slice %15 {offsets = [3, 0, 0], sizes = [1, 32, 8], strides = [1, 1, 1]} : vector<4x32x8xbf16> to vector<1x32x8xbf16>
    %165 = vector.shape_cast %164 : vector<1x32x8xbf16> to vector<32x8xbf16>
    %cst_61 = arith.constant dense<0.000000e+00> : vector<16x8xf32>
    %166 = tpu.matmul %5, %165, %cst_61 {dimension_numbers = #tpu.dot_dimension_numbers<[1], [0], [0], [1], [0, 0, 1, 1], [], []>} : vector<16x32xbf16>, vector<32x8xbf16>, vector<16x8xf32> -> vector<16x8xf32>
    %167 = vector.extract_strided_slice %17 {offsets = [3, 0, 0], sizes = [1, 1, 8], strides = [1, 1, 1]} : vector<4x1x8xf32> to vector<1x1x8xf32>
    %168 = vector.shape_cast %167 : vector<1x1x8xf32> to vector<1x8xf32>
    %169 = vector.broadcast %168 : vector<1x8xf32> to vector<16x8xf32>
    %170 = arith.addf %166, %169 : vector<16x8xf32>
    %171 = arith.truncf %156 : vector<16x8xf32> to vector<16x8xbf16>
    %172 = arith.truncf %163 : vector<16x8xf32> to vector<16x8xbf16>
    %cst_62 = arith.constant dense<0.000000e+00> : vector<16x16xf32>
    %173 = tpu.matmul %171, %172, %cst_62 {dimension_numbers = #tpu.dot_dimension_numbers<[1], [1], [0], [0], [0, 0, 1, 0], [], []>} : vector<16x8xbf16>, vector<16x8xbf16>, vector<16x16xf32> -> vector<16x16xf32>
    %174 = arith.addf %173, %1 : vector<16x16xf32>
    %cst_63 = arith.constant dense<0xFF800000> : vector<16xf32>
    %175 = vector.multi_reduction <maximumf>, %174, %cst_63 [1] : vector<16x16xf32> to vector<16xf32>
    %176 = vector.shape_cast %175 : vector<16xf32> to vector<16x1xf32>
    %177 = vector.broadcast %176 : vector<16x1xf32> to vector<16x16xf32>
    %178 = arith.subf %174, %177 : vector<16x16xf32>
    %179 = math.exp %178 : vector<16x16xf32>
    %cst_64 = arith.constant dense<0.000000e+00> : vector<16xf32>
    %180 = vector.multi_reduction <add>, %179, %cst_64 [1] : vector<16x16xf32> to vector<16xf32>
    %181 = vector.shape_cast %180 : vector<16xf32> to vector<16x1xf32>
    %182 = tpu.reciprocal %181 {approx = true} : vector<16x1xf32> -> vector<16x1xf32>
    %183 = vector.broadcast %182 : vector<16x1xf32> to vector<16x16xf32>
    %184 = arith.mulf %179, %183 : vector<16x16xf32>
    %185 = arith.truncf %184 : vector<16x16xf32> to vector<16x16xbf16>
    %186 = arith.truncf %170 : vector<16x8xf32> to vector<16x8xbf16>
    %cst_65 = arith.constant dense<0.000000e+00> : vector<16x8xf32>
    %187 = tpu.matmul %185, %186, %cst_65 {dimension_numbers = #tpu.dot_dimension_numbers<[1], [0], [0], [1], [0, 0, 1, 1], [], []>} : vector<16x16xbf16>, vector<16x8xbf16>, vector<16x8xf32> -> vector<16x8xf32>
    %188 = arith.truncf %187 : vector<16x8xf32> to vector<16x8xbf16>
    %189 = vector.extract_strided_slice %19 {offsets = [3, 0, 0], sizes = [1, 8, 32], strides = [1, 1, 1]} : vector<4x8x32xbf16> to vector<1x8x32xbf16>
    %190 = vector.shape_cast %189 : vector<1x8x32xbf16> to vector<8x32xbf16>
    %cst_66 = arith.constant dense<0.000000e+00> : vector<16x32xf32>
    %191 = tpu.matmul %188, %190, %cst_66 {dimension_numbers = #tpu.dot_dimension_numbers<[1], [0], [0], [1], [0, 0, 1, 1], [], []>} : vector<16x8xbf16>, vector<8x32xbf16>, vector<16x32xf32> -> vector<16x32xf32>
    %192 = arith.addf %149, %191 : vector<16x32xf32>
    %c0_67 = arith.constant 0 : index
    %c0_68 = arith.constant 0 : index
    %c0_69 = arith.constant 0 : index
    %193 = vector.load %arg11[%c0_67, %c0_68, %c0_69] : memref<2x1x32xf32, #tpu.memory_space<vmem>>, vector<1x1x32xf32>
    %194 = vector.shape_cast %193 : vector<1x1x32xf32> to vector<1x32xf32>
    %195 = vector.broadcast %194 : vector<1x32xf32> to vector<16x32xf32>
    %196 = arith.addf %192, %195 : vector<16x32xf32>
    %197 = arith.addf %196, %0 : vector<16x32xf32>
    %c0_70 = arith.constant 0 : index
    %c0_71 = arith.constant 0 : index
    %c0_72 = arith.constant 0 : index
    %198 = vector.load %arg24[%c0_70, %c0_71, %c0_72] : memref<2x1x32xf32, #tpu.memory_space<vmem>>, vector<1x1x32xf32>
    %199 = vector.shape_cast %198 : vector<1x1x32xf32> to vector<1x32xf32>
    %c0_73 = arith.constant 0 : index
    %c0_74 = arith.constant 0 : index
    %c0_75 = arith.constant 0 : index
    %200 = vector.load %arg25[%c0_73, %c0_74, %c0_75] : memref<2x1x32xf32, #tpu.memory_space<vmem>>, vector<1x1x32xf32>
    %201 = vector.shape_cast %200 : vector<1x1x32xf32> to vector<1x32xf32>
    %cst_76 = arith.constant dense<0.000000e+00> : vector<16xf32>
    %202 = vector.multi_reduction <add>, %197, %cst_76 [1] : vector<16x32xf32> to vector<16xf32>
    %203 = vector.shape_cast %202 : vector<16xf32> to vector<16x1xf32>
    %cst_77 = arith.constant 3.200000e+01 : f32
    %204 = vector.broadcast %cst_77 : f32 to vector<16x1xf32>
    %205 = arith.divf %203, %204 : vector<16x1xf32>
    %206 = vector.broadcast %205 : vector<16x1xf32> to vector<16x32xf32>
    %207 = arith.subf %197, %206 : vector<16x32xf32>
    %208 = arith.mulf %207, %207 : vector<16x32xf32>
    %cst_78 = arith.constant dense<0.000000e+00> : vector<16xf32>
    %209 = vector.multi_reduction <add>, %208, %cst_78 [1] : vector<16x32xf32> to vector<16xf32>
    %210 = vector.shape_cast %209 : vector<16xf32> to vector<16x1xf32>
    %cst_79 = arith.constant 3.200000e+01 : f32
    %211 = vector.broadcast %cst_79 : f32 to vector<16x1xf32>
    %212 = arith.divf %210, %211 : vector<16x1xf32>
    %213 = vector.broadcast %205 : vector<16x1xf32> to vector<16x32xf32>
    %214 = arith.subf %197, %213 : vector<16x32xf32>
    %cst_80 = arith.constant 9.99999974E-6 : f32
    %215 = vector.broadcast %cst_80 : f32 to vector<16x1xf32>
    %216 = arith.addf %212, %215 : vector<16x1xf32>
    %217 = math.rsqrt %216 : vector<16x1xf32>
    %218 = vector.broadcast %217 : vector<16x1xf32> to vector<16x32xf32>
    %219 = arith.mulf %214, %218 : vector<16x32xf32>
    %220 = vector.broadcast %199 : vector<1x32xf32> to vector<16x32xf32>
    %221 = arith.mulf %219, %220 : vector<16x32xf32>
    %222 = vector.broadcast %201 : vector<1x32xf32> to vector<16x32xf32>
    %223 = arith.addf %221, %222 : vector<16x32xf32>
    %224 = arith.truncf %223 : vector<16x32xf32> to vector<16x32xbf16>
    %c0_81 = arith.constant 0 : index
    %c0_82 = arith.constant 0 : index
    %c0_83 = arith.constant 0 : index
    %c0_84 = arith.constant 0 : index
    %225 = vector.load %arg12[%c0_81, %c0_82, %c0_83, %c0_84] : memref<2x4x32x8xbf16, #tpu.memory_space<vmem>>, vector<1x4x32x8xbf16>
    %226 = vector.shape_cast %225 : vector<1x4x32x8xbf16> to vector<4x32x8xbf16>
    %c0_85 = arith.constant 0 : index
    %c0_86 = arith.constant 0 : index
    %c0_87 = arith.constant 0 : index
    %c0_88 = arith.constant 0 : index
    %227 = vector.load %arg13[%c0_85, %c0_86, %c0_87, %c0_88] : memref<2x4x1x8xf32, #tpu.memory_space<vmem>>, vector<1x4x1x8xf32>
    %228 = vector.shape_cast %227 : vector<1x4x1x8xf32> to vector<4x1x8xf32>
    %c0_89 = arith.constant 0 : index
    %c0_90 = arith.constant 0 : index
    %c0_91 = arith.constant 0 : index
    %c0_92 = arith.constant 0 : index
    %229 = vector.load %arg14[%c0_89, %c0_90, %c0_91, %c0_92] : memref<2x4x32x8xbf16, #tpu.memory_space<vmem>>, vector<1x4x32x8xbf16>
    %230 = vector.shape_cast %229 : vector<1x4x32x8xbf16> to vector<4x32x8xbf16>
    %c0_93 = arith.constant 0 : index
    %c0_94 = arith.constant 0 : index
    %c0_95 = arith.constant 0 : index
    %c0_96 = arith.constant 0 : index
    %231 = vector.load %arg15[%c0_93, %c0_94, %c0_95, %c0_96] : memref<2x4x1x8xf32, #tpu.memory_space<vmem>>, vector<1x4x1x8xf32>
    %232 = vector.shape_cast %231 : vector<1x4x1x8xf32> to vector<4x1x8xf32>
    %c0_97 = arith.constant 0 : index
    %c0_98 = arith.constant 0 : index
    %c0_99 = arith.constant 0 : index
    %c0_100 = arith.constant 0 : index
    %233 = vector.load %arg16[%c0_97, %c0_98, %c0_99, %c0_100] : memref<2x4x32x8xbf16, #tpu.memory_space<vmem>>, vector<1x4x32x8xbf16>
    %234 = vector.shape_cast %233 : vector<1x4x32x8xbf16> to vector<4x32x8xbf16>
    %c0_101 = arith.constant 0 : index
    %c0_102 = arith.constant 0 : index
    %c0_103 = arith.constant 0 : index
    %c0_104 = arith.constant 0 : index
    %235 = vector.load %arg17[%c0_101, %c0_102, %c0_103, %c0_104] : memref<2x4x1x8xf32, #tpu.memory_space<vmem>>, vector<1x4x1x8xf32>
    %236 = vector.shape_cast %235 : vector<1x4x1x8xf32> to vector<4x1x8xf32>
    %c0_105 = arith.constant 0 : index
    %c0_106 = arith.constant 0 : index
    %c0_107 = arith.constant 0 : index
    %c0_108 = arith.constant 0 : index
    %237 = vector.load %arg18[%c0_105, %c0_106, %c0_107, %c0_108] : memref<2x4x8x32xbf16, #tpu.memory_space<vmem>>, vector<1x4x8x32xbf16>
    %238 = vector.shape_cast %237 : vector<1x4x8x32xbf16> to vector<4x8x32xbf16>
    %cst_109 = arith.constant 0.000000e+00 : f32
    %239 = vector.broadcast %cst_109 : f32 to vector<16x32xf32>
    %240 = vector.extract_strided_slice %226 {offsets = [0, 0, 0], sizes = [1, 32, 8], strides = [1, 1, 1]} : vector<4x32x8xbf16> to vector<1x32x8xbf16>
    %241 = vector.shape_cast %240 : vector<1x32x8xbf16> to vector<32x8xbf16>
    %cst_110 = arith.constant dense<0.000000e+00> : vector<16x8xf32>
    %242 = tpu.matmul %224, %241, %cst_110 {dimension_numbers = #tpu.dot_dimension_numbers<[1], [0], [0], [1], [0, 0, 1, 1], [], []>} : vector<16x32xbf16>, vector<32x8xbf16>, vector<16x8xf32> -> vector<16x8xf32>
    %243 = vector.extract_strided_slice %228 {offsets = [0, 0, 0], sizes = [1, 1, 8], strides = [1, 1, 1]} : vector<4x1x8xf32> to vector<1x1x8xf32>
    %244 = vector.shape_cast %243 : vector<1x1x8xf32> to vector<1x8xf32>
    %245 = vector.broadcast %244 : vector<1x8xf32> to vector<16x8xf32>
    %246 = arith.addf %242, %245 : vector<16x8xf32>
    %247 = vector.extract_strided_slice %230 {offsets = [0, 0, 0], sizes = [1, 32, 8], strides = [1, 1, 1]} : vector<4x32x8xbf16> to vector<1x32x8xbf16>
    %248 = vector.shape_cast %247 : vector<1x32x8xbf16> to vector<32x8xbf16>
    %cst_111 = arith.constant dense<0.000000e+00> : vector<20x8xf32>
    %249 = tpu.matmul %4, %248, %cst_111 {dimension_numbers = #tpu.dot_dimension_numbers<[1], [0], [0], [1], [0, 0, 1, 1], [], []>} : vector<20x32xbf16>, vector<32x8xbf16>, vector<20x8xf32> -> vector<20x8xf32>
    %250 = vector.extract_strided_slice %232 {offsets = [0, 0, 0], sizes = [1, 1, 8], strides = [1, 1, 1]} : vector<4x1x8xf32> to vector<1x1x8xf32>
    %251 = vector.shape_cast %250 : vector<1x1x8xf32> to vector<1x8xf32>
    %252 = vector.broadcast %251 : vector<1x8xf32> to vector<20x8xf32>
    %253 = arith.addf %249, %252 : vector<20x8xf32>
    %254 = vector.extract_strided_slice %234 {offsets = [0, 0, 0], sizes = [1, 32, 8], strides = [1, 1, 1]} : vector<4x32x8xbf16> to vector<1x32x8xbf16>
    %255 = vector.shape_cast %254 : vector<1x32x8xbf16> to vector<32x8xbf16>
    %cst_112 = arith.constant dense<0.000000e+00> : vector<20x8xf32>
    %256 = tpu.matmul %4, %255, %cst_112 {dimension_numbers = #tpu.dot_dimension_numbers<[1], [0], [0], [1], [0, 0, 1, 1], [], []>} : vector<20x32xbf16>, vector<32x8xbf16>, vector<20x8xf32> -> vector<20x8xf32>
    %257 = vector.extract_strided_slice %236 {offsets = [0, 0, 0], sizes = [1, 1, 8], strides = [1, 1, 1]} : vector<4x1x8xf32> to vector<1x1x8xf32>
    %258 = vector.shape_cast %257 : vector<1x1x8xf32> to vector<1x8xf32>
    %259 = vector.broadcast %258 : vector<1x8xf32> to vector<20x8xf32>
    %260 = arith.addf %256, %259 : vector<20x8xf32>
    %261 = arith.truncf %246 : vector<16x8xf32> to vector<16x8xbf16>
    %262 = arith.truncf %253 : vector<20x8xf32> to vector<20x8xbf16>
    %cst_113 = arith.constant dense<0.000000e+00> : vector<16x20xf32>
    %263 = tpu.matmul %261, %262, %cst_113 {dimension_numbers = #tpu.dot_dimension_numbers<[1], [1], [0], [0], [0, 0, 1, 0], [], []>} : vector<16x8xbf16>, vector<20x8xbf16>, vector<16x20xf32> -> vector<16x20xf32>
    %264 = arith.addf %263, %2 : vector<16x20xf32>
    %cst_114 = arith.constant dense<0xFF800000> : vector<16xf32>
    %265 = vector.multi_reduction <maximumf>, %264, %cst_114 [1] : vector<16x20xf32> to vector<16xf32>
    %266 = vector.shape_cast %265 : vector<16xf32> to vector<16x1xf32>
    %267 = vector.broadcast %266 : vector<16x1xf32> to vector<16x20xf32>
    %268 = arith.subf %264, %267 : vector<16x20xf32>
    %269 = math.exp %268 : vector<16x20xf32>
    %cst_115 = arith.constant dense<0.000000e+00> : vector<16xf32>
    %270 = vector.multi_reduction <add>, %269, %cst_115 [1] : vector<16x20xf32> to vector<16xf32>
    %271 = vector.shape_cast %270 : vector<16xf32> to vector<16x1xf32>
    %272 = tpu.reciprocal %271 {approx = true} : vector<16x1xf32> -> vector<16x1xf32>
    %273 = vector.broadcast %272 : vector<16x1xf32> to vector<16x20xf32>
    %274 = arith.mulf %269, %273 : vector<16x20xf32>
    %275 = arith.truncf %274 : vector<16x20xf32> to vector<16x20xbf16>
    %276 = arith.truncf %260 : vector<20x8xf32> to vector<20x8xbf16>
    %cst_116 = arith.constant dense<0.000000e+00> : vector<16x8xf32>
    %277 = tpu.matmul %275, %276, %cst_116 {dimension_numbers = #tpu.dot_dimension_numbers<[1], [0], [0], [1], [0, 0, 1, 1], [], []>} : vector<16x20xbf16>, vector<20x8xbf16>, vector<16x8xf32> -> vector<16x8xf32>
    %278 = arith.truncf %277 : vector<16x8xf32> to vector<16x8xbf16>
    %279 = vector.extract_strided_slice %238 {offsets = [0, 0, 0], sizes = [1, 8, 32], strides = [1, 1, 1]} : vector<4x8x32xbf16> to vector<1x8x32xbf16>
    %280 = vector.shape_cast %279 : vector<1x8x32xbf16> to vector<8x32xbf16>
    %cst_117 = arith.constant dense<0.000000e+00> : vector<16x32xf32>
    %281 = tpu.matmul %278, %280, %cst_117 {dimension_numbers = #tpu.dot_dimension_numbers<[1], [0], [0], [1], [0, 0, 1, 1], [], []>} : vector<16x8xbf16>, vector<8x32xbf16>, vector<16x32xf32> -> vector<16x32xf32>
    %282 = arith.addf %239, %281 : vector<16x32xf32>
    %283 = vector.extract_strided_slice %226 {offsets = [1, 0, 0], sizes = [1, 32, 8], strides = [1, 1, 1]} : vector<4x32x8xbf16> to vector<1x32x8xbf16>
    %284 = vector.shape_cast %283 : vector<1x32x8xbf16> to vector<32x8xbf16>
    %cst_118 = arith.constant dense<0.000000e+00> : vector<16x8xf32>
    %285 = tpu.matmul %224, %284, %cst_118 {dimension_numbers = #tpu.dot_dimension_numbers<[1], [0], [0], [1], [0, 0, 1, 1], [], []>} : vector<16x32xbf16>, vector<32x8xbf16>, vector<16x8xf32> -> vector<16x8xf32>
    %286 = vector.extract_strided_slice %228 {offsets = [1, 0, 0], sizes = [1, 1, 8], strides = [1, 1, 1]} : vector<4x1x8xf32> to vector<1x1x8xf32>
    %287 = vector.shape_cast %286 : vector<1x1x8xf32> to vector<1x8xf32>
    %288 = vector.broadcast %287 : vector<1x8xf32> to vector<16x8xf32>
    %289 = arith.addf %285, %288 : vector<16x8xf32>
    %290 = vector.extract_strided_slice %230 {offsets = [1, 0, 0], sizes = [1, 32, 8], strides = [1, 1, 1]} : vector<4x32x8xbf16> to vector<1x32x8xbf16>
    %291 = vector.shape_cast %290 : vector<1x32x8xbf16> to vector<32x8xbf16>
    %cst_119 = arith.constant dense<0.000000e+00> : vector<20x8xf32>
    %292 = tpu.matmul %4, %291, %cst_119 {dimension_numbers = #tpu.dot_dimension_numbers<[1], [0], [0], [1], [0, 0, 1, 1], [], []>} : vector<20x32xbf16>, vector<32x8xbf16>, vector<20x8xf32> -> vector<20x8xf32>
    %293 = vector.extract_strided_slice %232 {offsets = [1, 0, 0], sizes = [1, 1, 8], strides = [1, 1, 1]} : vector<4x1x8xf32> to vector<1x1x8xf32>
    %294 = vector.shape_cast %293 : vector<1x1x8xf32> to vector<1x8xf32>
    %295 = vector.broadcast %294 : vector<1x8xf32> to vector<20x8xf32>
    %296 = arith.addf %292, %295 : vector<20x8xf32>
    %297 = vector.extract_strided_slice %234 {offsets = [1, 0, 0], sizes = [1, 32, 8], strides = [1, 1, 1]} : vector<4x32x8xbf16> to vector<1x32x8xbf16>
    %298 = vector.shape_cast %297 : vector<1x32x8xbf16> to vector<32x8xbf16>
    %cst_120 = arith.constant dense<0.000000e+00> : vector<20x8xf32>
    %299 = tpu.matmul %4, %298, %cst_120 {dimension_numbers = #tpu.dot_dimension_numbers<[1], [0], [0], [1], [0, 0, 1, 1], [], []>} : vector<20x32xbf16>, vector<32x8xbf16>, vector<20x8xf32> -> vector<20x8xf32>
    %300 = vector.extract_strided_slice %236 {offsets = [1, 0, 0], sizes = [1, 1, 8], strides = [1, 1, 1]} : vector<4x1x8xf32> to vector<1x1x8xf32>
    %301 = vector.shape_cast %300 : vector<1x1x8xf32> to vector<1x8xf32>
    %302 = vector.broadcast %301 : vector<1x8xf32> to vector<20x8xf32>
    %303 = arith.addf %299, %302 : vector<20x8xf32>
    %304 = arith.truncf %289 : vector<16x8xf32> to vector<16x8xbf16>
    %305 = arith.truncf %296 : vector<20x8xf32> to vector<20x8xbf16>
    %cst_121 = arith.constant dense<0.000000e+00> : vector<16x20xf32>
    %306 = tpu.matmul %304, %305, %cst_121 {dimension_numbers = #tpu.dot_dimension_numbers<[1], [1], [0], [0], [0, 0, 1, 0], [], []>} : vector<16x8xbf16>, vector<20x8xbf16>, vector<16x20xf32> -> vector<16x20xf32>
    %307 = arith.addf %306, %2 : vector<16x20xf32>
    %cst_122 = arith.constant dense<0xFF800000> : vector<16xf32>
    %308 = vector.multi_reduction <maximumf>, %307, %cst_122 [1] : vector<16x20xf32> to vector<16xf32>
    %309 = vector.shape_cast %308 : vector<16xf32> to vector<16x1xf32>
    %310 = vector.broadcast %309 : vector<16x1xf32> to vector<16x20xf32>
    %311 = arith.subf %307, %310 : vector<16x20xf32>
    %312 = math.exp %311 : vector<16x20xf32>
    %cst_123 = arith.constant dense<0.000000e+00> : vector<16xf32>
    %313 = vector.multi_reduction <add>, %312, %cst_123 [1] : vector<16x20xf32> to vector<16xf32>
    %314 = vector.shape_cast %313 : vector<16xf32> to vector<16x1xf32>
    %315 = tpu.reciprocal %314 {approx = true} : vector<16x1xf32> -> vector<16x1xf32>
    %316 = vector.broadcast %315 : vector<16x1xf32> to vector<16x20xf32>
    %317 = arith.mulf %312, %316 : vector<16x20xf32>
    %318 = arith.truncf %317 : vector<16x20xf32> to vector<16x20xbf16>
    %319 = arith.truncf %303 : vector<20x8xf32> to vector<20x8xbf16>
    %cst_124 = arith.constant dense<0.000000e+00> : vector<16x8xf32>
    %320 = tpu.matmul %318, %319, %cst_124 {dimension_numbers = #tpu.dot_dimension_numbers<[1], [0], [0], [1], [0, 0, 1, 1], [], []>} : vector<16x20xbf16>, vector<20x8xbf16>, vector<16x8xf32> -> vector<16x8xf32>
    %321 = arith.truncf %320 : vector<16x8xf32> to vector<16x8xbf16>
    %322 = vector.extract_strided_slice %238 {offsets = [1, 0, 0], sizes = [1, 8, 32], strides = [1, 1, 1]} : vector<4x8x32xbf16> to vector<1x8x32xbf16>
    %323 = vector.shape_cast %322 : vector<1x8x32xbf16> to vector<8x32xbf16>
    %cst_125 = arith.constant dense<0.000000e+00> : vector<16x32xf32>
    %324 = tpu.matmul %321, %323, %cst_125 {dimension_numbers = #tpu.dot_dimension_numbers<[1], [0], [0], [1], [0, 0, 1, 1], [], []>} : vector<16x8xbf16>, vector<8x32xbf16>, vector<16x32xf32> -> vector<16x32xf32>
    %325 = arith.addf %282, %324 : vector<16x32xf32>
    %326 = vector.extract_strided_slice %226 {offsets = [2, 0, 0], sizes = [1, 32, 8], strides = [1, 1, 1]} : vector<4x32x8xbf16> to vector<1x32x8xbf16>
    %327 = vector.shape_cast %326 : vector<1x32x8xbf16> to vector<32x8xbf16>
    %cst_126 = arith.constant dense<0.000000e+00> : vector<16x8xf32>
    %328 = tpu.matmul %224, %327, %cst_126 {dimension_numbers = #tpu.dot_dimension_numbers<[1], [0], [0], [1], [0, 0, 1, 1], [], []>} : vector<16x32xbf16>, vector<32x8xbf16>, vector<16x8xf32> -> vector<16x8xf32>
    %329 = vector.extract_strided_slice %228 {offsets = [2, 0, 0], sizes = [1, 1, 8], strides = [1, 1, 1]} : vector<4x1x8xf32> to vector<1x1x8xf32>
    %330 = vector.shape_cast %329 : vector<1x1x8xf32> to vector<1x8xf32>
    %331 = vector.broadcast %330 : vector<1x8xf32> to vector<16x8xf32>
    %332 = arith.addf %328, %331 : vector<16x8xf32>
    %333 = vector.extract_strided_slice %230 {offsets = [2, 0, 0], sizes = [1, 32, 8], strides = [1, 1, 1]} : vector<4x32x8xbf16> to vector<1x32x8xbf16>
    %334 = vector.shape_cast %333 : vector<1x32x8xbf16> to vector<32x8xbf16>
    %cst_127 = arith.constant dense<0.000000e+00> : vector<20x8xf32>
    %335 = tpu.matmul %4, %334, %cst_127 {dimension_numbers = #tpu.dot_dimension_numbers<[1], [0], [0], [1], [0, 0, 1, 1], [], []>} : vector<20x32xbf16>, vector<32x8xbf16>, vector<20x8xf32> -> vector<20x8xf32>
    %336 = vector.extract_strided_slice %232 {offsets = [2, 0, 0], sizes = [1, 1, 8], strides = [1, 1, 1]} : vector<4x1x8xf32> to vector<1x1x8xf32>
    %337 = vector.shape_cast %336 : vector<1x1x8xf32> to vector<1x8xf32>
    %338 = vector.broadcast %337 : vector<1x8xf32> to vector<20x8xf32>
    %339 = arith.addf %335, %338 : vector<20x8xf32>
    %340 = vector.extract_strided_slice %234 {offsets = [2, 0, 0], sizes = [1, 32, 8], strides = [1, 1, 1]} : vector<4x32x8xbf16> to vector<1x32x8xbf16>
    %341 = vector.shape_cast %340 : vector<1x32x8xbf16> to vector<32x8xbf16>
    %cst_128 = arith.constant dense<0.000000e+00> : vector<20x8xf32>
    %342 = tpu.matmul %4, %341, %cst_128 {dimension_numbers = #tpu.dot_dimension_numbers<[1], [0], [0], [1], [0, 0, 1, 1], [], []>} : vector<20x32xbf16>, vector<32x8xbf16>, vector<20x8xf32> -> vector<20x8xf32>
    %343 = vector.extract_strided_slice %236 {offsets = [2, 0, 0], sizes = [1, 1, 8], strides = [1, 1, 1]} : vector<4x1x8xf32> to vector<1x1x8xf32>
    %344 = vector.shape_cast %343 : vector<1x1x8xf32> to vector<1x8xf32>
    %345 = vector.broadcast %344 : vector<1x8xf32> to vector<20x8xf32>
    %346 = arith.addf %342, %345 : vector<20x8xf32>
    %347 = arith.truncf %332 : vector<16x8xf32> to vector<16x8xbf16>
    %348 = arith.truncf %339 : vector<20x8xf32> to vector<20x8xbf16>
    %cst_129 = arith.constant dense<0.000000e+00> : vector<16x20xf32>
    %349 = tpu.matmul %347, %348, %cst_129 {dimension_numbers = #tpu.dot_dimension_numbers<[1], [1], [0], [0], [0, 0, 1, 0], [], []>} : vector<16x8xbf16>, vector<20x8xbf16>, vector<16x20xf32> -> vector<16x20xf32>
    %350 = arith.addf %349, %2 : vector<16x20xf32>
    %cst_130 = arith.constant dense<0xFF800000> : vector<16xf32>
    %351 = vector.multi_reduction <maximumf>, %350, %cst_130 [1] : vector<16x20xf32> to vector<16xf32>
    %352 = vector.shape_cast %351 : vector<16xf32> to vector<16x1xf32>
    %353 = vector.broadcast %352 : vector<16x1xf32> to vector<16x20xf32>
    %354 = arith.subf %350, %353 : vector<16x20xf32>
    %355 = math.exp %354 : vector<16x20xf32>
    %cst_131 = arith.constant dense<0.000000e+00> : vector<16xf32>
    %356 = vector.multi_reduction <add>, %355, %cst_131 [1] : vector<16x20xf32> to vector<16xf32>
    %357 = vector.shape_cast %356 : vector<16xf32> to vector<16x1xf32>
    %358 = tpu.reciprocal %357 {approx = true} : vector<16x1xf32> -> vector<16x1xf32>
    %359 = vector.broadcast %358 : vector<16x1xf32> to vector<16x20xf32>
    %360 = arith.mulf %355, %359 : vector<16x20xf32>
    %361 = arith.truncf %360 : vector<16x20xf32> to vector<16x20xbf16>
    %362 = arith.truncf %346 : vector<20x8xf32> to vector<20x8xbf16>
    %cst_132 = arith.constant dense<0.000000e+00> : vector<16x8xf32>
    %363 = tpu.matmul %361, %362, %cst_132 {dimension_numbers = #tpu.dot_dimension_numbers<[1], [0], [0], [1], [0, 0, 1, 1], [], []>} : vector<16x20xbf16>, vector<20x8xbf16>, vector<16x8xf32> -> vector<16x8xf32>
    %364 = arith.truncf %363 : vector<16x8xf32> to vector<16x8xbf16>
    %365 = vector.extract_strided_slice %238 {offsets = [2, 0, 0], sizes = [1, 8, 32], strides = [1, 1, 1]} : vector<4x8x32xbf16> to vector<1x8x32xbf16>
    %366 = vector.shape_cast %365 : vector<1x8x32xbf16> to vector<8x32xbf16>
    %cst_133 = arith.constant dense<0.000000e+00> : vector<16x32xf32>
    %367 = tpu.matmul %364, %366, %cst_133 {dimension_numbers = #tpu.dot_dimension_numbers<[1], [0], [0], [1], [0, 0, 1, 1], [], []>} : vector<16x8xbf16>, vector<8x32xbf16>, vector<16x32xf32> -> vector<16x32xf32>
    %368 = arith.addf %325, %367 : vector<16x32xf32>
    %369 = vector.extract_strided_slice %226 {offsets = [3, 0, 0], sizes = [1, 32, 8], strides = [1, 1, 1]} : vector<4x32x8xbf16> to vector<1x32x8xbf16>
    %370 = vector.shape_cast %369 : vector<1x32x8xbf16> to vector<32x8xbf16>
    %cst_134 = arith.constant dense<0.000000e+00> : vector<16x8xf32>
    %371 = tpu.matmul %224, %370, %cst_134 {dimension_numbers = #tpu.dot_dimension_numbers<[1], [0], [0], [1], [0, 0, 1, 1], [], []>} : vector<16x32xbf16>, vector<32x8xbf16>, vector<16x8xf32> -> vector<16x8xf32>
    %372 = vector.extract_strided_slice %228 {offsets = [3, 0, 0], sizes = [1, 1, 8], strides = [1, 1, 1]} : vector<4x1x8xf32> to vector<1x1x8xf32>
    %373 = vector.shape_cast %372 : vector<1x1x8xf32> to vector<1x8xf32>
    %374 = vector.broadcast %373 : vector<1x8xf32> to vector<16x8xf32>
    %375 = arith.addf %371, %374 : vector<16x8xf32>
    %376 = vector.extract_strided_slice %230 {offsets = [3, 0, 0], sizes = [1, 32, 8], strides = [1, 1, 1]} : vector<4x32x8xbf16> to vector<1x32x8xbf16>
    %377 = vector.shape_cast %376 : vector<1x32x8xbf16> to vector<32x8xbf16>
    %cst_135 = arith.constant dense<0.000000e+00> : vector<20x8xf32>
    %378 = tpu.matmul %4, %377, %cst_135 {dimension_numbers = #tpu.dot_dimension_numbers<[1], [0], [0], [1], [0, 0, 1, 1], [], []>} : vector<20x32xbf16>, vector<32x8xbf16>, vector<20x8xf32> -> vector<20x8xf32>
    %379 = vector.extract_strided_slice %232 {offsets = [3, 0, 0], sizes = [1, 1, 8], strides = [1, 1, 1]} : vector<4x1x8xf32> to vector<1x1x8xf32>
    %380 = vector.shape_cast %379 : vector<1x1x8xf32> to vector<1x8xf32>
    %381 = vector.broadcast %380 : vector<1x8xf32> to vector<20x8xf32>
    %382 = arith.addf %378, %381 : vector<20x8xf32>
    %383 = vector.extract_strided_slice %234 {offsets = [3, 0, 0], sizes = [1, 32, 8], strides = [1, 1, 1]} : vector<4x32x8xbf16> to vector<1x32x8xbf16>
    %384 = vector.shape_cast %383 : vector<1x32x8xbf16> to vector<32x8xbf16>
    %cst_136 = arith.constant dense<0.000000e+00> : vector<20x8xf32>
    %385 = tpu.matmul %4, %384, %cst_136 {dimension_numbers = #tpu.dot_dimension_numbers<[1], [0], [0], [1], [0, 0, 1, 1], [], []>} : vector<20x32xbf16>, vector<32x8xbf16>, vector<20x8xf32> -> vector<20x8xf32>
    %386 = vector.extract_strided_slice %236 {offsets = [3, 0, 0], sizes = [1, 1, 8], strides = [1, 1, 1]} : vector<4x1x8xf32> to vector<1x1x8xf32>
    %387 = vector.shape_cast %386 : vector<1x1x8xf32> to vector<1x8xf32>
    %388 = vector.broadcast %387 : vector<1x8xf32> to vector<20x8xf32>
    %389 = arith.addf %385, %388 : vector<20x8xf32>
    %390 = arith.truncf %375 : vector<16x8xf32> to vector<16x8xbf16>
    %391 = arith.truncf %382 : vector<20x8xf32> to vector<20x8xbf16>
    %cst_137 = arith.constant dense<0.000000e+00> : vector<16x20xf32>
    %392 = tpu.matmul %390, %391, %cst_137 {dimension_numbers = #tpu.dot_dimension_numbers<[1], [1], [0], [0], [0, 0, 1, 0], [], []>} : vector<16x8xbf16>, vector<20x8xbf16>, vector<16x20xf32> -> vector<16x20xf32>
    %393 = arith.addf %392, %2 : vector<16x20xf32>
    %cst_138 = arith.constant dense<0xFF800000> : vector<16xf32>
    %394 = vector.multi_reduction <maximumf>, %393, %cst_138 [1] : vector<16x20xf32> to vector<16xf32>
    %395 = vector.shape_cast %394 : vector<16xf32> to vector<16x1xf32>
    %396 = vector.broadcast %395 : vector<16x1xf32> to vector<16x20xf32>
    %397 = arith.subf %393, %396 : vector<16x20xf32>
    %398 = math.exp %397 : vector<16x20xf32>
    %cst_139 = arith.constant dense<0.000000e+00> : vector<16xf32>
    %399 = vector.multi_reduction <add>, %398, %cst_139 [1] : vector<16x20xf32> to vector<16xf32>
    %400 = vector.shape_cast %399 : vector<16xf32> to vector<16x1xf32>
    %401 = tpu.reciprocal %400 {approx = true} : vector<16x1xf32> -> vector<16x1xf32>
    %402 = vector.broadcast %401 : vector<16x1xf32> to vector<16x20xf32>
    %403 = arith.mulf %398, %402 : vector<16x20xf32>
    %404 = arith.truncf %403 : vector<16x20xf32> to vector<16x20xbf16>
    %405 = arith.truncf %389 : vector<20x8xf32> to vector<20x8xbf16>
    %cst_140 = arith.constant dense<0.000000e+00> : vector<16x8xf32>
    %406 = tpu.matmul %404, %405, %cst_140 {dimension_numbers = #tpu.dot_dimension_numbers<[1], [0], [0], [1], [0, 0, 1, 1], [], []>} : vector<16x20xbf16>, vector<20x8xbf16>, vector<16x8xf32> -> vector<16x8xf32>
    %407 = arith.truncf %406 : vector<16x8xf32> to vector<16x8xbf16>
    %408 = vector.extract_strided_slice %238 {offsets = [3, 0, 0], sizes = [1, 8, 32], strides = [1, 1, 1]} : vector<4x8x32xbf16> to vector<1x8x32xbf16>
    %409 = vector.shape_cast %408 : vector<1x8x32xbf16> to vector<8x32xbf16>
    %cst_141 = arith.constant dense<0.000000e+00> : vector<16x32xf32>
    %410 = tpu.matmul %407, %409, %cst_141 {dimension_numbers = #tpu.dot_dimension_numbers<[1], [0], [0], [1], [0, 0, 1, 1], [], []>} : vector<16x8xbf16>, vector<8x32xbf16>, vector<16x32xf32> -> vector<16x32xf32>
    %411 = arith.addf %368, %410 : vector<16x32xf32>
    %c0_142 = arith.constant 0 : index
    %c0_143 = arith.constant 0 : index
    %c0_144 = arith.constant 0 : index
    %412 = vector.load %arg19[%c0_142, %c0_143, %c0_144] : memref<2x1x32xf32, #tpu.memory_space<vmem>>, vector<1x1x32xf32>
    %413 = vector.shape_cast %412 : vector<1x1x32xf32> to vector<1x32xf32>
    %414 = vector.broadcast %413 : vector<1x32xf32> to vector<16x32xf32>
    %415 = arith.addf %411, %414 : vector<16x32xf32>
    %416 = arith.addf %415, %223 : vector<16x32xf32>
    %c0_145 = arith.constant 0 : index
    %c0_146 = arith.constant 0 : index
    %c0_147 = arith.constant 0 : index
    %417 = vector.load %arg26[%c0_145, %c0_146, %c0_147] : memref<2x1x32xf32, #tpu.memory_space<vmem>>, vector<1x1x32xf32>
    %418 = vector.shape_cast %417 : vector<1x1x32xf32> to vector<1x32xf32>
    %c0_148 = arith.constant 0 : index
    %c0_149 = arith.constant 0 : index
    %c0_150 = arith.constant 0 : index
    %419 = vector.load %arg27[%c0_148, %c0_149, %c0_150] : memref<2x1x32xf32, #tpu.memory_space<vmem>>, vector<1x1x32xf32>
    %420 = vector.shape_cast %419 : vector<1x1x32xf32> to vector<1x32xf32>
    %cst_151 = arith.constant dense<0.000000e+00> : vector<16xf32>
    %421 = vector.multi_reduction <add>, %416, %cst_151 [1] : vector<16x32xf32> to vector<16xf32>
    %422 = vector.shape_cast %421 : vector<16xf32> to vector<16x1xf32>
    %cst_152 = arith.constant 3.200000e+01 : f32
    %423 = vector.broadcast %cst_152 : f32 to vector<16x1xf32>
    %424 = arith.divf %422, %423 : vector<16x1xf32>
    %425 = vector.broadcast %424 : vector<16x1xf32> to vector<16x32xf32>
    %426 = arith.subf %416, %425 : vector<16x32xf32>
    %427 = arith.mulf %426, %426 : vector<16x32xf32>
    %cst_153 = arith.constant dense<0.000000e+00> : vector<16xf32>
    %428 = vector.multi_reduction <add>, %427, %cst_153 [1] : vector<16x32xf32> to vector<16xf32>
    %429 = vector.shape_cast %428 : vector<16xf32> to vector<16x1xf32>
    %cst_154 = arith.constant 3.200000e+01 : f32
    %430 = vector.broadcast %cst_154 : f32 to vector<16x1xf32>
    %431 = arith.divf %429, %430 : vector<16x1xf32>
    %432 = vector.broadcast %424 : vector<16x1xf32> to vector<16x32xf32>
    %433 = arith.subf %416, %432 : vector<16x32xf32>
    %cst_155 = arith.constant 9.99999974E-6 : f32
    %434 = vector.broadcast %cst_155 : f32 to vector<16x1xf32>
    %435 = arith.addf %431, %434 : vector<16x1xf32>
    %436 = math.rsqrt %435 : vector<16x1xf32>
    %437 = vector.broadcast %436 : vector<16x1xf32> to vector<16x32xf32>
    %438 = arith.mulf %433, %437 : vector<16x32xf32>
    %439 = vector.broadcast %418 : vector<1x32xf32> to vector<16x32xf32>
    %440 = arith.mulf %438, %439 : vector<16x32xf32>
    %441 = vector.broadcast %420 : vector<1x32xf32> to vector<16x32xf32>
    %442 = arith.addf %440, %441 : vector<16x32xf32>
    %443 = arith.truncf %442 : vector<16x32xf32> to vector<16x32xbf16>
    %c0_156 = arith.constant 0 : index
    %c0_157 = arith.constant 0 : index
    %c0_158 = arith.constant 0 : index
    %444 = vector.load %arg20[%c0_156, %c0_157, %c0_158] : memref<2x32x64xbf16, #tpu.memory_space<vmem>>, vector<1x32x64xbf16>
    %445 = vector.shape_cast %444 : vector<1x32x64xbf16> to vector<32x64xbf16>
    %cst_159 = arith.constant dense<0.000000e+00> : vector<16x64xf32>
    %446 = tpu.matmul %443, %445, %cst_159 {dimension_numbers = #tpu.dot_dimension_numbers<[1], [0], [0], [1], [0, 0, 1, 1], [], []>} : vector<16x32xbf16>, vector<32x64xbf16>, vector<16x64xf32> -> vector<16x64xf32>
    %c0_160 = arith.constant 0 : index
    %c0_161 = arith.constant 0 : index
    %c0_162 = arith.constant 0 : index
    %447 = vector.load %arg21[%c0_160, %c0_161, %c0_162] : memref<2x1x64xf32, #tpu.memory_space<vmem>>, vector<1x1x64xf32>
    %448 = vector.shape_cast %447 : vector<1x1x64xf32> to vector<1x64xf32>
    %449 = vector.broadcast %448 : vector<1x64xf32> to vector<16x64xf32>
    %450 = arith.addf %446, %449 : vector<16x64xf32>
    %cst_163 = arith.constant 0.000000e+00 : f32
    %451 = vector.broadcast %cst_163 : f32 to vector<16x64xf32>
    %452 = arith.maximumf %450, %451 : vector<16x64xf32>
    %453 = arith.truncf %452 : vector<16x64xf32> to vector<16x64xbf16>
    %c0_164 = arith.constant 0 : index
    %c0_165 = arith.constant 0 : index
    %c0_166 = arith.constant 0 : index
    %454 = vector.load %arg22[%c0_164, %c0_165, %c0_166] : memref<2x64x32xbf16, #tpu.memory_space<vmem>>, vector<1x64x32xbf16>
    %455 = vector.shape_cast %454 : vector<1x64x32xbf16> to vector<64x32xbf16>
    %cst_167 = arith.constant dense<0.000000e+00> : vector<16x32xf32>
    %456 = tpu.matmul %453, %455, %cst_167 {dimension_numbers = #tpu.dot_dimension_numbers<[1], [0], [0], [1], [0, 0, 1, 1], [], []>} : vector<16x64xbf16>, vector<64x32xbf16>, vector<16x32xf32> -> vector<16x32xf32>
    %c0_168 = arith.constant 0 : index
    %c0_169 = arith.constant 0 : index
    %c0_170 = arith.constant 0 : index
    %457 = vector.load %arg23[%c0_168, %c0_169, %c0_170] : memref<2x1x32xf32, #tpu.memory_space<vmem>>, vector<1x1x32xf32>
    %458 = vector.shape_cast %457 : vector<1x1x32xf32> to vector<1x32xf32>
    %459 = vector.broadcast %458 : vector<1x32xf32> to vector<16x32xf32>
    %460 = arith.addf %456, %459 : vector<16x32xf32>
    %461 = arith.addf %460, %442 : vector<16x32xf32>
    %c0_171 = arith.constant 0 : index
    %c0_172 = arith.constant 0 : index
    %c0_173 = arith.constant 0 : index
    %462 = vector.load %arg28[%c0_171, %c0_172, %c0_173] : memref<2x1x32xf32, #tpu.memory_space<vmem>>, vector<1x1x32xf32>
    %463 = vector.shape_cast %462 : vector<1x1x32xf32> to vector<1x32xf32>
    %c0_174 = arith.constant 0 : index
    %c0_175 = arith.constant 0 : index
    %c0_176 = arith.constant 0 : index
    %464 = vector.load %arg29[%c0_174, %c0_175, %c0_176] : memref<2x1x32xf32, #tpu.memory_space<vmem>>, vector<1x1x32xf32>
    %465 = vector.shape_cast %464 : vector<1x1x32xf32> to vector<1x32xf32>
    %cst_177 = arith.constant dense<0.000000e+00> : vector<16xf32>
    %466 = vector.multi_reduction <add>, %461, %cst_177 [1] : vector<16x32xf32> to vector<16xf32>
    %467 = vector.shape_cast %466 : vector<16xf32> to vector<16x1xf32>
    %cst_178 = arith.constant 3.200000e+01 : f32
    %468 = vector.broadcast %cst_178 : f32 to vector<16x1xf32>
    %469 = arith.divf %467, %468 : vector<16x1xf32>
    %470 = vector.broadcast %469 : vector<16x1xf32> to vector<16x32xf32>
    %471 = arith.subf %461, %470 : vector<16x32xf32>
    %472 = arith.mulf %471, %471 : vector<16x32xf32>
    %cst_179 = arith.constant dense<0.000000e+00> : vector<16xf32>
    %473 = vector.multi_reduction <add>, %472, %cst_179 [1] : vector<16x32xf32> to vector<16xf32>
    %474 = vector.shape_cast %473 : vector<16xf32> to vector<16x1xf32>
    %cst_180 = arith.constant 3.200000e+01 : f32
    %475 = vector.broadcast %cst_180 : f32 to vector<16x1xf32>
    %476 = arith.divf %474, %475 : vector<16x1xf32>
    %477 = vector.broadcast %469 : vector<16x1xf32> to vector<16x32xf32>
    %478 = arith.subf %461, %477 : vector<16x32xf32>
    %cst_181 = arith.constant 9.99999974E-6 : f32
    %479 = vector.broadcast %cst_181 : f32 to vector<16x1xf32>
    %480 = arith.addf %476, %479 : vector<16x1xf32>
    %481 = math.rsqrt %480 : vector<16x1xf32>
    %482 = vector.broadcast %481 : vector<16x1xf32> to vector<16x32xf32>
    %483 = arith.mulf %478, %482 : vector<16x32xf32>
    %484 = vector.broadcast %463 : vector<1x32xf32> to vector<16x32xf32>
    %485 = arith.mulf %483, %484 : vector<16x32xf32>
    %486 = vector.broadcast %465 : vector<1x32xf32> to vector<16x32xf32>
    %487 = arith.addf %485, %486 : vector<16x32xf32>
    %488 = arith.truncf %487 : vector<16x32xf32> to vector<16x32xbf16>
    %c1 = arith.constant 1 : index
    %c0_182 = arith.constant 0 : index
    %c0_183 = arith.constant 0 : index
    %c0_184 = arith.constant 0 : index
    %489 = vector.load %arg4[%c1, %c0_182, %c0_183, %c0_184] : memref<2x4x32x8xbf16, #tpu.memory_space<vmem>>, vector<1x4x32x8xbf16>
    %490 = vector.shape_cast %489 : vector<1x4x32x8xbf16> to vector<4x32x8xbf16>
    %c1_185 = arith.constant 1 : index
    %c0_186 = arith.constant 0 : index
    %c0_187 = arith.constant 0 : index
    %c0_188 = arith.constant 0 : index
    %491 = vector.load %arg5[%c1_185, %c0_186, %c0_187, %c0_188] : memref<2x4x1x8xf32, #tpu.memory_space<vmem>>, vector<1x4x1x8xf32>
    %492 = vector.shape_cast %491 : vector<1x4x1x8xf32> to vector<4x1x8xf32>
    %c1_189 = arith.constant 1 : index
    %c0_190 = arith.constant 0 : index
    %c0_191 = arith.constant 0 : index
    %c0_192 = arith.constant 0 : index
    %493 = vector.load %arg6[%c1_189, %c0_190, %c0_191, %c0_192] : memref<2x4x32x8xbf16, #tpu.memory_space<vmem>>, vector<1x4x32x8xbf16>
    %494 = vector.shape_cast %493 : vector<1x4x32x8xbf16> to vector<4x32x8xbf16>
    %c1_193 = arith.constant 1 : index
    %c0_194 = arith.constant 0 : index
    %c0_195 = arith.constant 0 : index
    %c0_196 = arith.constant 0 : index
    %495 = vector.load %arg7[%c1_193, %c0_194, %c0_195, %c0_196] : memref<2x4x1x8xf32, #tpu.memory_space<vmem>>, vector<1x4x1x8xf32>
    %496 = vector.shape_cast %495 : vector<1x4x1x8xf32> to vector<4x1x8xf32>
    %c1_197 = arith.constant 1 : index
    %c0_198 = arith.constant 0 : index
    %c0_199 = arith.constant 0 : index
    %c0_200 = arith.constant 0 : index
    %497 = vector.load %arg8[%c1_197, %c0_198, %c0_199, %c0_200] : memref<2x4x32x8xbf16, #tpu.memory_space<vmem>>, vector<1x4x32x8xbf16>
    %498 = vector.shape_cast %497 : vector<1x4x32x8xbf16> to vector<4x32x8xbf16>
    %c1_201 = arith.constant 1 : index
    %c0_202 = arith.constant 0 : index
    %c0_203 = arith.constant 0 : index
    %c0_204 = arith.constant 0 : index
    %499 = vector.load %arg9[%c1_201, %c0_202, %c0_203, %c0_204] : memref<2x4x1x8xf32, #tpu.memory_space<vmem>>, vector<1x4x1x8xf32>
    %500 = vector.shape_cast %499 : vector<1x4x1x8xf32> to vector<4x1x8xf32>
    %c1_205 = arith.constant 1 : index
    %c0_206 = arith.constant 0 : index
    %c0_207 = arith.constant 0 : index
    %c0_208 = arith.constant 0 : index
    %501 = vector.load %arg10[%c1_205, %c0_206, %c0_207, %c0_208] : memref<2x4x8x32xbf16, #tpu.memory_space<vmem>>, vector<1x4x8x32xbf16>
    %502 = vector.shape_cast %501 : vector<1x4x8x32xbf16> to vector<4x8x32xbf16>
    %cst_209 = arith.constant 0.000000e+00 : f32
    %503 = vector.broadcast %cst_209 : f32 to vector<16x32xf32>
    %504 = vector.extract_strided_slice %490 {offsets = [0, 0, 0], sizes = [1, 32, 8], strides = [1, 1, 1]} : vector<4x32x8xbf16> to vector<1x32x8xbf16>
    %505 = vector.shape_cast %504 : vector<1x32x8xbf16> to vector<32x8xbf16>
    %cst_210 = arith.constant dense<0.000000e+00> : vector<16x8xf32>
    %506 = tpu.matmul %488, %505, %cst_210 {dimension_numbers = #tpu.dot_dimension_numbers<[1], [0], [0], [1], [0, 0, 1, 1], [], []>} : vector<16x32xbf16>, vector<32x8xbf16>, vector<16x8xf32> -> vector<16x8xf32>
    %507 = vector.extract_strided_slice %492 {offsets = [0, 0, 0], sizes = [1, 1, 8], strides = [1, 1, 1]} : vector<4x1x8xf32> to vector<1x1x8xf32>
    %508 = vector.shape_cast %507 : vector<1x1x8xf32> to vector<1x8xf32>
    %509 = vector.broadcast %508 : vector<1x8xf32> to vector<16x8xf32>
    %510 = arith.addf %506, %509 : vector<16x8xf32>
    %511 = vector.extract_strided_slice %494 {offsets = [0, 0, 0], sizes = [1, 32, 8], strides = [1, 1, 1]} : vector<4x32x8xbf16> to vector<1x32x8xbf16>
    %512 = vector.shape_cast %511 : vector<1x32x8xbf16> to vector<32x8xbf16>
    %cst_211 = arith.constant dense<0.000000e+00> : vector<16x8xf32>
    %513 = tpu.matmul %488, %512, %cst_211 {dimension_numbers = #tpu.dot_dimension_numbers<[1], [0], [0], [1], [0, 0, 1, 1], [], []>} : vector<16x32xbf16>, vector<32x8xbf16>, vector<16x8xf32> -> vector<16x8xf32>
    %514 = vector.extract_strided_slice %496 {offsets = [0, 0, 0], sizes = [1, 1, 8], strides = [1, 1, 1]} : vector<4x1x8xf32> to vector<1x1x8xf32>
    %515 = vector.shape_cast %514 : vector<1x1x8xf32> to vector<1x8xf32>
    %516 = vector.broadcast %515 : vector<1x8xf32> to vector<16x8xf32>
    %517 = arith.addf %513, %516 : vector<16x8xf32>
    %518 = vector.extract_strided_slice %498 {offsets = [0, 0, 0], sizes = [1, 32, 8], strides = [1, 1, 1]} : vector<4x32x8xbf16> to vector<1x32x8xbf16>
    %519 = vector.shape_cast %518 : vector<1x32x8xbf16> to vector<32x8xbf16>
    %cst_212 = arith.constant dense<0.000000e+00> : vector<16x8xf32>
    %520 = tpu.matmul %488, %519, %cst_212 {dimension_numbers = #tpu.dot_dimension_numbers<[1], [0], [0], [1], [0, 0, 1, 1], [], []>} : vector<16x32xbf16>, vector<32x8xbf16>, vector<16x8xf32> -> vector<16x8xf32>
    %521 = vector.extract_strided_slice %500 {offsets = [0, 0, 0], sizes = [1, 1, 8], strides = [1, 1, 1]} : vector<4x1x8xf32> to vector<1x1x8xf32>
    %522 = vector.shape_cast %521 : vector<1x1x8xf32> to vector<1x8xf32>
    %523 = vector.broadcast %522 : vector<1x8xf32> to vector<16x8xf32>
    %524 = arith.addf %520, %523 : vector<16x8xf32>
    %525 = arith.truncf %510 : vector<16x8xf32> to vector<16x8xbf16>
    %526 = arith.truncf %517 : vector<16x8xf32> to vector<16x8xbf16>
    %cst_213 = arith.constant dense<0.000000e+00> : vector<16x16xf32>
    %527 = tpu.matmul %525, %526, %cst_213 {dimension_numbers = #tpu.dot_dimension_numbers<[1], [1], [0], [0], [0, 0, 1, 0], [], []>} : vector<16x8xbf16>, vector<16x8xbf16>, vector<16x16xf32> -> vector<16x16xf32>
    %528 = arith.addf %527, %1 : vector<16x16xf32>
    %cst_214 = arith.constant dense<0xFF800000> : vector<16xf32>
    %529 = vector.multi_reduction <maximumf>, %528, %cst_214 [1] : vector<16x16xf32> to vector<16xf32>
    %530 = vector.shape_cast %529 : vector<16xf32> to vector<16x1xf32>
    %531 = vector.broadcast %530 : vector<16x1xf32> to vector<16x16xf32>
    %532 = arith.subf %528, %531 : vector<16x16xf32>
    %533 = math.exp %532 : vector<16x16xf32>
    %cst_215 = arith.constant dense<0.000000e+00> : vector<16xf32>
    %534 = vector.multi_reduction <add>, %533, %cst_215 [1] : vector<16x16xf32> to vector<16xf32>
    %535 = vector.shape_cast %534 : vector<16xf32> to vector<16x1xf32>
    %536 = tpu.reciprocal %535 {approx = true} : vector<16x1xf32> -> vector<16x1xf32>
    %537 = vector.broadcast %536 : vector<16x1xf32> to vector<16x16xf32>
    %538 = arith.mulf %533, %537 : vector<16x16xf32>
    %539 = arith.truncf %538 : vector<16x16xf32> to vector<16x16xbf16>
    %540 = arith.truncf %524 : vector<16x8xf32> to vector<16x8xbf16>
    %cst_216 = arith.constant dense<0.000000e+00> : vector<16x8xf32>
    %541 = tpu.matmul %539, %540, %cst_216 {dimension_numbers = #tpu.dot_dimension_numbers<[1], [0], [0], [1], [0, 0, 1, 1], [], []>} : vector<16x16xbf16>, vector<16x8xbf16>, vector<16x8xf32> -> vector<16x8xf32>
    %542 = arith.truncf %541 : vector<16x8xf32> to vector<16x8xbf16>
    %543 = vector.extract_strided_slice %502 {offsets = [0, 0, 0], sizes = [1, 8, 32], strides = [1, 1, 1]} : vector<4x8x32xbf16> to vector<1x8x32xbf16>
    %544 = vector.shape_cast %543 : vector<1x8x32xbf16> to vector<8x32xbf16>
    %cst_217 = arith.constant dense<0.000000e+00> : vector<16x32xf32>
    %545 = tpu.matmul %542, %544, %cst_217 {dimension_numbers = #tpu.dot_dimension_numbers<[1], [0], [0], [1], [0, 0, 1, 1], [], []>} : vector<16x8xbf16>, vector<8x32xbf16>, vector<16x32xf32> -> vector<16x32xf32>
    %546 = arith.addf %503, %545 : vector<16x32xf32>
    %547 = vector.extract_strided_slice %490 {offsets = [1, 0, 0], sizes = [1, 32, 8], strides = [1, 1, 1]} : vector<4x32x8xbf16> to vector<1x32x8xbf16>
    %548 = vector.shape_cast %547 : vector<1x32x8xbf16> to vector<32x8xbf16>
    %cst_218 = arith.constant dense<0.000000e+00> : vector<16x8xf32>
    %549 = tpu.matmul %488, %548, %cst_218 {dimension_numbers = #tpu.dot_dimension_numbers<[1], [0], [0], [1], [0, 0, 1, 1], [], []>} : vector<16x32xbf16>, vector<32x8xbf16>, vector<16x8xf32> -> vector<16x8xf32>
    %550 = vector.extract_strided_slice %492 {offsets = [1, 0, 0], sizes = [1, 1, 8], strides = [1, 1, 1]} : vector<4x1x8xf32> to vector<1x1x8xf32>
    %551 = vector.shape_cast %550 : vector<1x1x8xf32> to vector<1x8xf32>
    %552 = vector.broadcast %551 : vector<1x8xf32> to vector<16x8xf32>
    %553 = arith.addf %549, %552 : vector<16x8xf32>
    %554 = vector.extract_strided_slice %494 {offsets = [1, 0, 0], sizes = [1, 32, 8], strides = [1, 1, 1]} : vector<4x32x8xbf16> to vector<1x32x8xbf16>
    %555 = vector.shape_cast %554 : vector<1x32x8xbf16> to vector<32x8xbf16>
    %cst_219 = arith.constant dense<0.000000e+00> : vector<16x8xf32>
    %556 = tpu.matmul %488, %555, %cst_219 {dimension_numbers = #tpu.dot_dimension_numbers<[1], [0], [0], [1], [0, 0, 1, 1], [], []>} : vector<16x32xbf16>, vector<32x8xbf16>, vector<16x8xf32> -> vector<16x8xf32>
    %557 = vector.extract_strided_slice %496 {offsets = [1, 0, 0], sizes = [1, 1, 8], strides = [1, 1, 1]} : vector<4x1x8xf32> to vector<1x1x8xf32>
    %558 = vector.shape_cast %557 : vector<1x1x8xf32> to vector<1x8xf32>
    %559 = vector.broadcast %558 : vector<1x8xf32> to vector<16x8xf32>
    %560 = arith.addf %556, %559 : vector<16x8xf32>
    %561 = vector.extract_strided_slice %498 {offsets = [1, 0, 0], sizes = [1, 32, 8], strides = [1, 1, 1]} : vector<4x32x8xbf16> to vector<1x32x8xbf16>
    %562 = vector.shape_cast %561 : vector<1x32x8xbf16> to vector<32x8xbf16>
    %cst_220 = arith.constant dense<0.000000e+00> : vector<16x8xf32>
    %563 = tpu.matmul %488, %562, %cst_220 {dimension_numbers = #tpu.dot_dimension_numbers<[1], [0], [0], [1], [0, 0, 1, 1], [], []>} : vector<16x32xbf16>, vector<32x8xbf16>, vector<16x8xf32> -> vector<16x8xf32>
    %564 = vector.extract_strided_slice %500 {offsets = [1, 0, 0], sizes = [1, 1, 8], strides = [1, 1, 1]} : vector<4x1x8xf32> to vector<1x1x8xf32>
    %565 = vector.shape_cast %564 : vector<1x1x8xf32> to vector<1x8xf32>
    %566 = vector.broadcast %565 : vector<1x8xf32> to vector<16x8xf32>
    %567 = arith.addf %563, %566 : vector<16x8xf32>
    %568 = arith.truncf %553 : vector<16x8xf32> to vector<16x8xbf16>
    %569 = arith.truncf %560 : vector<16x8xf32> to vector<16x8xbf16>
    %cst_221 = arith.constant dense<0.000000e+00> : vector<16x16xf32>
    %570 = tpu.matmul %568, %569, %cst_221 {dimension_numbers = #tpu.dot_dimension_numbers<[1], [1], [0], [0], [0, 0, 1, 0], [], []>} : vector<16x8xbf16>, vector<16x8xbf16>, vector<16x16xf32> -> vector<16x16xf32>
    %571 = arith.addf %570, %1 : vector<16x16xf32>
    %cst_222 = arith.constant dense<0xFF800000> : vector<16xf32>
    %572 = vector.multi_reduction <maximumf>, %571, %cst_222 [1] : vector<16x16xf32> to vector<16xf32>
    %573 = vector.shape_cast %572 : vector<16xf32> to vector<16x1xf32>
    %574 = vector.broadcast %573 : vector<16x1xf32> to vector<16x16xf32>
    %575 = arith.subf %571, %574 : vector<16x16xf32>
    %576 = math.exp %575 : vector<16x16xf32>
    %cst_223 = arith.constant dense<0.000000e+00> : vector<16xf32>
    %577 = vector.multi_reduction <add>, %576, %cst_223 [1] : vector<16x16xf32> to vector<16xf32>
    %578 = vector.shape_cast %577 : vector<16xf32> to vector<16x1xf32>
    %579 = tpu.reciprocal %578 {approx = true} : vector<16x1xf32> -> vector<16x1xf32>
    %580 = vector.broadcast %579 : vector<16x1xf32> to vector<16x16xf32>
    %581 = arith.mulf %576, %580 : vector<16x16xf32>
    %582 = arith.truncf %581 : vector<16x16xf32> to vector<16x16xbf16>
    %583 = arith.truncf %567 : vector<16x8xf32> to vector<16x8xbf16>
    %cst_224 = arith.constant dense<0.000000e+00> : vector<16x8xf32>
    %584 = tpu.matmul %582, %583, %cst_224 {dimension_numbers = #tpu.dot_dimension_numbers<[1], [0], [0], [1], [0, 0, 1, 1], [], []>} : vector<16x16xbf16>, vector<16x8xbf16>, vector<16x8xf32> -> vector<16x8xf32>
    %585 = arith.truncf %584 : vector<16x8xf32> to vector<16x8xbf16>
    %586 = vector.extract_strided_slice %502 {offsets = [1, 0, 0], sizes = [1, 8, 32], strides = [1, 1, 1]} : vector<4x8x32xbf16> to vector<1x8x32xbf16>
    %587 = vector.shape_cast %586 : vector<1x8x32xbf16> to vector<8x32xbf16>
    %cst_225 = arith.constant dense<0.000000e+00> : vector<16x32xf32>
    %588 = tpu.matmul %585, %587, %cst_225 {dimension_numbers = #tpu.dot_dimension_numbers<[1], [0], [0], [1], [0, 0, 1, 1], [], []>} : vector<16x8xbf16>, vector<8x32xbf16>, vector<16x32xf32> -> vector<16x32xf32>
    %589 = arith.addf %546, %588 : vector<16x32xf32>
    %590 = vector.extract_strided_slice %490 {offsets = [2, 0, 0], sizes = [1, 32, 8], strides = [1, 1, 1]} : vector<4x32x8xbf16> to vector<1x32x8xbf16>
    %591 = vector.shape_cast %590 : vector<1x32x8xbf16> to vector<32x8xbf16>
    %cst_226 = arith.constant dense<0.000000e+00> : vector<16x8xf32>
    %592 = tpu.matmul %488, %591, %cst_226 {dimension_numbers = #tpu.dot_dimension_numbers<[1], [0], [0], [1], [0, 0, 1, 1], [], []>} : vector<16x32xbf16>, vector<32x8xbf16>, vector<16x8xf32> -> vector<16x8xf32>
    %593 = vector.extract_strided_slice %492 {offsets = [2, 0, 0], sizes = [1, 1, 8], strides = [1, 1, 1]} : vector<4x1x8xf32> to vector<1x1x8xf32>
    %594 = vector.shape_cast %593 : vector<1x1x8xf32> to vector<1x8xf32>
    %595 = vector.broadcast %594 : vector<1x8xf32> to vector<16x8xf32>
    %596 = arith.addf %592, %595 : vector<16x8xf32>
    %597 = vector.extract_strided_slice %494 {offsets = [2, 0, 0], sizes = [1, 32, 8], strides = [1, 1, 1]} : vector<4x32x8xbf16> to vector<1x32x8xbf16>
    %598 = vector.shape_cast %597 : vector<1x32x8xbf16> to vector<32x8xbf16>
    %cst_227 = arith.constant dense<0.000000e+00> : vector<16x8xf32>
    %599 = tpu.matmul %488, %598, %cst_227 {dimension_numbers = #tpu.dot_dimension_numbers<[1], [0], [0], [1], [0, 0, 1, 1], [], []>} : vector<16x32xbf16>, vector<32x8xbf16>, vector<16x8xf32> -> vector<16x8xf32>
    %600 = vector.extract_strided_slice %496 {offsets = [2, 0, 0], sizes = [1, 1, 8], strides = [1, 1, 1]} : vector<4x1x8xf32> to vector<1x1x8xf32>
    %601 = vector.shape_cast %600 : vector<1x1x8xf32> to vector<1x8xf32>
    %602 = vector.broadcast %601 : vector<1x8xf32> to vector<16x8xf32>
    %603 = arith.addf %599, %602 : vector<16x8xf32>
    %604 = vector.extract_strided_slice %498 {offsets = [2, 0, 0], sizes = [1, 32, 8], strides = [1, 1, 1]} : vector<4x32x8xbf16> to vector<1x32x8xbf16>
    %605 = vector.shape_cast %604 : vector<1x32x8xbf16> to vector<32x8xbf16>
    %cst_228 = arith.constant dense<0.000000e+00> : vector<16x8xf32>
    %606 = tpu.matmul %488, %605, %cst_228 {dimension_numbers = #tpu.dot_dimension_numbers<[1], [0], [0], [1], [0, 0, 1, 1], [], []>} : vector<16x32xbf16>, vector<32x8xbf16>, vector<16x8xf32> -> vector<16x8xf32>
    %607 = vector.extract_strided_slice %500 {offsets = [2, 0, 0], sizes = [1, 1, 8], strides = [1, 1, 1]} : vector<4x1x8xf32> to vector<1x1x8xf32>
    %608 = vector.shape_cast %607 : vector<1x1x8xf32> to vector<1x8xf32>
    %609 = vector.broadcast %608 : vector<1x8xf32> to vector<16x8xf32>
    %610 = arith.addf %606, %609 : vector<16x8xf32>
    %611 = arith.truncf %596 : vector<16x8xf32> to vector<16x8xbf16>
    %612 = arith.truncf %603 : vector<16x8xf32> to vector<16x8xbf16>
    %cst_229 = arith.constant dense<0.000000e+00> : vector<16x16xf32>
    %613 = tpu.matmul %611, %612, %cst_229 {dimension_numbers = #tpu.dot_dimension_numbers<[1], [1], [0], [0], [0, 0, 1, 0], [], []>} : vector<16x8xbf16>, vector<16x8xbf16>, vector<16x16xf32> -> vector<16x16xf32>
    %614 = arith.addf %613, %1 : vector<16x16xf32>
    %cst_230 = arith.constant dense<0xFF800000> : vector<16xf32>
    %615 = vector.multi_reduction <maximumf>, %614, %cst_230 [1] : vector<16x16xf32> to vector<16xf32>
    %616 = vector.shape_cast %615 : vector<16xf32> to vector<16x1xf32>
    %617 = vector.broadcast %616 : vector<16x1xf32> to vector<16x16xf32>
    %618 = arith.subf %614, %617 : vector<16x16xf32>
    %619 = math.exp %618 : vector<16x16xf32>
    %cst_231 = arith.constant dense<0.000000e+00> : vector<16xf32>
    %620 = vector.multi_reduction <add>, %619, %cst_231 [1] : vector<16x16xf32> to vector<16xf32>
    %621 = vector.shape_cast %620 : vector<16xf32> to vector<16x1xf32>
    %622 = tpu.reciprocal %621 {approx = true} : vector<16x1xf32> -> vector<16x1xf32>
    %623 = vector.broadcast %622 : vector<16x1xf32> to vector<16x16xf32>
    %624 = arith.mulf %619, %623 : vector<16x16xf32>
    %625 = arith.truncf %624 : vector<16x16xf32> to vector<16x16xbf16>
    %626 = arith.truncf %610 : vector<16x8xf32> to vector<16x8xbf16>
    %cst_232 = arith.constant dense<0.000000e+00> : vector<16x8xf32>
    %627 = tpu.matmul %625, %626, %cst_232 {dimension_numbers = #tpu.dot_dimension_numbers<[1], [0], [0], [1], [0, 0, 1, 1], [], []>} : vector<16x16xbf16>, vector<16x8xbf16>, vector<16x8xf32> -> vector<16x8xf32>
    %628 = arith.truncf %627 : vector<16x8xf32> to vector<16x8xbf16>
    %629 = vector.extract_strided_slice %502 {offsets = [2, 0, 0], sizes = [1, 8, 32], strides = [1, 1, 1]} : vector<4x8x32xbf16> to vector<1x8x32xbf16>
    %630 = vector.shape_cast %629 : vector<1x8x32xbf16> to vector<8x32xbf16>
    %cst_233 = arith.constant dense<0.000000e+00> : vector<16x32xf32>
    %631 = tpu.matmul %628, %630, %cst_233 {dimension_numbers = #tpu.dot_dimension_numbers<[1], [0], [0], [1], [0, 0, 1, 1], [], []>} : vector<16x8xbf16>, vector<8x32xbf16>, vector<16x32xf32> -> vector<16x32xf32>
    %632 = arith.addf %589, %631 : vector<16x32xf32>
    %633 = vector.extract_strided_slice %490 {offsets = [3, 0, 0], sizes = [1, 32, 8], strides = [1, 1, 1]} : vector<4x32x8xbf16> to vector<1x32x8xbf16>
    %634 = vector.shape_cast %633 : vector<1x32x8xbf16> to vector<32x8xbf16>
    %cst_234 = arith.constant dense<0.000000e+00> : vector<16x8xf32>
    %635 = tpu.matmul %488, %634, %cst_234 {dimension_numbers = #tpu.dot_dimension_numbers<[1], [0], [0], [1], [0, 0, 1, 1], [], []>} : vector<16x32xbf16>, vector<32x8xbf16>, vector<16x8xf32> -> vector<16x8xf32>
    %636 = vector.extract_strided_slice %492 {offsets = [3, 0, 0], sizes = [1, 1, 8], strides = [1, 1, 1]} : vector<4x1x8xf32> to vector<1x1x8xf32>
    %637 = vector.shape_cast %636 : vector<1x1x8xf32> to vector<1x8xf32>
    %638 = vector.broadcast %637 : vector<1x8xf32> to vector<16x8xf32>
    %639 = arith.addf %635, %638 : vector<16x8xf32>
    %640 = vector.extract_strided_slice %494 {offsets = [3, 0, 0], sizes = [1, 32, 8], strides = [1, 1, 1]} : vector<4x32x8xbf16> to vector<1x32x8xbf16>
    %641 = vector.shape_cast %640 : vector<1x32x8xbf16> to vector<32x8xbf16>
    %cst_235 = arith.constant dense<0.000000e+00> : vector<16x8xf32>
    %642 = tpu.matmul %488, %641, %cst_235 {dimension_numbers = #tpu.dot_dimension_numbers<[1], [0], [0], [1], [0, 0, 1, 1], [], []>} : vector<16x32xbf16>, vector<32x8xbf16>, vector<16x8xf32> -> vector<16x8xf32>
    %643 = vector.extract_strided_slice %496 {offsets = [3, 0, 0], sizes = [1, 1, 8], strides = [1, 1, 1]} : vector<4x1x8xf32> to vector<1x1x8xf32>
    %644 = vector.shape_cast %643 : vector<1x1x8xf32> to vector<1x8xf32>
    %645 = vector.broadcast %644 : vector<1x8xf32> to vector<16x8xf32>
    %646 = arith.addf %642, %645 : vector<16x8xf32>
    %647 = vector.extract_strided_slice %498 {offsets = [3, 0, 0], sizes = [1, 32, 8], strides = [1, 1, 1]} : vector<4x32x8xbf16> to vector<1x32x8xbf16>
    %648 = vector.shape_cast %647 : vector<1x32x8xbf16> to vector<32x8xbf16>
    %cst_236 = arith.constant dense<0.000000e+00> : vector<16x8xf32>
    %649 = tpu.matmul %488, %648, %cst_236 {dimension_numbers = #tpu.dot_dimension_numbers<[1], [0], [0], [1], [0, 0, 1, 1], [], []>} : vector<16x32xbf16>, vector<32x8xbf16>, vector<16x8xf32> -> vector<16x8xf32>
    %650 = vector.extract_strided_slice %500 {offsets = [3, 0, 0], sizes = [1, 1, 8], strides = [1, 1, 1]} : vector<4x1x8xf32> to vector<1x1x8xf32>
    %651 = vector.shape_cast %650 : vector<1x1x8xf32> to vector<1x8xf32>
    %652 = vector.broadcast %651 : vector<1x8xf32> to vector<16x8xf32>
    %653 = arith.addf %649, %652 : vector<16x8xf32>
    %654 = arith.truncf %639 : vector<16x8xf32> to vector<16x8xbf16>
    %655 = arith.truncf %646 : vector<16x8xf32> to vector<16x8xbf16>
    %cst_237 = arith.constant dense<0.000000e+00> : vector<16x16xf32>
    %656 = tpu.matmul %654, %655, %cst_237 {dimension_numbers = #tpu.dot_dimension_numbers<[1], [1], [0], [0], [0, 0, 1, 0], [], []>} : vector<16x8xbf16>, vector<16x8xbf16>, vector<16x16xf32> -> vector<16x16xf32>
    %657 = arith.addf %656, %1 : vector<16x16xf32>
    %cst_238 = arith.constant dense<0xFF800000> : vector<16xf32>
    %658 = vector.multi_reduction <maximumf>, %657, %cst_238 [1] : vector<16x16xf32> to vector<16xf32>
    %659 = vector.shape_cast %658 : vector<16xf32> to vector<16x1xf32>
    %660 = vector.broadcast %659 : vector<16x1xf32> to vector<16x16xf32>
    %661 = arith.subf %657, %660 : vector<16x16xf32>
    %662 = math.exp %661 : vector<16x16xf32>
    %cst_239 = arith.constant dense<0.000000e+00> : vector<16xf32>
    %663 = vector.multi_reduction <add>, %662, %cst_239 [1] : vector<16x16xf32> to vector<16xf32>
    %664 = vector.shape_cast %663 : vector<16xf32> to vector<16x1xf32>
    %665 = tpu.reciprocal %664 {approx = true} : vector<16x1xf32> -> vector<16x1xf32>
    %666 = vector.broadcast %665 : vector<16x1xf32> to vector<16x16xf32>
    %667 = arith.mulf %662, %666 : vector<16x16xf32>
    %668 = arith.truncf %667 : vector<16x16xf32> to vector<16x16xbf16>
    %669 = arith.truncf %653 : vector<16x8xf32> to vector<16x8xbf16>
    %cst_240 = arith.constant dense<0.000000e+00> : vector<16x8xf32>
    %670 = tpu.matmul %668, %669, %cst_240 {dimension_numbers = #tpu.dot_dimension_numbers<[1], [0], [0], [1], [0, 0, 1, 1], [], []>} : vector<16x16xbf16>, vector<16x8xbf16>, vector<16x8xf32> -> vector<16x8xf32>
    %671 = arith.truncf %670 : vector<16x8xf32> to vector<16x8xbf16>
    %672 = vector.extract_strided_slice %502 {offsets = [3, 0, 0], sizes = [1, 8, 32], strides = [1, 1, 1]} : vector<4x8x32xbf16> to vector<1x8x32xbf16>
    %673 = vector.shape_cast %672 : vector<1x8x32xbf16> to vector<8x32xbf16>
    %cst_241 = arith.constant dense<0.000000e+00> : vector<16x32xf32>
    %674 = tpu.matmul %671, %673, %cst_241 {dimension_numbers = #tpu.dot_dimension_numbers<[1], [0], [0], [1], [0, 0, 1, 1], [], []>} : vector<16x8xbf16>, vector<8x32xbf16>, vector<16x32xf32> -> vector<16x32xf32>
    %675 = arith.addf %632, %674 : vector<16x32xf32>
    %c1_242 = arith.constant 1 : index
    %c0_243 = arith.constant 0 : index
    %c0_244 = arith.constant 0 : index
    %676 = vector.load %arg11[%c1_242, %c0_243, %c0_244] : memref<2x1x32xf32, #tpu.memory_space<vmem>>, vector<1x1x32xf32>
    %677 = vector.shape_cast %676 : vector<1x1x32xf32> to vector<1x32xf32>
    %678 = vector.broadcast %677 : vector<1x32xf32> to vector<16x32xf32>
    %679 = arith.addf %675, %678 : vector<16x32xf32>
    %680 = arith.addf %679, %487 : vector<16x32xf32>
    %c1_245 = arith.constant 1 : index
    %c0_246 = arith.constant 0 : index
    %c0_247 = arith.constant 0 : index
    %681 = vector.load %arg24[%c1_245, %c0_246, %c0_247] : memref<2x1x32xf32, #tpu.memory_space<vmem>>, vector<1x1x32xf32>
    %682 = vector.shape_cast %681 : vector<1x1x32xf32> to vector<1x32xf32>
    %c1_248 = arith.constant 1 : index
    %c0_249 = arith.constant 0 : index
    %c0_250 = arith.constant 0 : index
    %683 = vector.load %arg25[%c1_248, %c0_249, %c0_250] : memref<2x1x32xf32, #tpu.memory_space<vmem>>, vector<1x1x32xf32>
    %684 = vector.shape_cast %683 : vector<1x1x32xf32> to vector<1x32xf32>
    %cst_251 = arith.constant dense<0.000000e+00> : vector<16xf32>
    %685 = vector.multi_reduction <add>, %680, %cst_251 [1] : vector<16x32xf32> to vector<16xf32>
    %686 = vector.shape_cast %685 : vector<16xf32> to vector<16x1xf32>
    %cst_252 = arith.constant 3.200000e+01 : f32
    %687 = vector.broadcast %cst_252 : f32 to vector<16x1xf32>
    %688 = arith.divf %686, %687 : vector<16x1xf32>
    %689 = vector.broadcast %688 : vector<16x1xf32> to vector<16x32xf32>
    %690 = arith.subf %680, %689 : vector<16x32xf32>
    %691 = arith.mulf %690, %690 : vector<16x32xf32>
    %cst_253 = arith.constant dense<0.000000e+00> : vector<16xf32>
    %692 = vector.multi_reduction <add>, %691, %cst_253 [1] : vector<16x32xf32> to vector<16xf32>
    %693 = vector.shape_cast %692 : vector<16xf32> to vector<16x1xf32>
    %cst_254 = arith.constant 3.200000e+01 : f32
    %694 = vector.broadcast %cst_254 : f32 to vector<16x1xf32>
    %695 = arith.divf %693, %694 : vector<16x1xf32>
    %696 = vector.broadcast %688 : vector<16x1xf32> to vector<16x32xf32>
    %697 = arith.subf %680, %696 : vector<16x32xf32>
    %cst_255 = arith.constant 9.99999974E-6 : f32
    %698 = vector.broadcast %cst_255 : f32 to vector<16x1xf32>
    %699 = arith.addf %695, %698 : vector<16x1xf32>
    %700 = math.rsqrt %699 : vector<16x1xf32>
    %701 = vector.broadcast %700 : vector<16x1xf32> to vector<16x32xf32>
    %702 = arith.mulf %697, %701 : vector<16x32xf32>
    %703 = vector.broadcast %682 : vector<1x32xf32> to vector<16x32xf32>
    %704 = arith.mulf %702, %703 : vector<16x32xf32>
    %705 = vector.broadcast %684 : vector<1x32xf32> to vector<16x32xf32>
    %706 = arith.addf %704, %705 : vector<16x32xf32>
    %707 = arith.truncf %706 : vector<16x32xf32> to vector<16x32xbf16>
    %c1_256 = arith.constant 1 : index
    %c0_257 = arith.constant 0 : index
    %c0_258 = arith.constant 0 : index
    %c0_259 = arith.constant 0 : index
    %708 = vector.load %arg12[%c1_256, %c0_257, %c0_258, %c0_259] : memref<2x4x32x8xbf16, #tpu.memory_space<vmem>>, vector<1x4x32x8xbf16>
    %709 = vector.shape_cast %708 : vector<1x4x32x8xbf16> to vector<4x32x8xbf16>
    %c1_260 = arith.constant 1 : index
    %c0_261 = arith.constant 0 : index
    %c0_262 = arith.constant 0 : index
    %c0_263 = arith.constant 0 : index
    %710 = vector.load %arg13[%c1_260, %c0_261, %c0_262, %c0_263] : memref<2x4x1x8xf32, #tpu.memory_space<vmem>>, vector<1x4x1x8xf32>
    %711 = vector.shape_cast %710 : vector<1x4x1x8xf32> to vector<4x1x8xf32>
    %c1_264 = arith.constant 1 : index
    %c0_265 = arith.constant 0 : index
    %c0_266 = arith.constant 0 : index
    %c0_267 = arith.constant 0 : index
    %712 = vector.load %arg14[%c1_264, %c0_265, %c0_266, %c0_267] : memref<2x4x32x8xbf16, #tpu.memory_space<vmem>>, vector<1x4x32x8xbf16>
    %713 = vector.shape_cast %712 : vector<1x4x32x8xbf16> to vector<4x32x8xbf16>
    %c1_268 = arith.constant 1 : index
    %c0_269 = arith.constant 0 : index
    %c0_270 = arith.constant 0 : index
    %c0_271 = arith.constant 0 : index
    %714 = vector.load %arg15[%c1_268, %c0_269, %c0_270, %c0_271] : memref<2x4x1x8xf32, #tpu.memory_space<vmem>>, vector<1x4x1x8xf32>
    %715 = vector.shape_cast %714 : vector<1x4x1x8xf32> to vector<4x1x8xf32>
    %c1_272 = arith.constant 1 : index
    %c0_273 = arith.constant 0 : index
    %c0_274 = arith.constant 0 : index
    %c0_275 = arith.constant 0 : index
    %716 = vector.load %arg16[%c1_272, %c0_273, %c0_274, %c0_275] : memref<2x4x32x8xbf16, #tpu.memory_space<vmem>>, vector<1x4x32x8xbf16>
    %717 = vector.shape_cast %716 : vector<1x4x32x8xbf16> to vector<4x32x8xbf16>
    %c1_276 = arith.constant 1 : index
    %c0_277 = arith.constant 0 : index
    %c0_278 = arith.constant 0 : index
    %c0_279 = arith.constant 0 : index
    %718 = vector.load %arg17[%c1_276, %c0_277, %c0_278, %c0_279] : memref<2x4x1x8xf32, #tpu.memory_space<vmem>>, vector<1x4x1x8xf32>
    %719 = vector.shape_cast %718 : vector<1x4x1x8xf32> to vector<4x1x8xf32>
    %c1_280 = arith.constant 1 : index
    %c0_281 = arith.constant 0 : index
    %c0_282 = arith.constant 0 : index
    %c0_283 = arith.constant 0 : index
    %720 = vector.load %arg18[%c1_280, %c0_281, %c0_282, %c0_283] : memref<2x4x8x32xbf16, #tpu.memory_space<vmem>>, vector<1x4x8x32xbf16>
    %721 = vector.shape_cast %720 : vector<1x4x8x32xbf16> to vector<4x8x32xbf16>
    %cst_284 = arith.constant 0.000000e+00 : f32
    %722 = vector.broadcast %cst_284 : f32 to vector<16x32xf32>
    %723 = vector.extract_strided_slice %709 {offsets = [0, 0, 0], sizes = [1, 32, 8], strides = [1, 1, 1]} : vector<4x32x8xbf16> to vector<1x32x8xbf16>
    %724 = vector.shape_cast %723 : vector<1x32x8xbf16> to vector<32x8xbf16>
    %cst_285 = arith.constant dense<0.000000e+00> : vector<16x8xf32>
    %725 = tpu.matmul %707, %724, %cst_285 {dimension_numbers = #tpu.dot_dimension_numbers<[1], [0], [0], [1], [0, 0, 1, 1], [], []>} : vector<16x32xbf16>, vector<32x8xbf16>, vector<16x8xf32> -> vector<16x8xf32>
    %726 = vector.extract_strided_slice %711 {offsets = [0, 0, 0], sizes = [1, 1, 8], strides = [1, 1, 1]} : vector<4x1x8xf32> to vector<1x1x8xf32>
    %727 = vector.shape_cast %726 : vector<1x1x8xf32> to vector<1x8xf32>
    %728 = vector.broadcast %727 : vector<1x8xf32> to vector<16x8xf32>
    %729 = arith.addf %725, %728 : vector<16x8xf32>
    %730 = vector.extract_strided_slice %713 {offsets = [0, 0, 0], sizes = [1, 32, 8], strides = [1, 1, 1]} : vector<4x32x8xbf16> to vector<1x32x8xbf16>
    %731 = vector.shape_cast %730 : vector<1x32x8xbf16> to vector<32x8xbf16>
    %cst_286 = arith.constant dense<0.000000e+00> : vector<20x8xf32>
    %732 = tpu.matmul %4, %731, %cst_286 {dimension_numbers = #tpu.dot_dimension_numbers<[1], [0], [0], [1], [0, 0, 1, 1], [], []>} : vector<20x32xbf16>, vector<32x8xbf16>, vector<20x8xf32> -> vector<20x8xf32>
    %733 = vector.extract_strided_slice %715 {offsets = [0, 0, 0], sizes = [1, 1, 8], strides = [1, 1, 1]} : vector<4x1x8xf32> to vector<1x1x8xf32>
    %734 = vector.shape_cast %733 : vector<1x1x8xf32> to vector<1x8xf32>
    %735 = vector.broadcast %734 : vector<1x8xf32> to vector<20x8xf32>
    %736 = arith.addf %732, %735 : vector<20x8xf32>
    %737 = vector.extract_strided_slice %717 {offsets = [0, 0, 0], sizes = [1, 32, 8], strides = [1, 1, 1]} : vector<4x32x8xbf16> to vector<1x32x8xbf16>
    %738 = vector.shape_cast %737 : vector<1x32x8xbf16> to vector<32x8xbf16>
    %cst_287 = arith.constant dense<0.000000e+00> : vector<20x8xf32>
    %739 = tpu.matmul %4, %738, %cst_287 {dimension_numbers = #tpu.dot_dimension_numbers<[1], [0], [0], [1], [0, 0, 1, 1], [], []>} : vector<20x32xbf16>, vector<32x8xbf16>, vector<20x8xf32> -> vector<20x8xf32>
    %740 = vector.extract_strided_slice %719 {offsets = [0, 0, 0], sizes = [1, 1, 8], strides = [1, 1, 1]} : vector<4x1x8xf32> to vector<1x1x8xf32>
    %741 = vector.shape_cast %740 : vector<1x1x8xf32> to vector<1x8xf32>
    %742 = vector.broadcast %741 : vector<1x8xf32> to vector<20x8xf32>
    %743 = arith.addf %739, %742 : vector<20x8xf32>
    %744 = arith.truncf %729 : vector<16x8xf32> to vector<16x8xbf16>
    %745 = arith.truncf %736 : vector<20x8xf32> to vector<20x8xbf16>
    %cst_288 = arith.constant dense<0.000000e+00> : vector<16x20xf32>
    %746 = tpu.matmul %744, %745, %cst_288 {dimension_numbers = #tpu.dot_dimension_numbers<[1], [1], [0], [0], [0, 0, 1, 0], [], []>} : vector<16x8xbf16>, vector<20x8xbf16>, vector<16x20xf32> -> vector<16x20xf32>
    %747 = arith.addf %746, %2 : vector<16x20xf32>
    %cst_289 = arith.constant dense<0xFF800000> : vector<16xf32>
    %748 = vector.multi_reduction <maximumf>, %747, %cst_289 [1] : vector<16x20xf32> to vector<16xf32>
    %749 = vector.shape_cast %748 : vector<16xf32> to vector<16x1xf32>
    %750 = vector.broadcast %749 : vector<16x1xf32> to vector<16x20xf32>
    %751 = arith.subf %747, %750 : vector<16x20xf32>
    %752 = math.exp %751 : vector<16x20xf32>
    %cst_290 = arith.constant dense<0.000000e+00> : vector<16xf32>
    %753 = vector.multi_reduction <add>, %752, %cst_290 [1] : vector<16x20xf32> to vector<16xf32>
    %754 = vector.shape_cast %753 : vector<16xf32> to vector<16x1xf32>
    %755 = tpu.reciprocal %754 {approx = true} : vector<16x1xf32> -> vector<16x1xf32>
    %756 = vector.broadcast %755 : vector<16x1xf32> to vector<16x20xf32>
    %757 = arith.mulf %752, %756 : vector<16x20xf32>
    %758 = arith.truncf %757 : vector<16x20xf32> to vector<16x20xbf16>
    %759 = arith.truncf %743 : vector<20x8xf32> to vector<20x8xbf16>
    %cst_291 = arith.constant dense<0.000000e+00> : vector<16x8xf32>
    %760 = tpu.matmul %758, %759, %cst_291 {dimension_numbers = #tpu.dot_dimension_numbers<[1], [0], [0], [1], [0, 0, 1, 1], [], []>} : vector<16x20xbf16>, vector<20x8xbf16>, vector<16x8xf32> -> vector<16x8xf32>
    %761 = arith.truncf %760 : vector<16x8xf32> to vector<16x8xbf16>
    %762 = vector.extract_strided_slice %721 {offsets = [0, 0, 0], sizes = [1, 8, 32], strides = [1, 1, 1]} : vector<4x8x32xbf16> to vector<1x8x32xbf16>
    %763 = vector.shape_cast %762 : vector<1x8x32xbf16> to vector<8x32xbf16>
    %cst_292 = arith.constant dense<0.000000e+00> : vector<16x32xf32>
    %764 = tpu.matmul %761, %763, %cst_292 {dimension_numbers = #tpu.dot_dimension_numbers<[1], [0], [0], [1], [0, 0, 1, 1], [], []>} : vector<16x8xbf16>, vector<8x32xbf16>, vector<16x32xf32> -> vector<16x32xf32>
    %765 = arith.addf %722, %764 : vector<16x32xf32>
    %766 = vector.extract_strided_slice %709 {offsets = [1, 0, 0], sizes = [1, 32, 8], strides = [1, 1, 1]} : vector<4x32x8xbf16> to vector<1x32x8xbf16>
    %767 = vector.shape_cast %766 : vector<1x32x8xbf16> to vector<32x8xbf16>
    %cst_293 = arith.constant dense<0.000000e+00> : vector<16x8xf32>
    %768 = tpu.matmul %707, %767, %cst_293 {dimension_numbers = #tpu.dot_dimension_numbers<[1], [0], [0], [1], [0, 0, 1, 1], [], []>} : vector<16x32xbf16>, vector<32x8xbf16>, vector<16x8xf32> -> vector<16x8xf32>
    %769 = vector.extract_strided_slice %711 {offsets = [1, 0, 0], sizes = [1, 1, 8], strides = [1, 1, 1]} : vector<4x1x8xf32> to vector<1x1x8xf32>
    %770 = vector.shape_cast %769 : vector<1x1x8xf32> to vector<1x8xf32>
    %771 = vector.broadcast %770 : vector<1x8xf32> to vector<16x8xf32>
    %772 = arith.addf %768, %771 : vector<16x8xf32>
    %773 = vector.extract_strided_slice %713 {offsets = [1, 0, 0], sizes = [1, 32, 8], strides = [1, 1, 1]} : vector<4x32x8xbf16> to vector<1x32x8xbf16>
    %774 = vector.shape_cast %773 : vector<1x32x8xbf16> to vector<32x8xbf16>
    %cst_294 = arith.constant dense<0.000000e+00> : vector<20x8xf32>
    %775 = tpu.matmul %4, %774, %cst_294 {dimension_numbers = #tpu.dot_dimension_numbers<[1], [0], [0], [1], [0, 0, 1, 1], [], []>} : vector<20x32xbf16>, vector<32x8xbf16>, vector<20x8xf32> -> vector<20x8xf32>
    %776 = vector.extract_strided_slice %715 {offsets = [1, 0, 0], sizes = [1, 1, 8], strides = [1, 1, 1]} : vector<4x1x8xf32> to vector<1x1x8xf32>
    %777 = vector.shape_cast %776 : vector<1x1x8xf32> to vector<1x8xf32>
    %778 = vector.broadcast %777 : vector<1x8xf32> to vector<20x8xf32>
    %779 = arith.addf %775, %778 : vector<20x8xf32>
    %780 = vector.extract_strided_slice %717 {offsets = [1, 0, 0], sizes = [1, 32, 8], strides = [1, 1, 1]} : vector<4x32x8xbf16> to vector<1x32x8xbf16>
    %781 = vector.shape_cast %780 : vector<1x32x8xbf16> to vector<32x8xbf16>
    %cst_295 = arith.constant dense<0.000000e+00> : vector<20x8xf32>
    %782 = tpu.matmul %4, %781, %cst_295 {dimension_numbers = #tpu.dot_dimension_numbers<[1], [0], [0], [1], [0, 0, 1, 1], [], []>} : vector<20x32xbf16>, vector<32x8xbf16>, vector<20x8xf32> -> vector<20x8xf32>
    %783 = vector.extract_strided_slice %719 {offsets = [1, 0, 0], sizes = [1, 1, 8], strides = [1, 1, 1]} : vector<4x1x8xf32> to vector<1x1x8xf32>
    %784 = vector.shape_cast %783 : vector<1x1x8xf32> to vector<1x8xf32>
    %785 = vector.broadcast %784 : vector<1x8xf32> to vector<20x8xf32>
    %786 = arith.addf %782, %785 : vector<20x8xf32>
    %787 = arith.truncf %772 : vector<16x8xf32> to vector<16x8xbf16>
    %788 = arith.truncf %779 : vector<20x8xf32> to vector<20x8xbf16>
    %cst_296 = arith.constant dense<0.000000e+00> : vector<16x20xf32>
    %789 = tpu.matmul %787, %788, %cst_296 {dimension_numbers = #tpu.dot_dimension_numbers<[1], [1], [0], [0], [0, 0, 1, 0], [], []>} : vector<16x8xbf16>, vector<20x8xbf16>, vector<16x20xf32> -> vector<16x20xf32>
    %790 = arith.addf %789, %2 : vector<16x20xf32>
    %cst_297 = arith.constant dense<0xFF800000> : vector<16xf32>
    %791 = vector.multi_reduction <maximumf>, %790, %cst_297 [1] : vector<16x20xf32> to vector<16xf32>
    %792 = vector.shape_cast %791 : vector<16xf32> to vector<16x1xf32>
    %793 = vector.broadcast %792 : vector<16x1xf32> to vector<16x20xf32>
    %794 = arith.subf %790, %793 : vector<16x20xf32>
    %795 = math.exp %794 : vector<16x20xf32>
    %cst_298 = arith.constant dense<0.000000e+00> : vector<16xf32>
    %796 = vector.multi_reduction <add>, %795, %cst_298 [1] : vector<16x20xf32> to vector<16xf32>
    %797 = vector.shape_cast %796 : vector<16xf32> to vector<16x1xf32>
    %798 = tpu.reciprocal %797 {approx = true} : vector<16x1xf32> -> vector<16x1xf32>
    %799 = vector.broadcast %798 : vector<16x1xf32> to vector<16x20xf32>
    %800 = arith.mulf %795, %799 : vector<16x20xf32>
    %801 = arith.truncf %800 : vector<16x20xf32> to vector<16x20xbf16>
    %802 = arith.truncf %786 : vector<20x8xf32> to vector<20x8xbf16>
    %cst_299 = arith.constant dense<0.000000e+00> : vector<16x8xf32>
    %803 = tpu.matmul %801, %802, %cst_299 {dimension_numbers = #tpu.dot_dimension_numbers<[1], [0], [0], [1], [0, 0, 1, 1], [], []>} : vector<16x20xbf16>, vector<20x8xbf16>, vector<16x8xf32> -> vector<16x8xf32>
    %804 = arith.truncf %803 : vector<16x8xf32> to vector<16x8xbf16>
    %805 = vector.extract_strided_slice %721 {offsets = [1, 0, 0], sizes = [1, 8, 32], strides = [1, 1, 1]} : vector<4x8x32xbf16> to vector<1x8x32xbf16>
    %806 = vector.shape_cast %805 : vector<1x8x32xbf16> to vector<8x32xbf16>
    %cst_300 = arith.constant dense<0.000000e+00> : vector<16x32xf32>
    %807 = tpu.matmul %804, %806, %cst_300 {dimension_numbers = #tpu.dot_dimension_numbers<[1], [0], [0], [1], [0, 0, 1, 1], [], []>} : vector<16x8xbf16>, vector<8x32xbf16>, vector<16x32xf32> -> vector<16x32xf32>
    %808 = arith.addf %765, %807 : vector<16x32xf32>
    %809 = vector.extract_strided_slice %709 {offsets = [2, 0, 0], sizes = [1, 32, 8], strides = [1, 1, 1]} : vector<4x32x8xbf16> to vector<1x32x8xbf16>
    %810 = vector.shape_cast %809 : vector<1x32x8xbf16> to vector<32x8xbf16>
    %cst_301 = arith.constant dense<0.000000e+00> : vector<16x8xf32>
    %811 = tpu.matmul %707, %810, %cst_301 {dimension_numbers = #tpu.dot_dimension_numbers<[1], [0], [0], [1], [0, 0, 1, 1], [], []>} : vector<16x32xbf16>, vector<32x8xbf16>, vector<16x8xf32> -> vector<16x8xf32>
    %812 = vector.extract_strided_slice %711 {offsets = [2, 0, 0], sizes = [1, 1, 8], strides = [1, 1, 1]} : vector<4x1x8xf32> to vector<1x1x8xf32>
    %813 = vector.shape_cast %812 : vector<1x1x8xf32> to vector<1x8xf32>
    %814 = vector.broadcast %813 : vector<1x8xf32> to vector<16x8xf32>
    %815 = arith.addf %811, %814 : vector<16x8xf32>
    %816 = vector.extract_strided_slice %713 {offsets = [2, 0, 0], sizes = [1, 32, 8], strides = [1, 1, 1]} : vector<4x32x8xbf16> to vector<1x32x8xbf16>
    %817 = vector.shape_cast %816 : vector<1x32x8xbf16> to vector<32x8xbf16>
    %cst_302 = arith.constant dense<0.000000e+00> : vector<20x8xf32>
    %818 = tpu.matmul %4, %817, %cst_302 {dimension_numbers = #tpu.dot_dimension_numbers<[1], [0], [0], [1], [0, 0, 1, 1], [], []>} : vector<20x32xbf16>, vector<32x8xbf16>, vector<20x8xf32> -> vector<20x8xf32>
    %819 = vector.extract_strided_slice %715 {offsets = [2, 0, 0], sizes = [1, 1, 8], strides = [1, 1, 1]} : vector<4x1x8xf32> to vector<1x1x8xf32>
    %820 = vector.shape_cast %819 : vector<1x1x8xf32> to vector<1x8xf32>
    %821 = vector.broadcast %820 : vector<1x8xf32> to vector<20x8xf32>
    %822 = arith.addf %818, %821 : vector<20x8xf32>
    %823 = vector.extract_strided_slice %717 {offsets = [2, 0, 0], sizes = [1, 32, 8], strides = [1, 1, 1]} : vector<4x32x8xbf16> to vector<1x32x8xbf16>
    %824 = vector.shape_cast %823 : vector<1x32x8xbf16> to vector<32x8xbf16>
    %cst_303 = arith.constant dense<0.000000e+00> : vector<20x8xf32>
    %825 = tpu.matmul %4, %824, %cst_303 {dimension_numbers = #tpu.dot_dimension_numbers<[1], [0], [0], [1], [0, 0, 1, 1], [], []>} : vector<20x32xbf16>, vector<32x8xbf16>, vector<20x8xf32> -> vector<20x8xf32>
    %826 = vector.extract_strided_slice %719 {offsets = [2, 0, 0], sizes = [1, 1, 8], strides = [1, 1, 1]} : vector<4x1x8xf32> to vector<1x1x8xf32>
    %827 = vector.shape_cast %826 : vector<1x1x8xf32> to vector<1x8xf32>
    %828 = vector.broadcast %827 : vector<1x8xf32> to vector<20x8xf32>
    %829 = arith.addf %825, %828 : vector<20x8xf32>
    %830 = arith.truncf %815 : vector<16x8xf32> to vector<16x8xbf16>
    %831 = arith.truncf %822 : vector<20x8xf32> to vector<20x8xbf16>
    %cst_304 = arith.constant dense<0.000000e+00> : vector<16x20xf32>
    %832 = tpu.matmul %830, %831, %cst_304 {dimension_numbers = #tpu.dot_dimension_numbers<[1], [1], [0], [0], [0, 0, 1, 0], [], []>} : vector<16x8xbf16>, vector<20x8xbf16>, vector<16x20xf32> -> vector<16x20xf32>
    %833 = arith.addf %832, %2 : vector<16x20xf32>
    %cst_305 = arith.constant dense<0xFF800000> : vector<16xf32>
    %834 = vector.multi_reduction <maximumf>, %833, %cst_305 [1] : vector<16x20xf32> to vector<16xf32>
    %835 = vector.shape_cast %834 : vector<16xf32> to vector<16x1xf32>
    %836 = vector.broadcast %835 : vector<16x1xf32> to vector<16x20xf32>
    %837 = arith.subf %833, %836 : vector<16x20xf32>
    %838 = math.exp %837 : vector<16x20xf32>
    %cst_306 = arith.constant dense<0.000000e+00> : vector<16xf32>
    %839 = vector.multi_reduction <add>, %838, %cst_306 [1] : vector<16x20xf32> to vector<16xf32>
    %840 = vector.shape_cast %839 : vector<16xf32> to vector<16x1xf32>
    %841 = tpu.reciprocal %840 {approx = true} : vector<16x1xf32> -> vector<16x1xf32>
    %842 = vector.broadcast %841 : vector<16x1xf32> to vector<16x20xf32>
    %843 = arith.mulf %838, %842 : vector<16x20xf32>
    %844 = arith.truncf %843 : vector<16x20xf32> to vector<16x20xbf16>
    %845 = arith.truncf %829 : vector<20x8xf32> to vector<20x8xbf16>
    %cst_307 = arith.constant dense<0.000000e+00> : vector<16x8xf32>
    %846 = tpu.matmul %844, %845, %cst_307 {dimension_numbers = #tpu.dot_dimension_numbers<[1], [0], [0], [1], [0, 0, 1, 1], [], []>} : vector<16x20xbf16>, vector<20x8xbf16>, vector<16x8xf32> -> vector<16x8xf32>
    %847 = arith.truncf %846 : vector<16x8xf32> to vector<16x8xbf16>
    %848 = vector.extract_strided_slice %721 {offsets = [2, 0, 0], sizes = [1, 8, 32], strides = [1, 1, 1]} : vector<4x8x32xbf16> to vector<1x8x32xbf16>
    %849 = vector.shape_cast %848 : vector<1x8x32xbf16> to vector<8x32xbf16>
    %cst_308 = arith.constant dense<0.000000e+00> : vector<16x32xf32>
    %850 = tpu.matmul %847, %849, %cst_308 {dimension_numbers = #tpu.dot_dimension_numbers<[1], [0], [0], [1], [0, 0, 1, 1], [], []>} : vector<16x8xbf16>, vector<8x32xbf16>, vector<16x32xf32> -> vector<16x32xf32>
    %851 = arith.addf %808, %850 : vector<16x32xf32>
    %852 = vector.extract_strided_slice %709 {offsets = [3, 0, 0], sizes = [1, 32, 8], strides = [1, 1, 1]} : vector<4x32x8xbf16> to vector<1x32x8xbf16>
    %853 = vector.shape_cast %852 : vector<1x32x8xbf16> to vector<32x8xbf16>
    %cst_309 = arith.constant dense<0.000000e+00> : vector<16x8xf32>
    %854 = tpu.matmul %707, %853, %cst_309 {dimension_numbers = #tpu.dot_dimension_numbers<[1], [0], [0], [1], [0, 0, 1, 1], [], []>} : vector<16x32xbf16>, vector<32x8xbf16>, vector<16x8xf32> -> vector<16x8xf32>
    %855 = vector.extract_strided_slice %711 {offsets = [3, 0, 0], sizes = [1, 1, 8], strides = [1, 1, 1]} : vector<4x1x8xf32> to vector<1x1x8xf32>
    %856 = vector.shape_cast %855 : vector<1x1x8xf32> to vector<1x8xf32>
    %857 = vector.broadcast %856 : vector<1x8xf32> to vector<16x8xf32>
    %858 = arith.addf %854, %857 : vector<16x8xf32>
    %859 = vector.extract_strided_slice %713 {offsets = [3, 0, 0], sizes = [1, 32, 8], strides = [1, 1, 1]} : vector<4x32x8xbf16> to vector<1x32x8xbf16>
    %860 = vector.shape_cast %859 : vector<1x32x8xbf16> to vector<32x8xbf16>
    %cst_310 = arith.constant dense<0.000000e+00> : vector<20x8xf32>
    %861 = tpu.matmul %4, %860, %cst_310 {dimension_numbers = #tpu.dot_dimension_numbers<[1], [0], [0], [1], [0, 0, 1, 1], [], []>} : vector<20x32xbf16>, vector<32x8xbf16>, vector<20x8xf32> -> vector<20x8xf32>
    %862 = vector.extract_strided_slice %715 {offsets = [3, 0, 0], sizes = [1, 1, 8], strides = [1, 1, 1]} : vector<4x1x8xf32> to vector<1x1x8xf32>
    %863 = vector.shape_cast %862 : vector<1x1x8xf32> to vector<1x8xf32>
    %864 = vector.broadcast %863 : vector<1x8xf32> to vector<20x8xf32>
    %865 = arith.addf %861, %864 : vector<20x8xf32>
    %866 = vector.extract_strided_slice %717 {offsets = [3, 0, 0], sizes = [1, 32, 8], strides = [1, 1, 1]} : vector<4x32x8xbf16> to vector<1x32x8xbf16>
    %867 = vector.shape_cast %866 : vector<1x32x8xbf16> to vector<32x8xbf16>
    %cst_311 = arith.constant dense<0.000000e+00> : vector<20x8xf32>
    %868 = tpu.matmul %4, %867, %cst_311 {dimension_numbers = #tpu.dot_dimension_numbers<[1], [0], [0], [1], [0, 0, 1, 1], [], []>} : vector<20x32xbf16>, vector<32x8xbf16>, vector<20x8xf32> -> vector<20x8xf32>
    %869 = vector.extract_strided_slice %719 {offsets = [3, 0, 0], sizes = [1, 1, 8], strides = [1, 1, 1]} : vector<4x1x8xf32> to vector<1x1x8xf32>
    %870 = vector.shape_cast %869 : vector<1x1x8xf32> to vector<1x8xf32>
    %871 = vector.broadcast %870 : vector<1x8xf32> to vector<20x8xf32>
    %872 = arith.addf %868, %871 : vector<20x8xf32>
    %873 = arith.truncf %858 : vector<16x8xf32> to vector<16x8xbf16>
    %874 = arith.truncf %865 : vector<20x8xf32> to vector<20x8xbf16>
    %cst_312 = arith.constant dense<0.000000e+00> : vector<16x20xf32>
    %875 = tpu.matmul %873, %874, %cst_312 {dimension_numbers = #tpu.dot_dimension_numbers<[1], [1], [0], [0], [0, 0, 1, 0], [], []>} : vector<16x8xbf16>, vector<20x8xbf16>, vector<16x20xf32> -> vector<16x20xf32>
    %876 = arith.addf %875, %2 : vector<16x20xf32>
    %cst_313 = arith.constant dense<0xFF800000> : vector<16xf32>
    %877 = vector.multi_reduction <maximumf>, %876, %cst_313 [1] : vector<16x20xf32> to vector<16xf32>
    %878 = vector.shape_cast %877 : vector<16xf32> to vector<16x1xf32>
    %879 = vector.broadcast %878 : vector<16x1xf32> to vector<16x20xf32>
    %880 = arith.subf %876, %879 : vector<16x20xf32>
    %881 = math.exp %880 : vector<16x20xf32>
    %cst_314 = arith.constant dense<0.000000e+00> : vector<16xf32>
    %882 = vector.multi_reduction <add>, %881, %cst_314 [1] : vector<16x20xf32> to vector<16xf32>
    %883 = vector.shape_cast %882 : vector<16xf32> to vector<16x1xf32>
    %884 = tpu.reciprocal %883 {approx = true} : vector<16x1xf32> -> vector<16x1xf32>
    %885 = vector.broadcast %884 : vector<16x1xf32> to vector<16x20xf32>
    %886 = arith.mulf %881, %885 : vector<16x20xf32>
    %887 = arith.truncf %886 : vector<16x20xf32> to vector<16x20xbf16>
    %888 = arith.truncf %872 : vector<20x8xf32> to vector<20x8xbf16>
    %cst_315 = arith.constant dense<0.000000e+00> : vector<16x8xf32>
    %889 = tpu.matmul %887, %888, %cst_315 {dimension_numbers = #tpu.dot_dimension_numbers<[1], [0], [0], [1], [0, 0, 1, 1], [], []>} : vector<16x20xbf16>, vector<20x8xbf16>, vector<16x8xf32> -> vector<16x8xf32>
    %890 = arith.truncf %889 : vector<16x8xf32> to vector<16x8xbf16>
    %891 = vector.extract_strided_slice %721 {offsets = [3, 0, 0], sizes = [1, 8, 32], strides = [1, 1, 1]} : vector<4x8x32xbf16> to vector<1x8x32xbf16>
    %892 = vector.shape_cast %891 : vector<1x8x32xbf16> to vector<8x32xbf16>
    %cst_316 = arith.constant dense<0.000000e+00> : vector<16x32xf32>
    %893 = tpu.matmul %890, %892, %cst_316 {dimension_numbers = #tpu.dot_dimension_numbers<[1], [0], [0], [1], [0, 0, 1, 1], [], []>} : vector<16x8xbf16>, vector<8x32xbf16>, vector<16x32xf32> -> vector<16x32xf32>
    %894 = arith.addf %851, %893 : vector<16x32xf32>
    %c1_317 = arith.constant 1 : index
    %c0_318 = arith.constant 0 : index
    %c0_319 = arith.constant 0 : index
    %895 = vector.load %arg19[%c1_317, %c0_318, %c0_319] : memref<2x1x32xf32, #tpu.memory_space<vmem>>, vector<1x1x32xf32>
    %896 = vector.shape_cast %895 : vector<1x1x32xf32> to vector<1x32xf32>
    %897 = vector.broadcast %896 : vector<1x32xf32> to vector<16x32xf32>
    %898 = arith.addf %894, %897 : vector<16x32xf32>
    %899 = arith.addf %898, %706 : vector<16x32xf32>
    %c1_320 = arith.constant 1 : index
    %c0_321 = arith.constant 0 : index
    %c0_322 = arith.constant 0 : index
    %900 = vector.load %arg26[%c1_320, %c0_321, %c0_322] : memref<2x1x32xf32, #tpu.memory_space<vmem>>, vector<1x1x32xf32>
    %901 = vector.shape_cast %900 : vector<1x1x32xf32> to vector<1x32xf32>
    %c1_323 = arith.constant 1 : index
    %c0_324 = arith.constant 0 : index
    %c0_325 = arith.constant 0 : index
    %902 = vector.load %arg27[%c1_323, %c0_324, %c0_325] : memref<2x1x32xf32, #tpu.memory_space<vmem>>, vector<1x1x32xf32>
    %903 = vector.shape_cast %902 : vector<1x1x32xf32> to vector<1x32xf32>
    %cst_326 = arith.constant dense<0.000000e+00> : vector<16xf32>
    %904 = vector.multi_reduction <add>, %899, %cst_326 [1] : vector<16x32xf32> to vector<16xf32>
    %905 = vector.shape_cast %904 : vector<16xf32> to vector<16x1xf32>
    %cst_327 = arith.constant 3.200000e+01 : f32
    %906 = vector.broadcast %cst_327 : f32 to vector<16x1xf32>
    %907 = arith.divf %905, %906 : vector<16x1xf32>
    %908 = vector.broadcast %907 : vector<16x1xf32> to vector<16x32xf32>
    %909 = arith.subf %899, %908 : vector<16x32xf32>
    %910 = arith.mulf %909, %909 : vector<16x32xf32>
    %cst_328 = arith.constant dense<0.000000e+00> : vector<16xf32>
    %911 = vector.multi_reduction <add>, %910, %cst_328 [1] : vector<16x32xf32> to vector<16xf32>
    %912 = vector.shape_cast %911 : vector<16xf32> to vector<16x1xf32>
    %cst_329 = arith.constant 3.200000e+01 : f32
    %913 = vector.broadcast %cst_329 : f32 to vector<16x1xf32>
    %914 = arith.divf %912, %913 : vector<16x1xf32>
    %915 = vector.broadcast %907 : vector<16x1xf32> to vector<16x32xf32>
    %916 = arith.subf %899, %915 : vector<16x32xf32>
    %cst_330 = arith.constant 9.99999974E-6 : f32
    %917 = vector.broadcast %cst_330 : f32 to vector<16x1xf32>
    %918 = arith.addf %914, %917 : vector<16x1xf32>
    %919 = math.rsqrt %918 : vector<16x1xf32>
    %920 = vector.broadcast %919 : vector<16x1xf32> to vector<16x32xf32>
    %921 = arith.mulf %916, %920 : vector<16x32xf32>
    %922 = vector.broadcast %901 : vector<1x32xf32> to vector<16x32xf32>
    %923 = arith.mulf %921, %922 : vector<16x32xf32>
    %924 = vector.broadcast %903 : vector<1x32xf32> to vector<16x32xf32>
    %925 = arith.addf %923, %924 : vector<16x32xf32>
    %926 = arith.truncf %925 : vector<16x32xf32> to vector<16x32xbf16>
    %c1_331 = arith.constant 1 : index
    %c0_332 = arith.constant 0 : index
    %c0_333 = arith.constant 0 : index
    %927 = vector.load %arg20[%c1_331, %c0_332, %c0_333] : memref<2x32x64xbf16, #tpu.memory_space<vmem>>, vector<1x32x64xbf16>
    %928 = vector.shape_cast %927 : vector<1x32x64xbf16> to vector<32x64xbf16>
    %cst_334 = arith.constant dense<0.000000e+00> : vector<16x64xf32>
    %929 = tpu.matmul %926, %928, %cst_334 {dimension_numbers = #tpu.dot_dimension_numbers<[1], [0], [0], [1], [0, 0, 1, 1], [], []>} : vector<16x32xbf16>, vector<32x64xbf16>, vector<16x64xf32> -> vector<16x64xf32>
    %c1_335 = arith.constant 1 : index
    %c0_336 = arith.constant 0 : index
    %c0_337 = arith.constant 0 : index
    %930 = vector.load %arg21[%c1_335, %c0_336, %c0_337] : memref<2x1x64xf32, #tpu.memory_space<vmem>>, vector<1x1x64xf32>
    %931 = vector.shape_cast %930 : vector<1x1x64xf32> to vector<1x64xf32>
    %932 = vector.broadcast %931 : vector<1x64xf32> to vector<16x64xf32>
    %933 = arith.addf %929, %932 : vector<16x64xf32>
    %cst_338 = arith.constant 0.000000e+00 : f32
    %934 = vector.broadcast %cst_338 : f32 to vector<16x64xf32>
    %935 = arith.maximumf %933, %934 : vector<16x64xf32>
    %936 = arith.truncf %935 : vector<16x64xf32> to vector<16x64xbf16>
    %c1_339 = arith.constant 1 : index
    %c0_340 = arith.constant 0 : index
    %c0_341 = arith.constant 0 : index
    %937 = vector.load %arg22[%c1_339, %c0_340, %c0_341] : memref<2x64x32xbf16, #tpu.memory_space<vmem>>, vector<1x64x32xbf16>
    %938 = vector.shape_cast %937 : vector<1x64x32xbf16> to vector<64x32xbf16>
    %cst_342 = arith.constant dense<0.000000e+00> : vector<16x32xf32>
    %939 = tpu.matmul %936, %938, %cst_342 {dimension_numbers = #tpu.dot_dimension_numbers<[1], [0], [0], [1], [0, 0, 1, 1], [], []>} : vector<16x64xbf16>, vector<64x32xbf16>, vector<16x32xf32> -> vector<16x32xf32>
    %c1_343 = arith.constant 1 : index
    %c0_344 = arith.constant 0 : index
    %c0_345 = arith.constant 0 : index
    %940 = vector.load %arg23[%c1_343, %c0_344, %c0_345] : memref<2x1x32xf32, #tpu.memory_space<vmem>>, vector<1x1x32xf32>
    %941 = vector.shape_cast %940 : vector<1x1x32xf32> to vector<1x32xf32>
    %942 = vector.broadcast %941 : vector<1x32xf32> to vector<16x32xf32>
    %943 = arith.addf %939, %942 : vector<16x32xf32>
    %944 = arith.addf %943, %925 : vector<16x32xf32>
    %c1_346 = arith.constant 1 : index
    %c0_347 = arith.constant 0 : index
    %c0_348 = arith.constant 0 : index
    %945 = vector.load %arg28[%c1_346, %c0_347, %c0_348] : memref<2x1x32xf32, #tpu.memory_space<vmem>>, vector<1x1x32xf32>
    %946 = vector.shape_cast %945 : vector<1x1x32xf32> to vector<1x32xf32>
    %c1_349 = arith.constant 1 : index
    %c0_350 = arith.constant 0 : index
    %c0_351 = arith.constant 0 : index
    %947 = vector.load %arg29[%c1_349, %c0_350, %c0_351] : memref<2x1x32xf32, #tpu.memory_space<vmem>>, vector<1x1x32xf32>
    %948 = vector.shape_cast %947 : vector<1x1x32xf32> to vector<1x32xf32>
    %cst_352 = arith.constant dense<0.000000e+00> : vector<16xf32>
    %949 = vector.multi_reduction <add>, %944, %cst_352 [1] : vector<16x32xf32> to vector<16xf32>
    %950 = vector.shape_cast %949 : vector<16xf32> to vector<16x1xf32>
    %cst_353 = arith.constant 3.200000e+01 : f32
    %951 = vector.broadcast %cst_353 : f32 to vector<16x1xf32>
    %952 = arith.divf %950, %951 : vector<16x1xf32>
    %953 = vector.broadcast %952 : vector<16x1xf32> to vector<16x32xf32>
    %954 = arith.subf %944, %953 : vector<16x32xf32>
    %955 = arith.mulf %954, %954 : vector<16x32xf32>
    %cst_354 = arith.constant dense<0.000000e+00> : vector<16xf32>
    %956 = vector.multi_reduction <add>, %955, %cst_354 [1] : vector<16x32xf32> to vector<16xf32>
    %957 = vector.shape_cast %956 : vector<16xf32> to vector<16x1xf32>
    %cst_355 = arith.constant 3.200000e+01 : f32
    %958 = vector.broadcast %cst_355 : f32 to vector<16x1xf32>
    %959 = arith.divf %957, %958 : vector<16x1xf32>
    %960 = vector.broadcast %952 : vector<16x1xf32> to vector<16x32xf32>
    %961 = arith.subf %944, %960 : vector<16x32xf32>
    %cst_356 = arith.constant 9.99999974E-6 : f32
    %962 = vector.broadcast %cst_356 : f32 to vector<16x1xf32>
    %963 = arith.addf %959, %962 : vector<16x1xf32>
    %964 = math.rsqrt %963 : vector<16x1xf32>
    %965 = vector.broadcast %964 : vector<16x1xf32> to vector<16x32xf32>
    %966 = arith.mulf %961, %965 : vector<16x32xf32>
    %967 = vector.broadcast %946 : vector<1x32xf32> to vector<16x32xf32>
    %968 = arith.mulf %966, %967 : vector<16x32xf32>
    %969 = vector.broadcast %948 : vector<1x32xf32> to vector<16x32xf32>
    %970 = arith.addf %968, %969 : vector<16x32xf32>
    %971 = arith.truncf %970 : vector<16x32xf32> to vector<16x32xbf16>
    %c0_357 = arith.constant 0 : index
    %c0_358 = arith.constant 0 : index
    %972 = vector.load %arg30[%c0_357, %c0_358] : memref<32x128xbf16, #tpu.memory_space<vmem>>, vector<32x128xbf16>
    %cst_359 = arith.constant dense<0.000000e+00> : vector<16x128xf32>
    %973 = tpu.matmul %971, %972, %cst_359 {dimension_numbers = #tpu.dot_dimension_numbers<[1], [0], [0], [1], [0, 0, 1, 1], [], []>} : vector<16x32xbf16>, vector<32x128xbf16>, vector<16x128xf32> -> vector<16x128xf32>
    %c0_360 = arith.constant 0 : index
    %c0_361 = arith.constant 0 : index
    %974 = vector.load %arg31[%c0_360, %c0_361] : memref<1x128xf32, #tpu.memory_space<vmem>>, vector<1x128xf32>
    %975 = vector.broadcast %974 : vector<1x128xf32> to vector<16x128xf32>
    %976 = arith.addf %973, %975 : vector<16x128xf32>
    %c0_362 = arith.constant 0 : index
    %c0_363 = arith.constant 0 : index
    %977 = vector.load %arg32[%c0_362, %c0_363] : memref<16x128xf32, #tpu.memory_space<vmem>>, vector<16x128xf32>
    tpu.vector_store %arg32[%c0_362, %c0_363], %976 {strides = array<i32>} : memref<16x128xf32, #tpu.memory_space<vmem>>, vector<16x128xf32>,
    return
  }
}

</mosaic_0001>

<llo_original>
// kernel: decoder_forward.1
$region0: #{decoder_forward.1}
  #allocation0 [shape = 'u32[]', space=smem, size = 0x4, offset = 0x4, fixed_abs, tag = 'smem constant byte address 0x4 - core index']
  #allocation1 [shape = 'u32[144,128]{1,0:T(1,128)}', space=vmem, size = 0x12000, scoped, tag = 'internal scratch']
  %s0 = inlined_call_operand.smem [shape: u32[33], index: -1, kind: input, shape index: {}]
  %s1 = sld [smem:[%s0]]
  %s2 = scalar_lea.smem %s0, 1
  %s3 = sld [smem:[%s2]]
  %s4 = scalar_lea.smem %s0, 2
  %s5 = sld [smem:[%s4]]
  %s6 = scalar_lea.smem %s0, 3
  %s7 = sld [smem:[%s6]]
  %s8 = scalar_lea.smem %s0, 4
  %s9 = sld [smem:[%s8]]
  %s10 = scalar_lea.smem %s0, 5
  %s11 = sld [smem:[%s10]]
  %s12 = scalar_lea.smem %s0, 6
  %s13 = sld [smem:[%s12]]
  %s14 = scalar_lea.smem %s0, 7
  %s15 = sld [smem:[%s14]]
  %s16 = scalar_lea.smem %s0, 8
  %s17 = sld [smem:[%s16]]
  %s18 = scalar_lea.smem %s0, 9
  %s19 = sld [smem:[%s18]]
  %s20 = scalar_lea.smem %s0, 10
  %s21 = sld [smem:[%s20]]
  %s22 = scalar_lea.smem %s0, 11
  %s23 = sld [smem:[%s22]]
  %s24 = scalar_lea.smem %s0, 12
  %s25 = sld [smem:[%s24]]
  %s26 = scalar_lea.smem %s0, 13
  %s27 = sld [smem:[%s26]]
  %s28 = scalar_lea.smem %s0, 14
  %s29 = sld [smem:[%s28]]
  %s30 = scalar_lea.smem %s0, 15
  %s31 = sld [smem:[%s30]]
  %s32 = scalar_lea.smem %s0, 16
  %s33 = sld [smem:[%s32]]
  %s34 = scalar_lea.smem %s0, 17
  %s35 = sld [smem:[%s34]]
  %s36 = scalar_lea.smem %s0, 18
  %s37 = sld [smem:[%s36]]
  %s38 = scalar_lea.smem %s0, 19
  %s39 = sld [smem:[%s38]]
  %s40 = scalar_lea.smem %s0, 20
  %s41 = sld [smem:[%s40]]
  %s42 = scalar_lea.smem %s0, 21
  %s43 = sld [smem:[%s42]]
  %s44 = scalar_lea.smem %s0, 22
  %s45 = sld [smem:[%s44]]
  %s46 = scalar_lea.smem %s0, 23
  %s47 = sld [smem:[%s46]]
  %s48 = scalar_lea.smem %s0, 24
  %s49 = sld [smem:[%s48]]
  %s50 = scalar_lea.smem %s0, 25
  %s51 = sld [smem:[%s50]]
  %s52 = scalar_lea.smem %s0, 26
  %s53 = sld [smem:[%s52]]
  %s54 = scalar_lea.smem %s0, 27
  %s55 = sld [smem:[%s54]]
  %s56 = scalar_lea.smem %s0, 28
  %s57 = sld [smem:[%s56]]
  %s58 = scalar_lea.smem %s0, 29
  %s59 = sld [smem:[%s58]]
  %s60 = scalar_lea.smem %s0, 30
  %s61 = sld [smem:[%s60]]
  %s62 = scalar_lea.smem %s0, 31
  %s63 = sld [smem:[%s62]]
  %s64 = scalar_lea.smem %s0, 32
  %s65 = sld [smem:[%s64]]
  %s66 = sld [smem:[#allocation0]]
  $region138: #{decoder_forward.1} parent=0
    _
  %s68 = ssub.s32 1, %s66
  %s69 = scalar_select 0, %s68, %s66
  $region1: #{decoder_forward.1} parent=0
    #allocation2 [shape = 'u8[8192]{0}', space=vmem, size = 0x2000, scoped, tag = 'output window, operand 0, single buffered']
    #allocation3 [shape = 's32[1]{0}', space=sflag, size = 0x4, scoped, tag = 'scoped memory for decoder_forward.1']
    %70 = vsyncpa [#allocation3], 0
    // Predicated region
    $region2: #{decoder_forward.1} parent=1 // pred_check
      _
    $region3: #{decoder_forward.1} parent=1 // pred_check_branch
      %72 = sbr.rel (0) target = $region5
    $region4: #{decoder_forward.1} parent=1 // pred_region
      _
    $region5: #{decoder_forward.1} parent=1 // pred_fallthru
      _
    // Predicated region
    $region6: #{decoder_forward.1} parent=1 // pred_check
      _
    $region7: #{decoder_forward.1} parent=1 // pred_check_branch
      %74 = sbr.rel (0) target = $region9
    $region8: #{decoder_forward.1} parent=1 // pred_region
      _
    $region9: #{decoder_forward.1} parent=1 // pred_fallthru
      _
    // Predicated region
    $region10: #{decoder_forward.1} parent=1 // pred_check
      _
    $region11: #{decoder_forward.1} parent=1 // pred_check_branch
      %76 = sbr.rel (0) target = $region13
    $region12: #{decoder_forward.1} parent=1 // pred_region
      _
    $region13: #{decoder_forward.1} parent=1 // pred_fallthru
      _
    // Predicated region
    $region14: #{decoder_forward.1} parent=1 // pred_check
      _
    $region15: #{decoder_forward.1} parent=1 // pred_check_branch
      %78 = sbr.rel (0) target = $region17
    $region16: #{decoder_forward.1} parent=1 // pred_region
      _
    $region17: #{decoder_forward.1} parent=1 // pred_fallthru
      _
    // Predicated region
    $region18: #{decoder_forward.1} parent=1 // pred_check
      _
    $region19: #{decoder_forward.1} parent=1 // pred_check_branch
      %80 = sbr.rel (0) target = $region21
    $region20: #{decoder_forward.1} parent=1 // pred_region
      _
    $region21: #{decoder_forward.1} parent=1 // pred_fallthru
      _
    // Predicated region
    $region22: #{decoder_forward.1} parent=1 // pred_check
      _
    $region23: #{decoder_forward.1} parent=1 // pred_check_branch
      %82 = sbr.rel (0) target = $region25
    $region24: #{decoder_forward.1} parent=1 // pred_region
      _
    $region25: #{decoder_forward.1} parent=1 // pred_fallthru
      _
    // Predicated region
    $region26: #{decoder_forward.1} parent=1 // pred_check
      _
    $region27: #{decoder_forward.1} parent=1 // pred_check_branch
      %84 = sbr.rel (0) target = $region29
    $region28: #{decoder_forward.1} parent=1 // pred_region
      _
    $region29: #{decoder_forward.1} parent=1 // pred_fallthru
      _
    // Predicated region
    $region30: #{decoder_forward.1} parent=1 // pred_check
      _
    $region31: #{decoder_forward.1} parent=1 // pred_check_branch
      %86 = sbr.rel (0) target = $region33
    $region32: #{decoder_forward.1} parent=1 // pred_region
      _
    $region33: #{decoder_forward.1} parent=1 // pred_fallthru
      _
    // Predicated region
    $region34: #{decoder_forward.1} parent=1 // pred_check
      _
    $region35: #{decoder_forward.1} parent=1 // pred_check_branch
      %88 = sbr.rel (0) target = $region37
    $region36: #{decoder_forward.1} parent=1 // pred_region
      _
    $region37: #{decoder_forward.1} parent=1 // pred_fallthru
      _
    // Predicated region
    $region38: #{decoder_forward.1} parent=1 // pred_check
      _
    $region39: #{decoder_forward.1} parent=1 // pred_check_branch
      %90 = sbr.rel (0) target = $region41
    $region40: #{decoder_forward.1} parent=1 // pred_region
      _
    $region41: #{decoder_forward.1} parent=1 // pred_fallthru
      _
    // Predicated region
    $region42: #{decoder_forward.1} parent=1 // pred_check
      _
    $region43: #{decoder_forward.1} parent=1 // pred_check_branch
      %92 = sbr.rel (0) target = $region45
    $region44: #{decoder_forward.1} parent=1 // pred_region
      _
    $region45: #{decoder_forward.1} parent=1 // pred_fallthru
      _
    // Predicated region
    $region46: #{decoder_forward.1} parent=1 // pred_check
      _
    $region47: #{decoder_forward.1} parent=1 // pred_check_branch
      %94 = sbr.rel (0) target = $region49
    $region48: #{decoder_forward.1} parent=1 // pred_region
      _
    $region49: #{decoder_forward.1} parent=1 // pred_fallthru
      _
    // Predicated region
    $region50: #{decoder_forward.1} parent=1 // pred_check
      _
    $region51: #{decoder_forward.1} parent=1 // pred_check_branch
      %96 = sbr.rel (0) target = $region53
    $region52: #{decoder_forward.1} parent=1 // pred_region
      _
    $region53: #{decoder_forward.1} parent=1 // pred_fallthru
      _
    // Predicated region
    $region54: #{decoder_forward.1} parent=1 // pred_check
      _
    $region55: #{decoder_forward.1} parent=1 // pred_check_branch
      %98 = sbr.rel (0) target = $region57
    $region56: #{decoder_forward.1} parent=1 // pred_region
      _
    $region57: #{decoder_forward.1} parent=1 // pred_fallthru
      _
    // Predicated region
    $region58: #{decoder_forward.1} parent=1 // pred_check
      _
    $region59: #{decoder_forward.1} parent=1 // pred_check_branch
      %100 = sbr.rel (0) target = $region61
    $region60: #{decoder_forward.1} parent=1 // pred_region
      _
    $region61: #{decoder_forward.1} parent=1 // pred_fallthru
      _
    // Predicated region
    $region62: #{decoder_forward.1} parent=1 // pred_check
      _
    $region63: #{decoder_forward.1} parent=1 // pred_check_branch
      %102 = sbr.rel (0) target = $region65
    $region64: #{decoder_forward.1} parent=1 // pred_region
      _
    $region65: #{decoder_forward.1} parent=1 // pred_fallthru
      _
    // Predicated region
    $region66: #{decoder_forward.1} parent=1 // pred_check
      _
    $region67: #{decoder_forward.1} parent=1 // pred_check_branch
      %104 = sbr.rel (0) target = $region69
    $region68: #{decoder_forward.1} parent=1 // pred_region
      _
    $region69: #{decoder_forward.1} parent=1 // pred_fallthru
      _
    // Predicated region
    $region70: #{decoder_forward.1} parent=1 // pred_check
      _
    $region71: #{decoder_forward.1} parent=1 // pred_check_branch
      %106 = sbr.rel (0) target = $region73
    $region72: #{decoder_forward.1} parent=1 // pred_region
      _
    $region73: #{decoder_forward.1} parent=1 // pred_fallthru
      _
    // Predicated region
    $region74: #{decoder_forward.1} parent=1 // pred_check
      _
    $region75: #{decoder_forward.1} parent=1 // pred_check_branch
      %108 = sbr.rel (0) target = $region77
    $region76: #{decoder_forward.1} parent=1 // pred_region
      _
    $region77: #{decoder_forward.1} parent=1 // pred_fallthru
      _
    // Predicated region
    $region78: #{decoder_forward.1} parent=1 // pred_check
      _
    $region79: #{decoder_forward.1} parent=1 // pred_check_branch
      %110 = sbr.rel (0) target = $region81
    $region80: #{decoder_forward.1} parent=1 // pred_region
      _
    $region81: #{decoder_forward.1} parent=1 // pred_fallthru
      _
    // Predicated region
    $region82: #{decoder_forward.1} parent=1 // pred_check
      _
    $region83: #{decoder_forward.1} parent=1 // pred_check_branch
      %112 = sbr.rel (0) target = $region85
    $region84: #{decoder_forward.1} parent=1 // pred_region
      _
    $region85: #{decoder_forward.1} parent=1 // pred_fallthru
      _
    // Predicated region
    $region86: #{decoder_forward.1} parent=1 // pred_check
      _
    $region87: #{decoder_forward.1} parent=1 // pred_check_branch
      %114 = sbr.rel (0) target = $region89
    $region88: #{decoder_forward.1} parent=1 // pred_region
      _
    $region89: #{decoder_forward.1} parent=1 // pred_fallthru
      _
    // Predicated region
    $region90: #{decoder_forward.1} parent=1 // pred_check
      _
    $region91: #{decoder_forward.1} parent=1 // pred_check_branch
      %116 = sbr.rel (0) target = $region93
    $region92: #{decoder_forward.1} parent=1 // pred_region
      _
    $region93: #{decoder_forward.1} parent=1 // pred_fallthru
      _
    // Predicated region
    $region94: #{decoder_forward.1} parent=1 // pred_check
      _
    $region95: #{decoder_forward.1} parent=1 // pred_check_branch
      %118 = sbr.rel (0) target = $region97
    $region96: #{decoder_forward.1} parent=1 // pred_region
      _
    $region97: #{decoder_forward.1} parent=1 // pred_fallthru
      _
    // Predicated region
    $region98: #{decoder_forward.1} parent=1 // pred_check
      _
    $region99: #{decoder_forward.1} parent=1 // pred_check_branch
      %120 = sbr.rel (0) target = $region101
    $region100: #{decoder_forward.1} parent=1 // pred_region
      _
    $region101: #{decoder_forward.1} parent=1 // pred_fallthru
      _
    // Predicated region
    $region102: #{decoder_forward.1} parent=1 // pred_check
      _
    $region103: #{decoder_forward.1} parent=1 // pred_check_branch
      %122 = sbr.rel (0) target = $region105
    $region104: #{decoder_forward.1} parent=1 // pred_region
      _
    $region105: #{decoder_forward.1} parent=1 // pred_fallthru
      _
    // Predicated region
    $region106: #{decoder_forward.1} parent=1 // pred_check
      _
    $region107: #{decoder_forward.1} parent=1 // pred_check_branch
      %124 = sbr.rel (0) target = $region109
    $region108: #{decoder_forward.1} parent=1 // pred_region
      _
    $region109: #{decoder_forward.1} parent=1 // pred_fallthru
      _
    // Predicated region
    $region110: #{decoder_forward.1} parent=1 // pred_check
      _
    $region111: #{decoder_forward.1} parent=1 // pred_check_branch
      %126 = sbr.rel (0) target = $region113
    $region112: #{decoder_forward.1} parent=1 // pred_region
      _
    $region113: #{decoder_forward.1} parent=1 // pred_fallthru
      _
    // Predicated region
    $region114: #{decoder_forward.1} parent=1 // pred_check
      _
    $region115: #{decoder_forward.1} parent=1 // pred_check_branch
      %128 = sbr.rel (0) target = $region117
    $region116: #{decoder_forward.1} parent=1 // pred_region
      _
    $region117: #{decoder_forward.1} parent=1 // pred_fallthru
      _
    // Predicated region
    $region118: #{decoder_forward.1} parent=1 // pred_check
      _
    $region119: #{decoder_forward.1} parent=1 // pred_check_branch
      %130 = sbr.rel (0) target = $region121
    $region120: #{decoder_forward.1} parent=1 // pred_region
      _
    $region121: #{decoder_forward.1} parent=1 // pred_fallthru
      _
    // Predicated region
    $region122: #{decoder_forward.1} parent=1 // pred_check
      _
    $region123: #{decoder_forward.1} parent=1 // pred_check_branch
      %132 = sbr.rel (0) target = $region125
    $region124: #{decoder_forward.1} parent=1 // pred_region
      _
    $region125: #{decoder_forward.1} parent=1 // pred_fallthru
      _
    // Predicated region
    $region126: #{decoder_forward.1} parent=1 // pred_check
      _
    $region127: #{decoder_forward.1} parent=1 // pred_check_branch
      %134 = sbr.rel (0) target = $region129
    $region128: #{decoder_forward.1} parent=1 // pred_region
      _
    $region129: #{decoder_forward.1} parent=1 // pred_fallthru
      _
    %v136 = vld [vmem:[%s1] sm:$0xff]
    %v137 = vld [vmem:[%s1 + $0x8] sm:$0xff]
    %v138 = vld [vmem:[%s5] sm:$0xff]
    %v139 = vld [vmem:[%s5 + $0x8] sm:$0xff]
    %v140 = vld [vmem:[%s7] sm:$0xff]
    %v141 = vld [vmem:[%s7 + $0x8] sm:$0xff]
    %v142 = vld [vmem:[%s3] sm:$0xff]
    %v143 = vld [vmem:[%s3 + $0x8] sm:$0xff]
    %v144 = vld [vmem:[%s3 + $0x10] sm:$0xf]
    %v145 = vpack.c.bf16 %v143, %v142
    %v146 = vpack.c.bf16 %v144, %v144
    %v147 = vpack.c.bf16 %v137, %v136
    %v148 = vld [vmem:[%s9] sm:$0xf]
    %v149 = vld [vmem:[%s9 + $0x4] sm:$0xf]
    %v150 = vld [vmem:[%s9 + $0x8] sm:$0xf]
    %v151 = vld [vmem:[%s9 + $0xc] sm:$0xf]
    %v152 = vld [vmem:[%s9 + $0x10] sm:$0xf]
    %v153 = vld [vmem:[%s9 + $0x14] sm:$0xf]
    %v154 = vld [vmem:[%s9 + $0x18] sm:$0xf]
    %v155 = vld [vmem:[%s9 + $0x1c] sm:$0xf]
    %v156 = vld [vmem:[%s9 + $0x20] sm:$0xf]
    %v157 = vld [vmem:[%s9 + $0x24] sm:$0xf]
    %v158 = vld [vmem:[%s9 + $0x28] sm:$0xf]
    %v159 = vld [vmem:[%s9 + $0x2c] sm:$0xf]
    %v160 = vld [vmem:[%s9 + $0x30] sm:$0xf]
    %v161 = vld [vmem:[%s9 + $0x34] sm:$0xf]
    %v162 = vld [vmem:[%s9 + $0x38] sm:$0xf]
    %v163 = vld [vmem:[%s9 + $0x3c] sm:$0xf]
    %v164 = vld [vmem:[%s11] sm:$0x1]
    %v165 = vld [vmem:[%s11 + $0x1] sm:$0x1]
    %v166 = vld [vmem:[%s11 + $0x2] sm:$0x1]
    %v167 = vld [vmem:[%s11 + $0x3] sm:$0x1]
    %v168 = vld [vmem:[%s13] sm:$0xf]
    %v169 = vld [vmem:[%s13 + $0x4] sm:$0xf]
    %v170 = vld [vmem:[%s13 + $0x8] sm:$0xf]
    %v171 = vld [vmem:[%s13 + $0xc] sm:$0xf]
    %v172 = vld [vmem:[%s13 + $0x10] sm:$0xf]
    %v173 = vld [vmem:[%s13 + $0x14] sm:$0xf]
    %v174 = vld [vmem:[%s13 + $0x18] sm:$0xf]
    %v175 = vld [vmem:[%s13 + $0x1c] sm:$0xf]
    %v176 = vld [vmem:[%s13 + $0x20] sm:$0xf]
    %v177 = vld [vmem:[%s13 + $0x24] sm:$0xf]
    %v178 = vld [vmem:[%s13 + $0x28] sm:$0xf]
    %v179 = vld [vmem:[%s13 + $0x2c] sm:$0xf]
    %v180 = vld [vmem:[%s13 + $0x30] sm:$0xf]
    %v181 = vld [vmem:[%s13 + $0x34] sm:$0xf]
    %v182 = vld [vmem:[%s13 + $0x38] sm:$0xf]
    %v183 = vld [vmem:[%s13 + $0x3c] sm:$0xf]
    %v184 = vld [vmem:[%s15] sm:$0x1]
    %v185 = vld [vmem:[%s15 + $0x1] sm:$0x1]
    %v186 = vld [vmem:[%s15 + $0x2] sm:$0x1]
    %v187 = vld [vmem:[%s15 + $0x3] sm:$0x1]
    %v188 = vld [vmem:[%s17] sm:$0xf]
    %v189 = vld [vmem:[%s17 + $0x4] sm:$0xf]
    %v190 = vld [vmem:[%s17 + $0x8] sm:$0xf]
    %v191 = vld [vmem:[%s17 + $0xc] sm:$0xf]
    %v192 = vld [vmem:[%s17 + $0x10] sm:$0xf]
    %v193 = vld [vmem:[%s17 + $0x14] sm:$0xf]
    %v194 = vld [vmem:[%s17 + $0x18] sm:$0xf]
    %v195 = vld [vmem:[%s17 + $0x1c] sm:$0xf]
    %v196 = vld [vmem:[%s17 + $0x20] sm:$0xf]
    %v197 = vld [vmem:[%s17 + $0x24] sm:$0xf]
    %v198 = vld [vmem:[%s17 + $0x28] sm:$0xf]
    %v199 = vld [vmem:[%s17 + $0x2c] sm:$0xf]
    %v200 = vld [vmem:[%s17 + $0x30] sm:$0xf]
    %v201 = vld [vmem:[%s17 + $0x34] sm:$0xf]
    %v202 = vld [vmem:[%s17 + $0x38] sm:$0xf]
    %v203 = vld [vmem:[%s17 + $0x3c] sm:$0xf]
    %v204 = vld [vmem:[%s19] sm:$0x1]
    %v205 = vld [vmem:[%s19 + $0x1] sm:$0x1]
    %v206 = vld [vmem:[%s19 + $0x2] sm:$0x1]
    %v207 = vld [vmem:[%s19 + $0x3] sm:$0x1]
    %v208 = vld [vmem:[%s21] sm:$0xf]
    %v209 = vld [vmem:[%s21 + $0x4] sm:$0xf]
    %v210 = vld [vmem:[%s21 + $0x8] sm:$0xf]
    %v211 = vld [vmem:[%s21 + $0xc] sm:$0xf]
    %v213 = vlaneseq
    %v214 = vshrl.u32 %v213, 7
    %v215 = vsub.s32 0, %v214
    %v216 = vrot.slane %v164, %v215
    %v222 = vunpack.c.l.b16 %v148
    %v223 = vunpack.c.l.b16 %v149
    %v224 = vunpack.c.l.b16 %v150
    %v225 = vunpack.c.l.b16 %v151
    %v226 = vpack.c.b16 %v223, %v222
    %v227 = vpack.c.b16 %v225, %v224
    %vm230 = vcmask 261120
    %v232 = vsel %vm230, %v147, 0
    %234 = vmatprep.subr.bf16.mxu0 0
    %235 = vmatpush1.bf16.msra.mxu0 %v226
    %236 = vmatprep.subr.bf16.mxu0 0
    %237 = vmatpush1.bf16.msra.mxu0 %v227
    %238 = vmatprep.subr.bf16.mxu0 0
    %239 = vmatpush1.bf16.msra.mxu0 0
    %240 = vmatprep.subr.bf16.mxu0 0
    %241 = vmatpush1.bf16.msra.mxu0 0
    %242 = vmatprep.subr.bf16.mxu0 0
    %243 = vmatpush1.bf16.msra.mxu0 0
    %244 = vmatprep.subr.bf16.mxu0 0
    %245 = vmatpush1.bf16.msra.mxu0 0
    %246 = vmatprep.subr.bf16.mxu0 0
    %247 = vmatpush1.bf16.msra.mxu0 0
    %248 = vmatprep.subr.bf16.mxu0 0
    %249 = vmatpush1.bf16.msra.mxu0 0
    %250 = vmatprep.subr.bf16.mxu0 0
    %251 = vmatpush1.bf16.msra.mxu0 0
    %252 = vmatprep.subr.bf16.mxu0 0
    %253 = vmatpush1.bf16.msra.mxu0 0
    %254 = vmatprep.subr.bf16.mxu0 0
    %255 = vmatpush1.bf16.msra.mxu0 0
    %256 = vmatprep.subr.bf16.mxu0 0
    %257 = vmatpush1.bf16.msra.mxu0 0
    %258 = vmatprep.subr.bf16.mxu0 0
    %259 = vmatpush1.bf16.msra.mxu0 0
    %260 = vmatprep.subr.bf16.mxu0 0
    %261 = vmatpush1.bf16.msra.mxu0 0
    %262 = vmatprep.subr.bf16.mxu0 0
    %263 = vmatpush1.bf16.msra.mxu0 0
    %264 = vmatprep.subr.bf16.mxu0 0
    %265 = vmatpush1.bf16.msra.mxu0 0
    %266 = vmatprep.mubr.bf16.mxu0 0
    %267 = vmatmul.mubr.bf16.gmra.mrb[0].mxu0 %v232
    %v268 = vpop.f32.mrb[0].mxu0
    %v269 = vadd.f32 %v216, %v268
    %v270 = vpop.f32.mrb[0].mxu0
    %v271 = vpop.f32.mrb[0].mxu0
    %v272 = vadd.f32 %v216, %v271
    %v273 = vpop.f32.mrb[0].mxu0
    %274 = vdwg.mxu0
    %v276 = vlaneseq
    %v277 = vshrl.u32 %v276, 7
    %v278 = vsub.s32 0, %v277
    %v279 = vrot.slane %v184, %v278
    %v285 = vunpack.c.l.b16 %v168
    %v286 = vunpack.c.l.b16 %v169
    %v287 = vunpack.c.l.b16 %v170
    %v288 = vunpack.c.l.b16 %v171
    %v289 = vpack.c.b16 %v286, %v285
    %v290 = vpack.c.b16 %v288, %v287
    %293 = vmatprep.subr.bf16.mxu0 0
    %294 = vmatpush1.bf16.msra.mxu0 %v289
    %295 = vmatprep.subr.bf16.mxu0 0
    %296 = vmatpush1.bf16.msra.mxu0 %v290
    %297 = vmatprep.subr.bf16.mxu0 0
    %298 = vmatpush1.bf16.msra.mxu0 0
    %299 = vmatprep.subr.bf16.mxu0 0
    %300 = vmatpush1.bf16.msra.mxu0 0
    %301 = vmatprep.subr.bf16.mxu0 0
    %302 = vmatpush1.bf16.msra.mxu0 0
    %303 = vmatprep.subr.bf16.mxu0 0
    %304 = vmatpush1.bf16.msra.mxu0 0
    %305 = vmatprep.subr.bf16.mxu0 0
    %306 = vmatpush1.bf16.msra.mxu0 0
    %307 = vmatprep.subr.bf16.mxu0 0
    %308 = vmatpush1.bf16.msra.mxu0 0
    %309 = vmatprep.subr.bf16.mxu0 0
    %310 = vmatpush1.bf16.msra.mxu0 0
    %311 = vmatprep.subr.bf16.mxu0 0
    %312 = vmatpush1.bf16.msra.mxu0 0
    %313 = vmatprep.subr.bf16.mxu0 0
    %314 = vmatpush1.bf16.msra.mxu0 0
    %315 = vmatprep.subr.bf16.mxu0 0
    %316 = vmatpush1.bf16.msra.mxu0 0
    %317 = vmatprep.subr.bf16.mxu0 0
    %318 = vmatpush1.bf16.msra.mxu0 0
    %319 = vmatprep.subr.bf16.mxu0 0
    %320 = vmatpush1.bf16.msra.mxu0 0
    %321 = vmatprep.subr.bf16.mxu0 0
    %322 = vmatpush1.bf16.msra.mxu0 0
    %323 = vmatprep.subr.bf16.mxu0 0
    %324 = vmatpush1.bf16.msra.mxu0 0
    %325 = vmatprep.mubr.bf16.mxu0 0
    %326 = vmatmul.mubr.bf16.gmra.mrb[0].mxu0 %v232
    %v327 = vpop.f32.mrb[0].mxu0
    %v328 = vadd.f32 %v279, %v327
    %v329 = vpop.f32.mrb[0].mxu0
    %v330 = vpop.f32.mrb[0].mxu0
    %v331 = vadd.f32 %v279, %v330
    %v332 = vpop.f32.mrb[0].mxu0
    %333 = vdwg.mxu0
    %v335 = vlaneseq
    %v336 = vshrl.u32 %v335, 7
    %v337 = vsub.s32 0, %v336
    %v338 = vrot.slane %v204, %v337
    %v344 = vunpack.c.l.b16 %v188
    %v345 = vunpack.c.l.b16 %v189
    %v346 = vunpack.c.l.b16 %v190
    %v347 = vunpack.c.l.b16 %v191
    %v348 = vpack.c.b16 %v345, %v344
    %v349 = vpack.c.b16 %v347, %v346
    %352 = vmatprep.subr.bf16.mxu0 0
    %353 = vmatpush1.bf16.msra.mxu0 %v348
    %354 = vmatprep.subr.bf16.mxu0 0
    %355 = vmatpush1.bf16.msra.mxu0 %v349
    %356 = vmatprep.subr.bf16.mxu0 0
    %357 = vmatpush1.bf16.msra.mxu0 0
    %358 = vmatprep.subr.bf16.mxu0 0
    %359 = vmatpush1.bf16.msra.mxu0 0
    %360 = vmatprep.subr.bf16.mxu0 0
    %361 = vmatpush1.bf16.msra.mxu0 0
    %362 = vmatprep.subr.bf16.mxu0 0
    %363 = vmatpush1.bf16.msra.mxu0 0
    %364 = vmatprep.subr.bf16.mxu0 0
    %365 = vmatpush1.bf16.msra.mxu0 0
    %366 = vmatprep.subr.bf16.mxu0 0
    %367 = vmatpush1.bf16.msra.mxu0 0
    %368 = vmatprep.subr.bf16.mxu0 0
    %369 = vmatpush1.bf16.msra.mxu0 0
    %370 = vmatprep.subr.bf16.mxu0 0
    %371 = vmatpush1.bf16.msra.mxu0 0
    %372 = vmatprep.subr.bf16.mxu0 0
    %373 = vmatpush1.bf16.msra.mxu0 0
    %374 = vmatprep.subr.bf16.mxu0 0
    %375 = vmatpush1.bf16.msra.mxu0 0
    %376 = vmatprep.subr.bf16.mxu0 0
    %377 = vmatpush1.bf16.msra.mxu0 0
    %378 = vmatprep.subr.bf16.mxu0 0
    %379 = vmatpush1.bf16.msra.mxu0 0
    %380 = vmatprep.subr.bf16.mxu0 0
    %381 = vmatpush1.bf16.msra.mxu0 0
    %382 = vmatprep.subr.bf16.mxu0 0
    %383 = vmatpush1.bf16.msra.mxu0 0
    %384 = vmatprep.mubr.bf16.mxu0 0
    %385 = vmatmul.mubr.bf16.gmra.mrb[0].mxu0 %v232
    %v386 = vpop.f32.mrb[0].mxu0
    %v387 = vadd.f32 %v338, %v386
    %v388 = vpop.f32.mrb[0].mxu0
    %v389 = vpop.f32.mrb[0].mxu0
    %v390 = vadd.f32 %v338, %v389
    %v391 = vpop.f32.mrb[0].mxu0
    %392 = vdwg.mxu0
    %v393 = vpack.c.bf16 %v272, %v269
    %v394 = vpack.c.bf16 %v331, %v328
    %vm395 = vcmask 64512
    %v397 = vsel %vm395, %v393, 0
    %v400 = vsel %vm395, %v394, 0
    %402 = vmatprep.subr.bf16.mxu0 0
    %403 = vmatpush1.bf16.xpose.msra.mxu0 %v400
    %404 = vmatprep.subr.bf16.mxu0 0
    %405 = vmatpush1.bf16.xpose.msra.mxu0 0
    %406 = vmatprep.subr.bf16.mxu0 0
    %407 = vmatpush1.bf16.xpose.msra.mxu0 0
    %408 = vmatprep.subr.bf16.mxu0 0
    %409 = vmatpush1.bf16.xpose.msra.mxu0 0
    %410 = vmatprep.subr.bf16.mxu0 0
    %411 = vmatpush1.bf16.xpose.msra.mxu0 0
    %412 = vmatprep.subr.bf16.mxu0 0
    %413 = vmatpush1.bf16.xpose.msra.mxu0 0
    %414 = vmatprep.subr.bf16.mxu0 0
    %415 = vmatpush1.bf16.xpose.msra.mxu0 0
    %416 = vmatprep.subr.bf16.mxu0 0
    %417 = vmatpush1.bf16.xpose.msra.mxu0 0
    %418 = vmatprep.subr.bf16.mxu0 0
    %419 = vmatpush1.bf16.xpose.msra.mxu0 0
    %420 = vmatprep.subr.bf16.mxu0 0
    %421 = vmatpush1.bf16.xpose.msra.mxu0 0
    %422 = vmatprep.subr.bf16.mxu0 0
    %423 = vmatpush1.bf16.xpose.msra.mxu0 0
    %424 = vmatprep.subr.bf16.mxu0 0
    %425 = vmatpush1.bf16.xpose.msra.mxu0 0
    %426 = vmatprep.subr.bf16.mxu0 0
    %427 = vmatpush1.bf16.xpose.msra.mxu0 0
    %428 = vmatprep.subr.bf16.mxu0 0
    %429 = vmatpush1.bf16.xpose.msra.mxu0 0
    %430 = vmatprep.subr.bf16.mxu0 0
    %431 = vmatpush1.bf16.xpose.msra.mxu0 0
    %432 = vmatprep.subr.bf16.mxu0 0
    %433 = vmatpush1.bf16.xpose.msra.mxu0 0
    %434 = vmatprep.mubr.bf16.mxu0 0
    %435 = vmatmul.mubr.bf16.gmra.mrb[0].mxu0 %v397
    %v436 = vpop.f32.mrb[0].mxu0
    %v437 = vadd.f32 %v138, %v436
    %v438 = vpop.f32.mrb[0].mxu0
    %v439 = vpop.f32.mrb[0].mxu0
    %v440 = vadd.f32 %v139, %v439
    %v441 = vpop.f32.mrb[0].mxu0
    %442 = vdwg.mxu0
    %vm443 = vcmask 130048
    %v444 = vsel %vm443, %v437, -inf
    %445 = vmax.xlane.f32.xlu0 %v444
    %v446 = vpop.xlane.xlu0 %445
    %v447 = vsel %vm443, %v440, -inf
    %448 = vmax.xlane.f32.xlu0 %v447
    %v449 = vpop.xlane.xlu0 %448
    %v450 = vsub.f32 %v437, %v446
    %v451 = vsub.f32 %v440, %v449
    %v452 = vmul.f32 %v450, 1.442695
    %v453 = vpow.pop %v452
    %v454 = vmul.f32 %v451, 1.442695
    %v455 = vpow.pop %v454
    %v456 = vsel %vm443, %v453, 0.0
    %457 = vadd.xlane.f32.xlu0 %v456
    %v458 = vpop.xlane.xlu0 %457
    %v459 = vsel %vm443, %v455, 0.0
    %460 = vadd.xlane.f32.xlu0 %v459
    %v461 = vpop.xlane.xlu0 %460
    %v462 = vrcp.pop %v458
    %v463 = vrcp.pop %v461
    %v464 = vmul.f32 %v453, %v462
    %v465 = vmul.f32 %v455, %v463
    %v466 = vpack.c.bf16 %v465, %v464
    %v467 = vpack.c.bf16 %v390, %v387
    %v469 = vsel %vm443, %v466, 0
    %471 = vmatprep.subr.bf16.mxu0 0
    %472 = vmatpush1.bf16.msra.mxu0 %v467
    %473 = vmatprep.subr.bf16.mxu0 0
    %474 = vmatpush1.bf16.msra.mxu0 0
    %475 = vmatprep.subr.bf16.mxu0 0
    %476 = vmatpush1.bf16.msra.mxu0 0
    %477 = vmatprep.subr.bf16.mxu0 0
    %478 = vmatpush1.bf16.msra.mxu0 0
    %479 = vmatprep.subr.bf16.mxu0 0
    %480 = vmatpush1.bf16.msra.mxu0 0
    %481 = vmatprep.subr.bf16.mxu0 0
    %482 = vmatpush1.bf16.msra.mxu0 0
    %483 = vmatprep.subr.bf16.mxu0 0
    %484 = vmatpush1.bf16.msra.mxu0 0
    %485 = vmatprep.subr.bf16.mxu0 0
    %486 = vmatpush1.bf16.msra.mxu0 0
    %487 = vmatprep.subr.bf16.mxu0 0
    %488 = vmatpush1.bf16.msra.mxu0 0
    %489 = vmatprep.subr.bf16.mxu0 0
    %490 = vmatpush1.bf16.msra.mxu0 0
    %491 = vmatprep.subr.bf16.mxu0 0
    %492 = vmatpush1.bf16.msra.mxu0 0
    %493 = vmatprep.subr.bf16.mxu0 0
    %494 = vmatpush1.bf16.msra.mxu0 0
    %495 = vmatprep.subr.bf16.mxu0 0
    %496 = vmatpush1.bf16.msra.mxu0 0
    %497 = vmatprep.subr.bf16.mxu0 0
    %498 = vmatpush1.bf16.msra.mxu0 0
    %499 = vmatprep.subr.bf16.mxu0 0
    %500 = vmatpush1.bf16.msra.mxu0 0
    %501 = vmatprep.subr.bf16.mxu0 0
    %502 = vmatpush1.bf16.msra.mxu0 0
    %503 = vmatprep.mubr.bf16.mxu0 0
    %504 = vmatmul.mubr.bf16.gmra.mrb[0].mxu0 %v469
    %v505 = vpop.f32.mrb[0].mxu0
    %v506 = vadd.f32 0.0, %v505
    %v507 = vpop.f32.mrb[0].mxu0
    %v508 = vpop.f32.mrb[0].mxu0
    %v509 = vadd.f32 0.0, %v508
    %v510 = vpop.f32.mrb[0].mxu0
    %511 = vdwg.mxu0
    %v512 = vpack.c.bf16 %v509, %v506
    %v514 = vlaneseq
    %v515 = vshrl.u32 %v514, 7
    %v516 = vsub.s32 0, %v515
    %v517 = vrot.slane %v165, %v516
    %v523 = vunpack.c.l.b16 %v152
    %v524 = vunpack.c.l.b16 %v153
    %v525 = vunpack.c.l.b16 %v154
    %v526 = vunpack.c.l.b16 %v155
    %v527 = vpack.c.b16 %v524, %v523
    %v528 = vpack.c.b16 %v526, %v525
    %531 = vmatprep.subr.bf16.mxu0 0
    %532 = vmatpush1.bf16.msra.mxu0 %v527
    %533 = vmatprep.subr.bf16.mxu0 0
    %534 = vmatpush1.bf16.msra.mxu0 %v528
    %535 = vmatprep.subr.bf16.mxu0 0
    %536 = vmatpush1.bf16.msra.mxu0 0
    %537 = vmatprep.subr.bf16.mxu0 0
    %538 = vmatpush1.bf16.msra.mxu0 0
    %539 = vmatprep.subr.bf16.mxu0 0
    %540 = vmatpush1.bf16.msra.mxu0 0
    %541 = vmatprep.subr.bf16.mxu0 0
    %542 = vmatpush1.bf16.msra.mxu0 0
    %543 = vmatprep.subr.bf16.mxu0 0
    %544 = vmatpush1.bf16.msra.mxu0 0
    %545 = vmatprep.subr.bf16.mxu0 0
    %546 = vmatpush1.bf16.msra.mxu0 0
    %547 = vmatprep.subr.bf16.mxu0 0
    %548 = vmatpush1.bf16.msra.mxu0 0
    %549 = vmatprep.subr.bf16.mxu0 0
    %550 = vmatpush1.bf16.msra.mxu0 0
    %551 = vmatprep.subr.bf16.mxu0 0
    %552 = vmatpush1.bf16.msra.mxu0 0
    %553 = vmatprep.subr.bf16.mxu0 0
    %554 = vmatpush1.bf16.msra.mxu0 0
    %555 = vmatprep.subr.bf16.mxu0 0
    %556 = vmatpush1.bf16.msra.mxu0 0
    %557 = vmatprep.subr.bf16.mxu0 0
    %558 = vmatpush1.bf16.msra.mxu0 0
    %559 = vmatprep.subr.bf16.mxu0 0
    %560 = vmatpush1.bf16.msra.mxu0 0
    %561 = vmatprep.subr.bf16.mxu0 0
    %562 = vmatpush1.bf16.msra.mxu0 0
    %563 = vmatprep.mubr.bf16.mxu0 0
    %564 = vmatmul.mubr.bf16.gmra.mrb[0].mxu0 %v232
    %v565 = vpop.f32.mrb[0].mxu0
    %v566 = vadd.f32 %v517, %v565
    %v567 = vpop.f32.mrb[0].mxu0
    %v568 = vpop.f32.mrb[0].mxu0
    %v569 = vadd.f32 %v517, %v568
    %v570 = vpop.f32.mrb[0].mxu0
    %571 = vdwg.mxu0
    %v573 = vlaneseq
    %v574 = vshrl.u32 %v573, 7
    %v575 = vsub.s32 0, %v574
    %v576 = vrot.slane %v185, %v575
    %v582 = vunpack.c.l.b16 %v172
    %v583 = vunpack.c.l.b16 %v173
    %v584 = vunpack.c.l.b16 %v174
    %v585 = vunpack.c.l.b16 %v175
    %v586 = vpack.c.b16 %v583, %v582
    %v587 = vpack.c.b16 %v585, %v584
    %590 = vmatprep.subr.bf16.mxu0 0
    %591 = vmatpush1.bf16.msra.mxu0 %v586
    %592 = vmatprep.subr.bf16.mxu0 0
    %593 = vmatpush1.bf16.msra.mxu0 %v587
    %594 = vmatprep.subr.bf16.mxu0 0
    %595 = vmatpush1.bf16.msra.mxu0 0
    %596 = vmatprep.subr.bf16.mxu0 0
    %597 = vmatpush1.bf16.msra.mxu0 0
    %598 = vmatprep.subr.bf16.mxu0 0
    %599 = vmatpush1.bf16.msra.mxu0 0
    %600 = vmatprep.subr.bf16.mxu0 0
    %601 = vmatpush1.bf16.msra.mxu0 0
    %602 = vmatprep.subr.bf16.mxu0 0
    %603 = vmatpush1.bf16.msra.mxu0 0
    %604 = vmatprep.subr.bf16.mxu0 0
    %605 = vmatpush1.bf16.msra.mxu0 0
    %606 = vmatprep.subr.bf16.mxu0 0
    %607 = vmatpush1.bf16.msra.mxu0 0
    %608 = vmatprep.subr.bf16.mxu0 0
    %609 = vmatpush1.bf16.msra.mxu0 0
    %610 = vmatprep.subr.bf16.mxu0 0
    %611 = vmatpush1.bf16.msra.mxu0 0
    %612 = vmatprep.subr.bf16.mxu0 0
    %613 = vmatpush1.bf16.msra.mxu0 0
    %614 = vmatprep.subr.bf16.mxu0 0
    %615 = vmatpush1.bf16.msra.mxu0 0
    %616 = vmatprep.subr.bf16.mxu0 0
    %617 = vmatpush1.bf16.msra.mxu0 0
    %618 = vmatprep.subr.bf16.mxu0 0
    %619 = vmatpush1.bf16.msra.mxu0 0
    %620 = vmatprep.subr.bf16.mxu0 0
    %621 = vmatpush1.bf16.msra.mxu0 0
    %622 = vmatprep.mubr.bf16.mxu0 0
    %623 = vmatmul.mubr.bf16.gmra.mrb[0].mxu0 %v232
    %v624 = vpop.f32.mrb[0].mxu0
    %v625 = vadd.f32 %v576, %v624
    %v626 = vpop.f32.mrb[0].mxu0
    %v627 = vpop.f32.mrb[0].mxu0
    %v628 = vadd.f32 %v576, %v627
    %v629 = vpop.f32.mrb[0].mxu0
    %630 = vdwg.mxu0
    %v632 = vlaneseq
    %v633 = vshrl.u32 %v632, 7
    %v634 = vsub.s32 0, %v633
    %v635 = vrot.slane %v205, %v634
    %v641 = vunpack.c.l.b16 %v192
    %v642 = vunpack.c.l.b16 %v193
    %v643 = vunpack.c.l.b16 %v194
    %v644 = vunpack.c.l.b16 %v195
    %v645 = vpack.c.b16 %v642, %v641
    %v646 = vpack.c.b16 %v644, %v643
    %649 = vmatprep.subr.bf16.mxu0 0
    %650 = vmatpush1.bf16.msra.mxu0 %v645
    %651 = vmatprep.subr.bf16.mxu0 0
    %652 = vmatpush1.bf16.msra.mxu0 %v646
    %653 = vmatprep.subr.bf16.mxu0 0
    %654 = vmatpush1.bf16.msra.mxu0 0
    %655 = vmatprep.subr.bf16.mxu0 0
    %656 = vmatpush1.bf16.msra.mxu0 0
    %657 = vmatprep.subr.bf16.mxu0 0
    %658 = vmatpush1.bf16.msra.mxu0 0
    %659 = vmatprep.subr.bf16.mxu0 0
    %660 = vmatpush1.bf16.msra.mxu0 0
    %661 = vmatprep.subr.bf16.mxu0 0
    %662 = vmatpush1.bf16.msra.mxu0 0
    %663 = vmatprep.subr.bf16.mxu0 0
    %664 = vmatpush1.bf16.msra.mxu0 0
    %665 = vmatprep.subr.bf16.mxu0 0
    %666 = vmatpush1.bf16.msra.mxu0 0
    %667 = vmatprep.subr.bf16.mxu0 0
    %668 = vmatpush1.bf16.msra.mxu0 0
    %669 = vmatprep.subr.bf16.mxu0 0
    %670 = vmatpush1.bf16.msra.mxu0 0
    %671 = vmatprep.subr.bf16.mxu0 0
    %672 = vmatpush1.bf16.msra.mxu0 0
    %673 = vmatprep.subr.bf16.mxu0 0
    %674 = vmatpush1.bf16.msra.mxu0 0
    %675 = vmatprep.subr.bf16.mxu0 0
    %676 = vmatpush1.bf16.msra.mxu0 0
    %677 = vmatprep.subr.bf16.mxu0 0
    %678 = vmatpush1.bf16.msra.mxu0 0
    %679 = vmatprep.subr.bf16.mxu0 0
    %680 = vmatpush1.bf16.msra.mxu0 0
    %681 = vmatprep.mubr.bf16.mxu0 0
    %682 = vmatmul.mubr.bf16.gmra.mrb[0].mxu0 %v232
    %v683 = vpop.f32.mrb[0].mxu0
    %v684 = vadd.f32 %v635, %v683
    %v685 = vpop.f32.mrb[0].mxu0
    %v686 = vpop.f32.mrb[0].mxu0
    %v687 = vadd.f32 %v635, %v686
    %v688 = vpop.f32.mrb[0].mxu0
    %689 = vdwg.mxu0
    %v690 = vpack.c.bf16 %v569, %v566
    %v691 = vpack.c.bf16 %v628, %v625
    %v693 = vsel %vm395, %v690, 0
    %v696 = vsel %vm395, %v691, 0
    %698 = vmatprep.subr.bf16.mxu0 0
    %699 = vmatpush1.bf16.xpose.msra.mxu0 %v696
    %700 = vmatprep.subr.bf16.mxu0 0
    %701 = vmatpush1.bf16.xpose.msra.mxu0 0
    %702 = vmatprep.subr.bf16.mxu0 0
    %703 = vmatpush1.bf16.xpose.msra.mxu0 0
    %704 = vmatprep.subr.bf16.mxu0 0
    %705 = vmatpush1.bf16.xpose.msra.mxu0 0
    %706 = vmatprep.subr.bf16.mxu0 0
    %707 = vmatpush1.bf16.xpose.msra.mxu0 0
    %708 = vmatprep.subr.bf16.mxu0 0
    %709 = vmatpush1.bf16.xpose.msra.mxu0 0
    %710 = vmatprep.subr.bf16.mxu0 0
    %711 = vmatpush1.bf16.xpose.msra.mxu0 0
    %712 = vmatprep.subr.bf16.mxu0 0
    %713 = vmatpush1.bf16.xpose.msra.mxu0 0
    %714 = vmatprep.subr.bf16.mxu0 0
    %715 = vmatpush1.bf16.xpose.msra.mxu0 0
    %716 = vmatprep.subr.bf16.mxu0 0
    %717 = vmatpush1.bf16.xpose.msra.mxu0 0
    %718 = vmatprep.subr.bf16.mxu0 0
    %719 = vmatpush1.bf16.xpose.msra.mxu0 0
    %720 = vmatprep.subr.bf16.mxu0 0
    %721 = vmatpush1.bf16.xpose.msra.mxu0 0
    %722 = vmatprep.subr.bf16.mxu0 0
    %723 = vmatpush1.bf16.xpose.msra.mxu0 0
    %724 = vmatprep.subr.bf16.mxu0 0
    %725 = vmatpush1.bf16.xpose.msra.mxu0 0
    %726 = vmatprep.subr.bf16.mxu0 0
    %727 = vmatpush1.bf16.xpose.msra.mxu0 0
    %728 = vmatprep.subr.bf16.mxu0 0
    %729 = vmatpush1.bf16.xpose.msra.mxu0 0
    %730 = vmatprep.mubr.bf16.mxu0 0
    %731 = vmatmul.mubr.bf16.gmra.mrb[0].mxu0 %v693
    %v732 = vpop.f32.mrb[0].mxu0
    %v733 = vadd.f32 %v138, %v732
    %v734 = vpop.f32.mrb[0].mxu0
    %v735 = vpop.f32.mrb[0].mxu0
    %v736 = vadd.f32 %v139, %v735
    %v737 = vpop.f32.mrb[0].mxu0
    %738 = vdwg.mxu0
    %v739 = vsel %vm443, %v733, -inf
    %740 = vmax.xlane.f32.xlu0 %v739
    %v741 = vpop.xlane.xlu0 %740
    %v742 = vsel %vm443, %v736, -inf
    %743 = vmax.xlane.f32.xlu0 %v742
    %v744 = vpop.xlane.xlu0 %743
    %v745 = vsub.f32 %v733, %v741
    %v746 = vsub.f32 %v736, %v744
    %v747 = vmul.f32 %v745, 1.442695
    %v748 = vpow.pop %v747
    %v749 = vmul.f32 %v746, 1.442695
    %v750 = vpow.pop %v749
    %v751 = vsel %vm443, %v748, 0.0
    %752 = vadd.xlane.f32.xlu0 %v751
    %v753 = vpop.xlane.xlu0 %752
    %v754 = vsel %vm443, %v750, 0.0
    %755 = vadd.xlane.f32.xlu0 %v754
    %v756 = vpop.xlane.xlu0 %755
    %v757 = vrcp.pop %v753
    %v758 = vrcp.pop %v756
    %v759 = vmul.f32 %v748, %v757
    %v760 = vmul.f32 %v750, %v758
    %v761 = vpack.c.bf16 %v760, %v759
    %v762 = vpack.c.bf16 %v687, %v684
    %v764 = vsel %vm443, %v761, 0
    %766 = vmatprep.subr.bf16.mxu0 0
    %767 = vmatpush1.bf16.msra.mxu0 %v762
    %768 = vmatprep.subr.bf16.mxu0 0
    %769 = vmatpush1.bf16.msra.mxu0 0
    %770 = vmatprep.subr.bf16.mxu0 0
    %771 = vmatpush1.bf16.msra.mxu0 0
    %772 = vmatprep.subr.bf16.mxu0 0
    %773 = vmatpush1.bf16.msra.mxu0 0
    %774 = vmatprep.subr.bf16.mxu0 0
    %775 = vmatpush1.bf16.msra.mxu0 0
    %776 = vmatprep.subr.bf16.mxu0 0
    %777 = vmatpush1.bf16.msra.mxu0 0
    %778 = vmatprep.subr.bf16.mxu0 0
    %779 = vmatpush1.bf16.msra.mxu0 0
    %780 = vmatprep.subr.bf16.mxu0 0
    %781 = vmatpush1.bf16.msra.mxu0 0
    %782 = vmatprep.subr.bf16.mxu0 0
    %783 = vmatpush1.bf16.msra.mxu0 0
    %784 = vmatprep.subr.bf16.mxu0 0
    %785 = vmatpush1.bf16.msra.mxu0 0
    %786 = vmatprep.subr.bf16.mxu0 0
    %787 = vmatpush1.bf16.msra.mxu0 0
    %788 = vmatprep.subr.bf16.mxu0 0
    %789 = vmatpush1.bf16.msra.mxu0 0
    %790 = vmatprep.subr.bf16.mxu0 0
    %791 = vmatpush1.bf16.msra.mxu0 0
    %792 = vmatprep.subr.bf16.mxu0 0
    %793 = vmatpush1.bf16.msra.mxu0 0
    %794 = vmatprep.subr.bf16.mxu0 0
    %795 = vmatpush1.bf16.msra.mxu0 0
    %796 = vmatprep.subr.bf16.mxu0 0
    %797 = vmatpush1.bf16.msra.mxu0 0
    %798 = vmatprep.mubr.bf16.mxu0 0
    %799 = vmatmul.mubr.bf16.gmra.mrb[0].mxu0 %v764
    %v800 = vpop.f32.mrb[0].mxu0
    %v801 = vadd.f32 0.0, %v800
    %v802 = vpop.f32.mrb[0].mxu0
    %v803 = vpop.f32.mrb[0].mxu0
    %v804 = vadd.f32 0.0, %v803
    %v805 = vpop.f32.mrb[0].mxu0
    %806 = vdwg.mxu0
    %v807 = vpack.c.bf16 %v804, %v801
    %v809 = vsel %vm395, %v807, 0
    %vm811 = vcmask 1043456
    %v813 = vsel %vm811, %v209, 0
    %815 = vmatprep.subr.bf16.mxu0 0
    %816 = vmatpush1.bf16.msra.mxu0 %v813
    %817 = vmatprep.subr.bf16.mxu0 0
    %818 = vmatpush1.bf16.msra.mxu0 0
    %819 = vmatprep.subr.bf16.mxu0 0
    %820 = vmatpush1.bf16.msra.mxu0 0
    %821 = vmatprep.subr.bf16.mxu0 0
    %822 = vmatpush1.bf16.msra.mxu0 0
    %823 = vmatprep.subr.bf16.mxu0 0
    %824 = vmatpush1.bf16.msra.mxu0 0
    %825 = vmatprep.subr.bf16.mxu0 0
    %826 = vmatpush1.bf16.msra.mxu0 0
    %827 = vmatprep.subr.bf16.mxu0 0
    %828 = vmatpush1.bf16.msra.mxu0 0
    %829 = vmatprep.subr.bf16.mxu0 0
    %830 = vmatpush1.bf16.msra.mxu0 0
    %831 = vmatprep.subr.bf16.mxu0 0
    %832 = vmatpush1.bf16.msra.mxu0 0
    %833 = vmatprep.subr.bf16.mxu0 0
    %834 = vmatpush1.bf16.msra.mxu0 0
    %835 = vmatprep.subr.bf16.mxu0 0
    %836 = vmatpush1.bf16.msra.mxu0 0
    %837 = vmatprep.subr.bf16.mxu0 0
    %838 = vmatpush1.bf16.msra.mxu0 0
    %839 = vmatprep.subr.bf16.mxu0 0
    %840 = vmatpush1.bf16.msra.mxu0 0
    %841 = vmatprep.subr.bf16.mxu0 0
    %842 = vmatpush1.bf16.msra.mxu0 0
    %843 = vmatprep.subr.bf16.mxu0 0
    %844 = vmatpush1.bf16.msra.mxu0 0
    %845 = vmatprep.subr.bf16.mxu0 0
    %846 = vmatpush1.bf16.msra.mxu0 0
    %847 = vmatprep.mubr.bf16.mxu0 0
    %848 = vmatmul.mubr.bf16.gmra.mrb[0].mxu0 %v809
    %v849 = vpop.f32.mrb[0].mxu0
    %v850 = vadd.f32 0.0, %v849
    %v851 = vpop.f32.mrb[0].mxu0
    %v852 = vpop.f32.mrb[0].mxu0
    %v853 = vadd.f32 0.0, %v852
    %v854 = vpop.f32.mrb[0].mxu0
    %855 = vdwg.mxu0
    %v857 = vsel %vm395, %v512, 0
    %v860 = vsel %vm811, %v208, 0
    %862 = vmatprep.subr.bf16.mxu0 0
    %863 = vmatpush1.bf16.msra.mxu0 %v860
    %864 = vmatprep.subr.bf16.mxu0 0
    %865 = vmatpush1.bf16.msra.mxu0 0
    %866 = vmatprep.subr.bf16.mxu0 0
    %867 = vmatpush1.bf16.msra.mxu0 0
    %868 = vmatprep.subr.bf16.mxu0 0
    %869 = vmatpush1.bf16.msra.mxu0 0
    %870 = vmatprep.subr.bf16.mxu0 0
    %871 = vmatpush1.bf16.msra.mxu0 0
    %872 = vmatprep.subr.bf16.mxu0 0
    %873 = vmatpush1.bf16.msra.mxu0 0
    %874 = vmatprep.subr.bf16.mxu0 0
    %875 = vmatpush1.bf16.msra.mxu0 0
    %876 = vmatprep.subr.bf16.mxu0 0
    %877 = vmatpush1.bf16.msra.mxu0 0
    %878 = vmatprep.subr.bf16.mxu0 0
    %879 = vmatpush1.bf16.msra.mxu0 0
    %880 = vmatprep.subr.bf16.mxu0 0
    %881 = vmatpush1.bf16.msra.mxu0 0
    %882 = vmatprep.subr.bf16.mxu0 0
    %883 = vmatpush1.bf16.msra.mxu0 0
    %884 = vmatprep.subr.bf16.mxu0 0
    %885 = vmatpush1.bf16.msra.mxu0 0
    %886 = vmatprep.subr.bf16.mxu0 0
    %887 = vmatpush1.bf16.msra.mxu0 0
    %888 = vmatprep.subr.bf16.mxu0 0
    %889 = vmatpush1.bf16.msra.mxu0 0
    %890 = vmatprep.subr.bf16.mxu0 0
    %891 = vmatpush1.bf16.msra.mxu0 0
    %892 = vmatprep.subr.bf16.mxu0 0
    %893 = vmatpush1.bf16.msra.mxu0 0
    %894 = vmatprep.mubr.bf16.mxu0 0
    %895 = vmatmul.mubr.bf16.gmra.mrb[0].mxu0 %v857
    %v896 = vpop.f32.mrb[0].mxu0
    %v897 = vadd.f32 %v850, %v896
    %v898 = vpop.f32.mrb[0].mxu0
    %v899 = vpop.f32.mrb[0].mxu0
    %v900 = vadd.f32 %v853, %v899
    %v901 = vpop.f32.mrb[0].mxu0
    %902 = vdwg.mxu0
    %v904 = vlaneseq
    %v905 = vshrl.u32 %v904, 7
    %v906 = vsub.s32 0, %v905
    %v907 = vrot.slane %v166, %v906
    %v913 = vunpack.c.l.b16 %v156
    %v914 = vunpack.c.l.b16 %v157
    %v915 = vunpack.c.l.b16 %v158
    %v916 = vunpack.c.l.b16 %v159
    %v917 = vpack.c.b16 %v914, %v913
    %v918 = vpack.c.b16 %v916, %v915
    %921 = vmatprep.subr.bf16.mxu0 0
    %922 = vmatpush1.bf16.msra.mxu0 %v917
    %923 = vmatprep.subr.bf16.mxu0 0
    %924 = vmatpush1.bf16.msra.mxu0 %v918
    %925 = vmatprep.subr.bf16.mxu0 0
    %926 = vmatpush1.bf16.msra.mxu0 0
    %927 = vmatprep.subr.bf16.mxu0 0
    %928 = vmatpush1.bf16.msra.mxu0 0
    %929 = vmatprep.subr.bf16.mxu0 0
    %930 = vmatpush1.bf16.msra.mxu0 0
    %931 = vmatprep.subr.bf16.mxu0 0
    %932 = vmatpush1.bf16.msra.mxu0 0
    %933 = vmatprep.subr.bf16.mxu0 0
    %934 = vmatpush1.bf16.msra.mxu0 0
    %935 = vmatprep.subr.bf16.mxu0 0
    %936 = vmatpush1.bf16.msra.mxu0 0
    %937 = vmatprep.subr.bf16.mxu0 0
    %938 = vmatpush1.bf16.msra.mxu0 0
    %939 = vmatprep.subr.bf16.mxu0 0
    %940 = vmatpush1.bf16.msra.mxu0 0
    %941 = vmatprep.subr.bf16.mxu0 0
    %942 = vmatpush1.bf16.msra.mxu0 0
    %943 = vmatprep.subr.bf16.mxu0 0
    %944 = vmatpush1.bf16.msra.mxu0 0
    %945 = vmatprep.subr.bf16.mxu0 0
    %946 = vmatpush1.bf16.msra.mxu0 0
    %947 = vmatprep.subr.bf16.mxu0 0
    %948 = vmatpush1.bf16.msra.mxu0 0
    %949 = vmatprep.subr.bf16.mxu0 0
    %950 = vmatpush1.bf16.msra.mxu0 0
    %951 = vmatprep.subr.bf16.mxu0 0
    %952 = vmatpush1.bf16.msra.mxu0 0
    %953 = vmatprep.mubr.bf16.mxu0 0
    %954 = vmatmul.mubr.bf16.gmra.mrb[0].mxu0 %v232
    %v955 = vpop.f32.mrb[0].mxu0
    %v956 = vadd.f32 %v907, %v955
    %v957 = vpop.f32.mrb[0].mxu0
    %v958 = vpop.f32.mrb[0].mxu0
    %v959 = vadd.f32 %v907, %v958
    %v960 = vpop.f32.mrb[0].mxu0
    %961 = vdwg.mxu0
    %v963 = vlaneseq
    %v964 = vshrl.u32 %v963, 7
    %v965 = vsub.s32 0, %v964
    %v966 = vrot.slane %v186, %v965
    %v972 = vunpack.c.l.b16 %v176
    %v973 = vunpack.c.l.b16 %v177
    %v974 = vunpack.c.l.b16 %v178
    %v975 = vunpack.c.l.b16 %v179
    %v976 = vpack.c.b16 %v973, %v972
    %v977 = vpack.c.b16 %v975, %v974
    %980 = vmatprep.subr.bf16.mxu0 0
    %981 = vmatpush1.bf16.msra.mxu0 %v976
    %982 = vmatprep.subr.bf16.mxu0 0
    %983 = vmatpush1.bf16.msra.mxu0 %v977
    %984 = vmatprep.subr.bf16.mxu0 0
    %985 = vmatpush1.bf16.msra.mxu0 0
    %986 = vmatprep.subr.bf16.mxu0 0
    %987 = vmatpush1.bf16.msra.mxu0 0
    %988 = vmatprep.subr.bf16.mxu0 0
    %989 = vmatpush1.bf16.msra.mxu0 0
    %990 = vmatprep.subr.bf16.mxu0 0
    %991 = vmatpush1.bf16.msra.mxu0 0
    %992 = vmatprep.subr.bf16.mxu0 0
    %993 = vmatpush1.bf16.msra.mxu0 0
    %994 = vmatprep.subr.bf16.mxu0 0
    %995 = vmatpush1.bf16.msra.mxu0 0
    %996 = vmatprep.subr.bf16.mxu0 0
    %997 = vmatpush1.bf16.msra.mxu0 0
    %998 = vmatprep.subr.bf16.mxu0 0
    %999 = vmatpush1.bf16.msra.mxu0 0
    %1000 = vmatprep.subr.bf16.mxu0 0
    %1001 = vmatpush1.bf16.msra.mxu0 0
    %1002 = vmatprep.subr.bf16.mxu0 0
    %1003 = vmatpush1.bf16.msra.mxu0 0
    %1004 = vmatprep.subr.bf16.mxu0 0
    %1005 = vmatpush1.bf16.msra.mxu0 0
    %1006 = vmatprep.subr.bf16.mxu0 0
    %1007 = vmatpush1.bf16.msra.mxu0 0
    %1008 = vmatprep.subr.bf16.mxu0 0
    %1009 = vmatpush1.bf16.msra.mxu0 0
    %1010 = vmatprep.subr.bf16.mxu0 0
    %1011 = vmatpush1.bf16.msra.mxu0 0
    %1012 = vmatprep.mubr.bf16.mxu0 0
    %1013 = vmatmul.mubr.bf16.gmra.mrb[0].mxu0 %v232
    %v1014 = vpop.f32.mrb[0].mxu0
    %v1015 = vadd.f32 %v966, %v1014
    %v1016 = vpop.f32.mrb[0].mxu0
    %v1017 = vpop.f32.mrb[0].mxu0
    %v1018 = vadd.f32 %v966, %v1017
    %v1019 = vpop.f32.mrb[0].mxu0
    %1020 = vdwg.mxu0
    %v1022 = vlaneseq
    %v1023 = vshrl.u32 %v1022, 7
    %v1024 = vsub.s32 0, %v1023
    %v1025 = vrot.slane %v206, %v1024
    %v1031 = vunpack.c.l.b16 %v196
    %v1032 = vunpack.c.l.b16 %v197
    %v1033 = vunpack.c.l.b16 %v198
    %v1034 = vunpack.c.l.b16 %v199
    %v1035 = vpack.c.b16 %v1032, %v1031
    %v1036 = vpack.c.b16 %v1034, %v1033
    %1039 = vmatprep.subr.bf16.mxu0 0
    %1040 = vmatpush1.bf16.msra.mxu0 %v1035
    %1041 = vmatprep.subr.bf16.mxu0 0
    %1042 = vmatpush1.bf16.msra.mxu0 %v1036
    %1043 = vmatprep.subr.bf16.mxu0 0
    %1044 = vmatpush1.bf16.msra.mxu0 0
    %1045 = vmatprep.subr.bf16.mxu0 0
    %1046 = vmatpush1.bf16.msra.mxu0 0
    %1047 = vmatprep.subr.bf16.mxu0 0
    %1048 = vmatpush1.bf16.msra.mxu0 0
    %1049 = vmatprep.subr.bf16.mxu0 0
    %1050 = vmatpush1.bf16.msra.mxu0 0
    %1051 = vmatprep.subr.bf16.mxu0 0
    %1052 = vmatpush1.bf16.msra.mxu0 0
    %1053 = vmatprep.subr.bf16.mxu0 0
    %1054 = vmatpush1.bf16.msra.mxu0 0
    %1055 = vmatprep.subr.bf16.mxu0 0
    %1056 = vmatpush1.bf16.msra.mxu0 0
    %1057 = vmatprep.subr.bf16.mxu0 0
    %1058 = vmatpush1.bf16.msra.mxu0 0
    %1059 = vmatprep.subr.bf16.mxu0 0
    %1060 = vmatpush1.bf16.msra.mxu0 0
    %1061 = vmatprep.subr.bf16.mxu0 0
    %1062 = vmatpush1.bf16.msra.mxu0 0
    %1063 = vmatprep.subr.bf16.mxu0 0
    %1064 = vmatpush1.bf16.msra.mxu0 0
    %1065 = vmatprep.subr.bf16.mxu0 0
    %1066 = vmatpush1.bf16.msra.mxu0 0
    %1067 = vmatprep.subr.bf16.mxu0 0
    %1068 = vmatpush1.bf16.msra.mxu0 0
    %1069 = vmatprep.subr.bf16.mxu0 0
    %1070 = vmatpush1.bf16.msra.mxu0 0
    %1071 = vmatprep.mubr.bf16.mxu0 0
    %1072 = vmatmul.mubr.bf16.gmra.mrb[0].mxu0 %v232
    %v1073 = vpop.f32.mrb[0].mxu0
    %v1074 = vadd.f32 %v1025, %v1073
    %v1075 = vpop.f32.mrb[0].mxu0
    %v1076 = vpop.f32.mrb[0].mxu0
    %v1077 = vadd.f32 %v1025, %v1076
    %v1078 = vpop.f32.mrb[0].mxu0
    %1079 = vdwg.mxu0
    %v1080 = vpack.c.bf16 %v959, %v956
    %v1081 = vpack.c.bf16 %v1018, %v1015
    %v1083 = vsel %vm395, %v1080, 0
    %v1086 = vsel %vm395, %v1081, 0
    %1088 = vmatprep.subr.bf16.mxu0 0
    %1089 = vmatpush1.bf16.xpose.msra.mxu0 %v1086
    %1090 = vmatprep.subr.bf16.mxu0 0
    %1091 = vmatpush1.bf16.xpose.msra.mxu0 0
    %1092 = vmatprep.subr.bf16.mxu0 0
    %1093 = vmatpush1.bf16.xpose.msra.mxu0 0
    %1094 = vmatprep.subr.bf16.mxu0 0
    %1095 = vmatpush1.bf16.xpose.msra.mxu0 0
    %1096 = vmatprep.subr.bf16.mxu0 0
    %1097 = vmatpush1.bf16.xpose.msra.mxu0 0
    %1098 = vmatprep.subr.bf16.mxu0 0
    %1099 = vmatpush1.bf16.xpose.msra.mxu0 0
    %1100 = vmatprep.subr.bf16.mxu0 0
    %1101 = vmatpush1.bf16.xpose.msra.mxu0 0
    %1102 = vmatprep.subr.bf16.mxu0 0
    %1103 = vmatpush1.bf16.xpose.msra.mxu0 0
    %1104 = vmatprep.subr.bf16.mxu0 0
    %1105 = vmatpush1.bf16.xpose.msra.mxu0 0
    %1106 = vmatprep.subr.bf16.mxu0 0
    %1107 = vmatpush1.bf16.xpose.msra.mxu0 0
    %1108 = vmatprep.subr.bf16.mxu0 0
    %1109 = vmatpush1.bf16.xpose.msra.mxu0 0
    %1110 = vmatprep.subr.bf16.mxu0 0
    %1111 = vmatpush1.bf16.xpose.msra.mxu0 0
    %1112 = vmatprep.subr.bf16.mxu0 0
    %1113 = vmatpush1.bf16.xpose.msra.mxu0 0
    %1114 = vmatprep.subr.bf16.mxu0 0
    %1115 = vmatpush1.bf16.xpose.msra.mxu0 0
    %1116 = vmatprep.subr.bf16.mxu0 0
    %1117 = vmatpush1.bf16.xpose.msra.mxu0 0
    %1118 = vmatprep.subr.bf16.mxu0 0
    %1119 = vmatpush1.bf16.xpose.msra.mxu0 0
    %1120 = vmatprep.mubr.bf16.mxu0 0
    %1121 = vmatmul.mubr.bf16.gmra.mrb[0].mxu0 %v1083
    %v1122 = vpop.f32.mrb[0].mxu0
    %v1123 = vadd.f32 %v138, %v1122
    %v1124 = vpop.f32.mrb[0].mxu0
    %v1125 = vpop.f32.mrb[0].mxu0
    %v1126 = vadd.f32 %v139, %v1125
    %v1127 = vpop.f32.mrb[0].mxu0
    %1128 = vdwg.mxu0
    %v1129 = vsel %vm443, %v1123, -inf
    %1130 = vmax.xlane.f32.xlu0 %v1129
    %v1131 = vpop.xlane.xlu0 %1130
    %v1132 = vsel %vm443, %v1126, -inf
    %1133 = vmax.xlane.f32.xlu0 %v1132
    %v1134 = vpop.xlane.xlu0 %1133
    %v1135 = vsub.f32 %v1123, %v1131
    %v1136 = vsub.f32 %v1126, %v1134
    %v1137 = vmul.f32 %v1135, 1.442695
    %v1138 = vpow.pop %v1137
    %v1139 = vmul.f32 %v1136, 1.442695
    %v1140 = vpow.pop %v1139
    %v1141 = vsel %vm443, %v1138, 0.0
    %1142 = vadd.xlane.f32.xlu0 %v1141
    %v1143 = vpop.xlane.xlu0 %1142
    %v1144 = vsel %vm443, %v1140, 0.0
    %1145 = vadd.xlane.f32.xlu0 %v1144
    %v1146 = vpop.xlane.xlu0 %1145
    %v1147 = vrcp.pop %v1143
    %v1148 = vrcp.pop %v1146
    %v1149 = vmul.f32 %v1138, %v1147
    %v1150 = vmul.f32 %v1140, %v1148
    %v1151 = vpack.c.bf16 %v1150, %v1149
    %v1152 = vpack.c.bf16 %v1077, %v1074
    %v1154 = vsel %vm443, %v1151, 0
    %1156 = vmatprep.subr.bf16.mxu0 0
    %1157 = vmatpush1.bf16.msra.mxu0 %v1152
    %1158 = vmatprep.subr.bf16.mxu0 0
    %1159 = vmatpush1.bf16.msra.mxu0 0
    %1160 = vmatprep.subr.bf16.mxu0 0
    %1161 = vmatpush1.bf16.msra.mxu0 0
    %1162 = vmatprep.subr.bf16.mxu0 0
    %1163 = vmatpush1.bf16.msra.mxu0 0
    %1164 = vmatprep.subr.bf16.mxu0 0
    %1165 = vmatpush1.bf16.msra.mxu0 0
    %1166 = vmatprep.subr.bf16.mxu0 0
    %1167 = vmatpush1.bf16.msra.mxu0 0
    %1168 = vmatprep.subr.bf16.mxu0 0
    %1169 = vmatpush1.bf16.msra.mxu0 0
    %1170 = vmatprep.subr.bf16.mxu0 0
    %1171 = vmatpush1.bf16.msra.mxu0 0
    %1172 = vmatprep.subr.bf16.mxu0 0
    %1173 = vmatpush1.bf16.msra.mxu0 0
    %1174 = vmatprep.subr.bf16.mxu0 0
    %1175 = vmatpush1.bf16.msra.mxu0 0
    %1176 = vmatprep.subr.bf16.mxu0 0
    %1177 = vmatpush1.bf16.msra.mxu0 0
    %1178 = vmatprep.subr.bf16.mxu0 0
    %1179 = vmatpush1.bf16.msra.mxu0 0
    %1180 = vmatprep.subr.bf16.mxu0 0
    %1181 = vmatpush1.bf16.msra.mxu0 0
    %1182 = vmatprep.subr.bf16.mxu0 0
    %1183 = vmatpush1.bf16.msra.mxu0 0
    %1184 = vmatprep.subr.bf16.mxu0 0
    %1185 = vmatpush1.bf16.msra.mxu0 0
    %1186 = vmatprep.subr.bf16.mxu0 0
    %1187 = vmatpush1.bf16.msra.mxu0 0
    %1188 = vmatprep.mubr.bf16.mxu0 0
    %1189 = vmatmul.mubr.bf16.gmra.mrb[0].mxu0 %v1154
    %v1190 = vpop.f32.mrb[0].mxu0
    %v1191 = vadd.f32 0.0, %v1190
    %v1192 = vpop.f32.mrb[0].mxu0
    %v1193 = vpop.f32.mrb[0].mxu0
    %v1194 = vadd.f32 0.0, %v1193
    %v1195 = vpop.f32.mrb[0].mxu0
    %1196 = vdwg.mxu0
    %v1197 = vpack.c.bf16 %v1194, %v1191
    %v1199 = vsel %vm395, %v1197, 0
    %v1202 = vsel %vm811, %v210, 0
    %1204 = vmatprep.subr.bf16.mxu0 0
    %1205 = vmatpush1.bf16.msra.mxu0 %v1202
    %1206 = vmatprep.subr.bf16.mxu0 0
    %1207 = vmatpush1.bf16.msra.mxu0 0
    %1208 = vmatprep.subr.bf16.mxu0 0
    %1209 = vmatpush1.bf16.msra.mxu0 0
    %1210 = vmatprep.subr.bf16.mxu0 0
    %1211 = vmatpush1.bf16.msra.mxu0 0
    %1212 = vmatprep.subr.bf16.mxu0 0
    %1213 = vmatpush1.bf16.msra.mxu0 0
    %1214 = vmatprep.subr.bf16.mxu0 0
    %1215 = vmatpush1.bf16.msra.mxu0 0
    %1216 = vmatprep.subr.bf16.mxu0 0
    %1217 = vmatpush1.bf16.msra.mxu0 0
    %1218 = vmatprep.subr.bf16.mxu0 0
    %1219 = vmatpush1.bf16.msra.mxu0 0
    %1220 = vmatprep.subr.bf16.mxu0 0
    %1221 = vmatpush1.bf16.msra.mxu0 0
    %1222 = vmatprep.subr.bf16.mxu0 0
    %1223 = vmatpush1.bf16.msra.mxu0 0
    %1224 = vmatprep.subr.bf16.mxu0 0
    %1225 = vmatpush1.bf16.msra.mxu0 0
    %1226 = vmatprep.subr.bf16.mxu0 0
    %1227 = vmatpush1.bf16.msra.mxu0 0
    %1228 = vmatprep.subr.bf16.mxu0 0
    %1229 = vmatpush1.bf16.msra.mxu0 0
    %1230 = vmatprep.subr.bf16.mxu0 0
    %1231 = vmatpush1.bf16.msra.mxu0 0
    %1232 = vmatprep.subr.bf16.mxu0 0
    %1233 = vmatpush1.bf16.msra.mxu0 0
    %1234 = vmatprep.subr.bf16.mxu0 0
    %1235 = vmatpush1.bf16.msra.mxu0 0
    %1236 = vmatprep.mubr.bf16.mxu0 0
    %1237 = vmatmul.mubr.bf16.gmra.mrb[0].mxu0 %v1199
    %v1238 = vpop.f32.mrb[0].mxu0
    %v1239 = vadd.f32 0.0, %v1238
    %v1240 = vpop.f32.mrb[0].mxu0
    %v1241 = vpop.f32.mrb[0].mxu0
    %v1242 = vadd.f32 0.0, %v1241
    %v1243 = vpop.f32.mrb[0].mxu0
    %1244 = vdwg.mxu0
    %v1245 = vadd.f32 %v897, %v1239
    %v1246 = vadd.f32 %v900, %v1242
    %v1248 = vlaneseq
    %v1249 = vshrl.u32 %v1248, 7
    %v1250 = vsub.s32 0, %v1249
    %v1251 = vrot.slane %v167, %v1250
    %v1257 = vunpack.c.l.b16 %v160
    %v1258 = vunpack.c.l.b16 %v161
    %v1259 = vunpack.c.l.b16 %v162
    %v1260 = vunpack.c.l.b16 %v163
    %v1261 = vpack.c.b16 %v1258, %v1257
    %v1262 = vpack.c.b16 %v1260, %v1259
    %1265 = vmatprep.subr.bf16.mxu0 0
    %1266 = vmatpush1.bf16.msra.mxu0 %v1261
    %1267 = vmatprep.subr.bf16.mxu0 0
    %1268 = vmatpush1.bf16.msra.mxu0 %v1262
    %1269 = vmatprep.subr.bf16.mxu0 0
    %1270 = vmatpush1.bf16.msra.mxu0 0
    %1271 = vmatprep.subr.bf16.mxu0 0
    %1272 = vmatpush1.bf16.msra.mxu0 0
    %1273 = vmatprep.subr.bf16.mxu0 0
    %1274 = vmatpush1.bf16.msra.mxu0 0
    %1275 = vmatprep.subr.bf16.mxu0 0
    %1276 = vmatpush1.bf16.msra.mxu0 0
    %1277 = vmatprep.subr.bf16.mxu0 0
    %1278 = vmatpush1.bf16.msra.mxu0 0
    %1279 = vmatprep.subr.bf16.mxu0 0
    %1280 = vmatpush1.bf16.msra.mxu0 0
    %1281 = vmatprep.subr.bf16.mxu0 0
    %1282 = vmatpush1.bf16.msra.mxu0 0
    %1283 = vmatprep.subr.bf16.mxu0 0
    %1284 = vmatpush1.bf16.msra.mxu0 0
    %1285 = vmatprep.subr.bf16.mxu0 0
    %1286 = vmatpush1.bf16.msra.mxu0 0
    %1287 = vmatprep.subr.bf16.mxu0 0
    %1288 = vmatpush1.bf16.msra.mxu0 0
    %1289 = vmatprep.subr.bf16.mxu0 0
    %1290 = vmatpush1.bf16.msra.mxu0 0
    %1291 = vmatprep.subr.bf16.mxu0 0
    %1292 = vmatpush1.bf16.msra.mxu0 0
    %1293 = vmatprep.subr.bf16.mxu0 0
    %1294 = vmatpush1.bf16.msra.mxu0 0
    %1295 = vmatprep.subr.bf16.mxu0 0
    %1296 = vmatpush1.bf16.msra.mxu0 0
    %1297 = vmatprep.mubr.bf16.mxu0 0
    %1298 = vmatmul.mubr.bf16.gmra.mrb[0].mxu0 %v232
    %v1299 = vpop.f32.mrb[0].mxu0
    %v1300 = vadd.f32 %v1251, %v1299
    %v1301 = vpop.f32.mrb[0].mxu0
    %v1302 = vpop.f32.mrb[0].mxu0
    %v1303 = vadd.f32 %v1251, %v1302
    %v1304 = vpop.f32.mrb[0].mxu0
    %1305 = vdwg.mxu0
    %v1307 = vlaneseq
    %v1308 = vshrl.u32 %v1307, 7
    %v1309 = vsub.s32 0, %v1308
    %v1310 = vrot.slane %v187, %v1309
    %v1316 = vunpack.c.l.b16 %v180
    %v1317 = vunpack.c.l.b16 %v181
    %v1318 = vunpack.c.l.b16 %v182
    %v1319 = vunpack.c.l.b16 %v183
    %v1320 = vpack.c.b16 %v1317, %v1316
    %v1321 = vpack.c.b16 %v1319, %v1318
    %1324 = vmatprep.subr.bf16.mxu0 0
    %1325 = vmatpush1.bf16.msra.mxu0 %v1320
    %1326 = vmatprep.subr.bf16.mxu0 0
    %1327 = vmatpush1.bf16.msra.mxu0 %v1321
    %1328 = vmatprep.subr.bf16.mxu0 0
    %1329 = vmatpush1.bf16.msra.mxu0 0
    %1330 = vmatprep.subr.bf16.mxu0 0
    %1331 = vmatpush1.bf16.msra.mxu0 0
    %1332 = vmatprep.subr.bf16.mxu0 0
    %1333 = vmatpush1.bf16.msra.mxu0 0
    %1334 = vmatprep.subr.bf16.mxu0 0
    %1335 = vmatpush1.bf16.msra.mxu0 0
    %1336 = vmatprep.subr.bf16.mxu0 0
    %1337 = vmatpush1.bf16.msra.mxu0 0
    %1338 = vmatprep.subr.bf16.mxu0 0
    %1339 = vmatpush1.bf16.msra.mxu0 0
    %1340 = vmatprep.subr.bf16.mxu0 0
    %1341 = vmatpush1.bf16.msra.mxu0 0
    %1342 = vmatprep.subr.bf16.mxu0 0
    %1343 = vmatpush1.bf16.msra.mxu0 0
    %1344 = vmatprep.subr.bf16.mxu0 0
    %1345 = vmatpush1.bf16.msra.mxu0 0
    %1346 = vmatprep.subr.bf16.mxu0 0
    %1347 = vmatpush1.bf16.msra.mxu0 0
    %1348 = vmatprep.subr.bf16.mxu0 0
    %1349 = vmatpush1.bf16.msra.mxu0 0
    %1350 = vmatprep.subr.bf16.mxu0 0
    %1351 = vmatpush1.bf16.msra.mxu0 0
    %1352 = vmatprep.subr.bf16.mxu0 0
    %1353 = vmatpush1.bf16.msra.mxu0 0
    %1354 = vmatprep.subr.bf16.mxu0 0
    %1355 = vmatpush1.bf16.msra.mxu0 0
    %1356 = vmatprep.mubr.bf16.mxu0 0
    %1357 = vmatmul.mubr.bf16.gmra.mrb[0].mxu0 %v232
    %v1358 = vpop.f32.mrb[0].mxu0
    %v1359 = vadd.f32 %v1310, %v1358
    %v1360 = vpop.f32.mrb[0].mxu0
    %v1361 = vpop.f32.mrb[0].mxu0
    %v1362 = vadd.f32 %v1310, %v1361
    %v1363 = vpop.f32.mrb[0].mxu0
    %1364 = vdwg.mxu0
    %v1366 = vlaneseq
    %v1367 = vshrl.u32 %v1366, 7
    %v1368 = vsub.s32 0, %v1367
    %v1369 = vrot.slane %v207, %v1368
    %v1375 = vunpack.c.l.b16 %v200
    %v1376 = vunpack.c.l.b16 %v201
    %v1377 = vunpack.c.l.b16 %v202
    %v1378 = vunpack.c.l.b16 %v203
    %v1379 = vpack.c.b16 %v1376, %v1375
    %v1380 = vpack.c.b16 %v1378, %v1377
    %1383 = vmatprep.subr.bf16.mxu0 0
    %1384 = vmatpush1.bf16.msra.mxu0 %v1379
    %1385 = vmatprep.subr.bf16.mxu0 0
    %1386 = vmatpush1.bf16.msra.mxu0 %v1380
    %1387 = vmatprep.subr.bf16.mxu0 0
    %1388 = vmatpush1.bf16.msra.mxu0 0
    %1389 = vmatprep.subr.bf16.mxu0 0
    %1390 = vmatpush1.bf16.msra.mxu0 0
    %1391 = vmatprep.subr.bf16.mxu0 0
    %1392 = vmatpush1.bf16.msra.mxu0 0
    %1393 = vmatprep.subr.bf16.mxu0 0
    %1394 = vmatpush1.bf16.msra.mxu0 0
    %1395 = vmatprep.subr.bf16.mxu0 0
    %1396 = vmatpush1.bf16.msra.mxu0 0
    %1397 = vmatprep.subr.bf16.mxu0 0
    %1398 = vmatpush1.bf16.msra.mxu0 0
    %1399 = vmatprep.subr.bf16.mxu0 0
    %1400 = vmatpush1.bf16.msra.mxu0 0
    %1401 = vmatprep.subr.bf16.mxu0 0
    %1402 = vmatpush1.bf16.msra.mxu0 0
    %1403 = vmatprep.subr.bf16.mxu0 0
    %1404 = vmatpush1.bf16.msra.mxu0 0
    %1405 = vmatprep.subr.bf16.mxu0 0
    %1406 = vmatpush1.bf16.msra.mxu0 0
    %1407 = vmatprep.subr.bf16.mxu0 0
    %1408 = vmatpush1.bf16.msra.mxu0 0
    %1409 = vmatprep.subr.bf16.mxu0 0
    %1410 = vmatpush1.bf16.msra.mxu0 0
    %1411 = vmatprep.subr.bf16.mxu0 0
    %1412 = vmatpush1.bf16.msra.mxu0 0
    %1413 = vmatprep.subr.bf16.mxu0 0
    %1414 = vmatpush1.bf16.msra.mxu0 0
    %1415 = vmatprep.mubr.bf16.mxu0 0
    %1416 = vmatmul.mubr.bf16.gmra.mrb[0].mxu0 %v232
    %v1417 = vpop.f32.mrb[0].mxu0
    %v1418 = vadd.f32 %v1369, %v1417
    %v1419 = vpop.f32.mrb[0].mxu0
    %v1420 = vpop.f32.mrb[0].mxu0
    %v1421 = vadd.f32 %v1369, %v1420
    %v1422 = vpop.f32.mrb[0].mxu0
    %1423 = vdwg.mxu0
    %v1424 = vpack.c.bf16 %v1303, %v1300
    %v1425 = vpack.c.bf16 %v1362, %v1359
    %v1427 = vsel %vm395, %v1424, 0
    %v1430 = vsel %vm395, %v1425, 0
    %1432 = vmatprep.subr.bf16.mxu0 0
    %1433 = vmatpush1.bf16.xpose.msra.mxu0 %v1430
    %1434 = vmatprep.subr.bf16.mxu0 0
    %1435 = vmatpush1.bf16.xpose.msra.mxu0 0
    %1436 = vmatprep.subr.bf16.mxu0 0
    %1437 = vmatpush1.bf16.xpose.msra.mxu0 0
    %1438 = vmatprep.subr.bf16.mxu0 0
    %1439 = vmatpush1.bf16.xpose.msra.mxu0 0
    %1440 = vmatprep.subr.bf16.mxu0 0
    %1441 = vmatpush1.bf16.xpose.msra.mxu0 0
    %1442 = vmatprep.subr.bf16.mxu0 0
    %1443 = vmatpush1.bf16.xpose.msra.mxu0 0
    %1444 = vmatprep.subr.bf16.mxu0 0
    %1445 = vmatpush1.bf16.xpose.msra.mxu0 0
    %1446 = vmatprep.subr.bf16.mxu0 0
    %1447 = vmatpush1.bf16.xpose.msra.mxu0 0
    %1448 = vmatprep.subr.bf16.mxu0 0
    %1449 = vmatpush1.bf16.xpose.msra.mxu0 0
    %1450 = vmatprep.subr.bf16.mxu0 0
    %1451 = vmatpush1.bf16.xpose.msra.mxu0 0
    %1452 = vmatprep.subr.bf16.mxu0 0
    %1453 = vmatpush1.bf16.xpose.msra.mxu0 0
    %1454 = vmatprep.subr.bf16.mxu0 0
    %1455 = vmatpush1.bf16.xpose.msra.mxu0 0
    %1456 = vmatprep.subr.bf16.mxu0 0
    %1457 = vmatpush1.bf16.xpose.msra.mxu0 0
    %1458 = vmatprep.subr.bf16.mxu0 0
    %1459 = vmatpush1.bf16.xpose.msra.mxu0 0
    %1460 = vmatprep.subr.bf16.mxu0 0
    %1461 = vmatpush1.bf16.xpose.msra.mxu0 0
    %1462 = vmatprep.subr.bf16.mxu0 0
    %1463 = vmatpush1.bf16.xpose.msra.mxu0 0
    %1464 = vmatprep.mubr.bf16.mxu0 0
    %1465 = vmatmul.mubr.bf16.gmra.mrb[0].mxu0 %v1427
    %v1466 = vpop.f32.mrb[0].mxu0
    %v1467 = vadd.f32 %v138, %v1466
    %v1468 = vpop.f32.mrb[0].mxu0
    %v1469 = vpop.f32.mrb[0].mxu0
    %v1470 = vadd.f32 %v139, %v1469
    %v1471 = vpop.f32.mrb[0].mxu0
    %1472 = vdwg.mxu0
    %v1473 = vsel %vm443, %v1467, -inf
    %1474 = vmax.xlane.f32.xlu0 %v1473
    %v1475 = vpop.xlane.xlu0 %1474
    %v1476 = vsel %vm443, %v1470, -inf
    %1477 = vmax.xlane.f32.xlu0 %v1476
    %v1478 = vpop.xlane.xlu0 %1477
    %v1479 = vsub.f32 %v1467, %v1475
    %v1480 = vsub.f32 %v1470, %v1478
    %v1481 = vmul.f32 %v1479, 1.442695
    %v1482 = vpow.pop %v1481
    %v1483 = vmul.f32 %v1480, 1.442695
    %v1484 = vpow.pop %v1483
    %v1485 = vsel %vm443, %v1482, 0.0
    %1486 = vadd.xlane.f32.xlu0 %v1485
    %v1487 = vpop.xlane.xlu0 %1486
    %v1488 = vsel %vm443, %v1484, 0.0
    %1489 = vadd.xlane.f32.xlu0 %v1488
    %v1490 = vpop.xlane.xlu0 %1489
    %v1491 = vrcp.pop %v1487
    %v1492 = vrcp.pop %v1490
    %v1493 = vmul.f32 %v1482, %v1491
    %v1494 = vmul.f32 %v1484, %v1492
    %v1495 = vpack.c.bf16 %v1494, %v1493
    %v1496 = vpack.c.bf16 %v1421, %v1418
    %v1498 = vsel %vm443, %v1495, 0
    %1500 = vmatprep.subr.bf16.mxu0 0
    %1501 = vmatpush1.bf16.msra.mxu0 %v1496
    %1502 = vmatprep.subr.bf16.mxu0 0
    %1503 = vmatpush1.bf16.msra.mxu0 0
    %1504 = vmatprep.subr.bf16.mxu0 0
    %1505 = vmatpush1.bf16.msra.mxu0 0
    %1506 = vmatprep.subr.bf16.mxu0 0
    %1507 = vmatpush1.bf16.msra.mxu0 0
    %1508 = vmatprep.subr.bf16.mxu0 0
    %1509 = vmatpush1.bf16.msra.mxu0 0
    %1510 = vmatprep.subr.bf16.mxu0 0
    %1511 = vmatpush1.bf16.msra.mxu0 0
    %1512 = vmatprep.subr.bf16.mxu0 0
    %1513 = vmatpush1.bf16.msra.mxu0 0
    %1514 = vmatprep.subr.bf16.mxu0 0
    %1515 = vmatpush1.bf16.msra.mxu0 0
    %1516 = vmatprep.subr.bf16.mxu0 0
    %1517 = vmatpush1.bf16.msra.mxu0 0
    %1518 = vmatprep.subr.bf16.mxu0 0
    %1519 = vmatpush1.bf16.msra.mxu0 0
    %1520 = vmatprep.subr.bf16.mxu0 0
    %1521 = vmatpush1.bf16.msra.mxu0 0
    %1522 = vmatprep.subr.bf16.mxu0 0
    %1523 = vmatpush1.bf16.msra.mxu0 0
    %1524 = vmatprep.subr.bf16.mxu0 0
    %1525 = vmatpush1.bf16.msra.mxu0 0
    %1526 = vmatprep.subr.bf16.mxu0 0
    %1527 = vmatpush1.bf16.msra.mxu0 0
    %1528 = vmatprep.subr.bf16.mxu0 0
    %1529 = vmatpush1.bf16.msra.mxu0 0
    %1530 = vmatprep.subr.bf16.mxu0 0
    %1531 = vmatpush1.bf16.msra.mxu0 0
    %1532 = vmatprep.mubr.bf16.mxu0 0
    %1533 = vmatmul.mubr.bf16.gmra.mrb[0].mxu0 %v1498
    %v1534 = vpop.f32.mrb[0].mxu0
    %v1535 = vadd.f32 0.0, %v1534
    %v1536 = vpop.f32.mrb[0].mxu0
    %v1537 = vpop.f32.mrb[0].mxu0
    %v1538 = vadd.f32 0.0, %v1537
    %v1539 = vpop.f32.mrb[0].mxu0
    %1540 = vdwg.mxu0
    %v1541 = vpack.c.bf16 %v1538, %v1535
    %v1543 = vsel %vm395, %v1541, 0
    %v1546 = vsel %vm811, %v211, 0
    %1548 = vmatprep.subr.bf16.mxu0 0
    %1549 = vmatpush1.bf16.msra.mxu0 %v1546
    %1550 = vmatprep.subr.bf16.mxu0 0
    %1551 = vmatpush1.bf16.msra.mxu0 0
    %1552 = vmatprep.subr.bf16.mxu0 0
    %1553 = vmatpush1.bf16.msra.mxu0 0
    %1554 = vmatprep.subr.bf16.mxu0 0
    %1555 = vmatpush1.bf16.msra.mxu0 0
    %1556 = vmatprep.subr.bf16.mxu0 0
    %1557 = vmatpush1.bf16.msra.mxu0 0
    %1558 = vmatprep.subr.bf16.mxu0 0
    %1559 = vmatpush1.bf16.msra.mxu0 0
    %1560 = vmatprep.subr.bf16.mxu0 0
    %1561 = vmatpush1.bf16.msra.mxu0 0
    %1562 = vmatprep.subr.bf16.mxu0 0
    %1563 = vmatpush1.bf16.msra.mxu0 0
    %1564 = vmatprep.subr.bf16.mxu0 0
    %1565 = vmatpush1.bf16.msra.mxu0 0
    %1566 = vmatprep.subr.bf16.mxu0 0
    %1567 = vmatpush1.bf16.msra.mxu0 0
    %1568 = vmatprep.subr.bf16.mxu0 0
    %1569 = vmatpush1.bf16.msra.mxu0 0
    %1570 = vmatprep.subr.bf16.mxu0 0
    %1571 = vmatpush1.bf16.msra.mxu0 0
    %1572 = vmatprep.subr.bf16.mxu0 0
    %1573 = vmatpush1.bf16.msra.mxu0 0
    %1574 = vmatprep.subr.bf16.mxu0 0
    %1575 = vmatpush1.bf16.msra.mxu0 0
    %1576 = vmatprep.subr.bf16.mxu0 0
    %1577 = vmatpush1.bf16.msra.mxu0 0
    %1578 = vmatprep.subr.bf16.mxu0 0
    %1579 = vmatpush1.bf16.msra.mxu0 0
    %1580 = vmatprep.mubr.bf16.mxu0 0
    %1581 = vmatmul.mubr.bf16.gmra.mrb[0].mxu0 %v1543
    %v1582 = vpop.f32.mrb[0].mxu0
    %v1583 = vadd.f32 0.0, %v1582
    %v1584 = vpop.f32.mrb[0].mxu0
    %v1585 = vpop.f32.mrb[0].mxu0
    %v1586 = vadd.f32 0.0, %v1585
    %v1587 = vpop.f32.mrb[0].mxu0
    %1588 = vdwg.mxu0
    %v1589 = vadd.f32 %v1245, %v1583
    %v1590 = vadd.f32 %v1246, %v1586
    %v1591 = vld [vmem:[%s23] sm:$0x1]
    %v1593 = vlaneseq
    %v1594 = vshrl.u32 %v1593, 7
    %v1595 = vsub.s32 0, %v1594
    %v1596 = vrot.slane %v1591, %v1595
    %v1598 = vadd.f32 %v1589, %v1596
    %v1599 = vadd.f32 %v1590, %v1596
    %v1600 = vadd.f32 %v1598, %v136
    %v1601 = vadd.f32 %v1599, %v137
    %v1602 = vld [vmem:[%s49] sm:$0x1]
    %v1603 = vld [vmem:[%s51] sm:$0x1]
    %v1604 = vsel %vm230, %v1600, 0.0
    %1605 = vadd.xlane.f32.xlu0 %v1604
    %v1606 = vpop.xlane.xlu0 %1605
    %v1607 = vsel %vm230, %v1601, 0.0
    %1608 = vadd.xlane.f32.xlu0 %v1607
    %v1609 = vpop.xlane.xlu0 %1608
    %v1610 = vrcp.pop 32.0
    %v1611 = vmul.f32 %v1606, %v1610
    %v1612 = vmul.f32 %v1609, %v1610
    %v1613 = vsub.f32 %v1600, %v1611
    %v1614 = vsub.f32 %v1601, %v1612
    %v1615 = vmul.f32 %v1613, %v1613
    %v1616 = vmul.f32 %v1614, %v1614
    %v1617 = vsel %vm230, %v1615, 0.0
    %1618 = vadd.xlane.f32.xlu0 %v1617
    %v1619 = vpop.xlane.xlu0 %1618
    %v1620 = vsel %vm230, %v1616, 0.0
    %1621 = vadd.xlane.f32.xlu0 %v1620
    %v1622 = vpop.xlane.xlu0 %1621
    %v1623 = vmul.f32 %v1619, %v1610
    %v1624 = vmul.f32 %v1622, %v1610
    %v1625 = vadd.f32 %v1623, 1e-05
    %v1626 = vadd.f32 %v1624, 1e-05
    %v1627 = vrsqrt.pop %v1625
    %v1628 = vrsqrt.pop %v1626
    %v1629 = vmul.f32 %v1613, %v1627
    %v1630 = vmul.f32 %v1614, %v1628
    %v1632 = vlaneseq
    %v1633 = vshrl.u32 %v1632, 7
    %v1634 = vsub.s32 0, %v1633
    %v1635 = vrot.slane %v1602, %v1634
    %v1637 = vmul.f32 %v1629, %v1635
    %v1638 = vmul.f32 %v1630, %v1635
    %v1640 = vlaneseq
    %v1641 = vshrl.u32 %v1640, 7
    %v1642 = vsub.s32 0, %v1641
    %v1643 = vrot.slane %v1603, %v1642
    %v1645 = vadd.f32 %v1637, %v1643
    %v1646 = vadd.f32 %v1638, %v1643
    %v1647 = vpack.c.bf16 %v1646, %v1645
    %v1648 = vld [vmem:[%s25] sm:$0xf]
    %v1649 = vld [vmem:[%s25 + $0x4] sm:$0xf]
    %v1650 = vld [vmem:[%s25 + $0x8] sm:$0xf]
    %v1651 = vld [vmem:[%s25 + $0xc] sm:$0xf]
    %v1652 = vld [vmem:[%s25 + $0x10] sm:$0xf]
    %v1653 = vld [vmem:[%s25 + $0x14] sm:$0xf]
    %v1654 = vld [vmem:[%s25 + $0x18] sm:$0xf]
    %v1655 = vld [vmem:[%s25 + $0x1c] sm:$0xf]
    %v1656 = vld [vmem:[%s25 + $0x20] sm:$0xf]
    %v1657 = vld [vmem:[%s25 + $0x24] sm:$0xf]
    %v1658 = vld [vmem:[%s25 + $0x28] sm:$0xf]
    %v1659 = vld [vmem:[%s25 + $0x2c] sm:$0xf]
    %v1660 = vld [vmem:[%s25 + $0x30] sm:$0xf]
    %v1661 = vld [vmem:[%s25 + $0x34] sm:$0xf]
    %v1662 = vld [vmem:[%s25 + $0x38] sm:$0xf]
    %v1663 = vld [vmem:[%s25 + $0x3c] sm:$0xf]
    %v1664 = vld [vmem:[%s27] sm:$0x1]
    %v1665 = vld [vmem:[%s27 + $0x1] sm:$0x1]
    %v1666 = vld [vmem:[%s27 + $0x2] sm:$0x1]
    %v1667 = vld [vmem:[%s27 + $0x3] sm:$0x1]
    %v1668 = vld [vmem:[%s29] sm:$0xf]
    %v1669 = vld [vmem:[%s29 + $0x4] sm:$0xf]
    %v1670 = vld [vmem:[%s29 + $0x8] sm:$0xf]
    %v1671 = vld [vmem:[%s29 + $0xc] sm:$0xf]
    %v1672 = vld [vmem:[%s29 + $0x10] sm:$0xf]
    %v1673 = vld [vmem:[%s29 + $0x14] sm:$0xf]
    %v1674 = vld [vmem:[%s29 + $0x18] sm:$0xf]
    %v1675 = vld [vmem:[%s29 + $0x1c] sm:$0xf]
    %v1676 = vld [vmem:[%s29 + $0x20] sm:$0xf]
    %v1677 = vld [vmem:[%s29 + $0x24] sm:$0xf]
    %v1678 = vld [vmem:[%s29 + $0x28] sm:$0xf]
    %v1679 = vld [vmem:[%s29 + $0x2c] sm:$0xf]
    %v1680 = vld [vmem:[%s29 + $0x30] sm:$0xf]
    %v1681 = vld [vmem:[%s29 + $0x34] sm:$0xf]
    %v1682 = vld [vmem:[%s29 + $0x38] sm:$0xf]
    %v1683 = vld [vmem:[%s29 + $0x3c] sm:$0xf]
    %v1684 = vld [vmem:[%s31] sm:$0x1]
    %v1685 = vld [vmem:[%s31 + $0x1] sm:$0x1]
    %v1686 = vld [vmem:[%s31 + $0x2] sm:$0x1]
    %v1687 = vld [vmem:[%s31 + $0x3] sm:$0x1]
    %v1688 = vld [vmem:[%s33] sm:$0xf]
    %v1689 = vld [vmem:[%s33 + $0x4] sm:$0xf]
    %v1690 = vld [vmem:[%s33 + $0x8] sm:$0xf]
    %v1691 = vld [vmem:[%s33 + $0xc] sm:$0xf]
    %v1692 = vld [vmem:[%s33 + $0x10] sm:$0xf]
    %v1693 = vld [vmem:[%s33 + $0x14] sm:$0xf]
    %v1694 = vld [vmem:[%s33 + $0x18] sm:$0xf]
    %v1695 = vld [vmem:[%s33 + $0x1c] sm:$0xf]
    %v1696 = vld [vmem:[%s33 + $0x20] sm:$0xf]
    %v1697 = vld [vmem:[%s33 + $0x24] sm:$0xf]
    %v1698 = vld [vmem:[%s33 + $0x28] sm:$0xf]
    %v1699 = vld [vmem:[%s33 + $0x2c] sm:$0xf]
    %v1700 = vld [vmem:[%s33 + $0x30] sm:$0xf]
    %v1701 = vld [vmem:[%s33 + $0x34] sm:$0xf]
    %v1702 = vld [vmem:[%s33 + $0x38] sm:$0xf]
    %v1703 = vld [vmem:[%s33 + $0x3c] sm:$0xf]
    %v1704 = vld [vmem:[%s35] sm:$0x1]
    %v1705 = vld [vmem:[%s35 + $0x1] sm:$0x1]
    %v1706 = vld [vmem:[%s35 + $0x2] sm:$0x1]
    %v1707 = vld [vmem:[%s35 + $0x3] sm:$0x1]
    %v1708 = vld [vmem:[%s37] sm:$0xf]
    %v1709 = vld [vmem:[%s37 + $0x4] sm:$0xf]
    %v1710 = vld [vmem:[%s37 + $0x8] sm:$0xf]
    %v1711 = vld [vmem:[%s37 + $0xc] sm:$0xf]
    %v1713 = vlaneseq
    %v1714 = vshrl.u32 %v1713, 7
    %v1715 = vsub.s32 0, %v1714
    %v1716 = vrot.slane %v1664, %v1715
    %v1722 = vunpack.c.l.b16 %v1648
    %v1723 = vunpack.c.l.b16 %v1649
    %v1724 = vunpack.c.l.b16 %v1650
    %v1725 = vunpack.c.l.b16 %v1651
    %v1726 = vpack.c.b16 %v1723, %v1722
    %v1727 = vpack.c.b16 %v1725, %v1724
    %v1731 = vsel %vm230, %v1647, 0
    %1733 = vmatprep.subr.bf16.mxu0 0
    %1734 = vmatpush1.bf16.msra.mxu0 %v1726
    %1735 = vmatprep.subr.bf16.mxu0 0
    %1736 = vmatpush1.bf16.msra.mxu0 %v1727
    %1737 = vmatprep.subr.bf16.mxu0 0
    %1738 = vmatpush1.bf16.msra.mxu0 0
    %1739 = vmatprep.subr.bf16.mxu0 0
    %1740 = vmatpush1.bf16.msra.mxu0 0
    %1741 = vmatprep.subr.bf16.mxu0 0
    %1742 = vmatpush1.bf16.msra.mxu0 0
    %1743 = vmatprep.subr.bf16.mxu0 0
    %1744 = vmatpush1.bf16.msra.mxu0 0
    %1745 = vmatprep.subr.bf16.mxu0 0
    %1746 = vmatpush1.bf16.msra.mxu0 0
    %1747 = vmatprep.subr.bf16.mxu0 0
    %1748 = vmatpush1.bf16.msra.mxu0 0
    %1749 = vmatprep.subr.bf16.mxu0 0
    %1750 = vmatpush1.bf16.msra.mxu0 0
    %1751 = vmatprep.subr.bf16.mxu0 0
    %1752 = vmatpush1.bf16.msra.mxu0 0
    %1753 = vmatprep.subr.bf16.mxu0 0
    %1754 = vmatpush1.bf16.msra.mxu0 0
    %1755 = vmatprep.subr.bf16.mxu0 0
    %1756 = vmatpush1.bf16.msra.mxu0 0
    %1757 = vmatprep.subr.bf16.mxu0 0
    %1758 = vmatpush1.bf16.msra.mxu0 0
    %1759 = vmatprep.subr.bf16.mxu0 0
    %1760 = vmatpush1.bf16.msra.mxu0 0
    %1761 = vmatprep.subr.bf16.mxu0 0
    %1762 = vmatpush1.bf16.msra.mxu0 0
    %1763 = vmatprep.subr.bf16.mxu0 0
    %1764 = vmatpush1.bf16.msra.mxu0 0
    %1765 = vmatprep.mubr.bf16.mxu0 0
    %1766 = vmatmul.mubr.bf16.gmra.mrb[0].mxu0 %v1731
    %v1767 = vpop.f32.mrb[0].mxu0
    %v1768 = vadd.f32 %v1716, %v1767
    %v1769 = vpop.f32.mrb[0].mxu0
    %v1770 = vpop.f32.mrb[0].mxu0
    %v1771 = vadd.f32 %v1716, %v1770
    %v1772 = vpop.f32.mrb[0].mxu0
    %1773 = vdwg.mxu0
    %v1775 = vlaneseq
    %v1776 = vshrl.u32 %v1775, 7
    %v1777 = vsub.s32 0, %v1776
    %v1778 = vrot.slane %v1684, %v1777
    %v1784 = vunpack.c.l.b16 %v1668
    %v1785 = vunpack.c.l.b16 %v1669
    %v1786 = vunpack.c.l.b16 %v1670
    %v1787 = vunpack.c.l.b16 %v1671
    %v1788 = vpack.c.b16 %v1785, %v1784
    %v1789 = vpack.c.b16 %v1787, %v1786
    %v1793 = vsel %vm230, %v145, 0
    %v1796 = vsel %vm230, %v146, 0
    %1798 = vmatprep.subr.bf16.mxu0 0
    %1799 = vmatpush1.bf16.msra.mxu0 %v1788
    %1800 = vmatprep.subr.bf16.mxu0 0
    %1801 = vmatpush1.bf16.msra.mxu0 %v1789
    %1802 = vmatprep.subr.bf16.mxu0 0
    %1803 = vmatpush1.bf16.msra.mxu0 0
    %1804 = vmatprep.subr.bf16.mxu0 0
    %1805 = vmatpush1.bf16.msra.mxu0 0
    %1806 = vmatprep.subr.bf16.mxu0 0
    %1807 = vmatpush1.bf16.msra.mxu0 0
    %1808 = vmatprep.subr.bf16.mxu0 0
    %1809 = vmatpush1.bf16.msra.mxu0 0
    %1810 = vmatprep.subr.bf16.mxu0 0
    %1811 = vmatpush1.bf16.msra.mxu0 0
    %1812 = vmatprep.subr.bf16.mxu0 0
    %1813 = vmatpush1.bf16.msra.mxu0 0
    %1814 = vmatprep.subr.bf16.mxu0 0
    %1815 = vmatpush1.bf16.msra.mxu0 0
    %1816 = vmatprep.subr.bf16.mxu0 0
    %1817 = vmatpush1.bf16.msra.mxu0 0
    %1818 = vmatprep.subr.bf16.mxu0 0
    %1819 = vmatpush1.bf16.msra.mxu0 0
    %1820 = vmatprep.subr.bf16.mxu0 0
    %1821 = vmatpush1.bf16.msra.mxu0 0
    %1822 = vmatprep.subr.bf16.mxu0 0
    %1823 = vmatpush1.bf16.msra.mxu0 0
    %1824 = vmatprep.subr.bf16.mxu0 0
    %1825 = vmatpush1.bf16.msra.mxu0 0
    %1826 = vmatprep.subr.bf16.mxu0 0
    %1827 = vmatpush1.bf16.msra.mxu0 0
    %1828 = vmatprep.subr.bf16.mxu0 0
    %1829 = vmatpush1.bf16.msra.mxu0 0
    %1830 = vmatprep.mubr.bf16.mxu0 0
    %1831 = vmatmul.mubr.bf16.gmra.mrb[0].mxu0 %v1793
    %v1832 = vpop.f32.mrb[0].mxu0
    %v1833 = vadd.f32 %v1778, %v1832
    %v1834 = vpop.f32.mrb[0].mxu0
    %v1835 = vpop.f32.mrb[0].mxu0
    %v1836 = vadd.f32 %v1778, %v1835
    %v1837 = vpop.f32.mrb[0].mxu0
    %1838 = vmatprep.mubr.bf16.mxu0 0
    %1839 = vmatmul.mubr.bf16.gmra.mrb[0].mxu0 %v1796
    %v1840 = vpop.f32.mrb[0].mxu0
    %v1841 = vadd.f32 %v1778, %v1840
    %v1842 = vpop.f32.mrb[0].mxu0
    %v1843 = vpop.f32.mrb[0].mxu0
    %v1844 = vpop.f32.mrb[0].mxu0
    %1845 = vdwg.mxu0
    %v1847 = vlaneseq
    %v1848 = vshrl.u32 %v1847, 7
    %v1849 = vsub.s32 0, %v1848
    %v1850 = vrot.slane %v1704, %v1849
    %v1856 = vunpack.c.l.b16 %v1688
    %v1857 = vunpack.c.l.b16 %v1689
    %v1858 = vunpack.c.l.b16 %v1690
    %v1859 = vunpack.c.l.b16 %v1691
    %v1860 = vpack.c.b16 %v1857, %v1856
    %v1861 = vpack.c.b16 %v1859, %v1858
    %1864 = vmatprep.subr.bf16.mxu0 0
    %1865 = vmatpush1.bf16.msra.mxu0 %v1860
    %1866 = vmatprep.subr.bf16.mxu0 0
    %1867 = vmatpush1.bf16.msra.mxu0 %v1861
    %1868 = vmatprep.subr.bf16.mxu0 0
    %1869 = vmatpush1.bf16.msra.mxu0 0
    %1870 = vmatprep.subr.bf16.mxu0 0
    %1871 = vmatpush1.bf16.msra.mxu0 0
    %1872 = vmatprep.subr.bf16.mxu0 0
    %1873 = vmatpush1.bf16.msra.mxu0 0
    %1874 = vmatprep.subr.bf16.mxu0 0
    %1875 = vmatpush1.bf16.msra.mxu0 0
    %1876 = vmatprep.subr.bf16.mxu0 0
    %1877 = vmatpush1.bf16.msra.mxu0 0
    %1878 = vmatprep.subr.bf16.mxu0 0
    %1879 = vmatpush1.bf16.msra.mxu0 0
    %1880 = vmatprep.subr.bf16.mxu0 0
    %1881 = vmatpush1.bf16.msra.mxu0 0
    %1882 = vmatprep.subr.bf16.mxu0 0
    %1883 = vmatpush1.bf16.msra.mxu0 0
    %1884 = vmatprep.subr.bf16.mxu0 0
    %1885 = vmatpush1.bf16.msra.mxu0 0
    %1886 = vmatprep.subr.bf16.mxu0 0
    %1887 = vmatpush1.bf16.msra.mxu0 0
    %1888 = vmatprep.subr.bf16.mxu0 0
    %1889 = vmatpush1.bf16.msra.mxu0 0
    %1890 = vmatprep.subr.bf16.mxu0 0
    %1891 = vmatpush1.bf16.msra.mxu0 0
    %1892 = vmatprep.subr.bf16.mxu0 0
    %1893 = vmatpush1.bf16.msra.mxu0 0
    %1894 = vmatprep.subr.bf16.mxu0 0
    %1895 = vmatpush1.bf16.msra.mxu0 0
    %1896 = vmatprep.mubr.bf16.mxu0 0
    %1897 = vmatmul.mubr.bf16.gmra.mrb[0].mxu0 %v1793
    %v1898 = vpop.f32.mrb[0].mxu0
    %v1899 = vadd.f32 %v1850, %v1898
    %v1900 = vpop.f32.mrb[0].mxu0
    %v1901 = vpop.f32.mrb[0].mxu0
    %v1902 = vadd.f32 %v1850, %v1901
    %v1903 = vpop.f32.mrb[0].mxu0
    %1904 = vmatprep.mubr.bf16.mxu0 0
    %1905 = vmatmul.mubr.bf16.gmra.mrb[0].mxu0 %v1796
    %v1906 = vpop.f32.mrb[0].mxu0
    %v1907 = vadd.f32 %v1850, %v1906
    %v1908 = vpop.f32.mrb[0].mxu0
    %v1909 = vpop.f32.mrb[0].mxu0
    %v1910 = vpop.f32.mrb[0].mxu0
    %1911 = vdwg.mxu0
    %v1912 = vpack.c.bf16 %v1771, %v1768
    %v1913 = vpack.c.bf16 %v1836, %v1833
    %v1914 = vpack.c.bf16 %v1841, %v1841
    %v1916 = vsel %vm395, %v1912, 0
    %v1919 = vsel %vm395, %v1913, 0
    %v1922 = vsel %vm395, %v1914, 0
    %1924 = vmatprep.subr.bf16.mxu0 0
    %1925 = vmatpush1.bf16.xpose.msra.mxu0 %v1919
    %1926 = vmatprep.subr.bf16.mxu0 0
    %1927 = vmatpush1.bf16.xpose.msra.mxu0 %v1922
    %1928 = vmatprep.subr.bf16.mxu0 0
    %1929 = vmatpush1.bf16.xpose.msra.mxu0 0
    %1930 = vmatprep.subr.bf16.mxu0 0
    %1931 = vmatpush1.bf16.xpose.msra.mxu0 0
    %1932 = vmatprep.subr.bf16.mxu0 0
    %1933 = vmatpush1.bf16.xpose.msra.mxu0 0
    %1934 = vmatprep.subr.bf16.mxu0 0
    %1935 = vmatpush1.bf16.xpose.msra.mxu0 0
    %1936 = vmatprep.subr.bf16.mxu0 0
    %1937 = vmatpush1.bf16.xpose.msra.mxu0 0
    %1938 = vmatprep.subr.bf16.mxu0 0
    %1939 = vmatpush1.bf16.xpose.msra.mxu0 0
    %1940 = vmatprep.subr.bf16.mxu0 0
    %1941 = vmatpush1.bf16.xpose.msra.mxu0 0
    %1942 = vmatprep.subr.bf16.mxu0 0
    %1943 = vmatpush1.bf16.xpose.msra.mxu0 0
    %1944 = vmatprep.subr.bf16.mxu0 0
    %1945 = vmatpush1.bf16.xpose.msra.mxu0 0
    %1946 = vmatprep.subr.bf16.mxu0 0
    %1947 = vmatpush1.bf16.xpose.msra.mxu0 0
    %1948 = vmatprep.subr.bf16.mxu0 0
    %1949 = vmatpush1.bf16.xpose.msra.mxu0 0
    %1950 = vmatprep.subr.bf16.mxu0 0
    %1951 = vmatpush1.bf16.xpose.msra.mxu0 0
    %1952 = vmatprep.subr.bf16.mxu0 0
    %1953 = vmatpush1.bf16.xpose.msra.mxu0 0
    %1954 = vmatprep.subr.bf16.mxu0 0
    %1955 = vmatpush1.bf16.xpose.msra.mxu0 0
    %1956 = vmatprep.mubr.bf16.mxu0 0
    %1957 = vmatmul.mubr.bf16.gmra.mrb[0].mxu0 %v1916
    %v1958 = vpop.f32.mrb[0].mxu0
    %v1959 = vadd.f32 %v140, %v1958
    %v1960 = vpop.f32.mrb[0].mxu0
    %v1961 = vpop.f32.mrb[0].mxu0
    %v1962 = vadd.f32 %v141, %v1961
    %v1963 = vpop.f32.mrb[0].mxu0
    %1964 = vdwg.mxu0
    %vm1965 = vcmask 162816
    %v1966 = vsel %vm1965, %v1959, -inf
    %1967 = vmax.xlane.f32.xlu0 %v1966
    %v1968 = vpop.xlane.xlu0 %1967
    %v1969 = vsel %vm1965, %v1962, -inf
    %1970 = vmax.xlane.f32.xlu0 %v1969
    %v1971 = vpop.xlane.xlu0 %1970
    %v1972 = vsub.f32 %v1959, %v1968
    %v1973 = vsub.f32 %v1962, %v1971
    %v1974 = vmul.f32 %v1972, 1.442695
    %v1975 = vpow.pop %v1974
    %v1976 = vmul.f32 %v1973, 1.442695
    %v1977 = vpow.pop %v1976
    %v1978 = vsel %vm1965, %v1975, 0.0
    %1979 = vadd.xlane.f32.xlu0 %v1978
    %v1980 = vpop.xlane.xlu0 %1979
    %v1981 = vsel %vm1965, %v1977, 0.0
    %1982 = vadd.xlane.f32.xlu0 %v1981
    %v1983 = vpop.xlane.xlu0 %1982
    %v1984 = vrcp.pop %v1980
    %v1985 = vrcp.pop %v1983
    %v1986 = vmul.f32 %v1975, %v1984
    %v1987 = vmul.f32 %v1977, %v1985
    %v1988 = vpack.c.bf16 %v1987, %v1986
    %v1989 = vpack.c.bf16 %v1902, %v1899
    %v1990 = vpack.c.bf16 %v1907, %v1907
    %v1992 = vsel %vm1965, %v1988, 0
    %vm1994 = vcmask 1041408
    %v1996 = vsel %vm1994, %v1990, 0
    %1998 = vmatprep.subr.bf16.mxu0 0
    %1999 = vmatpush1.bf16.msra.mxu0 %v1989
    %2000 = vmatprep.subr.bf16.mxu0 0
    %2001 = vmatpush1.bf16.msra.mxu0 %v1996
    %2002 = vmatprep.subr.bf16.mxu0 0
    %2003 = vmatpush1.bf16.msra.mxu0 0
    %2004 = vmatprep.subr.bf16.mxu0 0
    %2005 = vmatpush1.bf16.msra.mxu0 0
    %2006 = vmatprep.subr.bf16.mxu0 0
    %2007 = vmatpush1.bf16.msra.mxu0 0
    %2008 = vmatprep.subr.bf16.mxu0 0
    %2009 = vmatpush1.bf16.msra.mxu0 0
    %2010 = vmatprep.subr.bf16.mxu0 0
    %2011 = vmatpush1.bf16.msra.mxu0 0
    %2012 = vmatprep.subr.bf16.mxu0 0
    %2013 = vmatpush1.bf16.msra.mxu0 0
    %2014 = vmatprep.subr.bf16.mxu0 0
    %2015 = vmatpush1.bf16.msra.mxu0 0
    %2016 = vmatprep.subr.bf16.mxu0 0
    %2017 = vmatpush1.bf16.msra.mxu0 0
    %2018 = vmatprep.subr.bf16.mxu0 0
    %2019 = vmatpush1.bf16.msra.mxu0 0
    %2020 = vmatprep.subr.bf16.mxu0 0
    %2021 = vmatpush1.bf16.msra.mxu0 0
    %2022 = vmatprep.subr.bf16.mxu0 0
    %2023 = vmatpush1.bf16.msra.mxu0 0
    %2024 = vmatprep.subr.bf16.mxu0 0
    %2025 = vmatpush1.bf16.msra.mxu0 0
    %2026 = vmatprep.subr.bf16.mxu0 0
    %2027 = vmatpush1.bf16.msra.mxu0 0
    %2028 = vmatprep.subr.bf16.mxu0 0
    %2029 = vmatpush1.bf16.msra.mxu0 0
    %2030 = vmatprep.mubr.bf16.mxu0 0
    %2031 = vmatmul.mubr.bf16.gmra.mrb[0].mxu0 %v1992
    %v2032 = vpop.f32.mrb[0].mxu0
    %v2033 = vadd.f32 0.0, %v2032
    %v2034 = vpop.f32.mrb[0].mxu0
    %v2035 = vpop.f32.mrb[0].mxu0
    %v2036 = vadd.f32 0.0, %v2035
    %v2037 = vpop.f32.mrb[0].mxu0
    %2038 = vdwg.mxu0
    %v2039 = vpack.c.bf16 %v2036, %v2033
    %v2041 = vlaneseq
    %v2042 = vshrl.u32 %v2041, 7
    %v2043 = vsub.s32 0, %v2042
    %v2044 = vrot.slane %v1665, %v2043
    %v2050 = vunpack.c.l.b16 %v1652
    %v2051 = vunpack.c.l.b16 %v1653
    %v2052 = vunpack.c.l.b16 %v1654
    %v2053 = vunpack.c.l.b16 %v1655
    %v2054 = vpack.c.b16 %v2051, %v2050
    %v2055 = vpack.c.b16 %v2053, %v2052
    %2058 = vmatprep.subr.bf16.mxu0 0
    %2059 = vmatpush1.bf16.msra.mxu0 %v2054
    %2060 = vmatprep.subr.bf16.mxu0 0
    %2061 = vmatpush1.bf16.msra.mxu0 %v2055
    %2062 = vmatprep.subr.bf16.mxu0 0
    %2063 = vmatpush1.bf16.msra.mxu0 0
    %2064 = vmatprep.subr.bf16.mxu0 0
    %2065 = vmatpush1.bf16.msra.mxu0 0
    %2066 = vmatprep.subr.bf16.mxu0 0
    %2067 = vmatpush1.bf16.msra.mxu0 0
    %2068 = vmatprep.subr.bf16.mxu0 0
    %2069 = vmatpush1.bf16.msra.mxu0 0
    %2070 = vmatprep.subr.bf16.mxu0 0
    %2071 = vmatpush1.bf16.msra.mxu0 0
    %2072 = vmatprep.subr.bf16.mxu0 0
    %2073 = vmatpush1.bf16.msra.mxu0 0
    %2074 = vmatprep.subr.bf16.mxu0 0
    %2075 = vmatpush1.bf16.msra.mxu0 0
    %2076 = vmatprep.subr.bf16.mxu0 0
    %2077 = vmatpush1.bf16.msra.mxu0 0
    %2078 = vmatprep.subr.bf16.mxu0 0
    %2079 = vmatpush1.bf16.msra.mxu0 0
    %2080 = vmatprep.subr.bf16.mxu0 0
    %2081 = vmatpush1.bf16.msra.mxu0 0
    %2082 = vmatprep.subr.bf16.mxu0 0
    %2083 = vmatpush1.bf16.msra.mxu0 0
    %2084 = vmatprep.subr.bf16.mxu0 0
    %2085 = vmatpush1.bf16.msra.mxu0 0
    %2086 = vmatprep.subr.bf16.mxu0 0
    %2087 = vmatpush1.bf16.msra.mxu0 0
    %2088 = vmatprep.subr.bf16.mxu0 0
    %2089 = vmatpush1.bf16.msra.mxu0 0
    %2090 = vmatprep.mubr.bf16.mxu0 0
    %2091 = vmatmul.mubr.bf16.gmra.mrb[0].mxu0 %v1731
    %v2092 = vpop.f32.mrb[0].mxu0
    %v2093 = vadd.f32 %v2044, %v2092
    %v2094 = vpop.f32.mrb[0].mxu0
    %v2095 = vpop.f32.mrb[0].mxu0
    %v2096 = vadd.f32 %v2044, %v2095
    %v2097 = vpop.f32.mrb[0].mxu0
    %2098 = vdwg.mxu0
    %v2100 = vlaneseq
    %v2101 = vshrl.u32 %v2100, 7
    %v2102 = vsub.s32 0, %v2101
    %v2103 = vrot.slane %v1685, %v2102
    %v2109 = vunpack.c.l.b16 %v1672
    %v2110 = vunpack.c.l.b16 %v1673
    %v2111 = vunpack.c.l.b16 %v1674
    %v2112 = vunpack.c.l.b16 %v1675
    %v2113 = vpack.c.b16 %v2110, %v2109
    %v2114 = vpack.c.b16 %v2112, %v2111
    %2117 = vmatprep.subr.bf16.mxu0 0
    %2118 = vmatpush1.bf16.msra.mxu0 %v2113
    %2119 = vmatprep.subr.bf16.mxu0 0
    %2120 = vmatpush1.bf16.msra.mxu0 %v2114
    %2121 = vmatprep.subr.bf16.mxu0 0
    %2122 = vmatpush1.bf16.msra.mxu0 0
    %2123 = vmatprep.subr.bf16.mxu0 0
    %2124 = vmatpush1.bf16.msra.mxu0 0
    %2125 = vmatprep.subr.bf16.mxu0 0
    %2126 = vmatpush1.bf16.msra.mxu0 0
    %2127 = vmatprep.subr.bf16.mxu0 0
    %2128 = vmatpush1.bf16.msra.mxu0 0
    %2129 = vmatprep.subr.bf16.mxu0 0
    %2130 = vmatpush1.bf16.msra.mxu0 0
    %2131 = vmatprep.subr.bf16.mxu0 0
    %2132 = vmatpush1.bf16.msra.mxu0 0
    %2133 = vmatprep.subr.bf16.mxu0 0
    %2134 = vmatpush1.bf16.msra.mxu0 0
    %2135 = vmatprep.subr.bf16.mxu0 0
    %2136 = vmatpush1.bf16.msra.mxu0 0
    %2137 = vmatprep.subr.bf16.mxu0 0
    %2138 = vmatpush1.bf16.msra.mxu0 0
    %2139 = vmatprep.subr.bf16.mxu0 0
    %2140 = vmatpush1.bf16.msra.mxu0 0
    %2141 = vmatprep.subr.bf16.mxu0 0
    %2142 = vmatpush1.bf16.msra.mxu0 0
    %2143 = vmatprep.subr.bf16.mxu0 0
    %2144 = vmatpush1.bf16.msra.mxu0 0
    %2145 = vmatprep.subr.bf16.mxu0 0
    %2146 = vmatpush1.bf16.msra.mxu0 0
    %2147 = vmatprep.subr.bf16.mxu0 0
    %2148 = vmatpush1.bf16.msra.mxu0 0
    %2149 = vmatprep.mubr.bf16.mxu0 0
    %2150 = vmatmul.mubr.bf16.gmra.mrb[0].mxu0 %v1793
    %v2151 = vpop.f32.mrb[0].mxu0
    %v2152 = vadd.f32 %v2103, %v2151
    %v2153 = vpop.f32.mrb[0].mxu0
    %v2154 = vpop.f32.mrb[0].mxu0
    %v2155 = vadd.f32 %v2103, %v2154
    %v2156 = vpop.f32.mrb[0].mxu0
    %2157 = vmatprep.mubr.bf16.mxu0 0
    %2158 = vmatmul.mubr.bf16.gmra.mrb[0].mxu0 %v1796
    %v2159 = vpop.f32.mrb[0].mxu0
    %v2160 = vadd.f32 %v2103, %v2159
    %v2161 = vpop.f32.mrb[0].mxu0
    %v2162 = vpop.f32.mrb[0].mxu0
    %v2163 = vpop.f32.mrb[0].mxu0
    %2164 = vdwg.mxu0
    %v2166 = vlaneseq
    %v2167 = vshrl.u32 %v2166, 7
    %v2168 = vsub.s32 0, %v2167
    %v2169 = vrot.slane %v1705, %v2168
    %v2175 = vunpack.c.l.b16 %v1692
    %v2176 = vunpack.c.l.b16 %v1693
    %v2177 = vunpack.c.l.b16 %v1694
    %v2178 = vunpack.c.l.b16 %v1695
    %v2179 = vpack.c.b16 %v2176, %v2175
    %v2180 = vpack.c.b16 %v2178, %v2177
    %2183 = vmatprep.subr.bf16.mxu0 0
    %2184 = vmatpush1.bf16.msra.mxu0 %v2179
    %2185 = vmatprep.subr.bf16.mxu0 0
    %2186 = vmatpush1.bf16.msra.mxu0 %v2180
    %2187 = vmatprep.subr.bf16.mxu0 0
    %2188 = vmatpush1.bf16.msra.mxu0 0
    %2189 = vmatprep.subr.bf16.mxu0 0
    %2190 = vmatpush1.bf16.msra.mxu0 0
    %2191 = vmatprep.subr.bf16.mxu0 0
    %2192 = vmatpush1.bf16.msra.mxu0 0
    %2193 = vmatprep.subr.bf16.mxu0 0
    %2194 = vmatpush1.bf16.msra.mxu0 0
    %2195 = vmatprep.subr.bf16.mxu0 0
    %2196 = vmatpush1.bf16.msra.mxu0 0
    %2197 = vmatprep.subr.bf16.mxu0 0
    %2198 = vmatpush1.bf16.msra.mxu0 0
    %2199 = vmatprep.subr.bf16.mxu0 0
    %2200 = vmatpush1.bf16.msra.mxu0 0
    %2201 = vmatprep.subr.bf16.mxu0 0
    %2202 = vmatpush1.bf16.msra.mxu0 0
    %2203 = vmatprep.subr.bf16.mxu0 0
    %2204 = vmatpush1.bf16.msra.mxu0 0
    %2205 = vmatprep.subr.bf16.mxu0 0
    %2206 = vmatpush1.bf16.msra.mxu0 0
    %2207 = vmatprep.subr.bf16.mxu0 0
    %2208 = vmatpush1.bf16.msra.mxu0 0
    %2209 = vmatprep.subr.bf16.mxu0 0
    %2210 = vmatpush1.bf16.msra.mxu0 0
    %2211 = vmatprep.subr.bf16.mxu0 0
    %2212 = vmatpush1.bf16.msra.mxu0 0
    %2213 = vmatprep.subr.bf16.mxu0 0
    %2214 = vmatpush1.bf16.msra.mxu0 0
    %2215 = vmatprep.mubr.bf16.mxu0 0
    %2216 = vmatmul.mubr.bf16.gmra.mrb[0].mxu0 %v1793
    %v2217 = vpop.f32.mrb[0].mxu0
    %v2218 = vadd.f32 %v2169, %v2217
    %v2219 = vpop.f32.mrb[0].mxu0
    %v2220 = vpop.f32.mrb[0].mxu0
    %v2221 = vadd.f32 %v2169, %v2220
    %v2222 = vpop.f32.mrb[0].mxu0
    %2223 = vmatprep.mubr.bf16.mxu0 0
    %2224 = vmatmul.mubr.bf16.gmra.mrb[0].mxu0 %v1796
    %v2225 = vpop.f32.mrb[0].mxu0
    %v2226 = vadd.f32 %v2169, %v2225
    %v2227 = vpop.f32.mrb[0].mxu0
    %v2228 = vpop.f32.mrb[0].mxu0
    %v2229 = vpop.f32.mrb[0].mxu0
    %2230 = vdwg.mxu0
    %v2231 = vpack.c.bf16 %v2096, %v2093
    %v2232 = vpack.c.bf16 %v2155, %v2152
    %v2233 = vpack.c.bf16 %v2160, %v2160
    %v2235 = vsel %vm395, %v2231, 0
    %v2238 = vsel %vm395, %v2232, 0
    %v2241 = vsel %vm395, %v2233, 0
    %2243 = vmatprep.subr.bf16.mxu0 0
    %2244 = vmatpush1.bf16.xpose.msra.mxu0 %v2238
    %2245 = vmatprep.subr.bf16.mxu0 0
    %2246 = vmatpush1.bf16.xpose.msra.mxu0 %v2241
    %2247 = vmatprep.subr.bf16.mxu0 0
    %2248 = vmatpush1.bf16.xpose.msra.mxu0 0
    %2249 = vmatprep.subr.bf16.mxu0 0
    %2250 = vmatpush1.bf16.xpose.msra.mxu0 0
    %2251 = vmatprep.subr.bf16.mxu0 0
    %2252 = vmatpush1.bf16.xpose.msra.mxu0 0
    %2253 = vmatprep.subr.bf16.mxu0 0
    %2254 = vmatpush1.bf16.xpose.msra.mxu0 0
    %2255 = vmatprep.subr.bf16.mxu0 0
    %2256 = vmatpush1.bf16.xpose.msra.mxu0 0
    %2257 = vmatprep.subr.bf16.mxu0 0
    %2258 = vmatpush1.bf16.xpose.msra.mxu0 0
    %2259 = vmatprep.subr.bf16.mxu0 0
    %2260 = vmatpush1.bf16.xpose.msra.mxu0 0
    %2261 = vmatprep.subr.bf16.mxu0 0
    %2262 = vmatpush1.bf16.xpose.msra.mxu0 0
    %2263 = vmatprep.subr.bf16.mxu0 0
    %2264 = vmatpush1.bf16.xpose.msra.mxu0 0
    %2265 = vmatprep.subr.bf16.mxu0 0
    %2266 = vmatpush1.bf16.xpose.msra.mxu0 0
    %2267 = vmatprep.subr.bf16.mxu0 0
    %2268 = vmatpush1.bf16.xpose.msra.mxu0 0
    %2269 = vmatprep.subr.bf16.mxu0 0
    %2270 = vmatpush1.bf16.xpose.msra.mxu0 0
    %2271 = vmatprep.subr.bf16.mxu0 0
    %2272 = vmatpush1.bf16.xpose.msra.mxu0 0
    %2273 = vmatprep.subr.bf16.mxu0 0
    %2274 = vmatpush1.bf16.xpose.msra.mxu0 0
    %2275 = vmatprep.mubr.bf16.mxu0 0
    %2276 = vmatmul.mubr.bf16.gmra.mrb[0].mxu0 %v2235
    %v2277 = vpop.f32.mrb[0].mxu0
    %v2278 = vadd.f32 %v140, %v2277
    %v2279 = vpop.f32.mrb[0].mxu0
    %v2280 = vpop.f32.mrb[0].mxu0
    %v2281 = vadd.f32 %v141, %v2280
    %v2282 = vpop.f32.mrb[0].mxu0
    %2283 = vdwg.mxu0
    %v2284 = vsel %vm1965, %v2278, -inf
    %2285 = vmax.xlane.f32.xlu0 %v2284
    %v2286 = vpop.xlane.xlu0 %2285
    %v2287 = vsel %vm1965, %v2281, -inf
    %2288 = vmax.xlane.f32.xlu0 %v2287
    %v2289 = vpop.xlane.xlu0 %2288
    %v2290 = vsub.f32 %v2278, %v2286
    %v2291 = vsub.f32 %v2281, %v2289
    %v2292 = vmul.f32 %v2290, 1.442695
    %v2293 = vpow.pop %v2292
    %v2294 = vmul.f32 %v2291, 1.442695
    %v2295 = vpow.pop %v2294
    %v2296 = vsel %vm1965, %v2293, 0.0
    %2297 = vadd.xlane.f32.xlu0 %v2296
    %v2298 = vpop.xlane.xlu0 %2297
    %v2299 = vsel %vm1965, %v2295, 0.0
    %2300 = vadd.xlane.f32.xlu0 %v2299
    %v2301 = vpop.xlane.xlu0 %2300
    %v2302 = vrcp.pop %v2298
    %v2303 = vrcp.pop %v2301
    %v2304 = vmul.f32 %v2293, %v2302
    %v2305 = vmul.f32 %v2295, %v2303
    %v2306 = vpack.c.bf16 %v2305, %v2304
    %v2307 = vpack.c.bf16 %v2221, %v2218
    %v2308 = vpack.c.bf16 %v2226, %v2226
    %v2310 = vsel %vm1965, %v2306, 0
    %v2313 = vsel %vm1994, %v2308, 0
    %2315 = vmatprep.subr.bf16.mxu0 0
    %2316 = vmatpush1.bf16.msra.mxu0 %v2307
    %2317 = vmatprep.subr.bf16.mxu0 0
    %2318 = vmatpush1.bf16.msra.mxu0 %v2313
    %2319 = vmatprep.subr.bf16.mxu0 0
    %2320 = vmatpush1.bf16.msra.mxu0 0
    %2321 = vmatprep.subr.bf16.mxu0 0
    %2322 = vmatpush1.bf16.msra.mxu0 0
    %2323 = vmatprep.subr.bf16.mxu0 0
    %2324 = vmatpush1.bf16.msra.mxu0 0
    %2325 = vmatprep.subr.bf16.mxu0 0
    %2326 = vmatpush1.bf16.msra.mxu0 0
    %2327 = vmatprep.subr.bf16.mxu0 0
    %2328 = vmatpush1.bf16.msra.mxu0 0
    %2329 = vmatprep.subr.bf16.mxu0 0
    %2330 = vmatpush1.bf16.msra.mxu0 0
    %2331 = vmatprep.subr.bf16.mxu0 0
    %2332 = vmatpush1.bf16.msra.mxu0 0
    %2333 = vmatprep.subr.bf16.mxu0 0
    %2334 = vmatpush1.bf16.msra.mxu0 0
    %2335 = vmatprep.subr.bf16.mxu0 0
    %2336 = vmatpush1.bf16.msra.mxu0 0
    %2337 = vmatprep.subr.bf16.mxu0 0
    %2338 = vmatpush1.bf16.msra.mxu0 0
    %2339 = vmatprep.subr.bf16.mxu0 0
    %2340 = vmatpush1.bf16.msra.mxu0 0
    %2341 = vmatprep.subr.bf16.mxu0 0
    %2342 = vmatpush1.bf16.msra.mxu0 0
    %2343 = vmatprep.subr.bf16.mxu0 0
    %2344 = vmatpush1.bf16.msra.mxu0 0
    %2345 = vmatprep.subr.bf16.mxu0 0
    %2346 = vmatpush1.bf16.msra.mxu0 0
    %2347 = vmatprep.mubr.bf16.mxu0 0
    %2348 = vmatmul.mubr.bf16.gmra.mrb[0].mxu0 %v2310
    %v2349 = vpop.f32.mrb[0].mxu0
    %v2350 = vadd.f32 0.0, %v2349
    %v2351 = vpop.f32.mrb[0].mxu0
    %v2352 = vpop.f32.mrb[0].mxu0
    %v2353 = vadd.f32 0.0, %v2352
    %v2354 = vpop.f32.mrb[0].mxu0
    %2355 = vdwg.mxu0
    %v2356 = vpack.c.bf16 %v2353, %v2350
    %v2358 = vsel %vm395, %v2356, 0
    %v2361 = vsel %vm811, %v1709, 0
    %2363 = vmatprep.subr.bf16.mxu0 0
    %2364 = vmatpush1.bf16.msra.mxu0 %v2361
    %2365 = vmatprep.subr.bf16.mxu0 0
    %2366 = vmatpush1.bf16.msra.mxu0 0
    %2367 = vmatprep.subr.bf16.mxu0 0
    %2368 = vmatpush1.bf16.msra.mxu0 0
    %2369 = vmatprep.subr.bf16.mxu0 0
    %2370 = vmatpush1.bf16.msra.mxu0 0
    %2371 = vmatprep.subr.bf16.mxu0 0
    %2372 = vmatpush1.bf16.msra.mxu0 0
    %2373 = vmatprep.subr.bf16.mxu0 0
    %2374 = vmatpush1.bf16.msra.mxu0 0
    %2375 = vmatprep.subr.bf16.mxu0 0
    %2376 = vmatpush1.bf16.msra.mxu0 0
    %2377 = vmatprep.subr.bf16.mxu0 0
    %2378 = vmatpush1.bf16.msra.mxu0 0
    %2379 = vmatprep.subr.bf16.mxu0 0
    %2380 = vmatpush1.bf16.msra.mxu0 0
    %2381 = vmatprep.subr.bf16.mxu0 0
    %2382 = vmatpush1.bf16.msra.mxu0 0
    %2383 = vmatprep.subr.bf16.mxu0 0
    %2384 = vmatpush1.bf16.msra.mxu0 0
    %2385 = vmatprep.subr.bf16.mxu0 0
    %2386 = vmatpush1.bf16.msra.mxu0 0
    %2387 = vmatprep.subr.bf16.mxu0 0
    %2388 = vmatpush1.bf16.msra.mxu0 0
    %2389 = vmatprep.subr.bf16.mxu0 0
    %2390 = vmatpush1.bf16.msra.mxu0 0
    %2391 = vmatprep.subr.bf16.mxu0 0
    %2392 = vmatpush1.bf16.msra.mxu0 0
    %2393 = vmatprep.subr.bf16.mxu0 0
    %2394 = vmatpush1.bf16.msra.mxu0 0
    %2395 = vmatprep.mubr.bf16.mxu0 0
    %2396 = vmatmul.mubr.bf16.gmra.mrb[0].mxu0 %v2358
    %v2397 = vpop.f32.mrb[0].mxu0
    %v2398 = vadd.f32 0.0, %v2397
    %v2399 = vpop.f32.mrb[0].mxu0
    %v2400 = vpop.f32.mrb[0].mxu0
    %v2401 = vadd.f32 0.0, %v2400
    %v2402 = vpop.f32.mrb[0].mxu0
    %2403 = vdwg.mxu0
    %v2405 = vsel %vm395, %v2039, 0
    %v2408 = vsel %vm811, %v1708, 0
    %2410 = vmatprep.subr.bf16.mxu0 0
    %2411 = vmatpush1.bf16.msra.mxu0 %v2408
    %2412 = vmatprep.subr.bf16.mxu0 0
    %2413 = vmatpush1.bf16.msra.mxu0 0
    %2414 = vmatprep.subr.bf16.mxu0 0
    %2415 = vmatpush1.bf16.msra.mxu0 0
    %2416 = vmatprep.subr.bf16.mxu0 0
    %2417 = vmatpush1.bf16.msra.mxu0 0
    %2418 = vmatprep.subr.bf16.mxu0 0
    %2419 = vmatpush1.bf16.msra.mxu0 0
    %2420 = vmatprep.subr.bf16.mxu0 0
    %2421 = vmatpush1.bf16.msra.mxu0 0
    %2422 = vmatprep.subr.bf16.mxu0 0
    %2423 = vmatpush1.bf16.msra.mxu0 0
    %2424 = vmatprep.subr.bf16.mxu0 0
    %2425 = vmatpush1.bf16.msra.mxu0 0
    %2426 = vmatprep.subr.bf16.mxu0 0
    %2427 = vmatpush1.bf16.msra.mxu0 0
    %2428 = vmatprep.subr.bf16.mxu0 0
    %2429 = vmatpush1.bf16.msra.mxu0 0
    %2430 = vmatprep.subr.bf16.mxu0 0
    %2431 = vmatpush1.bf16.msra.mxu0 0
    %2432 = vmatprep.subr.bf16.mxu0 0
    %2433 = vmatpush1.bf16.msra.mxu0 0
    %2434 = vmatprep.subr.bf16.mxu0 0
    %2435 = vmatpush1.bf16.msra.mxu0 0
    %2436 = vmatprep.subr.bf16.mxu0 0
    %2437 = vmatpush1.bf16.msra.mxu0 0
    %2438 = vmatprep.subr.bf16.mxu0 0
    %2439 = vmatpush1.bf16.msra.mxu0 0
    %2440 = vmatprep.subr.bf16.mxu0 0
    %2441 = vmatpush1.bf16.msra.mxu0 0
    %2442 = vmatprep.mubr.bf16.mxu0 0
    %2443 = vmatmul.mubr.bf16.gmra.mrb[0].mxu0 %v2405
    %v2444 = vpop.f32.mrb[0].mxu0
    %v2445 = vadd.f32 %v2398, %v2444
    %v2446 = vpop.f32.mrb[0].mxu0
    %v2447 = vpop.f32.mrb[0].mxu0
    %v2448 = vadd.f32 %v2401, %v2447
    %v2449 = vpop.f32.mrb[0].mxu0
    %2450 = vdwg.mxu0
    %v2452 = vlaneseq
    %v2453 = vshrl.u32 %v2452, 7
    %v2454 = vsub.s32 0, %v2453
    %v2455 = vrot.slane %v1666, %v2454
    %v2461 = vunpack.c.l.b16 %v1656
    %v2462 = vunpack.c.l.b16 %v1657
    %v2463 = vunpack.c.l.b16 %v1658
    %v2464 = vunpack.c.l.b16 %v1659
    %v2465 = vpack.c.b16 %v2462, %v2461
    %v2466 = vpack.c.b16 %v2464, %v2463
    %2469 = vmatprep.subr.bf16.mxu0 0
    %2470 = vmatpush1.bf16.msra.mxu0 %v2465
    %2471 = vmatprep.subr.bf16.mxu0 0
    %2472 = vmatpush1.bf16.msra.mxu0 %v2466
    %2473 = vmatprep.subr.bf16.mxu0 0
    %2474 = vmatpush1.bf16.msra.mxu0 0
    %2475 = vmatprep.subr.bf16.mxu0 0
    %2476 = vmatpush1.bf16.msra.mxu0 0
    %2477 = vmatprep.subr.bf16.mxu0 0
    %2478 = vmatpush1.bf16.msra.mxu0 0
    %2479 = vmatprep.subr.bf16.mxu0 0
    %2480 = vmatpush1.bf16.msra.mxu0 0
    %2481 = vmatprep.subr.bf16.mxu0 0
    %2482 = vmatpush1.bf16.msra.mxu0 0
    %2483 = vmatprep.subr.bf16.mxu0 0
    %2484 = vmatpush1.bf16.msra.mxu0 0
    %2485 = vmatprep.subr.bf16.mxu0 0
    %2486 = vmatpush1.bf16.msra.mxu0 0
    %2487 = vmatprep.subr.bf16.mxu0 0
    %2488 = vmatpush1.bf16.msra.mxu0 0
    %2489 = vmatprep.subr.bf16.mxu0 0
    %2490 = vmatpush1.bf16.msra.mxu0 0
    %2491 = vmatprep.subr.bf16.mxu0 0
    %2492 = vmatpush1.bf16.msra.mxu0 0
    %2493 = vmatprep.subr.bf16.mxu0 0
    %2494 = vmatpush1.bf16.msra.mxu0 0
    %2495 = vmatprep.subr.bf16.mxu0 0
    %2496 = vmatpush1.bf16.msra.mxu0 0
    %2497 = vmatprep.subr.bf16.mxu0 0
    %2498 = vmatpush1.bf16.msra.mxu0 0
    %2499 = vmatprep.subr.bf16.mxu0 0
    %2500 = vmatpush1.bf16.msra.mxu0 0
    %2501 = vmatprep.mubr.bf16.mxu0 0
    %2502 = vmatmul.mubr.bf16.gmra.mrb[0].mxu0 %v1731
    %v2503 = vpop.f32.mrb[0].mxu0
    %v2504 = vadd.f32 %v2455, %v2503
    %v2505 = vpop.f32.mrb[0].mxu0
    %v2506 = vpop.f32.mrb[0].mxu0
    %v2507 = vadd.f32 %v2455, %v2506
    %v2508 = vpop.f32.mrb[0].mxu0
    %2509 = vdwg.mxu0
    %v2511 = vlaneseq
    %v2512 = vshrl.u32 %v2511, 7
    %v2513 = vsub.s32 0, %v2512
    %v2514 = vrot.slane %v1686, %v2513
    %v2520 = vunpack.c.l.b16 %v1676
    %v2521 = vunpack.c.l.b16 %v1677
    %v2522 = vunpack.c.l.b16 %v1678
    %v2523 = vunpack.c.l.b16 %v1679
    %v2524 = vpack.c.b16 %v2521, %v2520
    %v2525 = vpack.c.b16 %v2523, %v2522
    %2528 = vmatprep.subr.bf16.mxu0 0
    %2529 = vmatpush1.bf16.msra.mxu0 %v2524
    %2530 = vmatprep.subr.bf16.mxu0 0
    %2531 = vmatpush1.bf16.msra.mxu0 %v2525
    %2532 = vmatprep.subr.bf16.mxu0 0
    %2533 = vmatpush1.bf16.msra.mxu0 0
    %2534 = vmatprep.subr.bf16.mxu0 0
    %2535 = vmatpush1.bf16.msra.mxu0 0
    %2536 = vmatprep.subr.bf16.mxu0 0
    %2537 = vmatpush1.bf16.msra.mxu0 0
    %2538 = vmatprep.subr.bf16.mxu0 0
    %2539 = vmatpush1.bf16.msra.mxu0 0
    %2540 = vmatprep.subr.bf16.mxu0 0
    %2541 = vmatpush1.bf16.msra.mxu0 0
    %2542 = vmatprep.subr.bf16.mxu0 0
    %2543 = vmatpush1.bf16.msra.mxu0 0
    %2544 = vmatprep.subr.bf16.mxu0 0
    %2545 = vmatpush1.bf16.msra.mxu0 0
    %2546 = vmatprep.subr.bf16.mxu0 0
    %2547 = vmatpush1.bf16.msra.mxu0 0
    %2548 = vmatprep.subr.bf16.mxu0 0
    %2549 = vmatpush1.bf16.msra.mxu0 0
    %2550 = vmatprep.subr.bf16.mxu0 0
    %2551 = vmatpush1.bf16.msra.mxu0 0
    %2552 = vmatprep.subr.bf16.mxu0 0
    %2553 = vmatpush1.bf16.msra.mxu0 0
    %2554 = vmatprep.subr.bf16.mxu0 0
    %2555 = vmatpush1.bf16.msra.mxu0 0
    %2556 = vmatprep.subr.bf16.mxu0 0
    %2557 = vmatpush1.bf16.msra.mxu0 0
    %2558 = vmatprep.subr.bf16.mxu0 0
    %2559 = vmatpush1.bf16.msra.mxu0 0
    %2560 = vmatprep.mubr.bf16.mxu0 0
    %2561 = vmatmul.mubr.bf16.gmra.mrb[0].mxu0 %v1793
    %v2562 = vpop.f32.mrb[0].mxu0
    %v2563 = vadd.f32 %v2514, %v2562
    %v2564 = vpop.f32.mrb[0].mxu0
    %v2565 = vpop.f32.mrb[0].mxu0
    %v2566 = vadd.f32 %v2514, %v2565
    %v2567 = vpop.f32.mrb[0].mxu0
    %2568 = vmatprep.mubr.bf16.mxu0 0
    %2569 = vmatmul.mubr.bf16.gmra.mrb[0].mxu0 %v1796
    %v2570 = vpop.f32.mrb[0].mxu0
    %v2571 = vadd.f32 %v2514, %v2570
    %v2572 = vpop.f32.mrb[0].mxu0
    %v2573 = vpop.f32.mrb[0].mxu0
    %v2574 = vpop.f32.mrb[0].mxu0
    %2575 = vdwg.mxu0
    %v2577 = vlaneseq
    %v2578 = vshrl.u32 %v2577, 7
    %v2579 = vsub.s32 0, %v2578
    %v2580 = vrot.slane %v1706, %v2579
    %v2586 = vunpack.c.l.b16 %v1696
    %v2587 = vunpack.c.l.b16 %v1697
    %v2588 = vunpack.c.l.b16 %v1698
    %v2589 = vunpack.c.l.b16 %v1699
    %v2590 = vpack.c.b16 %v2587, %v2586
    %v2591 = vpack.c.b16 %v2589, %v2588
    %2594 = vmatprep.subr.bf16.mxu0 0
    %2595 = vmatpush1.bf16.msra.mxu0 %v2590
    %2596 = vmatprep.subr.bf16.mxu0 0
    %2597 = vmatpush1.bf16.msra.mxu0 %v2591
    %2598 = vmatprep.subr.bf16.mxu0 0
    %2599 = vmatpush1.bf16.msra.mxu0 0
    %2600 = vmatprep.subr.bf16.mxu0 0
    %2601 = vmatpush1.bf16.msra.mxu0 0
    %2602 = vmatprep.subr.bf16.mxu0 0
    %2603 = vmatpush1.bf16.msra.mxu0 0
    %2604 = vmatprep.subr.bf16.mxu0 0
    %2605 = vmatpush1.bf16.msra.mxu0 0
    %2606 = vmatprep.subr.bf16.mxu0 0
    %2607 = vmatpush1.bf16.msra.mxu0 0
    %2608 = vmatprep.subr.bf16.mxu0 0
    %2609 = vmatpush1.bf16.msra.mxu0 0
    %2610 = vmatprep.subr.bf16.mxu0 0
    %2611 = vmatpush1.bf16.msra.mxu0 0
    %2612 = vmatprep.subr.bf16.mxu0 0
    %2613 = vmatpush1.bf16.msra.mxu0 0
    %2614 = vmatprep.subr.bf16.mxu0 0
    %2615 = vmatpush1.bf16.msra.mxu0 0
    %2616 = vmatprep.subr.bf16.mxu0 0
    %2617 = vmatpush1.bf16.msra.mxu0 0
    %2618 = vmatprep.subr.bf16.mxu0 0
    %2619 = vmatpush1.bf16.msra.mxu0 0
    %2620 = vmatprep.subr.bf16.mxu0 0
    %2621 = vmatpush1.bf16.msra.mxu0 0
    %2622 = vmatprep.subr.bf16.mxu0 0
    %2623 = vmatpush1.bf16.msra.mxu0 0
    %2624 = vmatprep.subr.bf16.mxu0 0
    %2625 = vmatpush1.bf16.msra.mxu0 0
    %2626 = vmatprep.mubr.bf16.mxu0 0
    %2627 = vmatmul.mubr.bf16.gmra.mrb[0].mxu0 %v1793
    %v2628 = vpop.f32.mrb[0].mxu0
    %v2629 = vadd.f32 %v2580, %v2628
    %v2630 = vpop.f32.mrb[0].mxu0
    %v2631 = vpop.f32.mrb[0].mxu0
    %v2632 = vadd.f32 %v2580, %v2631
    %v2633 = vpop.f32.mrb[0].mxu0
    %2634 = vmatprep.mubr.bf16.mxu0 0
    %2635 = vmatmul.mubr.bf16.gmra.mrb[0].mxu0 %v1796
    %v2636 = vpop.f32.mrb[0].mxu0
    %v2637 = vadd.f32 %v2580, %v2636
    %v2638 = vpop.f32.mrb[0].mxu0
    %v2639 = vpop.f32.mrb[0].mxu0
    %v2640 = vpop.f32.mrb[0].mxu0
    %2641 = vdwg.mxu0
    %v2642 = vpack.c.bf16 %v2507, %v2504
    %v2643 = vpack.c.bf16 %v2566, %v2563
    %v2644 = vpack.c.bf16 %v2571, %v2571
    %v2646 = vsel %vm395, %v2642, 0
    %v2649 = vsel %vm395, %v2643, 0
    %v2652 = vsel %vm395, %v2644, 0
    %2654 = vmatprep.subr.bf16.mxu0 0
    %2655 = vmatpush1.bf16.xpose.msra.mxu0 %v2649
    %2656 = vmatprep.subr.bf16.mxu0 0
    %2657 = vmatpush1.bf16.xpose.msra.mxu0 %v2652
    %2658 = vmatprep.subr.bf16.mxu0 0
    %2659 = vmatpush1.bf16.xpose.msra.mxu0 0
    %2660 = vmatprep.subr.bf16.mxu0 0
    %2661 = vmatpush1.bf16.xpose.msra.mxu0 0
    %2662 = vmatprep.subr.bf16.mxu0 0
    %2663 = vmatpush1.bf16.xpose.msra.mxu0 0
    %2664 = vmatprep.subr.bf16.mxu0 0
    %2665 = vmatpush1.bf16.xpose.msra.mxu0 0
    %2666 = vmatprep.subr.bf16.mxu0 0
    %2667 = vmatpush1.bf16.xpose.msra.mxu0 0
    %2668 = vmatprep.subr.bf16.mxu0 0
    %2669 = vmatpush1.bf16.xpose.msra.mxu0 0
    %2670 = vmatprep.subr.bf16.mxu0 0
    %2671 = vmatpush1.bf16.xpose.msra.mxu0 0
    %2672 = vmatprep.subr.bf16.mxu0 0
    %2673 = vmatpush1.bf16.xpose.msra.mxu0 0
    %2674 = vmatprep.subr.bf16.mxu0 0
    %2675 = vmatpush1.bf16.xpose.msra.mxu0 0
    %2676 = vmatprep.subr.bf16.mxu0 0
    %2677 = vmatpush1.bf16.xpose.msra.mxu0 0
    %2678 = vmatprep.subr.bf16.mxu0 0
    %2679 = vmatpush1.bf16.xpose.msra.mxu0 0
    %2680 = vmatprep.subr.bf16.mxu0 0
    %2681 = vmatpush1.bf16.xpose.msra.mxu0 0
    %2682 = vmatprep.subr.bf16.mxu0 0
    %2683 = vmatpush1.bf16.xpose.msra.mxu0 0
    %2684 = vmatprep.subr.bf16.mxu0 0
    %2685 = vmatpush1.bf16.xpose.msra.mxu0 0
    %2686 = vmatprep.mubr.bf16.mxu0 0
    %2687 = vmatmul.mubr.bf16.gmra.mrb[0].mxu0 %v2646
    %v2688 = vpop.f32.mrb[0].mxu0
    %v2689 = vadd.f32 %v140, %v2688
    %v2690 = vpop.f32.mrb[0].mxu0
    %v2691 = vpop.f32.mrb[0].mxu0
    %v2692 = vadd.f32 %v141, %v2691
    %v2693 = vpop.f32.mrb[0].mxu0
    %2694 = vdwg.mxu0
    %v2695 = vsel %vm1965, %v2689, -inf
    %2696 = vmax.xlane.f32.xlu0 %v2695
    %v2697 = vpop.xlane.xlu0 %2696
    %v2698 = vsel %vm1965, %v2692, -inf
    %2699 = vmax.xlane.f32.xlu0 %v2698
    %v2700 = vpop.xlane.xlu0 %2699
    %v2701 = vsub.f32 %v2689, %v2697
    %v2702 = vsub.f32 %v2692, %v2700
    %v2703 = vmul.f32 %v2701, 1.442695
    %v2704 = vpow.pop %v2703
    %v2705 = vmul.f32 %v2702, 1.442695
    %v2706 = vpow.pop %v2705
    %v2707 = vsel %vm1965, %v2704, 0.0
    %2708 = vadd.xlane.f32.xlu0 %v2707
    %v2709 = vpop.xlane.xlu0 %2708
    %v2710 = vsel %vm1965, %v2706, 0.0
    %2711 = vadd.xlane.f32.xlu0 %v2710
    %v2712 = vpop.xlane.xlu0 %2711
    %v2713 = vrcp.pop %v2709
    %v2714 = vrcp.pop %v2712
    %v2715 = vmul.f32 %v2704, %v2713
    %v2716 = vmul.f32 %v2706, %v2714
    %v2717 = vpack.c.bf16 %v2716, %v2715
    %v2718 = vpack.c.bf16 %v2632, %v2629
    %v2719 = vpack.c.bf16 %v2637, %v2637
    %v2721 = vsel %vm1965, %v2717, 0
    %v2724 = vsel %vm1994, %v2719, 0
    %2726 = vmatprep.subr.bf16.mxu0 0
    %2727 = vmatpush1.bf16.msra.mxu0 %v2718
    %2728 = vmatprep.subr.bf16.mxu0 0
    %2729 = vmatpush1.bf16.msra.mxu0 %v2724
    %2730 = vmatprep.subr.bf16.mxu0 0
    %2731 = vmatpush1.bf16.msra.mxu0 0
    %2732 = vmatprep.subr.bf16.mxu0 0
    %2733 = vmatpush1.bf16.msra.mxu0 0
    %2734 = vmatprep.subr.bf16.mxu0 0
    %2735 = vmatpush1.bf16.msra.mxu0 0
    %2736 = vmatprep.subr.bf16.mxu0 0
    %2737 = vmatpush1.bf16.msra.mxu0 0
    %2738 = vmatprep.subr.bf16.mxu0 0
    %2739 = vmatpush1.bf16.msra.mxu0 0
    %2740 = vmatprep.subr.bf16.mxu0 0
    %2741 = vmatpush1.bf16.msra.mxu0 0
    %2742 = vmatprep.subr.bf16.mxu0 0
    %2743 = vmatpush1.bf16.msra.mxu0 0
    %2744 = vmatprep.subr.bf16.mxu0 0
    %2745 = vmatpush1.bf16.msra.mxu0 0
    %2746 = vmatprep.subr.bf16.mxu0 0
    %2747 = vmatpush1.bf16.msra.mxu0 0
    %2748 = vmatprep.subr.bf16.mxu0 0
    %2749 = vmatpush1.bf16.msra.mxu0 0
    %2750 = vmatprep.subr.bf16.mxu0 0
    %2751 = vmatpush1.bf16.msra.mxu0 0
    %2752 = vmatprep.subr.bf16.mxu0 0
    %2753 = vmatpush1.bf16.msra.mxu0 0
    %2754 = vmatprep.subr.bf16.mxu0 0
    %2755 = vmatpush1.bf16.msra.mxu0 0
    %2756 = vmatprep.subr.bf16.mxu0 0
    %2757 = vmatpush1.bf16.msra.mxu0 0
    %2758 = vmatprep.mubr.bf16.mxu0 0
    %2759 = vmatmul.mubr.bf16.gmra.mrb[0].mxu0 %v2721
    %v2760 = vpop.f32.mrb[0].mxu0
    %v2761 = vadd.f32 0.0, %v2760
    %v2762 = vpop.f32.mrb[0].mxu0
    %v2763 = vpop.f32.mrb[0].mxu0
    %v2764 = vadd.f32 0.0, %v2763
    %v2765 = vpop.f32.mrb[0].mxu0
    %2766 = vdwg.mxu0
    %v2767 = vpack.c.bf16 %v2764, %v2761
    %v2769 = vsel %vm395, %v2767, 0
    %v2772 = vsel %vm811, %v1710, 0
    %2774 = vmatprep.subr.bf16.mxu0 0
    %2775 = vmatpush1.bf16.msra.mxu0 %v2772
    %2776 = vmatprep.subr.bf16.mxu0 0
    %2777 = vmatpush1.bf16.msra.mxu0 0
    %2778 = vmatprep.subr.bf16.mxu0 0
    %2779 = vmatpush1.bf16.msra.mxu0 0
    %2780 = vmatprep.subr.bf16.mxu0 0
    %2781 = vmatpush1.bf16.msra.mxu0 0
    %2782 = vmatprep.subr.bf16.mxu0 0
    %2783 = vmatpush1.bf16.msra.mxu0 0
    %2784 = vmatprep.subr.bf16.mxu0 0
    %2785 = vmatpush1.bf16.msra.mxu0 0
    %2786 = vmatprep.subr.bf16.mxu0 0
    %2787 = vmatpush1.bf16.msra.mxu0 0
    %2788 = vmatprep.subr.bf16.mxu0 0
    %2789 = vmatpush1.bf16.msra.mxu0 0
    %2790 = vmatprep.subr.bf16.mxu0 0
    %2791 = vmatpush1.bf16.msra.mxu0 0
    %2792 = vmatprep.subr.bf16.mxu0 0
    %2793 = vmatpush1.bf16.msra.mxu0 0
    %2794 = vmatprep.subr.bf16.mxu0 0
    %2795 = vmatpush1.bf16.msra.mxu0 0
    %2796 = vmatprep.subr.bf16.mxu0 0
    %2797 = vmatpush1.bf16.msra.mxu0 0
    %2798 = vmatprep.subr.bf16.mxu0 0
    %2799 = vmatpush1.bf16.msra.mxu0 0
    %2800 = vmatprep.subr.bf16.mxu0 0
    %2801 = vmatpush1.bf16.msra.mxu0 0
    %2802 = vmatprep.subr.bf16.mxu0 0
    %2803 = vmatpush1.bf16.msra.mxu0 0
    %2804 = vmatprep.subr.bf16.mxu0 0
    %2805 = vmatpush1.bf16.msra.mxu0 0
    %2806 = vmatprep.mubr.bf16.mxu0 0
    %2807 = vmatmul.mubr.bf16.gmra.mrb[0].mxu0 %v2769
    %v2808 = vpop.f32.mrb[0].mxu0
    %v2809 = vadd.f32 0.0, %v2808
    %v2810 = vpop.f32.mrb[0].mxu0
    %v2811 = vpop.f32.mrb[0].mxu0
    %v2812 = vadd.f32 0.0, %v2811
    %v2813 = vpop.f32.mrb[0].mxu0
    %2814 = vdwg.mxu0
    %v2815 = vadd.f32 %v2445, %v2809
    %v2816 = vadd.f32 %v2448, %v2812
    %v2818 = vlaneseq
    %v2819 = vshrl.u32 %v2818, 7
    %v2820 = vsub.s32 0, %v2819
    %v2821 = vrot.slane %v1667, %v2820
    %v2827 = vunpack.c.l.b16 %v1660
    %v2828 = vunpack.c.l.b16 %v1661
    %v2829 = vunpack.c.l.b16 %v1662
    %v2830 = vunpack.c.l.b16 %v1663
    %v2831 = vpack.c.b16 %v2828, %v2827
    %v2832 = vpack.c.b16 %v2830, %v2829
    %2835 = vmatprep.subr.bf16.mxu0 0
    %2836 = vmatpush1.bf16.msra.mxu0 %v2831
    %2837 = vmatprep.subr.bf16.mxu0 0
    %2838 = vmatpush1.bf16.msra.mxu0 %v2832
    %2839 = vmatprep.subr.bf16.mxu0 0
    %2840 = vmatpush1.bf16.msra.mxu0 0
    %2841 = vmatprep.subr.bf16.mxu0 0
    %2842 = vmatpush1.bf16.msra.mxu0 0
    %2843 = vmatprep.subr.bf16.mxu0 0
    %2844 = vmatpush1.bf16.msra.mxu0 0
    %2845 = vmatprep.subr.bf16.mxu0 0
    %2846 = vmatpush1.bf16.msra.mxu0 0
    %2847 = vmatprep.subr.bf16.mxu0 0
    %2848 = vmatpush1.bf16.msra.mxu0 0
    %2849 = vmatprep.subr.bf16.mxu0 0
    %2850 = vmatpush1.bf16.msra.mxu0 0
    %2851 = vmatprep.subr.bf16.mxu0 0
    %2852 = vmatpush1.bf16.msra.mxu0 0
    %2853 = vmatprep.subr.bf16.mxu0 0
    %2854 = vmatpush1.bf16.msra.mxu0 0
    %2855 = vmatprep.subr.bf16.mxu0 0
    %2856 = vmatpush1.bf16.msra.mxu0 0
    %2857 = vmatprep.subr.bf16.mxu0 0
    %2858 = vmatpush1.bf16.msra.mxu0 0
    %2859 = vmatprep.subr.bf16.mxu0 0
    %2860 = vmatpush1.bf16.msra.mxu0 0
    %2861 = vmatprep.subr.bf16.mxu0 0
    %2862 = vmatpush1.bf16.msra.mxu0 0
    %2863 = vmatprep.subr.bf16.mxu0 0
    %2864 = vmatpush1.bf16.msra.mxu0 0
    %2865 = vmatprep.subr.bf16.mxu0 0
    %2866 = vmatpush1.bf16.msra.mxu0 0
    %2867 = vmatprep.mubr.bf16.mxu0 0
    %2868 = vmatmul.mubr.bf16.gmra.mrb[0].mxu0 %v1731
    %v2869 = vpop.f32.mrb[0].mxu0
    %v2870 = vadd.f32 %v2821, %v2869
    %v2871 = vpop.f32.mrb[0].mxu0
    %v2872 = vpop.f32.mrb[0].mxu0
    %v2873 = vadd.f32 %v2821, %v2872
    %v2874 = vpop.f32.mrb[0].mxu0
    %2875 = vdwg.mxu0
    %v2877 = vlaneseq
    %v2878 = vshrl.u32 %v2877, 7
    %v2879 = vsub.s32 0, %v2878
    %v2880 = vrot.slane %v1687, %v2879
    %v2886 = vunpack.c.l.b16 %v1680
    %v2887 = vunpack.c.l.b16 %v1681
    %v2888 = vunpack.c.l.b16 %v1682
    %v2889 = vunpack.c.l.b16 %v1683
    %v2890 = vpack.c.b16 %v2887, %v2886
    %v2891 = vpack.c.b16 %v2889, %v2888
    %2894 = vmatprep.subr.bf16.mxu0 0
    %2895 = vmatpush1.bf16.msra.mxu0 %v2890
    %2896 = vmatprep.subr.bf16.mxu0 0
    %2897 = vmatpush1.bf16.msra.mxu0 %v2891
    %2898 = vmatprep.subr.bf16.mxu0 0
    %2899 = vmatpush1.bf16.msra.mxu0 0
    %2900 = vmatprep.subr.bf16.mxu0 0
    %2901 = vmatpush1.bf16.msra.mxu0 0
    %2902 = vmatprep.subr.bf16.mxu0 0
    %2903 = vmatpush1.bf16.msra.mxu0 0
    %2904 = vmatprep.subr.bf16.mxu0 0
    %2905 = vmatpush1.bf16.msra.mxu0 0
    %2906 = vmatprep.subr.bf16.mxu0 0
    %2907 = vmatpush1.bf16.msra.mxu0 0
    %2908 = vmatprep.subr.bf16.mxu0 0
    %2909 = vmatpush1.bf16.msra.mxu0 0
    %2910 = vmatprep.subr.bf16.mxu0 0
    %2911 = vmatpush1.bf16.msra.mxu0 0
    %2912 = vmatprep.subr.bf16.mxu0 0
    %2913 = vmatpush1.bf16.msra.mxu0 0
    %2914 = vmatprep.subr.bf16.mxu0 0
    %2915 = vmatpush1.bf16.msra.mxu0 0
    %2916 = vmatprep.subr.bf16.mxu0 0
    %2917 = vmatpush1.bf16.msra.mxu0 0
    %2918 = vmatprep.subr.bf16.mxu0 0
    %2919 = vmatpush1.bf16.msra.mxu0 0
    %2920 = vmatprep.subr.bf16.mxu0 0
    %2921 = vmatpush1.bf16.msra.mxu0 0
    %2922 = vmatprep.subr.bf16.mxu0 0
    %2923 = vmatpush1.bf16.msra.mxu0 0
    %2924 = vmatprep.subr.bf16.mxu0 0
    %2925 = vmatpush1.bf16.msra.mxu0 0
    %2926 = vmatprep.mubr.bf16.mxu0 0
    %2927 = vmatmul.mubr.bf16.gmra.mrb[0].mxu0 %v1793
    %v2928 = vpop.f32.mrb[0].mxu0
    %v2929 = vadd.f32 %v2880, %v2928
    %v2930 = vpop.f32.mrb[0].mxu0
    %v2931 = vpop.f32.mrb[0].mxu0
    %v2932 = vadd.f32 %v2880, %v2931
    %v2933 = vpop.f32.mrb[0].mxu0
    %2934 = vmatprep.mubr.bf16.mxu0 0
    %2935 = vmatmul.mubr.bf16.gmra.mrb[0].mxu0 %v1796
    %v2936 = vpop.f32.mrb[0].mxu0
    %v2937 = vadd.f32 %v2880, %v2936
    %v2938 = vpop.f32.mrb[0].mxu0
    %v2939 = vpop.f32.mrb[0].mxu0
    %v2940 = vpop.f32.mrb[0].mxu0
    %2941 = vdwg.mxu0
    %v2943 = vlaneseq
    %v2944 = vshrl.u32 %v2943, 7
    %v2945 = vsub.s32 0, %v2944
    %v2946 = vrot.slane %v1707, %v2945
    %v2952 = vunpack.c.l.b16 %v1700
    %v2953 = vunpack.c.l.b16 %v1701
    %v2954 = vunpack.c.l.b16 %v1702
    %v2955 = vunpack.c.l.b16 %v1703
    %v2956 = vpack.c.b16 %v2953, %v2952
    %v2957 = vpack.c.b16 %v2955, %v2954
    %2960 = vmatprep.subr.bf16.mxu0 0
    %2961 = vmatpush1.bf16.msra.mxu0 %v2956
    %2962 = vmatprep.subr.bf16.mxu0 0
    %2963 = vmatpush1.bf16.msra.mxu0 %v2957
    %2964 = vmatprep.subr.bf16.mxu0 0
    %2965 = vmatpush1.bf16.msra.mxu0 0
    %2966 = vmatprep.subr.bf16.mxu0 0
    %2967 = vmatpush1.bf16.msra.mxu0 0
    %2968 = vmatprep.subr.bf16.mxu0 0
    %2969 = vmatpush1.bf16.msra.mxu0 0
    %2970 = vmatprep.subr.bf16.mxu0 0
    %2971 = vmatpush1.bf16.msra.mxu0 0
    %2972 = vmatprep.subr.bf16.mxu0 0
    %2973 = vmatpush1.bf16.msra.mxu0 0
    %2974 = vmatprep.subr.bf16.mxu0 0
    %2975 = vmatpush1.bf16.msra.mxu0 0
    %2976 = vmatprep.subr.bf16.mxu0 0
    %2977 = vmatpush1.bf16.msra.mxu0 0
    %2978 = vmatprep.subr.bf16.mxu0 0
    %2979 = vmatpush1.bf16.msra.mxu0 0
    %2980 = vmatprep.subr.bf16.mxu0 0
    %2981 = vmatpush1.bf16.msra.mxu0 0
    %2982 = vmatprep.subr.bf16.mxu0 0
    %2983 = vmatpush1.bf16.msra.mxu0 0
    %2984 = vmatprep.subr.bf16.mxu0 0
    %2985 = vmatpush1.bf16.msra.mxu0 0
    %2986 = vmatprep.subr.bf16.mxu0 0
    %2987 = vmatpush1.bf16.msra.mxu0 0
    %2988 = vmatprep.subr.bf16.mxu0 0
    %2989 = vmatpush1.bf16.msra.mxu0 0
    %2990 = vmatprep.subr.bf16.mxu0 0
    %2991 = vmatpush1.bf16.msra.mxu0 0
    %2992 = vmatprep.mubr.bf16.mxu0 0
    %2993 = vmatmul.mubr.bf16.gmra.mrb[0].mxu0 %v1793
    %v2994 = vpop.f32.mrb[0].mxu0
    %v2995 = vadd.f32 %v2946, %v2994
    %v2996 = vpop.f32.mrb[0].mxu0
    %v2997 = vpop.f32.mrb[0].mxu0
    %v2998 = vadd.f32 %v2946, %v2997
    %v2999 = vpop.f32.mrb[0].mxu0
    %3000 = vmatprep.mubr.bf16.mxu0 0
    %3001 = vmatmul.mubr.bf16.gmra.mrb[0].mxu0 %v1796
    %v3002 = vpop.f32.mrb[0].mxu0
    %v3003 = vadd.f32 %v2946, %v3002
    %v3004 = vpop.f32.mrb[0].mxu0
    %v3005 = vpop.f32.mrb[0].mxu0
    %v3006 = vpop.f32.mrb[0].mxu0
    %3007 = vdwg.mxu0
    %v3008 = vpack.c.bf16 %v2873, %v2870
    %v3009 = vpack.c.bf16 %v2932, %v2929
    %v3010 = vpack.c.bf16 %v2937, %v2937
    %v3012 = vsel %vm395, %v3008, 0
    %v3015 = vsel %vm395, %v3009, 0
    %v3018 = vsel %vm395, %v3010, 0
    %3020 = vmatprep.subr.bf16.mxu0 0
    %3021 = vmatpush1.bf16.xpose.msra.mxu0 %v3015
    %3022 = vmatprep.subr.bf16.mxu0 0
    %3023 = vmatpush1.bf16.xpose.msra.mxu0 %v3018
    %3024 = vmatprep.subr.bf16.mxu0 0
    %3025 = vmatpush1.bf16.xpose.msra.mxu0 0
    %3026 = vmatprep.subr.bf16.mxu0 0
    %3027 = vmatpush1.bf16.xpose.msra.mxu0 0
    %3028 = vmatprep.subr.bf16.mxu0 0
    %3029 = vmatpush1.bf16.xpose.msra.mxu0 0
    %3030 = vmatprep.subr.bf16.mxu0 0
    %3031 = vmatpush1.bf16.xpose.msra.mxu0 0
    %3032 = vmatprep.subr.bf16.mxu0 0
    %3033 = vmatpush1.bf16.xpose.msra.mxu0 0
    %3034 = vmatprep.subr.bf16.mxu0 0
    %3035 = vmatpush1.bf16.xpose.msra.mxu0 0
    %3036 = vmatprep.subr.bf16.mxu0 0
    %3037 = vmatpush1.bf16.xpose.msra.mxu0 0
    %3038 = vmatprep.subr.bf16.mxu0 0
    %3039 = vmatpush1.bf16.xpose.msra.mxu0 0
    %3040 = vmatprep.subr.bf16.mxu0 0
    %3041 = vmatpush1.bf16.xpose.msra.mxu0 0
    %3042 = vmatprep.subr.bf16.mxu0 0
    %3043 = vmatpush1.bf16.xpose.msra.mxu0 0
    %3044 = vmatprep.subr.bf16.mxu0 0
    %3045 = vmatpush1.bf16.xpose.msra.mxu0 0
    %3046 = vmatprep.subr.bf16.mxu0 0
    %3047 = vmatpush1.bf16.xpose.msra.mxu0 0
    %3048 = vmatprep.subr.bf16.mxu0 0
    %3049 = vmatpush1.bf16.xpose.msra.mxu0 0
    %3050 = vmatprep.subr.bf16.mxu0 0
    %3051 = vmatpush1.bf16.xpose.msra.mxu0 0
    %3052 = vmatprep.mubr.bf16.mxu0 0
    %3053 = vmatmul.mubr.bf16.gmra.mrb[0].mxu0 %v3012
    %v3054 = vpop.f32.mrb[0].mxu0
    %v3055 = vadd.f32 %v140, %v3054
    %v3056 = vpop.f32.mrb[0].mxu0
    %v3057 = vpop.f32.mrb[0].mxu0
    %v3058 = vadd.f32 %v141, %v3057
    %v3059 = vpop.f32.mrb[0].mxu0
    %3060 = vdwg.mxu0
    %v3061 = vsel %vm1965, %v3055, -inf
    %3062 = vmax.xlane.f32.xlu0 %v3061
    %v3063 = vpop.xlane.xlu0 %3062
    %v3064 = vsel %vm1965, %v3058, -inf
    %3065 = vmax.xlane.f32.xlu0 %v3064
    %v3066 = vpop.xlane.xlu0 %3065
    %v3067 = vsub.f32 %v3055, %v3063
    %v3068 = vsub.f32 %v3058, %v3066
    %v3069 = vmul.f32 %v3067, 1.442695
    %v3070 = vpow.pop %v3069
    %v3071 = vmul.f32 %v3068, 1.442695
    %v3072 = vpow.pop %v3071
    %v3073 = vsel %vm1965, %v3070, 0.0
    %3074 = vadd.xlane.f32.xlu0 %v3073
    %v3075 = vpop.xlane.xlu0 %3074
    %v3076 = vsel %vm1965, %v3072, 0.0
    %3077 = vadd.xlane.f32.xlu0 %v3076
    %v3078 = vpop.xlane.xlu0 %3077
    %v3079 = vrcp.pop %v3075
    %v3080 = vrcp.pop %v3078
    %v3081 = vmul.f32 %v3070, %v3079
    %v3082 = vmul.f32 %v3072, %v3080
    %v3083 = vpack.c.bf16 %v3082, %v3081
    %v3084 = vpack.c.bf16 %v2998, %v2995
    %v3085 = vpack.c.bf16 %v3003, %v3003
    %v3087 = vsel %vm1965, %v3083, 0
    %v3090 = vsel %vm1994, %v3085, 0
    %3092 = vmatprep.subr.bf16.mxu0 0
    %3093 = vmatpush1.bf16.msra.mxu0 %v3084
    %3094 = vmatprep.subr.bf16.mxu0 0
    %3095 = vmatpush1.bf16.msra.mxu0 %v3090
    %3096 = vmatprep.subr.bf16.mxu0 0
    %3097 = vmatpush1.bf16.msra.mxu0 0
    %3098 = vmatprep.subr.bf16.mxu0 0
    %3099 = vmatpush1.bf16.msra.mxu0 0
    %3100 = vmatprep.subr.bf16.mxu0 0
    %3101 = vmatpush1.bf16.msra.mxu0 0
    %3102 = vmatprep.subr.bf16.mxu0 0
    %3103 = vmatpush1.bf16.msra.mxu0 0
    %3104 = vmatprep.subr.bf16.mxu0 0
    %3105 = vmatpush1.bf16.msra.mxu0 0
    %3106 = vmatprep.subr.bf16.mxu0 0
    %3107 = vmatpush1.bf16.msra.mxu0 0
    %3108 = vmatprep.subr.bf16.mxu0 0
    %3109 = vmatpush1.bf16.msra.mxu0 0
    %3110 = vmatprep.subr.bf16.mxu0 0
    %3111 = vmatpush1.bf16.msra.mxu0 0
    %3112 = vmatprep.subr.bf16.mxu0 0
    %3113 = vmatpush1.bf16.msra.mxu0 0
    %3114 = vmatprep.subr.bf16.mxu0 0
    %3115 = vmatpush1.bf16.msra.mxu0 0
    %3116 = vmatprep.subr.bf16.mxu0 0
    %3117 = vmatpush1.bf16.msra.mxu0 0
    %3118 = vmatprep.subr.bf16.mxu0 0
    %3119 = vmatpush1.bf16.msra.mxu0 0
    %3120 = vmatprep.subr.bf16.mxu0 0
    %3121 = vmatpush1.bf16.msra.mxu0 0
    %3122 = vmatprep.subr.bf16.mxu0 0
    %3123 = vmatpush1.bf16.msra.mxu0 0
    %3124 = vmatprep.mubr.bf16.mxu0 0
    %3125 = vmatmul.mubr.bf16.gmra.mrb[0].mxu0 %v3087
    %v3126 = vpop.f32.mrb[0].mxu0
    %v3127 = vadd.f32 0.0, %v3126
    %v3128 = vpop.f32.mrb[0].mxu0
    %v3129 = vpop.f32.mrb[0].mxu0
    %v3130 = vadd.f32 0.0, %v3129
    %v3131 = vpop.f32.mrb[0].mxu0
    %3132 = vdwg.mxu0
    %v3133 = vpack.c.bf16 %v3130, %v3127
    %v3135 = vsel %vm395, %v3133, 0
    %v3138 = vsel %vm811, %v1711, 0
    %3140 = vmatprep.subr.bf16.mxu0 0
    %3141 = vmatpush1.bf16.msra.mxu0 %v3138
    %3142 = vmatprep.subr.bf16.mxu0 0
    %3143 = vmatpush1.bf16.msra.mxu0 0
    %3144 = vmatprep.subr.bf16.mxu0 0
    %3145 = vmatpush1.bf16.msra.mxu0 0
    %3146 = vmatprep.subr.bf16.mxu0 0
    %3147 = vmatpush1.bf16.msra.mxu0 0
    %3148 = vmatprep.subr.bf16.mxu0 0
    %3149 = vmatpush1.bf16.msra.mxu0 0
    %3150 = vmatprep.subr.bf16.mxu0 0
    %3151 = vmatpush1.bf16.msra.mxu0 0
    %3152 = vmatprep.subr.bf16.mxu0 0
    %3153 = vmatpush1.bf16.msra.mxu0 0
    %3154 = vmatprep.subr.bf16.mxu0 0
    %3155 = vmatpush1.bf16.msra.mxu0 0
    %3156 = vmatprep.subr.bf16.mxu0 0
    %3157 = vmatpush1.bf16.msra.mxu0 0
    %3158 = vmatprep.subr.bf16.mxu0 0
    %3159 = vmatpush1.bf16.msra.mxu0 0
    %3160 = vmatprep.subr.bf16.mxu0 0
    %3161 = vmatpush1.bf16.msra.mxu0 0
    %3162 = vmatprep.subr.bf16.mxu0 0
    %3163 = vmatpush1.bf16.msra.mxu0 0
    %3164 = vmatprep.subr.bf16.mxu0 0
    %3165 = vmatpush1.bf16.msra.mxu0 0
    %3166 = vmatprep.subr.bf16.mxu0 0
    %3167 = vmatpush1.bf16.msra.mxu0 0
    %3168 = vmatprep.subr.bf16.mxu0 0
    %3169 = vmatpush1.bf16.msra.mxu0 0
    %3170 = vmatprep.subr.bf16.mxu0 0
    %3171 = vmatpush1.bf16.msra.mxu0 0
    %3172 = vmatprep.mubr.bf16.mxu0 0
    %3173 = vmatmul.mubr.bf16.gmra.mrb[0].mxu0 %v3135
    %v3174 = vpop.f32.mrb[0].mxu0
    %v3175 = vadd.f32 0.0, %v3174
    %v3176 = vpop.f32.mrb[0].mxu0
    %v3177 = vpop.f32.mrb[0].mxu0
    %v3178 = vadd.f32 0.0, %v3177
    %v3179 = vpop.f32.mrb[0].mxu0
    %3180 = vdwg.mxu0
    %v3181 = vadd.f32 %v2815, %v3175
    %v3182 = vadd.f32 %v2816, %v3178
    %v3183 = vld [vmem:[%s39] sm:$0x1]
    %v3185 = vlaneseq
    %v3186 = vshrl.u32 %v3185, 7
    %v3187 = vsub.s32 0, %v3186
    %v3188 = vrot.slane %v3183, %v3187
    %v3190 = vadd.f32 %v3181, %v3188
    %v3191 = vadd.f32 %v3182, %v3188
    %v3192 = vadd.f32 %v3190, %v1645
    %v3193 = vadd.f32 %v3191, %v1646
    %v3194 = vld [vmem:[%s53] sm:$0x1]
    %v3195 = vld [vmem:[%s55] sm:$0x1]
    %v3196 = vsel %vm230, %v3192, 0.0
    %3197 = vadd.xlane.f32.xlu0 %v3196
    %v3198 = vpop.xlane.xlu0 %3197
    %v3199 = vsel %vm230, %v3193, 0.0
    %3200 = vadd.xlane.f32.xlu0 %v3199
    %v3201 = vpop.xlane.xlu0 %3200
    %v3202 = vmul.f32 %v3198, %v1610
    %v3203 = vmul.f32 %v3201, %v1610
    %v3204 = vsub.f32 %v3192, %v3202
    %v3205 = vsub.f32 %v3193, %v3203
    %v3206 = vmul.f32 %v3204, %v3204
    %v3207 = vmul.f32 %v3205, %v3205
    %v3208 = vsel %vm230, %v3206, 0.0
    %3209 = vadd.xlane.f32.xlu0 %v3208
    %v3210 = vpop.xlane.xlu0 %3209
    %v3211 = vsel %vm230, %v3207, 0.0
    %3212 = vadd.xlane.f32.xlu0 %v3211
    %v3213 = vpop.xlane.xlu0 %3212
    %v3214 = vmul.f32 %v3210, %v1610
    %v3215 = vmul.f32 %v3213, %v1610
    %v3216 = vadd.f32 %v3214, 1e-05
    %v3217 = vadd.f32 %v3215, 1e-05
    %v3218 = vrsqrt.pop %v3216
    %v3219 = vrsqrt.pop %v3217
    %v3220 = vmul.f32 %v3204, %v3218
    %v3221 = vmul.f32 %v3205, %v3219
    %v3223 = vlaneseq
    %v3224 = vshrl.u32 %v3223, 7
    %v3225 = vsub.s32 0, %v3224
    %v3226 = vrot.slane %v3194, %v3225
    %v3228 = vmul.f32 %v3220, %v3226
    %v3229 = vmul.f32 %v3221, %v3226
    %v3231 = vlaneseq
    %v3232 = vshrl.u32 %v3231, 7
    %v3233 = vsub.s32 0, %v3232
    %v3234 = vrot.slane %v3195, %v3233
    %v3236 = vadd.f32 %v3228, %v3234
    %v3237 = vadd.f32 %v3229, %v3234
    %v3238 = vpack.c.bf16 %v3237, %v3236
    %v3239 = vld [vmem:[%s41] sm:$0xf]
    %v3240 = vld [vmem:[%s41 + $0x4] sm:$0xf]
    %v3241 = vld [vmem:[%s41 + $0x8] sm:$0xf]
    %v3242 = vld [vmem:[%s41 + $0xc] sm:$0xf]
    %v3243 = vld [vmem:[%s43] sm:$0x1]
    %v3245 = vlaneseq
    %v3246 = vshrl.u32 %v3245, 7
    %v3247 = vsub.s32 0, %v3246
    %v3248 = vrot.slane %v3243, %v3247
    %v3254 = vunpack.c.l.b16 %v3239
    %v3255 = vunpack.c.l.b16 %v3240
    %v3256 = vunpack.c.l.b16 %v3241
    %v3257 = vunpack.c.l.b16 %v3242
    %v3258 = vpack.c.b16 %v3255, %v3254
    %v3259 = vpack.c.b16 %v3257, %v3256
    %v3263 = vsel %vm230, %v3238, 0
    %3265 = vmatprep.subr.bf16.mxu0 0
    %3266 = vmatpush1.bf16.msra.mxu0 %v3258
    %3267 = vmatprep.subr.bf16.mxu0 0
    %3268 = vmatpush1.bf16.msra.mxu0 %v3259
    %3269 = vmatprep.subr.bf16.mxu0 0
    %3270 = vmatpush1.bf16.msra.mxu0 0
    %3271 = vmatprep.subr.bf16.mxu0 0
    %3272 = vmatpush1.bf16.msra.mxu0 0
    %3273 = vmatprep.subr.bf16.mxu0 0
    %3274 = vmatpush1.bf16.msra.mxu0 0
    %3275 = vmatprep.subr.bf16.mxu0 0
    %3276 = vmatpush1.bf16.msra.mxu0 0
    %3277 = vmatprep.subr.bf16.mxu0 0
    %3278 = vmatpush1.bf16.msra.mxu0 0
    %3279 = vmatprep.subr.bf16.mxu0 0
    %3280 = vmatpush1.bf16.msra.mxu0 0
    %3281 = vmatprep.subr.bf16.mxu0 0
    %3282 = vmatpush1.bf16.msra.mxu0 0
    %3283 = vmatprep.subr.bf16.mxu0 0
    %3284 = vmatpush1.bf16.msra.mxu0 0
    %3285 = vmatprep.subr.bf16.mxu0 0
    %3286 = vmatpush1.bf16.msra.mxu0 0
    %3287 = vmatprep.subr.bf16.mxu0 0
    %3288 = vmatpush1.bf16.msra.mxu0 0
    %3289 = vmatprep.subr.bf16.mxu0 0
    %3290 = vmatpush1.bf16.msra.mxu0 0
    %3291 = vmatprep.subr.bf16.mxu0 0
    %3292 = vmatpush1.bf16.msra.mxu0 0
    %3293 = vmatprep.subr.bf16.mxu0 0
    %3294 = vmatpush1.bf16.msra.mxu0 0
    %3295 = vmatprep.subr.bf16.mxu0 0
    %3296 = vmatpush1.bf16.msra.mxu0 0
    %3297 = vmatprep.mubr.bf16.mxu0 0
    %3298 = vmatmul.mubr.bf16.gmra.mrb[0].mxu0 %v3263
    %v3299 = vpop.f32.mrb[0].mxu0
    %v3300 = vadd.f32 %v3248, %v3299
    %v3301 = vpop.f32.mrb[0].mxu0
    %v3302 = vpop.f32.mrb[0].mxu0
    %v3303 = vadd.f32 %v3248, %v3302
    %v3304 = vpop.f32.mrb[0].mxu0
    %3305 = vdwg.mxu0
    %v3306 = vmax.f32 %v3300, 0.0
    %v3307 = vmax.f32 %v3303, 0.0
    %v3308 = vpack.c.bf16 %v3307, %v3306
    %v3309 = vld [vmem:[%s45] sm:$0xf]
    %v3310 = vld [vmem:[%s45 + $0x4] sm:$0xf]
    %v3311 = vld [vmem:[%s45 + $0x8] sm:$0xf]
    %v3312 = vld [vmem:[%s45 + $0xc] sm:$0xf]
    %v3313 = vld [vmem:[%s45 + $0x10] sm:$0xf]
    %v3314 = vld [vmem:[%s45 + $0x14] sm:$0xf]
    %v3315 = vld [vmem:[%s45 + $0x18] sm:$0xf]
    %v3316 = vld [vmem:[%s45 + $0x1c] sm:$0xf]
    %v3317 = vld [vmem:[%s47] sm:$0x1]
    %v3319 = vlaneseq
    %v3320 = vshrl.u32 %v3319, 7
    %v3321 = vsub.s32 0, %v3320
    %v3322 = vrot.slane %v3317, %v3321
    %v3332 = vunpack.c.l.b16 %v3309
    %v3333 = vunpack.c.l.b16 %v3310
    %v3334 = vunpack.c.l.b16 %v3311
    %v3335 = vunpack.c.l.b16 %v3312
    %v3336 = vunpack.c.l.b16 %v3313
    %v3337 = vunpack.c.l.b16 %v3314
    %v3338 = vunpack.c.l.b16 %v3315
    %v3339 = vunpack.c.l.b16 %v3316
    %v3340 = vpack.c.b16 %v3333, %v3332
    %v3341 = vpack.c.b16 %v3335, %v3334
    %v3342 = vpack.c.b16 %v3337, %v3336
    %v3343 = vpack.c.b16 %v3339, %v3338
    %vm3348 = vcmask 523264
    %v3350 = vsel %vm3348, %v3308, 0
    %3352 = vmatprep.subr.bf16.mxu0 0
    %3353 = vmatpush1.bf16.msra.mxu0 %v3340
    %3354 = vmatprep.subr.bf16.mxu0 0
    %3355 = vmatpush1.bf16.msra.mxu0 %v3341
    %3356 = vmatprep.subr.bf16.mxu0 0
    %3357 = vmatpush1.bf16.msra.mxu0 %v3342
    %3358 = vmatprep.subr.bf16.mxu0 0
    %3359 = vmatpush1.bf16.msra.mxu0 %v3343
    %3360 = vmatprep.subr.bf16.mxu0 0
    %3361 = vmatpush1.bf16.msra.mxu0 0
    %3362 = vmatprep.subr.bf16.mxu0 0
    %3363 = vmatpush1.bf16.msra.mxu0 0
    %3364 = vmatprep.subr.bf16.mxu0 0
    %3365 = vmatpush1.bf16.msra.mxu0 0
    %3366 = vmatprep.subr.bf16.mxu0 0
    %3367 = vmatpush1.bf16.msra.mxu0 0
    %3368 = vmatprep.subr.bf16.mxu0 0
    %3369 = vmatpush1.bf16.msra.mxu0 0
    %3370 = vmatprep.subr.bf16.mxu0 0
    %3371 = vmatpush1.bf16.msra.mxu0 0
    %3372 = vmatprep.subr.bf16.mxu0 0
    %3373 = vmatpush1.bf16.msra.mxu0 0
    %3374 = vmatprep.subr.bf16.mxu0 0
    %3375 = vmatpush1.bf16.msra.mxu0 0
    %3376 = vmatprep.subr.bf16.mxu0 0
    %3377 = vmatpush1.bf16.msra.mxu0 0
    %3378 = vmatprep.subr.bf16.mxu0 0
    %3379 = vmatpush1.bf16.msra.mxu0 0
    %3380 = vmatprep.subr.bf16.mxu0 0
    %3381 = vmatpush1.bf16.msra.mxu0 0
    %3382 = vmatprep.subr.bf16.mxu0 0
    %3383 = vmatpush1.bf16.msra.mxu0 0
    %3384 = vmatprep.mubr.bf16.mxu0 0
    %3385 = vmatmul.mubr.bf16.gmra.mrb[0].mxu0 %v3350
    %v3386 = vpop.f32.mrb[0].mxu0
    %v3387 = vadd.f32 %v3322, %v3386
    %v3388 = vpop.f32.mrb[0].mxu0
    %v3389 = vpop.f32.mrb[0].mxu0
    %v3390 = vadd.f32 %v3322, %v3389
    %v3391 = vpop.f32.mrb[0].mxu0
    %3392 = vdwg.mxu0
    %v3393 = vadd.f32 %v3387, %v3236
    %v3394 = vadd.f32 %v3390, %v3237
    %v3395 = vld [vmem:[%s57] sm:$0x1]
    %v3396 = vld [vmem:[%s59] sm:$0x1]
    %v3397 = vsel %vm230, %v3393, 0.0
    %3398 = vadd.xlane.f32.xlu0 %v3397
    %v3399 = vpop.xlane.xlu0 %3398
    %v3400 = vsel %vm230, %v3394, 0.0
    %3401 = vadd.xlane.f32.xlu0 %v3400
    %v3402 = vpop.xlane.xlu0 %3401
    %v3403 = vmul.f32 %v3399, %v1610
    %v3404 = vmul.f32 %v3402, %v1610
    %v3405 = vsub.f32 %v3393, %v3403
    %v3406 = vsub.f32 %v3394, %v3404
    %v3407 = vmul.f32 %v3405, %v3405
    %v3408 = vmul.f32 %v3406, %v3406
    %v3409 = vsel %vm230, %v3407, 0.0
    %3410 = vadd.xlane.f32.xlu0 %v3409
    %v3411 = vpop.xlane.xlu0 %3410
    %v3412 = vsel %vm230, %v3408, 0.0
    %3413 = vadd.xlane.f32.xlu0 %v3412
    %v3414 = vpop.xlane.xlu0 %3413
    %v3415 = vmul.f32 %v3411, %v1610
    %v3416 = vmul.f32 %v3414, %v1610
    %v3417 = vadd.f32 %v3415, 1e-05
    %v3418 = vadd.f32 %v3416, 1e-05
    %v3419 = vrsqrt.pop %v3417
    %v3420 = vrsqrt.pop %v3418
    %v3421 = vmul.f32 %v3405, %v3419
    %v3422 = vmul.f32 %v3406, %v3420
    %v3424 = vlaneseq
    %v3425 = vshrl.u32 %v3424, 7
    %v3426 = vsub.s32 0, %v3425
    %v3427 = vrot.slane %v3395, %v3426
    %v3429 = vmul.f32 %v3421, %v3427
    %v3430 = vmul.f32 %v3422, %v3427
    %v3432 = vlaneseq
    %v3433 = vshrl.u32 %v3432, 7
    %v3434 = vsub.s32 0, %v3433
    %v3435 = vrot.slane %v3396, %v3434
    %v3437 = vadd.f32 %v3429, %v3435
    %v3438 = vadd.f32 %v3430, %v3435
    %v3439 = vpack.c.bf16 %v3438, %v3437
    %s3440 = scalar_lea.vmem %s9, 64
    %v3441 = vld [vmem:[%s3440] sm:$0xf]
    %v3442 = vld [vmem:[%s3440 + $0x4] sm:$0xf]
    %v3443 = vld [vmem:[%s3440 + $0x8] sm:$0xf]
    %v3444 = vld [vmem:[%s3440 + $0xc] sm:$0xf]
    %v3445 = vld [vmem:[%s3440 + $0x10] sm:$0xf]
    %v3446 = vld [vmem:[%s3440 + $0x14] sm:$0xf]
    %v3447 = vld [vmem:[%s3440 + $0x18] sm:$0xf]
    %v3448 = vld [vmem:[%s3440 + $0x1c] sm:$0xf]
    %v3449 = vld [vmem:[%s3440 + $0x20] sm:$0xf]
    %v3450 = vld [vmem:[%s3440 + $0x24] sm:$0xf]
    %v3451 = vld [vmem:[%s3440 + $0x28] sm:$0xf]
    %v3452 = vld [vmem:[%s3440 + $0x2c] sm:$0xf]
    %v3453 = vld [vmem:[%s3440 + $0x30] sm:$0xf]
    %v3454 = vld [vmem:[%s3440 + $0x34] sm:$0xf]
    %v3455 = vld [vmem:[%s3440 + $0x38] sm:$0xf]
    %v3456 = vld [vmem:[%s3440 + $0x3c] sm:$0xf]
    %s3457 = scalar_lea.vmem %s11, 4
    %v3458 = vld [vmem:[%s3457] sm:$0x1]
    %v3459 = vld [vmem:[%s3457 + $0x1] sm:$0x1]
    %v3460 = vld [vmem:[%s3457 + $0x2] sm:$0x1]
    %v3461 = vld [vmem:[%s3457 + $0x3] sm:$0x1]
    %s3462 = scalar_lea.vmem %s13, 64
    %v3463 = vld [vmem:[%s3462] sm:$0xf]
    %v3464 = vld [vmem:[%s3462 + $0x4] sm:$0xf]
    %v3465 = vld [vmem:[%s3462 + $0x8] sm:$0xf]
    %v3466 = vld [vmem:[%s3462 + $0xc] sm:$0xf]
    %v3467 = vld [vmem:[%s3462 + $0x10] sm:$0xf]
    %v3468 = vld [vmem:[%s3462 + $0x14] sm:$0xf]
    %v3469 = vld [vmem:[%s3462 + $0x18] sm:$0xf]
    %v3470 = vld [vmem:[%s3462 + $0x1c] sm:$0xf]
    %v3471 = vld [vmem:[%s3462 + $0x20] sm:$0xf]
    %v3472 = vld [vmem:[%s3462 + $0x24] sm:$0xf]
    %v3473 = vld [vmem:[%s3462 + $0x28] sm:$0xf]
    %v3474 = vld [vmem:[%s3462 + $0x2c] sm:$0xf]
    %v3475 = vld [vmem:[%s3462 + $0x30] sm:$0xf]
    %v3476 = vld [vmem:[%s3462 + $0x34] sm:$0xf]
    %v3477 = vld [vmem:[%s3462 + $0x38] sm:$0xf]
    %v3478 = vld [vmem:[%s3462 + $0x3c] sm:$0xf]
    %s3479 = scalar_lea.vmem %s15, 4
    %v3480 = vld [vmem:[%s3479] sm:$0x1]
    %v3481 = vld [vmem:[%s3479 + $0x1] sm:$0x1]
    %v3482 = vld [vmem:[%s3479 + $0x2] sm:$0x1]
    %v3483 = vld [vmem:[%s3479 + $0x3] sm:$0x1]
    %s3484 = scalar_lea.vmem %s17, 64
    %v3485 = vld [vmem:[%s3484] sm:$0xf]
    %v3486 = vld [vmem:[%s3484 + $0x4] sm:$0xf]
    %v3487 = vld [vmem:[%s3484 + $0x8] sm:$0xf]
    %v3488 = vld [vmem:[%s3484 + $0xc] sm:$0xf]
    %v3489 = vld [vmem:[%s3484 + $0x10] sm:$0xf]
    %v3490 = vld [vmem:[%s3484 + $0x14] sm:$0xf]
    %v3491 = vld [vmem:[%s3484 + $0x18] sm:$0xf]
    %v3492 = vld [vmem:[%s3484 + $0x1c] sm:$0xf]
    %v3493 = vld [vmem:[%s3484 + $0x20] sm:$0xf]
    %v3494 = vld [vmem:[%s3484 + $0x24] sm:$0xf]
    %v3495 = vld [vmem:[%s3484 + $0x28] sm:$0xf]
    %v3496 = vld [vmem:[%s3484 + $0x2c] sm:$0xf]
    %v3497 = vld [vmem:[%s3484 + $0x30] sm:$0xf]
    %v3498 = vld [vmem:[%s3484 + $0x34] sm:$0xf]
    %v3499 = vld [vmem:[%s3484 + $0x38] sm:$0xf]
    %v3500 = vld [vmem:[%s3484 + $0x3c] sm:$0xf]
    %s3501 = scalar_lea.vmem %s19, 4
    %v3502 = vld [vmem:[%s3501] sm:$0x1]
    %v3503 = vld [vmem:[%s3501 + $0x1] sm:$0x1]
    %v3504 = vld [vmem:[%s3501 + $0x2] sm:$0x1]
    %v3505 = vld [vmem:[%s3501 + $0x3] sm:$0x1]
    %s3506 = scalar_lea.vmem %s21, 16
    %v3507 = vld [vmem:[%s3506] sm:$0xf]
    %v3508 = vld [vmem:[%s3506 + $0x4] sm:$0xf]
    %v3509 = vld [vmem:[%s3506 + $0x8] sm:$0xf]
    %v3510 = vld [vmem:[%s3506 + $0xc] sm:$0xf]
    %v3512 = vlaneseq
    %v3513 = vshrl.u32 %v3512, 7
    %v3514 = vsub.s32 0, %v3513
    %v3515 = vrot.slane %v3458, %v3514
    %v3521 = vunpack.c.l.b16 %v3441
    %v3522 = vunpack.c.l.b16 %v3442
    %v3523 = vunpack.c.l.b16 %v3443
    %v3524 = vunpack.c.l.b16 %v3444
    %v3525 = vpack.c.b16 %v3522, %v3521
    %v3526 = vpack.c.b16 %v3524, %v3523
    %v3530 = vsel %vm230, %v3439, 0
    %3532 = vmatprep.subr.bf16.mxu0 0
    %3533 = vmatpush1.bf16.msra.mxu0 %v3525
    %3534 = vmatprep.subr.bf16.mxu0 0
    %3535 = vmatpush1.bf16.msra.mxu0 %v3526
    %3536 = vmatprep.subr.bf16.mxu0 0
    %3537 = vmatpush1.bf16.msra.mxu0 0
    %3538 = vmatprep.subr.bf16.mxu0 0
    %3539 = vmatpush1.bf16.msra.mxu0 0
    %3540 = vmatprep.subr.bf16.mxu0 0
    %3541 = vmatpush1.bf16.msra.mxu0 0
    %3542 = vmatprep.subr.bf16.mxu0 0
    %3543 = vmatpush1.bf16.msra.mxu0 0
    %3544 = vmatprep.subr.bf16.mxu0 0
    %3545 = vmatpush1.bf16.msra.mxu0 0
    %3546 = vmatprep.subr.bf16.mxu0 0
    %3547 = vmatpush1.bf16.msra.mxu0 0
    %3548 = vmatprep.subr.bf16.mxu0 0
    %3549 = vmatpush1.bf16.msra.mxu0 0
    %3550 = vmatprep.subr.bf16.mxu0 0
    %3551 = vmatpush1.bf16.msra.mxu0 0
    %3552 = vmatprep.subr.bf16.mxu0 0
    %3553 = vmatpush1.bf16.msra.mxu0 0
    %3554 = vmatprep.subr.bf16.mxu0 0
    %3555 = vmatpush1.bf16.msra.mxu0 0
    %3556 = vmatprep.subr.bf16.mxu0 0
    %3557 = vmatpush1.bf16.msra.mxu0 0
    %3558 = vmatprep.subr.bf16.mxu0 0
    %3559 = vmatpush1.bf16.msra.mxu0 0
    %3560 = vmatprep.subr.bf16.mxu0 0
    %3561 = vmatpush1.bf16.msra.mxu0 0
    %3562 = vmatprep.subr.bf16.mxu0 0
    %3563 = vmatpush1.bf16.msra.mxu0 0
    %3564 = vmatprep.mubr.bf16.mxu0 0
    %3565 = vmatmul.mubr.bf16.gmra.mrb[0].mxu0 %v3530
    %v3566 = vpop.f32.mrb[0].mxu0
    %v3567 = vadd.f32 %v3515, %v3566
    %v3568 = vpop.f32.mrb[0].mxu0
    %v3569 = vpop.f32.mrb[0].mxu0
    %v3570 = vadd.f32 %v3515, %v3569
    %v3571 = vpop.f32.mrb[0].mxu0
    %3572 = vdwg.mxu0
    %v3574 = vlaneseq
    %v3575 = vshrl.u32 %v3574, 7
    %v3576 = vsub.s32 0, %v3575
    %v3577 = vrot.slane %v3480, %v3576
    %v3583 = vunpack.c.l.b16 %v3463
    %v3584 = vunpack.c.l.b16 %v3464
    %v3585 = vunpack.c.l.b16 %v3465
    %v3586 = vunpack.c.l.b16 %v3466
    %v3587 = vpack.c.b16 %v3584, %v3583
    %v3588 = vpack.c.b16 %v3586, %v3585
    %3591 = vmatprep.subr.bf16.mxu0 0
    %3592 = vmatpush1.bf16.msra.mxu0 %v3587
    %3593 = vmatprep.subr.bf16.mxu0 0
    %3594 = vmatpush1.bf16.msra.mxu0 %v3588
    %3595 = vmatprep.subr.bf16.mxu0 0
    %3596 = vmatpush1.bf16.msra.mxu0 0
    %3597 = vmatprep.subr.bf16.mxu0 0
    %3598 = vmatpush1.bf16.msra.mxu0 0
    %3599 = vmatprep.subr.bf16.mxu0 0
    %3600 = vmatpush1.bf16.msra.mxu0 0
    %3601 = vmatprep.subr.bf16.mxu0 0
    %3602 = vmatpush1.bf16.msra.mxu0 0
    %3603 = vmatprep.subr.bf16.mxu0 0
    %3604 = vmatpush1.bf16.msra.mxu0 0
    %3605 = vmatprep.subr.bf16.mxu0 0
    %3606 = vmatpush1.bf16.msra.mxu0 0
    %3607 = vmatprep.subr.bf16.mxu0 0
    %3608 = vmatpush1.bf16.msra.mxu0 0
    %3609 = vmatprep.subr.bf16.mxu0 0
    %3610 = vmatpush1.bf16.msra.mxu0 0
    %3611 = vmatprep.subr.bf16.mxu0 0
    %3612 = vmatpush1.bf16.msra.mxu0 0
    %3613 = vmatprep.subr.bf16.mxu0 0
    %3614 = vmatpush1.bf16.msra.mxu0 0
    %3615 = vmatprep.subr.bf16.mxu0 0
    %3616 = vmatpush1.bf16.msra.mxu0 0
    %3617 = vmatprep.subr.bf16.mxu0 0
    %3618 = vmatpush1.bf16.msra.mxu0 0
    %3619 = vmatprep.subr.bf16.mxu0 0
    %3620 = vmatpush1.bf16.msra.mxu0 0
    %3621 = vmatprep.subr.bf16.mxu0 0
    %3622 = vmatpush1.bf16.msra.mxu0 0
    %3623 = vmatprep.mubr.bf16.mxu0 0
    %3624 = vmatmul.mubr.bf16.gmra.mrb[0].mxu0 %v3530
    %v3625 = vpop.f32.mrb[0].mxu0
    %v3626 = vadd.f32 %v3577, %v3625
    %v3627 = vpop.f32.mrb[0].mxu0
    %v3628 = vpop.f32.mrb[0].mxu0
    %v3629 = vadd.f32 %v3577, %v3628
    %v3630 = vpop.f32.mrb[0].mxu0
    %3631 = vdwg.mxu0
    %v3633 = vlaneseq
    %v3634 = vshrl.u32 %v3633, 7
    %v3635 = vsub.s32 0, %v3634
    %v3636 = vrot.slane %v3502, %v3635
    %v3642 = vunpack.c.l.b16 %v3485
    %v3643 = vunpack.c.l.b16 %v3486
    %v3644 = vunpack.c.l.b16 %v3487
    %v3645 = vunpack.c.l.b16 %v3488
    %v3646 = vpack.c.b16 %v3643, %v3642
    %v3647 = vpack.c.b16 %v3645, %v3644
    %3650 = vmatprep.subr.bf16.mxu0 0
    %3651 = vmatpush1.bf16.msra.mxu0 %v3646
    %3652 = vmatprep.subr.bf16.mxu0 0
    %3653 = vmatpush1.bf16.msra.mxu0 %v3647
    %3654 = vmatprep.subr.bf16.mxu0 0
    %3655 = vmatpush1.bf16.msra.mxu0 0
    %3656 = vmatprep.subr.bf16.mxu0 0
    %3657 = vmatpush1.bf16.msra.mxu0 0
    %3658 = vmatprep.subr.bf16.mxu0 0
    %3659 = vmatpush1.bf16.msra.mxu0 0
    %3660 = vmatprep.subr.bf16.mxu0 0
    %3661 = vmatpush1.bf16.msra.mxu0 0
    %3662 = vmatprep.subr.bf16.mxu0 0
    %3663 = vmatpush1.bf16.msra.mxu0 0
    %3664 = vmatprep.subr.bf16.mxu0 0
    %3665 = vmatpush1.bf16.msra.mxu0 0
    %3666 = vmatprep.subr.bf16.mxu0 0
    %3667 = vmatpush1.bf16.msra.mxu0 0
    %3668 = vmatprep.subr.bf16.mxu0 0
    %3669 = vmatpush1.bf16.msra.mxu0 0
    %3670 = vmatprep.subr.bf16.mxu0 0
    %3671 = vmatpush1.bf16.msra.mxu0 0
    %3672 = vmatprep.subr.bf16.mxu0 0
    %3673 = vmatpush1.bf16.msra.mxu0 0
    %3674 = vmatprep.subr.bf16.mxu0 0
    %3675 = vmatpush1.bf16.msra.mxu0 0
    %3676 = vmatprep.subr.bf16.mxu0 0
    %3677 = vmatpush1.bf16.msra.mxu0 0
    %3678 = vmatprep.subr.bf16.mxu0 0
    %3679 = vmatpush1.bf16.msra.mxu0 0
    %3680 = vmatprep.subr.bf16.mxu0 0
    %3681 = vmatpush1.bf16.msra.mxu0 0
    %3682 = vmatprep.mubr.bf16.mxu0 0
    %3683 = vmatmul.mubr.bf16.gmra.mrb[0].mxu0 %v3530
    %v3684 = vpop.f32.mrb[0].mxu0
    %v3685 = vadd.f32 %v3636, %v3684
    %v3686 = vpop.f32.mrb[0].mxu0
    %v3687 = vpop.f32.mrb[0].mxu0
    %v3688 = vadd.f32 %v3636, %v3687
    %v3689 = vpop.f32.mrb[0].mxu0
    %3690 = vdwg.mxu0
    %v3691 = vpack.c.bf16 %v3570, %v3567
    %v3692 = vpack.c.bf16 %v3629, %v3626
    %v3694 = vsel %vm395, %v3691, 0
    %v3697 = vsel %vm395, %v3692, 0
    %3699 = vmatprep.subr.bf16.mxu0 0
    %3700 = vmatpush1.bf16.xpose.msra.mxu0 %v3697
    %3701 = vmatprep.subr.bf16.mxu0 0
    %3702 = vmatpush1.bf16.xpose.msra.mxu0 0
    %3703 = vmatprep.subr.bf16.mxu0 0
    %3704 = vmatpush1.bf16.xpose.msra.mxu0 0
    %3705 = vmatprep.subr.bf16.mxu0 0
    %3706 = vmatpush1.bf16.xpose.msra.mxu0 0
    %3707 = vmatprep.subr.bf16.mxu0 0
    %3708 = vmatpush1.bf16.xpose.msra.mxu0 0
    %3709 = vmatprep.subr.bf16.mxu0 0
    %3710 = vmatpush1.bf16.xpose.msra.mxu0 0
    %3711 = vmatprep.subr.bf16.mxu0 0
    %3712 = vmatpush1.bf16.xpose.msra.mxu0 0
    %3713 = vmatprep.subr.bf16.mxu0 0
    %3714 = vmatpush1.bf16.xpose.msra.mxu0 0
    %3715 = vmatprep.subr.bf16.mxu0 0
    %3716 = vmatpush1.bf16.xpose.msra.mxu0 0
    %3717 = vmatprep.subr.bf16.mxu0 0
    %3718 = vmatpush1.bf16.xpose.msra.mxu0 0
    %3719 = vmatprep.subr.bf16.mxu0 0
    %3720 = vmatpush1.bf16.xpose.msra.mxu0 0
    %3721 = vmatprep.subr.bf16.mxu0 0
    %3722 = vmatpush1.bf16.xpose.msra.mxu0 0
    %3723 = vmatprep.subr.bf16.mxu0 0
    %3724 = vmatpush1.bf16.xpose.msra.mxu0 0
    %3725 = vmatprep.subr.bf16.mxu0 0
    %3726 = vmatpush1.bf16.xpose.msra.mxu0 0
    %3727 = vmatprep.subr.bf16.mxu0 0
    %3728 = vmatpush1.bf16.xpose.msra.mxu0 0
    %3729 = vmatprep.subr.bf16.mxu0 0
    %3730 = vmatpush1.bf16.xpose.msra.mxu0 0
    %3731 = vmatprep.mubr.bf16.mxu0 0
    %3732 = vmatmul.mubr.bf16.gmra.mrb[0].mxu0 %v3694
    %v3733 = vpop.f32.mrb[0].mxu0
    %v3734 = vadd.f32 %v138, %v3733
    %v3735 = vpop.f32.mrb[0].mxu0
    %v3736 = vpop.f32.mrb[0].mxu0
    %v3737 = vadd.f32 %v139, %v3736
    %v3738 = vpop.f32.mrb[0].mxu0
    %3739 = vdwg.mxu0
    %v3740 = vsel %vm443, %v3734, -inf
    %3741 = vmax.xlane.f32.xlu0 %v3740
    %v3742 = vpop.xlane.xlu0 %3741
    %v3743 = vsel %vm443, %v3737, -inf
    %3744 = vmax.xlane.f32.xlu0 %v3743
    %v3745 = vpop.xlane.xlu0 %3744
    %v3746 = vsub.f32 %v3734, %v3742
    %v3747 = vsub.f32 %v3737, %v3745
    %v3748 = vmul.f32 %v3746, 1.442695
    %v3749 = vpow.pop %v3748
    %v3750 = vmul.f32 %v3747, 1.442695
    %v3751 = vpow.pop %v3750
    %v3752 = vsel %vm443, %v3749, 0.0
    %3753 = vadd.xlane.f32.xlu0 %v3752
    %v3754 = vpop.xlane.xlu0 %3753
    %v3755 = vsel %vm443, %v3751, 0.0
    %3756 = vadd.xlane.f32.xlu0 %v3755
    %v3757 = vpop.xlane.xlu0 %3756
    %v3758 = vrcp.pop %v3754
    %v3759 = vrcp.pop %v3757
    %v3760 = vmul.f32 %v3749, %v3758
    %v3761 = vmul.f32 %v3751, %v3759
    %v3762 = vpack.c.bf16 %v3761, %v3760
    %v3763 = vpack.c.bf16 %v3688, %v3685
    %v3765 = vsel %vm443, %v3762, 0
    %3767 = vmatprep.subr.bf16.mxu0 0
    %3768 = vmatpush1.bf16.msra.mxu0 %v3763
    %3769 = vmatprep.subr.bf16.mxu0 0
    %3770 = vmatpush1.bf16.msra.mxu0 0
    %3771 = vmatprep.subr.bf16.mxu0 0
    %3772 = vmatpush1.bf16.msra.mxu0 0
    %3773 = vmatprep.subr.bf16.mxu0 0
    %3774 = vmatpush1.bf16.msra.mxu0 0
    %3775 = vmatprep.subr.bf16.mxu0 0
    %3776 = vmatpush1.bf16.msra.mxu0 0
    %3777 = vmatprep.subr.bf16.mxu0 0
    %3778 = vmatpush1.bf16.msra.mxu0 0
    %3779 = vmatprep.subr.bf16.mxu0 0
    %3780 = vmatpush1.bf16.msra.mxu0 0
    %3781 = vmatprep.subr.bf16.mxu0 0
    %3782 = vmatpush1.bf16.msra.mxu0 0
    %3783 = vmatprep.subr.bf16.mxu0 0
    %3784 = vmatpush1.bf16.msra.mxu0 0
    %3785 = vmatprep.subr.bf16.mxu0 0
    %3786 = vmatpush1.bf16.msra.mxu0 0
    %3787 = vmatprep.subr.bf16.mxu0 0
    %3788 = vmatpush1.bf16.msra.mxu0 0
    %3789 = vmatprep.subr.bf16.mxu0 0
    %3790 = vmatpush1.bf16.msra.mxu0 0
    %3791 = vmatprep.subr.bf16.mxu0 0
    %3792 = vmatpush1.bf16.msra.mxu0 0
    %3793 = vmatprep.subr.bf16.mxu0 0
    %3794 = vmatpush1.bf16.msra.mxu0 0
    %3795 = vmatprep.subr.bf16.mxu0 0
    %3796 = vmatpush1.bf16.msra.mxu0 0
    %3797 = vmatprep.subr.bf16.mxu0 0
    %3798 = vmatpush1.bf16.msra.mxu0 0
    %3799 = vmatprep.mubr.bf16.mxu0 0
    %3800 = vmatmul.mubr.bf16.gmra.mrb[0].mxu0 %v3765
    %v3801 = vpop.f32.mrb[0].mxu0
    %v3802 = vadd.f32 0.0, %v3801
    %v3803 = vpop.f32.mrb[0].mxu0
    %v3804 = vpop.f32.mrb[0].mxu0
    %v3805 = vadd.f32 0.0, %v3804
    %v3806 = vpop.f32.mrb[0].mxu0
    %3807 = vdwg.mxu0
    %v3808 = vpack.c.bf16 %v3805, %v3802
    %v3810 = vlaneseq
    %v3811 = vshrl.u32 %v3810, 7
    %v3812 = vsub.s32 0, %v3811
    %v3813 = vrot.slane %v3459, %v3812
    %v3819 = vunpack.c.l.b16 %v3445
    %v3820 = vunpack.c.l.b16 %v3446
    %v3821 = vunpack.c.l.b16 %v3447
    %v3822 = vunpack.c.l.b16 %v3448
    %v3823 = vpack.c.b16 %v3820, %v3819
    %v3824 = vpack.c.b16 %v3822, %v3821
    %3827 = vmatprep.subr.bf16.mxu0 0
    %3828 = vmatpush1.bf16.msra.mxu0 %v3823
    %3829 = vmatprep.subr.bf16.mxu0 0
    %3830 = vmatpush1.bf16.msra.mxu0 %v3824
    %3831 = vmatprep.subr.bf16.mxu0 0
    %3832 = vmatpush1.bf16.msra.mxu0 0
    %3833 = vmatprep.subr.bf16.mxu0 0
    %3834 = vmatpush1.bf16.msra.mxu0 0
    %3835 = vmatprep.subr.bf16.mxu0 0
    %3836 = vmatpush1.bf16.msra.mxu0 0
    %3837 = vmatprep.subr.bf16.mxu0 0
    %3838 = vmatpush1.bf16.msra.mxu0 0
    %3839 = vmatprep.subr.bf16.mxu0 0
    %3840 = vmatpush1.bf16.msra.mxu0 0
    %3841 = vmatprep.subr.bf16.mxu0 0
    %3842 = vmatpush1.bf16.msra.mxu0 0
    %3843 = vmatprep.subr.bf16.mxu0 0
    %3844 = vmatpush1.bf16.msra.mxu0 0
    %3845 = vmatprep.subr.bf16.mxu0 0
    %3846 = vmatpush1.bf16.msra.mxu0 0
    %3847 = vmatprep.subr.bf16.mxu0 0
    %3848 = vmatpush1.bf16.msra.mxu0 0
    %3849 = vmatprep.subr.bf16.mxu0 0
    %3850 = vmatpush1.bf16.msra.mxu0 0
    %3851 = vmatprep.subr.bf16.mxu0 0
    %3852 = vmatpush1.bf16.msra.mxu0 0
    %3853 = vmatprep.subr.bf16.mxu0 0
    %3854 = vmatpush1.bf16.msra.mxu0 0
    %3855 = vmatprep.subr.bf16.mxu0 0
    %3856 = vmatpush1.bf16.msra.mxu0 0
    %3857 = vmatprep.subr.bf16.mxu0 0
    %3858 = vmatpush1.bf16.msra.mxu0 0
    %3859 = vmatprep.mubr.bf16.mxu0 0
    %3860 = vmatmul.mubr.bf16.gmra.mrb[0].mxu0 %v3530
    %v3861 = vpop.f32.mrb[0].mxu0
    %v3862 = vadd.f32 %v3813, %v3861
    %v3863 = vpop.f32.mrb[0].mxu0
    %v3864 = vpop.f32.mrb[0].mxu0
    %v3865 = vadd.f32 %v3813, %v3864
    %v3866 = vpop.f32.mrb[0].mxu0
    %3867 = vdwg.mxu0
    %v3869 = vlaneseq
    %v3870 = vshrl.u32 %v3869, 7
    %v3871 = vsub.s32 0, %v3870
    %v3872 = vrot.slane %v3481, %v3871
    %v3878 = vunpack.c.l.b16 %v3467
    %v3879 = vunpack.c.l.b16 %v3468
    %v3880 = vunpack.c.l.b16 %v3469
    %v3881 = vunpack.c.l.b16 %v3470
    %v3882 = vpack.c.b16 %v3879, %v3878
    %v3883 = vpack.c.b16 %v3881, %v3880
    %3886 = vmatprep.subr.bf16.mxu0 0
    %3887 = vmatpush1.bf16.msra.mxu0 %v3882
    %3888 = vmatprep.subr.bf16.mxu0 0
    %3889 = vmatpush1.bf16.msra.mxu0 %v3883
    %3890 = vmatprep.subr.bf16.mxu0 0
    %3891 = vmatpush1.bf16.msra.mxu0 0
    %3892 = vmatprep.subr.bf16.mxu0 0
    %3893 = vmatpush1.bf16.msra.mxu0 0
    %3894 = vmatprep.subr.bf16.mxu0 0
    %3895 = vmatpush1.bf16.msra.mxu0 0
    %3896 = vmatprep.subr.bf16.mxu0 0
    %3897 = vmatpush1.bf16.msra.mxu0 0
    %3898 = vmatprep.subr.bf16.mxu0 0
    %3899 = vmatpush1.bf16.msra.mxu0 0
    %3900 = vmatprep.subr.bf16.mxu0 0
    %3901 = vmatpush1.bf16.msra.mxu0 0
    %3902 = vmatprep.subr.bf16.mxu0 0
    %3903 = vmatpush1.bf16.msra.mxu0 0
    %3904 = vmatprep.subr.bf16.mxu0 0
    %3905 = vmatpush1.bf16.msra.mxu0 0
    %3906 = vmatprep.subr.bf16.mxu0 0
    %3907 = vmatpush1.bf16.msra.mxu0 0
    %3908 = vmatprep.subr.bf16.mxu0 0
    %3909 = vmatpush1.bf16.msra.mxu0 0
    %3910 = vmatprep.subr.bf16.mxu0 0
    %3911 = vmatpush1.bf16.msra.mxu0 0
    %3912 = vmatprep.subr.bf16.mxu0 0
    %3913 = vmatpush1.bf16.msra.mxu0 0
    %3914 = vmatprep.subr.bf16.mxu0 0
    %3915 = vmatpush1.bf16.msra.mxu0 0
    %3916 = vmatprep.subr.bf16.mxu0 0
    %3917 = vmatpush1.bf16.msra.mxu0 0
    %3918 = vmatprep.mubr.bf16.mxu0 0
    %3919 = vmatmul.mubr.bf16.gmra.mrb[0].mxu0 %v3530
    %v3920 = vpop.f32.mrb[0].mxu0
    %v3921 = vadd.f32 %v3872, %v3920
    %v3922 = vpop.f32.mrb[0].mxu0
    %v3923 = vpop.f32.mrb[0].mxu0
    %v3924 = vadd.f32 %v3872, %v3923
    %v3925 = vpop.f32.mrb[0].mxu0
    %3926 = vdwg.mxu0
    %v3928 = vlaneseq
    %v3929 = vshrl.u32 %v3928, 7
    %v3930 = vsub.s32 0, %v3929
    %v3931 = vrot.slane %v3503, %v3930
    %v3937 = vunpack.c.l.b16 %v3489
    %v3938 = vunpack.c.l.b16 %v3490
    %v3939 = vunpack.c.l.b16 %v3491
    %v3940 = vunpack.c.l.b16 %v3492
    %v3941 = vpack.c.b16 %v3938, %v3937
    %v3942 = vpack.c.b16 %v3940, %v3939
    %3945 = vmatprep.subr.bf16.mxu0 0
    %3946 = vmatpush1.bf16.msra.mxu0 %v3941
    %3947 = vmatprep.subr.bf16.mxu0 0
    %3948 = vmatpush1.bf16.msra.mxu0 %v3942
    %3949 = vmatprep.subr.bf16.mxu0 0
    %3950 = vmatpush1.bf16.msra.mxu0 0
    %3951 = vmatprep.subr.bf16.mxu0 0
    %3952 = vmatpush1.bf16.msra.mxu0 0
    %3953 = vmatprep.subr.bf16.mxu0 0
    %3954 = vmatpush1.bf16.msra.mxu0 0
    %3955 = vmatprep.subr.bf16.mxu0 0
    %3956 = vmatpush1.bf16.msra.mxu0 0
    %3957 = vmatprep.subr.bf16.mxu0 0
    %3958 = vmatpush1.bf16.msra.mxu0 0
    %3959 = vmatprep.subr.bf16.mxu0 0
    %3960 = vmatpush1.bf16.msra.mxu0 0
    %3961 = vmatprep.subr.bf16.mxu0 0
    %3962 = vmatpush1.bf16.msra.mxu0 0
    %3963 = vmatprep.subr.bf16.mxu0 0
    %3964 = vmatpush1.bf16.msra.mxu0 0
    %3965 = vmatprep.subr.bf16.mxu0 0
    %3966 = vmatpush1.bf16.msra.mxu0 0
    %3967 = vmatprep.subr.bf16.mxu0 0
    %3968 = vmatpush1.bf16.msra.mxu0 0
    %3969 = vmatprep.subr.bf16.mxu0 0
    %3970 = vmatpush1.bf16.msra.mxu0 0
    %3971 = vmatprep.subr.bf16.mxu0 0
    %3972 = vmatpush1.bf16.msra.mxu0 0
    %3973 = vmatprep.subr.bf16.mxu0 0
    %3974 = vmatpush1.bf16.msra.mxu0 0
    %3975 = vmatprep.subr.bf16.mxu0 0
    %3976 = vmatpush1.bf16.msra.mxu0 0
    %3977 = vmatprep.mubr.bf16.mxu0 0
    %3978 = vmatmul.mubr.bf16.gmra.mrb[0].mxu0 %v3530
    %v3979 = vpop.f32.mrb[0].mxu0
    %v3980 = vadd.f32 %v3931, %v3979
    %v3981 = vpop.f32.mrb[0].mxu0
    %v3982 = vpop.f32.mrb[0].mxu0
    %v3983 = vadd.f32 %v3931, %v3982
    %v3984 = vpop.f32.mrb[0].mxu0
    %3985 = vdwg.mxu0
    %v3986 = vpack.c.bf16 %v3865, %v3862
    %v3987 = vpack.c.bf16 %v3924, %v3921
    %v3989 = vsel %vm395, %v3986, 0
    %v3992 = vsel %vm395, %v3987, 0
    %3994 = vmatprep.subr.bf16.mxu0 0
    %3995 = vmatpush1.bf16.xpose.msra.mxu0 %v3992
    %3996 = vmatprep.subr.bf16.mxu0 0
    %3997 = vmatpush1.bf16.xpose.msra.mxu0 0
    %3998 = vmatprep.subr.bf16.mxu0 0
    %3999 = vmatpush1.bf16.xpose.msra.mxu0 0
    %4000 = vmatprep.subr.bf16.mxu0 0
    %4001 = vmatpush1.bf16.xpose.msra.mxu0 0
    %4002 = vmatprep.subr.bf16.mxu0 0
    %4003 = vmatpush1.bf16.xpose.msra.mxu0 0
    %4004 = vmatprep.subr.bf16.mxu0 0
    %4005 = vmatpush1.bf16.xpose.msra.mxu0 0
    %4006 = vmatprep.subr.bf16.mxu0 0
    %4007 = vmatpush1.bf16.xpose.msra.mxu0 0
    %4008 = vmatprep.subr.bf16.mxu0 0
    %4009 = vmatpush1.bf16.xpose.msra.mxu0 0
    %4010 = vmatprep.subr.bf16.mxu0 0
    %4011 = vmatpush1.bf16.xpose.msra.mxu0 0
    %4012 = vmatprep.subr.bf16.mxu0 0
    %4013 = vmatpush1.bf16.xpose.msra.mxu0 0
    %4014 = vmatprep.subr.bf16.mxu0 0
    %4015 = vmatpush1.bf16.xpose.msra.mxu0 0
    %4016 = vmatprep.subr.bf16.mxu0 0
    %4017 = vmatpush1.bf16.xpose.msra.mxu0 0
    %4018 = vmatprep.subr.bf16.mxu0 0
    %4019 = vmatpush1.bf16.xpose.msra.mxu0 0
    %4020 = vmatprep.subr.bf16.mxu0 0
    %4021 = vmatpush1.bf16.xpose.msra.mxu0 0
    %4022 = vmatprep.subr.bf16.mxu0 0
    %4023 = vmatpush1.bf16.xpose.msra.mxu0 0
    %4024 = vmatprep.subr.bf16.mxu0 0
    %4025 = vmatpush1.bf16.xpose.msra.mxu0 0
    %4026 = vmatprep.mubr.bf16.mxu0 0
    %4027 = vmatmul.mubr.bf16.gmra.mrb[0].mxu0 %v3989
    %v4028 = vpop.f32.mrb[0].mxu0
    %v4029 = vadd.f32 %v138, %v4028
    %v4030 = vpop.f32.mrb[0].mxu0
    %v4031 = vpop.f32.mrb[0].mxu0
    %v4032 = vadd.f32 %v139, %v4031
    %v4033 = vpop.f32.mrb[0].mxu0
    %4034 = vdwg.mxu0
    %v4035 = vsel %vm443, %v4029, -inf
    %4036 = vmax.xlane.f32.xlu0 %v4035
    %v4037 = vpop.xlane.xlu0 %4036
    %v4038 = vsel %vm443, %v4032, -inf
    %4039 = vmax.xlane.f32.xlu0 %v4038
    %v4040 = vpop.xlane.xlu0 %4039
    %v4041 = vsub.f32 %v4029, %v4037
    %v4042 = vsub.f32 %v4032, %v4040
    %v4043 = vmul.f32 %v4041, 1.442695
    %v4044 = vpow.pop %v4043
    %v4045 = vmul.f32 %v4042, 1.442695
    %v4046 = vpow.pop %v4045
    %v4047 = vsel %vm443, %v4044, 0.0
    %4048 = vadd.xlane.f32.xlu0 %v4047
    %v4049 = vpop.xlane.xlu0 %4048
    %v4050 = vsel %vm443, %v4046, 0.0
    %4051 = vadd.xlane.f32.xlu0 %v4050
    %v4052 = vpop.xlane.xlu0 %4051
    %v4053 = vrcp.pop %v4049
    %v4054 = vrcp.pop %v4052
    %v4055 = vmul.f32 %v4044, %v4053
    %v4056 = vmul.f32 %v4046, %v4054
    %v4057 = vpack.c.bf16 %v4056, %v4055
    %v4058 = vpack.c.bf16 %v3983, %v3980
    %v4060 = vsel %vm443, %v4057, 0
    %4062 = vmatprep.subr.bf16.mxu0 0
    %4063 = vmatpush1.bf16.msra.mxu0 %v4058
    %4064 = vmatprep.subr.bf16.mxu0 0
    %4065 = vmatpush1.bf16.msra.mxu0 0
    %4066 = vmatprep.subr.bf16.mxu0 0
    %4067 = vmatpush1.bf16.msra.mxu0 0
    %4068 = vmatprep.subr.bf16.mxu0 0
    %4069 = vmatpush1.bf16.msra.mxu0 0
    %4070 = vmatprep.subr.bf16.mxu0 0
    %4071 = vmatpush1.bf16.msra.mxu0 0
    %4072 = vmatprep.subr.bf16.mxu0 0
    %4073 = vmatpush1.bf16.msra.mxu0 0
    %4074 = vmatprep.subr.bf16.mxu0 0
    %4075 = vmatpush1.bf16.msra.mxu0 0
    %4076 = vmatprep.subr.bf16.mxu0 0
    %4077 = vmatpush1.bf16.msra.mxu0 0
    %4078 = vmatprep.subr.bf16.mxu0 0
    %4079 = vmatpush1.bf16.msra.mxu0 0
    %4080 = vmatprep.subr.bf16.mxu0 0
    %4081 = vmatpush1.bf16.msra.mxu0 0
    %4082 = vmatprep.subr.bf16.mxu0 0
    %4083 = vmatpush1.bf16.msra.mxu0 0
    %4084 = vmatprep.subr.bf16.mxu0 0
    %4085 = vmatpush1.bf16.msra.mxu0 0
    %4086 = vmatprep.subr.bf16.mxu0 0
    %4087 = vmatpush1.bf16.msra.mxu0 0
    %4088 = vmatprep.subr.bf16.mxu0 0
    %4089 = vmatpush1.bf16.msra.mxu0 0
    %4090 = vmatprep.subr.bf16.mxu0 0
    %4091 = vmatpush1.bf16.msra.mxu0 0
    %4092 = vmatprep.subr.bf16.mxu0 0
    %4093 = vmatpush1.bf16.msra.mxu0 0
    %4094 = vmatprep.mubr.bf16.mxu0 0
    %4095 = vmatmul.mubr.bf16.gmra.mrb[0].mxu0 %v4060
    %v4096 = vpop.f32.mrb[0].mxu0
    %v4097 = vadd.f32 0.0, %v4096
    %v4098 = vpop.f32.mrb[0].mxu0
    %v4099 = vpop.f32.mrb[0].mxu0
    %v4100 = vadd.f32 0.0, %v4099
    %v4101 = vpop.f32.mrb[0].mxu0
    %4102 = vdwg.mxu0
    %v4103 = vpack.c.bf16 %v4100, %v4097
    %v4105 = vsel %vm395, %v4103, 0
    %v4108 = vsel %vm811, %v3508, 0
    %4110 = vmatprep.subr.bf16.mxu0 0
    %4111 = vmatpush1.bf16.msra.mxu0 %v4108
    %4112 = vmatprep.subr.bf16.mxu0 0
    %4113 = vmatpush1.bf16.msra.mxu0 0
    %4114 = vmatprep.subr.bf16.mxu0 0
    %4115 = vmatpush1.bf16.msra.mxu0 0
    %4116 = vmatprep.subr.bf16.mxu0 0
    %4117 = vmatpush1.bf16.msra.mxu0 0
    %4118 = vmatprep.subr.bf16.mxu0 0
    %4119 = vmatpush1.bf16.msra.mxu0 0
    %4120 = vmatprep.subr.bf16.mxu0 0
    %4121 = vmatpush1.bf16.msra.mxu0 0
    %4122 = vmatprep.subr.bf16.mxu0 0
    %4123 = vmatpush1.bf16.msra.mxu0 0
    %4124 = vmatprep.subr.bf16.mxu0 0
    %4125 = vmatpush1.bf16.msra.mxu0 0
    %4126 = vmatprep.subr.bf16.mxu0 0
    %4127 = vmatpush1.bf16.msra.mxu0 0
    %4128 = vmatprep.subr.bf16.mxu0 0
    %4129 = vmatpush1.bf16.msra.mxu0 0
    %4130 = vmatprep.subr.bf16.mxu0 0
    %4131 = vmatpush1.bf16.msra.mxu0 0
    %4132 = vmatprep.subr.bf16.mxu0 0
    %4133 = vmatpush1.bf16.msra.mxu0 0
    %4134 = vmatprep.subr.bf16.mxu0 0
    %4135 = vmatpush1.bf16.msra.mxu0 0
    %4136 = vmatprep.subr.bf16.mxu0 0
    %4137 = vmatpush1.bf16.msra.mxu0 0
    %4138 = vmatprep.subr.bf16.mxu0 0
    %4139 = vmatpush1.bf16.msra.mxu0 0
    %4140 = vmatprep.subr.bf16.mxu0 0
    %4141 = vmatpush1.bf16.msra.mxu0 0
    %4142 = vmatprep.mubr.bf16.mxu0 0
    %4143 = vmatmul.mubr.bf16.gmra.mrb[0].mxu0 %v4105
    %v4144 = vpop.f32.mrb[0].mxu0
    %v4145 = vadd.f32 0.0, %v4144
    %v4146 = vpop.f32.mrb[0].mxu0
    %v4147 = vpop.f32.mrb[0].mxu0
    %v4148 = vadd.f32 0.0, %v4147
    %v4149 = vpop.f32.mrb[0].mxu0
    %4150 = vdwg.mxu0
    %v4152 = vsel %vm395, %v3808, 0
    %v4155 = vsel %vm811, %v3507, 0
    %4157 = vmatprep.subr.bf16.mxu0 0
    %4158 = vmatpush1.bf16.msra.mxu0 %v4155
    %4159 = vmatprep.subr.bf16.mxu0 0
    %4160 = vmatpush1.bf16.msra.mxu0 0
    %4161 = vmatprep.subr.bf16.mxu0 0
    %4162 = vmatpush1.bf16.msra.mxu0 0
    %4163 = vmatprep.subr.bf16.mxu0 0
    %4164 = vmatpush1.bf16.msra.mxu0 0
    %4165 = vmatprep.subr.bf16.mxu0 0
    %4166 = vmatpush1.bf16.msra.mxu0 0
    %4167 = vmatprep.subr.bf16.mxu0 0
    %4168 = vmatpush1.bf16.msra.mxu0 0
    %4169 = vmatprep.subr.bf16.mxu0 0
    %4170 = vmatpush1.bf16.msra.mxu0 0
    %4171 = vmatprep.subr.bf16.mxu0 0
    %4172 = vmatpush1.bf16.msra.mxu0 0
    %4173 = vmatprep.subr.bf16.mxu0 0
    %4174 = vmatpush1.bf16.msra.mxu0 0
    %4175 = vmatprep.subr.bf16.mxu0 0
    %4176 = vmatpush1.bf16.msra.mxu0 0
    %4177 = vmatprep.subr.bf16.mxu0 0
    %4178 = vmatpush1.bf16.msra.mxu0 0
    %4179 = vmatprep.subr.bf16.mxu0 0
    %4180 = vmatpush1.bf16.msra.mxu0 0
    %4181 = vmatprep.subr.bf16.mxu0 0
    %4182 = vmatpush1.bf16.msra.mxu0 0
    %4183 = vmatprep.subr.bf16.mxu0 0
    %4184 = vmatpush1.bf16.msra.mxu0 0
    %4185 = vmatprep.subr.bf16.mxu0 0
    %4186 = vmatpush1.bf16.msra.mxu0 0
    %4187 = vmatprep.subr.bf16.mxu0 0
    %4188 = vmatpush1.bf16.msra.mxu0 0
    %4189 = vmatprep.mubr.bf16.mxu0 0
    %4190 = vmatmul.mubr.bf16.gmra.mrb[0].mxu0 %v4152
    %v4191 = vpop.f32.mrb[0].mxu0
    %v4192 = vadd.f32 %v4145, %v4191
    %v4193 = vpop.f32.mrb[0].mxu0
    %v4194 = vpop.f32.mrb[0].mxu0
    %v4195 = vadd.f32 %v4148, %v4194
    %v4196 = vpop.f32.mrb[0].mxu0
    %4197 = vdwg.mxu0
    %v4199 = vlaneseq
    %v4200 = vshrl.u32 %v4199, 7
    %v4201 = vsub.s32 0, %v4200
    %v4202 = vrot.slane %v3460, %v4201
    %v4208 = vunpack.c.l.b16 %v3449
    %v4209 = vunpack.c.l.b16 %v3450
    %v4210 = vunpack.c.l.b16 %v3451
    %v4211 = vunpack.c.l.b16 %v3452
    %v4212 = vpack.c.b16 %v4209, %v4208
    %v4213 = vpack.c.b16 %v4211, %v4210
    %4216 = vmatprep.subr.bf16.mxu0 0
    %4217 = vmatpush1.bf16.msra.mxu0 %v4212
    %4218 = vmatprep.subr.bf16.mxu0 0
    %4219 = vmatpush1.bf16.msra.mxu0 %v4213
    %4220 = vmatprep.subr.bf16.mxu0 0
    %4221 = vmatpush1.bf16.msra.mxu0 0
    %4222 = vmatprep.subr.bf16.mxu0 0
    %4223 = vmatpush1.bf16.msra.mxu0 0
    %4224 = vmatprep.subr.bf16.mxu0 0
    %4225 = vmatpush1.bf16.msra.mxu0 0
    %4226 = vmatprep.subr.bf16.mxu0 0
    %4227 = vmatpush1.bf16.msra.mxu0 0
    %4228 = vmatprep.subr.bf16.mxu0 0
    %4229 = vmatpush1.bf16.msra.mxu0 0
    %4230 = vmatprep.subr.bf16.mxu0 0
    %4231 = vmatpush1.bf16.msra.mxu0 0
    %4232 = vmatprep.subr.bf16.mxu0 0
    %4233 = vmatpush1.bf16.msra.mxu0 0
    %4234 = vmatprep.subr.bf16.mxu0 0
    %4235 = vmatpush1.bf16.msra.mxu0 0
    %4236 = vmatprep.subr.bf16.mxu0 0
    %4237 = vmatpush1.bf16.msra.mxu0 0
    %4238 = vmatprep.subr.bf16.mxu0 0
    %4239 = vmatpush1.bf16.msra.mxu0 0
    %4240 = vmatprep.subr.bf16.mxu0 0
    %4241 = vmatpush1.bf16.msra.mxu0 0
    %4242 = vmatprep.subr.bf16.mxu0 0
    %4243 = vmatpush1.bf16.msra.mxu0 0
    %4244 = vmatprep.subr.bf16.mxu0 0
    %4245 = vmatpush1.bf16.msra.mxu0 0
    %4246 = vmatprep.subr.bf16.mxu0 0
    %4247 = vmatpush1.bf16.msra.mxu0 0
    %4248 = vmatprep.mubr.bf16.mxu0 0
    %4249 = vmatmul.mubr.bf16.gmra.mrb[0].mxu0 %v3530
    %v4250 = vpop.f32.mrb[0].mxu0
    %v4251 = vadd.f32 %v4202, %v4250
    %v4252 = vpop.f32.mrb[0].mxu0
    %v4253 = vpop.f32.mrb[0].mxu0
    %v4254 = vadd.f32 %v4202, %v4253
    %v4255 = vpop.f32.mrb[0].mxu0
    %4256 = vdwg.mxu0
    %v4258 = vlaneseq
    %v4259 = vshrl.u32 %v4258, 7
    %v4260 = vsub.s32 0, %v4259
    %v4261 = vrot.slane %v3482, %v4260
    %v4267 = vunpack.c.l.b16 %v3471
    %v4268 = vunpack.c.l.b16 %v3472
    %v4269 = vunpack.c.l.b16 %v3473
    %v4270 = vunpack.c.l.b16 %v3474
    %v4271 = vpack.c.b16 %v4268, %v4267
    %v4272 = vpack.c.b16 %v4270, %v4269
    %4275 = vmatprep.subr.bf16.mxu0 0
    %4276 = vmatpush1.bf16.msra.mxu0 %v4271
    %4277 = vmatprep.subr.bf16.mxu0 0
    %4278 = vmatpush1.bf16.msra.mxu0 %v4272
    %4279 = vmatprep.subr.bf16.mxu0 0
    %4280 = vmatpush1.bf16.msra.mxu0 0
    %4281 = vmatprep.subr.bf16.mxu0 0
    %4282 = vmatpush1.bf16.msra.mxu0 0
    %4283 = vmatprep.subr.bf16.mxu0 0
    %4284 = vmatpush1.bf16.msra.mxu0 0
    %4285 = vmatprep.subr.bf16.mxu0 0
    %4286 = vmatpush1.bf16.msra.mxu0 0
    %4287 = vmatprep.subr.bf16.mxu0 0
    %4288 = vmatpush1.bf16.msra.mxu0 0
    %4289 = vmatprep.subr.bf16.mxu0 0
    %4290 = vmatpush1.bf16.msra.mxu0 0
    %4291 = vmatprep.subr.bf16.mxu0 0
    %4292 = vmatpush1.bf16.msra.mxu0 0
    %4293 = vmatprep.subr.bf16.mxu0 0
    %4294 = vmatpush1.bf16.msra.mxu0 0
    %4295 = vmatprep.subr.bf16.mxu0 0
    %4296 = vmatpush1.bf16.msra.mxu0 0
    %4297 = vmatprep.subr.bf16.mxu0 0
    %4298 = vmatpush1.bf16.msra.mxu0 0
    %4299 = vmatprep.subr.bf16.mxu0 0
    %4300 = vmatpush1.bf16.msra.mxu0 0
    %4301 = vmatprep.subr.bf16.mxu0 0
    %4302 = vmatpush1.bf16.msra.mxu0 0
    %4303 = vmatprep.subr.bf16.mxu0 0
    %4304 = vmatpush1.bf16.msra.mxu0 0
    %4305 = vmatprep.subr.bf16.mxu0 0
    %4306 = vmatpush1.bf16.msra.mxu0 0
    %4307 = vmatprep.mubr.bf16.mxu0 0
    %4308 = vmatmul.mubr.bf16.gmra.mrb[0].mxu0 %v3530
    %v4309 = vpop.f32.mrb[0].mxu0
    %v4310 = vadd.f32 %v4261, %v4309
    %v4311 = vpop.f32.mrb[0].mxu0
    %v4312 = vpop.f32.mrb[0].mxu0
    %v4313 = vadd.f32 %v4261, %v4312
    %v4314 = vpop.f32.mrb[0].mxu0
    %4315 = vdwg.mxu0
    %v4317 = vlaneseq
    %v4318 = vshrl.u32 %v4317, 7
    %v4319 = vsub.s32 0, %v4318
    %v4320 = vrot.slane %v3504, %v4319
    %v4326 = vunpack.c.l.b16 %v3493
    %v4327 = vunpack.c.l.b16 %v3494
    %v4328 = vunpack.c.l.b16 %v3495
    %v4329 = vunpack.c.l.b16 %v3496
    %v4330 = vpack.c.b16 %v4327, %v4326
    %v4331 = vpack.c.b16 %v4329, %v4328
    %4334 = vmatprep.subr.bf16.mxu0 0
    %4335 = vmatpush1.bf16.msra.mxu0 %v4330
    %4336 = vmatprep.subr.bf16.mxu0 0
    %4337 = vmatpush1.bf16.msra.mxu0 %v4331
    %4338 = vmatprep.subr.bf16.mxu0 0
    %4339 = vmatpush1.bf16.msra.mxu0 0
    %4340 = vmatprep.subr.bf16.mxu0 0
    %4341 = vmatpush1.bf16.msra.mxu0 0
    %4342 = vmatprep.subr.bf16.mxu0 0
    %4343 = vmatpush1.bf16.msra.mxu0 0
    %4344 = vmatprep.subr.bf16.mxu0 0
    %4345 = vmatpush1.bf16.msra.mxu0 0
    %4346 = vmatprep.subr.bf16.mxu0 0
    %4347 = vmatpush1.bf16.msra.mxu0 0
    %4348 = vmatprep.subr.bf16.mxu0 0
    %4349 = vmatpush1.bf16.msra.mxu0 0
    %4350 = vmatprep.subr.bf16.mxu0 0
    %4351 = vmatpush1.bf16.msra.mxu0 0
    %4352 = vmatprep.subr.bf16.mxu0 0
    %4353 = vmatpush1.bf16.msra.mxu0 0
    %4354 = vmatprep.subr.bf16.mxu0 0
    %4355 = vmatpush1.bf16.msra.mxu0 0
    %4356 = vmatprep.subr.bf16.mxu0 0
    %4357 = vmatpush1.bf16.msra.mxu0 0
    %4358 = vmatprep.subr.bf16.mxu0 0
    %4359 = vmatpush1.bf16.msra.mxu0 0
    %4360 = vmatprep.subr.bf16.mxu0 0
    %4361 = vmatpush1.bf16.msra.mxu0 0
    %4362 = vmatprep.subr.bf16.mxu0 0
    %4363 = vmatpush1.bf16.msra.mxu0 0
    %4364 = vmatprep.subr.bf16.mxu0 0
    %4365 = vmatpush1.bf16.msra.mxu0 0
    %4366 = vmatprep.mubr.bf16.mxu0 0
    %4367 = vmatmul.mubr.bf16.gmra.mrb[0].mxu0 %v3530
    %v4368 = vpop.f32.mrb[0].mxu0
    %v4369 = vadd.f32 %v4320, %v4368
    %v4370 = vpop.f32.mrb[0].mxu0
    %v4371 = vpop.f32.mrb[0].mxu0
    %v4372 = vadd.f32 %v4320, %v4371
    %v4373 = vpop.f32.mrb[0].mxu0
    %4374 = vdwg.mxu0
    %v4375 = vpack.c.bf16 %v4254, %v4251
    %v4376 = vpack.c.bf16 %v4313, %v4310
    %v4378 = vsel %vm395, %v4375, 0
    %v4381 = vsel %vm395, %v4376, 0
    %4383 = vmatprep.subr.bf16.mxu0 0
    %4384 = vmatpush1.bf16.xpose.msra.mxu0 %v4381
    %4385 = vmatprep.subr.bf16.mxu0 0
    %4386 = vmatpush1.bf16.xpose.msra.mxu0 0
    %4387 = vmatprep.subr.bf16.mxu0 0
    %4388 = vmatpush1.bf16.xpose.msra.mxu0 0
    %4389 = vmatprep.subr.bf16.mxu0 0
    %4390 = vmatpush1.bf16.xpose.msra.mxu0 0
    %4391 = vmatprep.subr.bf16.mxu0 0
    %4392 = vmatpush1.bf16.xpose.msra.mxu0 0
    %4393 = vmatprep.subr.bf16.mxu0 0
    %4394 = vmatpush1.bf16.xpose.msra.mxu0 0
    %4395 = vmatprep.subr.bf16.mxu0 0
    %4396 = vmatpush1.bf16.xpose.msra.mxu0 0
    %4397 = vmatprep.subr.bf16.mxu0 0
    %4398 = vmatpush1.bf16.xpose.msra.mxu0 0
    %4399 = vmatprep.subr.bf16.mxu0 0
    %4400 = vmatpush1.bf16.xpose.msra.mxu0 0
    %4401 = vmatprep.subr.bf16.mxu0 0
    %4402 = vmatpush1.bf16.xpose.msra.mxu0 0
    %4403 = vmatprep.subr.bf16.mxu0 0
    %4404 = vmatpush1.bf16.xpose.msra.mxu0 0
    %4405 = vmatprep.subr.bf16.mxu0 0
    %4406 = vmatpush1.bf16.xpose.msra.mxu0 0
    %4407 = vmatprep.subr.bf16.mxu0 0
    %4408 = vmatpush1.bf16.xpose.msra.mxu0 0
    %4409 = vmatprep.subr.bf16.mxu0 0
    %4410 = vmatpush1.bf16.xpose.msra.mxu0 0
    %4411 = vmatprep.subr.bf16.mxu0 0
    %4412 = vmatpush1.bf16.xpose.msra.mxu0 0
    %4413 = vmatprep.subr.bf16.mxu0 0
    %4414 = vmatpush1.bf16.xpose.msra.mxu0 0
    %4415 = vmatprep.mubr.bf16.mxu0 0
    %4416 = vmatmul.mubr.bf16.gmra.mrb[0].mxu0 %v4378
    %v4417 = vpop.f32.mrb[0].mxu0
    %v4418 = vadd.f32 %v138, %v4417
    %v4419 = vpop.f32.mrb[0].mxu0
    %v4420 = vpop.f32.mrb[0].mxu0
    %v4421 = vadd.f32 %v139, %v4420
    %v4422 = vpop.f32.mrb[0].mxu0
    %4423 = vdwg.mxu0
    %v4424 = vsel %vm443, %v4418, -inf
    %4425 = vmax.xlane.f32.xlu0 %v4424
    %v4426 = vpop.xlane.xlu0 %4425
    %v4427 = vsel %vm443, %v4421, -inf
    %4428 = vmax.xlane.f32.xlu0 %v4427
    %v4429 = vpop.xlane.xlu0 %4428
    %v4430 = vsub.f32 %v4418, %v4426
    %v4431 = vsub.f32 %v4421, %v4429
    %v4432 = vmul.f32 %v4430, 1.442695
    %v4433 = vpow.pop %v4432
    %v4434 = vmul.f32 %v4431, 1.442695
    %v4435 = vpow.pop %v4434
    %v4436 = vsel %vm443, %v4433, 0.0
    %4437 = vadd.xlane.f32.xlu0 %v4436
    %v4438 = vpop.xlane.xlu0 %4437
    %v4439 = vsel %vm443, %v4435, 0.0
    %4440 = vadd.xlane.f32.xlu0 %v4439
    %v4441 = vpop.xlane.xlu0 %4440
    %v4442 = vrcp.pop %v4438
    %v4443 = vrcp.pop %v4441
    %v4444 = vmul.f32 %v4433, %v4442
    %v4445 = vmul.f32 %v4435, %v4443
    %v4446 = vpack.c.bf16 %v4445, %v4444
    %v4447 = vpack.c.bf16 %v4372, %v4369
    %v4449 = vsel %vm443, %v4446, 0
    %4451 = vmatprep.subr.bf16.mxu0 0
    %4452 = vmatpush1.bf16.msra.mxu0 %v4447
    %4453 = vmatprep.subr.bf16.mxu0 0
    %4454 = vmatpush1.bf16.msra.mxu0 0
    %4455 = vmatprep.subr.bf16.mxu0 0
    %4456 = vmatpush1.bf16.msra.mxu0 0
    %4457 = vmatprep.subr.bf16.mxu0 0
    %4458 = vmatpush1.bf16.msra.mxu0 0
    %4459 = vmatprep.subr.bf16.mxu0 0
    %4460 = vmatpush1.bf16.msra.mxu0 0
    %4461 = vmatprep.subr.bf16.mxu0 0
    %4462 = vmatpush1.bf16.msra.mxu0 0
    %4463 = vmatprep.subr.bf16.mxu0 0
    %4464 = vmatpush1.bf16.msra.mxu0 0
    %4465 = vmatprep.subr.bf16.mxu0 0
    %4466 = vmatpush1.bf16.msra.mxu0 0
    %4467 = vmatprep.subr.bf16.mxu0 0
    %4468 = vmatpush1.bf16.msra.mxu0 0
    %4469 = vmatprep.subr.bf16.mxu0 0
    %4470 = vmatpush1.bf16.msra.mxu0 0
    %4471 = vmatprep.subr.bf16.mxu0 0
    %4472 = vmatpush1.bf16.msra.mxu0 0
    %4473 = vmatprep.subr.bf16.mxu0 0
    %4474 = vmatpush1.bf16.msra.mxu0 0
    %4475 = vmatprep.subr.bf16.mxu0 0
    %4476 = vmatpush1.bf16.msra.mxu0 0
    %4477 = vmatprep.subr.bf16.mxu0 0
    %4478 = vmatpush1.bf16.msra.mxu0 0
    %4479 = vmatprep.subr.bf16.mxu0 0
    %4480 = vmatpush1.bf16.msra.mxu0 0
    %4481 = vmatprep.subr.bf16.mxu0 0
    %4482 = vmatpush1.bf16.msra.mxu0 0
    %4483 = vmatprep.mubr.bf16.mxu0 0
    %4484 = vmatmul.mubr.bf16.gmra.mrb[0].mxu0 %v4449
    %v4485 = vpop.f32.mrb[0].mxu0
    %v4486 = vadd.f32 0.0, %v4485
    %v4487 = vpop.f32.mrb[0].mxu0
    %v4488 = vpop.f32.mrb[0].mxu0
    %v4489 = vadd.f32 0.0, %v4488
    %v4490 = vpop.f32.mrb[0].mxu0
    %4491 = vdwg.mxu0
    %v4492 = vpack.c.bf16 %v4489, %v4486
    %v4494 = vsel %vm395, %v4492, 0
    %v4497 = vsel %vm811, %v3509, 0
    %4499 = vmatprep.subr.bf16.mxu0 0
    %4500 = vmatpush1.bf16.msra.mxu0 %v4497
    %4501 = vmatprep.subr.bf16.mxu0 0
    %4502 = vmatpush1.bf16.msra.mxu0 0
    %4503 = vmatprep.subr.bf16.mxu0 0
    %4504 = vmatpush1.bf16.msra.mxu0 0
    %4505 = vmatprep.subr.bf16.mxu0 0
    %4506 = vmatpush1.bf16.msra.mxu0 0
    %4507 = vmatprep.subr.bf16.mxu0 0
    %4508 = vmatpush1.bf16.msra.mxu0 0
    %4509 = vmatprep.subr.bf16.mxu0 0
    %4510 = vmatpush1.bf16.msra.mxu0 0
    %4511 = vmatprep.subr.bf16.mxu0 0
    %4512 = vmatpush1.bf16.msra.mxu0 0
    %4513 = vmatprep.subr.bf16.mxu0 0
    %4514 = vmatpush1.bf16.msra.mxu0 0
    %4515 = vmatprep.subr.bf16.mxu0 0
    %4516 = vmatpush1.bf16.msra.mxu0 0
    %4517 = vmatprep.subr.bf16.mxu0 0
    %4518 = vmatpush1.bf16.msra.mxu0 0
    %4519 = vmatprep.subr.bf16.mxu0 0
    %4520 = vmatpush1.bf16.msra.mxu0 0
    %4521 = vmatprep.subr.bf16.mxu0 0
    %4522 = vmatpush1.bf16.msra.mxu0 0
    %4523 = vmatprep.subr.bf16.mxu0 0
    %4524 = vmatpush1.bf16.msra.mxu0 0
    %4525 = vmatprep.subr.bf16.mxu0 0
    %4526 = vmatpush1.bf16.msra.mxu0 0
    %4527 = vmatprep.subr.bf16.mxu0 0
    %4528 = vmatpush1.bf16.msra.mxu0 0
    %4529 = vmatprep.subr.bf16.mxu0 0
    %4530 = vmatpush1.bf16.msra.mxu0 0
    %4531 = vmatprep.mubr.bf16.mxu0 0
    %4532 = vmatmul.mubr.bf16.gmra.mrb[0].mxu0 %v4494
    %v4533 = vpop.f32.mrb[0].mxu0
    %v4534 = vadd.f32 0.0, %v4533
    %v4535 = vpop.f32.mrb[0].mxu0
    %v4536 = vpop.f32.mrb[0].mxu0
    %v4537 = vadd.f32 0.0, %v4536
    %v4538 = vpop.f32.mrb[0].mxu0
    %4539 = vdwg.mxu0
    %v4540 = vadd.f32 %v4192, %v4534
    %v4541 = vadd.f32 %v4195, %v4537
    %v4543 = vlaneseq
    %v4544 = vshrl.u32 %v4543, 7
    %v4545 = vsub.s32 0, %v4544
    %v4546 = vrot.slane %v3461, %v4545
    %v4552 = vunpack.c.l.b16 %v3453
    %v4553 = vunpack.c.l.b16 %v3454
    %v4554 = vunpack.c.l.b16 %v3455
    %v4555 = vunpack.c.l.b16 %v3456
    %v4556 = vpack.c.b16 %v4553, %v4552
    %v4557 = vpack.c.b16 %v4555, %v4554
    %4560 = vmatprep.subr.bf16.mxu0 0
    %4561 = vmatpush1.bf16.msra.mxu0 %v4556
    %4562 = vmatprep.subr.bf16.mxu0 0
    %4563 = vmatpush1.bf16.msra.mxu0 %v4557
    %4564 = vmatprep.subr.bf16.mxu0 0
    %4565 = vmatpush1.bf16.msra.mxu0 0
    %4566 = vmatprep.subr.bf16.mxu0 0
    %4567 = vmatpush1.bf16.msra.mxu0 0
    %4568 = vmatprep.subr.bf16.mxu0 0
    %4569 = vmatpush1.bf16.msra.mxu0 0
    %4570 = vmatprep.subr.bf16.mxu0 0
    %4571 = vmatpush1.bf16.msra.mxu0 0
    %4572 = vmatprep.subr.bf16.mxu0 0
    %4573 = vmatpush1.bf16.msra.mxu0 0
    %4574 = vmatprep.subr.bf16.mxu0 0
    %4575 = vmatpush1.bf16.msra.mxu0 0
    %4576 = vmatprep.subr.bf16.mxu0 0
    %4577 = vmatpush1.bf16.msra.mxu0 0
    %4578 = vmatprep.subr.bf16.mxu0 0
    %4579 = vmatpush1.bf16.msra.mxu0 0
    %4580 = vmatprep.subr.bf16.mxu0 0
    %4581 = vmatpush1.bf16.msra.mxu0 0
    %4582 = vmatprep.subr.bf16.mxu0 0
    %4583 = vmatpush1.bf16.msra.mxu0 0
    %4584 = vmatprep.subr.bf16.mxu0 0
    %4585 = vmatpush1.bf16.msra.mxu0 0
    %4586 = vmatprep.subr.bf16.mxu0 0
    %4587 = vmatpush1.bf16.msra.mxu0 0
    %4588 = vmatprep.subr.bf16.mxu0 0
    %4589 = vmatpush1.bf16.msra.mxu0 0
    %4590 = vmatprep.subr.bf16.mxu0 0
    %4591 = vmatpush1.bf16.msra.mxu0 0
    %4592 = vmatprep.mubr.bf16.mxu0 0
    %4593 = vmatmul.mubr.bf16.gmra.mrb[0].mxu0 %v3530
    %v4594 = vpop.f32.mrb[0].mxu0
    %v4595 = vadd.f32 %v4546, %v4594
    %v4596 = vpop.f32.mrb[0].mxu0
    %v4597 = vpop.f32.mrb[0].mxu0
    %v4598 = vadd.f32 %v4546, %v4597
    %v4599 = vpop.f32.mrb[0].mxu0
    %4600 = vdwg.mxu0
    %v4602 = vlaneseq
    %v4603 = vshrl.u32 %v4602, 7
    %v4604 = vsub.s32 0, %v4603
    %v4605 = vrot.slane %v3483, %v4604
    %v4611 = vunpack.c.l.b16 %v3475
    %v4612 = vunpack.c.l.b16 %v3476
    %v4613 = vunpack.c.l.b16 %v3477
    %v4614 = vunpack.c.l.b16 %v3478
    %v4615 = vpack.c.b16 %v4612, %v4611
    %v4616 = vpack.c.b16 %v4614, %v4613
    %4619 = vmatprep.subr.bf16.mxu0 0
    %4620 = vmatpush1.bf16.msra.mxu0 %v4615
    %4621 = vmatprep.subr.bf16.mxu0 0
    %4622 = vmatpush1.bf16.msra.mxu0 %v4616
    %4623 = vmatprep.subr.bf16.mxu0 0
    %4624 = vmatpush1.bf16.msra.mxu0 0
    %4625 = vmatprep.subr.bf16.mxu0 0
    %4626 = vmatpush1.bf16.msra.mxu0 0
    %4627 = vmatprep.subr.bf16.mxu0 0
    %4628 = vmatpush1.bf16.msra.mxu0 0
    %4629 = vmatprep.subr.bf16.mxu0 0
    %4630 = vmatpush1.bf16.msra.mxu0 0
    %4631 = vmatprep.subr.bf16.mxu0 0
    %4632 = vmatpush1.bf16.msra.mxu0 0
    %4633 = vmatprep.subr.bf16.mxu0 0
    %4634 = vmatpush1.bf16.msra.mxu0 0
    %4635 = vmatprep.subr.bf16.mxu0 0
    %4636 = vmatpush1.bf16.msra.mxu0 0
    %4637 = vmatprep.subr.bf16.mxu0 0
    %4638 = vmatpush1.bf16.msra.mxu0 0
    %4639 = vmatprep.subr.bf16.mxu0 0
    %4640 = vmatpush1.bf16.msra.mxu0 0
    %4641 = vmatprep.subr.bf16.mxu0 0
    %4642 = vmatpush1.bf16.msra.mxu0 0
    %4643 = vmatprep.subr.bf16.mxu0 0
    %4644 = vmatpush1.bf16.msra.mxu0 0
    %4645 = vmatprep.subr.bf16.mxu0 0
    %4646 = vmatpush1.bf16.msra.mxu0 0
    %4647 = vmatprep.subr.bf16.mxu0 0
    %4648 = vmatpush1.bf16.msra.mxu0 0
    %4649 = vmatprep.subr.bf16.mxu0 0
    %4650 = vmatpush1.bf16.msra.mxu0 0
    %4651 = vmatprep.mubr.bf16.mxu0 0
    %4652 = vmatmul.mubr.bf16.gmra.mrb[0].mxu0 %v3530
    %v4653 = vpop.f32.mrb[0].mxu0
    %v4654 = vadd.f32 %v4605, %v4653
    %v4655 = vpop.f32.mrb[0].mxu0
    %v4656 = vpop.f32.mrb[0].mxu0
    %v4657 = vadd.f32 %v4605, %v4656
    %v4658 = vpop.f32.mrb[0].mxu0
    %4659 = vdwg.mxu0
    %v4661 = vlaneseq
    %v4662 = vshrl.u32 %v4661, 7
    %v4663 = vsub.s32 0, %v4662
    %v4664 = vrot.slane %v3505, %v4663
    %v4670 = vunpack.c.l.b16 %v3497
    %v4671 = vunpack.c.l.b16 %v3498
    %v4672 = vunpack.c.l.b16 %v3499
    %v4673 = vunpack.c.l.b16 %v3500
    %v4674 = vpack.c.b16 %v4671, %v4670
    %v4675 = vpack.c.b16 %v4673, %v4672
    %4678 = vmatprep.subr.bf16.mxu0 0
    %4679 = vmatpush1.bf16.msra.mxu0 %v4674
    %4680 = vmatprep.subr.bf16.mxu0 0
    %4681 = vmatpush1.bf16.msra.mxu0 %v4675
    %4682 = vmatprep.subr.bf16.mxu0 0
    %4683 = vmatpush1.bf16.msra.mxu0 0
    %4684 = vmatprep.subr.bf16.mxu0 0
    %4685 = vmatpush1.bf16.msra.mxu0 0
    %4686 = vmatprep.subr.bf16.mxu0 0
    %4687 = vmatpush1.bf16.msra.mxu0 0
    %4688 = vmatprep.subr.bf16.mxu0 0
    %4689 = vmatpush1.bf16.msra.mxu0 0
    %4690 = vmatprep.subr.bf16.mxu0 0
    %4691 = vmatpush1.bf16.msra.mxu0 0
    %4692 = vmatprep.subr.bf16.mxu0 0
    %4693 = vmatpush1.bf16.msra.mxu0 0
    %4694 = vmatprep.subr.bf16.mxu0 0
    %4695 = vmatpush1.bf16.msra.mxu0 0
    %4696 = vmatprep.subr.bf16.mxu0 0
    %4697 = vmatpush1.bf16.msra.mxu0 0
    %4698 = vmatprep.subr.bf16.mxu0 0
    %4699 = vmatpush1.bf16.msra.mxu0 0
    %4700 = vmatprep.subr.bf16.mxu0 0
    %4701 = vmatpush1.bf16.msra.mxu0 0
    %4702 = vmatprep.subr.bf16.mxu0 0
    %4703 = vmatpush1.bf16.msra.mxu0 0
    %4704 = vmatprep.subr.bf16.mxu0 0
    %4705 = vmatpush1.bf16.msra.mxu0 0
    %4706 = vmatprep.subr.bf16.mxu0 0
    %4707 = vmatpush1.bf16.msra.mxu0 0
    %4708 = vmatprep.subr.bf16.mxu0 0
    %4709 = vmatpush1.bf16.msra.mxu0 0
    %4710 = vmatprep.mubr.bf16.mxu0 0
    %4711 = vmatmul.mubr.bf16.gmra.mrb[0].mxu0 %v3530
    %v4712 = vpop.f32.mrb[0].mxu0
    %v4713 = vadd.f32 %v4664, %v4712
    %v4714 = vpop.f32.mrb[0].mxu0
    %v4715 = vpop.f32.mrb[0].mxu0
    %v4716 = vadd.f32 %v4664, %v4715
    %v4717 = vpop.f32.mrb[0].mxu0
    %4718 = vdwg.mxu0
    %v4719 = vpack.c.bf16 %v4598, %v4595
    %v4720 = vpack.c.bf16 %v4657, %v4654
    %v4722 = vsel %vm395, %v4719, 0
    %v4725 = vsel %vm395, %v4720, 0
    %4727 = vmatprep.subr.bf16.mxu0 0
    %4728 = vmatpush1.bf16.xpose.msra.mxu0 %v4725
    %4729 = vmatprep.subr.bf16.mxu0 0
    %4730 = vmatpush1.bf16.xpose.msra.mxu0 0
    %4731 = vmatprep.subr.bf16.mxu0 0
    %4732 = vmatpush1.bf16.xpose.msra.mxu0 0
    %4733 = vmatprep.subr.bf16.mxu0 0
    %4734 = vmatpush1.bf16.xpose.msra.mxu0 0
    %4735 = vmatprep.subr.bf16.mxu0 0
    %4736 = vmatpush1.bf16.xpose.msra.mxu0 0
    %4737 = vmatprep.subr.bf16.mxu0 0
    %4738 = vmatpush1.bf16.xpose.msra.mxu0 0
    %4739 = vmatprep.subr.bf16.mxu0 0
    %4740 = vmatpush1.bf16.xpose.msra.mxu0 0
    %4741 = vmatprep.subr.bf16.mxu0 0
    %4742 = vmatpush1.bf16.xpose.msra.mxu0 0
    %4743 = vmatprep.subr.bf16.mxu0 0
    %4744 = vmatpush1.bf16.xpose.msra.mxu0 0
    %4745 = vmatprep.subr.bf16.mxu0 0
    %4746 = vmatpush1.bf16.xpose.msra.mxu0 0
    %4747 = vmatprep.subr.bf16.mxu0 0
    %4748 = vmatpush1.bf16.xpose.msra.mxu0 0
    %4749 = vmatprep.subr.bf16.mxu0 0
    %4750 = vmatpush1.bf16.xpose.msra.mxu0 0
    %4751 = vmatprep.subr.bf16.mxu0 0
    %4752 = vmatpush1.bf16.xpose.msra.mxu0 0
    %4753 = vmatprep.subr.bf16.mxu0 0
    %4754 = vmatpush1.bf16.xpose.msra.mxu0 0
    %4755 = vmatprep.subr.bf16.mxu0 0
    %4756 = vmatpush1.bf16.xpose.msra.mxu0 0
    %4757 = vmatprep.subr.bf16.mxu0 0
    %4758 = vmatpush1.bf16.xpose.msra.mxu0 0
    %4759 = vmatprep.mubr.bf16.mxu0 0
    %4760 = vmatmul.mubr.bf16.gmra.mrb[0].mxu0 %v4722
    %v4761 = vpop.f32.mrb[0].mxu0
    %v4762 = vadd.f32 %v138, %v4761
    %v4763 = vpop.f32.mrb[0].mxu0
    %v4764 = vpop.f32.mrb[0].mxu0
    %v4765 = vadd.f32 %v139, %v4764
    %v4766 = vpop.f32.mrb[0].mxu0
    %4767 = vdwg.mxu0
    %v4768 = vsel %vm443, %v4762, -inf
    %4769 = vmax.xlane.f32.xlu0 %v4768
    %v4770 = vpop.xlane.xlu0 %4769
    %v4771 = vsel %vm443, %v4765, -inf
    %4772 = vmax.xlane.f32.xlu0 %v4771
    %v4773 = vpop.xlane.xlu0 %4772
    %v4774 = vsub.f32 %v4762, %v4770
    %v4775 = vsub.f32 %v4765, %v4773
    %v4776 = vmul.f32 %v4774, 1.442695
    %v4777 = vpow.pop %v4776
    %v4778 = vmul.f32 %v4775, 1.442695
    %v4779 = vpow.pop %v4778
    %v4780 = vsel %vm443, %v4777, 0.0
    %4781 = vadd.xlane.f32.xlu0 %v4780
    %v4782 = vpop.xlane.xlu0 %4781
    %v4783 = vsel %vm443, %v4779, 0.0
    %4784 = vadd.xlane.f32.xlu0 %v4783
    %v4785 = vpop.xlane.xlu0 %4784
    %v4786 = vrcp.pop %v4782
    %v4787 = vrcp.pop %v4785
    %v4788 = vmul.f32 %v4777, %v4786
    %v4789 = vmul.f32 %v4779, %v4787
    %v4790 = vpack.c.bf16 %v4789, %v4788
    %v4791 = vpack.c.bf16 %v4716, %v4713
    %v4793 = vsel %vm443, %v4790, 0
    %4795 = vmatprep.subr.bf16.mxu0 0
    %4796 = vmatpush1.bf16.msra.mxu0 %v4791
    %4797 = vmatprep.subr.bf16.mxu0 0
    %4798 = vmatpush1.bf16.msra.mxu0 0
    %4799 = vmatprep.subr.bf16.mxu0 0
    %4800 = vmatpush1.bf16.msra.mxu0 0
    %4801 = vmatprep.subr.bf16.mxu0 0
    %4802 = vmatpush1.bf16.msra.mxu0 0
    %4803 = vmatprep.subr.bf16.mxu0 0
    %4804 = vmatpush1.bf16.msra.mxu0 0
    %4805 = vmatprep.subr.bf16.mxu0 0
    %4806 = vmatpush1.bf16.msra.mxu0 0
    %4807 = vmatprep.subr.bf16.mxu0 0
    %4808 = vmatpush1.bf16.msra.mxu0 0
    %4809 = vmatprep.subr.bf16.mxu0 0
    %4810 = vmatpush1.bf16.msra.mxu0 0
    %4811 = vmatprep.subr.bf16.mxu0 0
    %4812 = vmatpush1.bf16.msra.mxu0 0
    %4813 = vmatprep.subr.bf16.mxu0 0
    %4814 = vmatpush1.bf16.msra.mxu0 0
    %4815 = vmatprep.subr.bf16.mxu0 0
    %4816 = vmatpush1.bf16.msra.mxu0 0
    %4817 = vmatprep.subr.bf16.mxu0 0
    %4818 = vmatpush1.bf16.msra.mxu0 0
    %4819 = vmatprep.subr.bf16.mxu0 0
    %4820 = vmatpush1.bf16.msra.mxu0 0
    %4821 = vmatprep.subr.bf16.mxu0 0
    %4822 = vmatpush1.bf16.msra.mxu0 0
    %4823 = vmatprep.subr.bf16.mxu0 0
    %4824 = vmatpush1.bf16.msra.mxu0 0
    %4825 = vmatprep.subr.bf16.mxu0 0
    %4826 = vmatpush1.bf16.msra.mxu0 0
    %4827 = vmatprep.mubr.bf16.mxu0 0
    %4828 = vmatmul.mubr.bf16.gmra.mrb[0].mxu0 %v4793
    %v4829 = vpop.f32.mrb[0].mxu0
    %v4830 = vadd.f32 0.0, %v4829
    %v4831 = vpop.f32.mrb[0].mxu0
    %v4832 = vpop.f32.mrb[0].mxu0
    %v4833 = vadd.f32 0.0, %v4832
    %v4834 = vpop.f32.mrb[0].mxu0
    %4835 = vdwg.mxu0
    %v4836 = vpack.c.bf16 %v4833, %v4830
    %v4838 = vsel %vm395, %v4836, 0
    %v4841 = vsel %vm811, %v3510, 0
    %4843 = vmatprep.subr.bf16.mxu0 0
    %4844 = vmatpush1.bf16.msra.mxu0 %v4841
    %4845 = vmatprep.subr.bf16.mxu0 0
    %4846 = vmatpush1.bf16.msra.mxu0 0
    %4847 = vmatprep.subr.bf16.mxu0 0
    %4848 = vmatpush1.bf16.msra.mxu0 0
    %4849 = vmatprep.subr.bf16.mxu0 0
    %4850 = vmatpush1.bf16.msra.mxu0 0
    %4851 = vmatprep.subr.bf16.mxu0 0
    %4852 = vmatpush1.bf16.msra.mxu0 0
    %4853 = vmatprep.subr.bf16.mxu0 0
    %4854 = vmatpush1.bf16.msra.mxu0 0
    %4855 = vmatprep.subr.bf16.mxu0 0
    %4856 = vmatpush1.bf16.msra.mxu0 0
    %4857 = vmatprep.subr.bf16.mxu0 0
    %4858 = vmatpush1.bf16.msra.mxu0 0
    %4859 = vmatprep.subr.bf16.mxu0 0
    %4860 = vmatpush1.bf16.msra.mxu0 0
    %4861 = vmatprep.subr.bf16.mxu0 0
    %4862 = vmatpush1.bf16.msra.mxu0 0
    %4863 = vmatprep.subr.bf16.mxu0 0
    %4864 = vmatpush1.bf16.msra.mxu0 0
    %4865 = vmatprep.subr.bf16.mxu0 0
    %4866 = vmatpush1.bf16.msra.mxu0 0
    %4867 = vmatprep.subr.bf16.mxu0 0
    %4868 = vmatpush1.bf16.msra.mxu0 0
    %4869 = vmatprep.subr.bf16.mxu0 0
    %4870 = vmatpush1.bf16.msra.mxu0 0
    %4871 = vmatprep.subr.bf16.mxu0 0
    %4872 = vmatpush1.bf16.msra.mxu0 0
    %4873 = vmatprep.subr.bf16.mxu0 0
    %4874 = vmatpush1.bf16.msra.mxu0 0
    %4875 = vmatprep.mubr.bf16.mxu0 0
    %4876 = vmatmul.mubr.bf16.gmra.mrb[0].mxu0 %v4838
    %v4877 = vpop.f32.mrb[0].mxu0
    %v4878 = vadd.f32 0.0, %v4877
    %v4879 = vpop.f32.mrb[0].mxu0
    %v4880 = vpop.f32.mrb[0].mxu0
    %v4881 = vadd.f32 0.0, %v4880
    %v4882 = vpop.f32.mrb[0].mxu0
    %4883 = vdwg.mxu0
    %v4884 = vadd.f32 %v4540, %v4878
    %v4885 = vadd.f32 %v4541, %v4881
    %s4886 = scalar_lea.vmem %s23, 1
    %v4887 = vld [vmem:[%s4886] sm:$0x1]
    %v4889 = vlaneseq
    %v4890 = vshrl.u32 %v4889, 7
    %v4891 = vsub.s32 0, %v4890
    %v4892 = vrot.slane %v4887, %v4891
    %v4894 = vadd.f32 %v4884, %v4892
    %v4895 = vadd.f32 %v4885, %v4892
    %v4896 = vadd.f32 %v4894, %v3437
    %v4897 = vadd.f32 %v4895, %v3438
    %s4898 = scalar_lea.vmem %s49, 1
    %v4899 = vld [vmem:[%s4898] sm:$0x1]
    %s4900 = scalar_lea.vmem %s51, 1
    %v4901 = vld [vmem:[%s4900] sm:$0x1]
    %v4902 = vsel %vm230, %v4896, 0.0
    %4903 = vadd.xlane.f32.xlu0 %v4902
    %v4904 = vpop.xlane.xlu0 %4903
    %v4905 = vsel %vm230, %v4897, 0.0
    %4906 = vadd.xlane.f32.xlu0 %v4905
    %v4907 = vpop.xlane.xlu0 %4906
    %v4908 = vmul.f32 %v4904, %v1610
    %v4909 = vmul.f32 %v4907, %v1610
    %v4910 = vsub.f32 %v4896, %v4908
    %v4911 = vsub.f32 %v4897, %v4909
    %v4912 = vmul.f32 %v4910, %v4910
    %v4913 = vmul.f32 %v4911, %v4911
    %v4914 = vsel %vm230, %v4912, 0.0
    %4915 = vadd.xlane.f32.xlu0 %v4914
    %v4916 = vpop.xlane.xlu0 %4915
    %v4917 = vsel %vm230, %v4913, 0.0
    %4918 = vadd.xlane.f32.xlu0 %v4917
    %v4919 = vpop.xlane.xlu0 %4918
    %v4920 = vmul.f32 %v4916, %v1610
    %v4921 = vmul.f32 %v4919, %v1610
    %v4922 = vadd.f32 %v4920, 1e-05
    %v4923 = vadd.f32 %v4921, 1e-05
    %v4924 = vrsqrt.pop %v4922
    %v4925 = vrsqrt.pop %v4923
    %v4926 = vmul.f32 %v4910, %v4924
    %v4927 = vmul.f32 %v4911, %v4925
    %v4929 = vlaneseq
    %v4930 = vshrl.u32 %v4929, 7
    %v4931 = vsub.s32 0, %v4930
    %v4932 = vrot.slane %v4899, %v4931
    %v4934 = vmul.f32 %v4926, %v4932
    %v4935 = vmul.f32 %v4927, %v4932
    %v4937 = vlaneseq
    %v4938 = vshrl.u32 %v4937, 7
    %v4939 = vsub.s32 0, %v4938
    %v4940 = vrot.slane %v4901, %v4939
    %v4942 = vadd.f32 %v4934, %v4940
    %v4943 = vadd.f32 %v4935, %v4940
    %v4944 = vpack.c.bf16 %v4943, %v4942
    %s4945 = scalar_lea.vmem %s25, 64
    %v4946 = vld [vmem:[%s4945] sm:$0xf]
    %v4947 = vld [vmem:[%s4945 + $0x4] sm:$0xf]
    %v4948 = vld [vmem:[%s4945 + $0x8] sm:$0xf]
    %v4949 = vld [vmem:[%s4945 + $0xc] sm:$0xf]
    %v4950 = vld [vmem:[%s4945 + $0x10] sm:$0xf]
    %v4951 = vld [vmem:[%s4945 + $0x14] sm:$0xf]
    %v4952 = vld [vmem:[%s4945 + $0x18] sm:$0xf]
    %v4953 = vld [vmem:[%s4945 + $0x1c] sm:$0xf]
    %v4954 = vld [vmem:[%s4945 + $0x20] sm:$0xf]
    %v4955 = vld [vmem:[%s4945 + $0x24] sm:$0xf]
    %v4956 = vld [vmem:[%s4945 + $0x28] sm:$0xf]
    %v4957 = vld [vmem:[%s4945 + $0x2c] sm:$0xf]
    %v4958 = vld [vmem:[%s4945 + $0x30] sm:$0xf]
    %v4959 = vld [vmem:[%s4945 + $0x34] sm:$0xf]
    %v4960 = vld [vmem:[%s4945 + $0x38] sm:$0xf]
    %v4961 = vld [vmem:[%s4945 + $0x3c] sm:$0xf]
    %s4962 = scalar_lea.vmem %s27, 4
    %v4963 = vld [vmem:[%s4962] sm:$0x1]
    %v4964 = vld [vmem:[%s4962 + $0x1] sm:$0x1]
    %v4965 = vld [vmem:[%s4962 + $0x2] sm:$0x1]
    %v4966 = vld [vmem:[%s4962 + $0x3] sm:$0x1]
    %s4967 = scalar_lea.vmem %s29, 64
    %v4968 = vld [vmem:[%s4967] sm:$0xf]
    %v4969 = vld [vmem:[%s4967 + $0x4] sm:$0xf]
    %v4970 = vld [vmem:[%s4967 + $0x8] sm:$0xf]
    %v4971 = vld [vmem:[%s4967 + $0xc] sm:$0xf]
    %v4972 = vld [vmem:[%s4967 + $0x10] sm:$0xf]
    %v4973 = vld [vmem:[%s4967 + $0x14] sm:$0xf]
    %v4974 = vld [vmem:[%s4967 + $0x18] sm:$0xf]
    %v4975 = vld [vmem:[%s4967 + $0x1c] sm:$0xf]
    %v4976 = vld [vmem:[%s4967 + $0x20] sm:$0xf]
    %v4977 = vld [vmem:[%s4967 + $0x24] sm:$0xf]
    %v4978 = vld [vmem:[%s4967 + $0x28] sm:$0xf]
    %v4979 = vld [vmem:[%s4967 + $0x2c] sm:$0xf]
    %v4980 = vld [vmem:[%s4967 + $0x30] sm:$0xf]
    %v4981 = vld [vmem:[%s4967 + $0x34] sm:$0xf]
    %v4982 = vld [vmem:[%s4967 + $0x38] sm:$0xf]
    %v4983 = vld [vmem:[%s4967 + $0x3c] sm:$0xf]
    %s4984 = scalar_lea.vmem %s31, 4
    %v4985 = vld [vmem:[%s4984] sm:$0x1]
    %v4986 = vld [vmem:[%s4984 + $0x1] sm:$0x1]
    %v4987 = vld [vmem:[%s4984 + $0x2] sm:$0x1]
    %v4988 = vld [vmem:[%s4984 + $0x3] sm:$0x1]
    %s4989 = scalar_lea.vmem %s33, 64
    %v4990 = vld [vmem:[%s4989] sm:$0xf]
    %v4991 = vld [vmem:[%s4989 + $0x4] sm:$0xf]
    %v4992 = vld [vmem:[%s4989 + $0x8] sm:$0xf]
    %v4993 = vld [vmem:[%s4989 + $0xc] sm:$0xf]
    %v4994 = vld [vmem:[%s4989 + $0x10] sm:$0xf]
    %v4995 = vld [vmem:[%s4989 + $0x14] sm:$0xf]
    %v4996 = vld [vmem:[%s4989 + $0x18] sm:$0xf]
    %v4997 = vld [vmem:[%s4989 + $0x1c] sm:$0xf]
    %v4998 = vld [vmem:[%s4989 + $0x20] sm:$0xf]
    %v4999 = vld [vmem:[%s4989 + $0x24] sm:$0xf]
    %v5000 = vld [vmem:[%s4989 + $0x28] sm:$0xf]
    %v5001 = vld [vmem:[%s4989 + $0x2c] sm:$0xf]
    %v5002 = vld [vmem:[%s4989 + $0x30] sm:$0xf]
    %v5003 = vld [vmem:[%s4989 + $0x34] sm:$0xf]
    %v5004 = vld [vmem:[%s4989 + $0x38] sm:$0xf]
    %v5005 = vld [vmem:[%s4989 + $0x3c] sm:$0xf]
    %s5006 = scalar_lea.vmem %s35, 4
    %v5007 = vld [vmem:[%s5006] sm:$0x1]
    %v5008 = vld [vmem:[%s5006 + $0x1] sm:$0x1]
    %v5009 = vld [vmem:[%s5006 + $0x2] sm:$0x1]
    %v5010 = vld [vmem:[%s5006 + $0x3] sm:$0x1]
    %s5011 = scalar_lea.vmem %s37, 16
    %v5012 = vld [vmem:[%s5011] sm:$0xf]
    %v5013 = vld [vmem:[%s5011 + $0x4] sm:$0xf]
    %v5014 = vld [vmem:[%s5011 + $0x8] sm:$0xf]
    %v5015 = vld [vmem:[%s5011 + $0xc] sm:$0xf]
    %v5017 = vlaneseq
    %v5018 = vshrl.u32 %v5017, 7
    %v5019 = vsub.s32 0, %v5018
    %v5020 = vrot.slane %v4963, %v5019
    %v5026 = vunpack.c.l.b16 %v4946
    %v5027 = vunpack.c.l.b16 %v4947
    %v5028 = vunpack.c.l.b16 %v4948
    %v5029 = vunpack.c.l.b16 %v4949
    %v5030 = vpack.c.b16 %v5027, %v5026
    %v5031 = vpack.c.b16 %v5029, %v5028
    %v5035 = vsel %vm230, %v4944, 0
    %5037 = vmatprep.subr.bf16.mxu0 0
    %5038 = vmatpush1.bf16.msra.mxu0 %v5030
    %5039 = vmatprep.subr.bf16.mxu0 0
    %5040 = vmatpush1.bf16.msra.mxu0 %v5031
    %5041 = vmatprep.subr.bf16.mxu0 0
    %5042 = vmatpush1.bf16.msra.mxu0 0
    %5043 = vmatprep.subr.bf16.mxu0 0
    %5044 = vmatpush1.bf16.msra.mxu0 0
    %5045 = vmatprep.subr.bf16.mxu0 0
    %5046 = vmatpush1.bf16.msra.mxu0 0
    %5047 = vmatprep.subr.bf16.mxu0 0
    %5048 = vmatpush1.bf16.msra.mxu0 0
    %5049 = vmatprep.subr.bf16.mxu0 0
    %5050 = vmatpush1.bf16.msra.mxu0 0
    %5051 = vmatprep.subr.bf16.mxu0 0
    %5052 = vmatpush1.bf16.msra.mxu0 0
    %5053 = vmatprep.subr.bf16.mxu0 0
    %5054 = vmatpush1.bf16.msra.mxu0 0
    %5055 = vmatprep.subr.bf16.mxu0 0
    %5056 = vmatpush1.bf16.msra.mxu0 0
    %5057 = vmatprep.subr.bf16.mxu0 0
    %5058 = vmatpush1.bf16.msra.mxu0 0
    %5059 = vmatprep.subr.bf16.mxu0 0
    %5060 = vmatpush1.bf16.msra.mxu0 0
    %5061 = vmatprep.subr.bf16.mxu0 0
    %5062 = vmatpush1.bf16.msra.mxu0 0
    %5063 = vmatprep.subr.bf16.mxu0 0
    %5064 = vmatpush1.bf16.msra.mxu0 0
    %5065 = vmatprep.subr.bf16.mxu0 0
    %5066 = vmatpush1.bf16.msra.mxu0 0
    %5067 = vmatprep.subr.bf16.mxu0 0
    %5068 = vmatpush1.bf16.msra.mxu0 0
    %5069 = vmatprep.mubr.bf16.mxu0 0
    %5070 = vmatmul.mubr.bf16.gmra.mrb[0].mxu0 %v5035
    %v5071 = vpop.f32.mrb[0].mxu0
    %v5072 = vadd.f32 %v5020, %v5071
    %v5073 = vpop.f32.mrb[0].mxu0
    %v5074 = vpop.f32.mrb[0].mxu0
    %v5075 = vadd.f32 %v5020, %v5074
    %v5076 = vpop.f32.mrb[0].mxu0
    %5077 = vdwg.mxu0
    %v5079 = vlaneseq
    %v5080 = vshrl.u32 %v5079, 7
    %v5081 = vsub.s32 0, %v5080
    %v5082 = vrot.slane %v4985, %v5081
    %v5088 = vunpack.c.l.b16 %v4968
    %v5089 = vunpack.c.l.b16 %v4969
    %v5090 = vunpack.c.l.b16 %v4970
    %v5091 = vunpack.c.l.b16 %v4971
    %v5092 = vpack.c.b16 %v5089, %v5088
    %v5093 = vpack.c.b16 %v5091, %v5090
    %5096 = vmatprep.subr.bf16.mxu0 0
    %5097 = vmatpush1.bf16.msra.mxu0 %v5092
    %5098 = vmatprep.subr.bf16.mxu0 0
    %5099 = vmatpush1.bf16.msra.mxu0 %v5093
    %5100 = vmatprep.subr.bf16.mxu0 0
    %5101 = vmatpush1.bf16.msra.mxu0 0
    %5102 = vmatprep.subr.bf16.mxu0 0
    %5103 = vmatpush1.bf16.msra.mxu0 0
    %5104 = vmatprep.subr.bf16.mxu0 0
    %5105 = vmatpush1.bf16.msra.mxu0 0
    %5106 = vmatprep.subr.bf16.mxu0 0
    %5107 = vmatpush1.bf16.msra.mxu0 0
    %5108 = vmatprep.subr.bf16.mxu0 0
    %5109 = vmatpush1.bf16.msra.mxu0 0
    %5110 = vmatprep.subr.bf16.mxu0 0
    %5111 = vmatpush1.bf16.msra.mxu0 0
    %5112 = vmatprep.subr.bf16.mxu0 0
    %5113 = vmatpush1.bf16.msra.mxu0 0
    %5114 = vmatprep.subr.bf16.mxu0 0
    %5115 = vmatpush1.bf16.msra.mxu0 0
    %5116 = vmatprep.subr.bf16.mxu0 0
    %5117 = vmatpush1.bf16.msra.mxu0 0
    %5118 = vmatprep.subr.bf16.mxu0 0
    %5119 = vmatpush1.bf16.msra.mxu0 0
    %5120 = vmatprep.subr.bf16.mxu0 0
    %5121 = vmatpush1.bf16.msra.mxu0 0
    %5122 = vmatprep.subr.bf16.mxu0 0
    %5123 = vmatpush1.bf16.msra.mxu0 0
    %5124 = vmatprep.subr.bf16.mxu0 0
    %5125 = vmatpush1.bf16.msra.mxu0 0
    %5126 = vmatprep.subr.bf16.mxu0 0
    %5127 = vmatpush1.bf16.msra.mxu0 0
    %5128 = vmatprep.mubr.bf16.mxu0 0
    %5129 = vmatmul.mubr.bf16.gmra.mrb[0].mxu0 %v1793
    %v5130 = vpop.f32.mrb[0].mxu0
    %v5131 = vadd.f32 %v5082, %v5130
    %v5132 = vpop.f32.mrb[0].mxu0
    %v5133 = vpop.f32.mrb[0].mxu0
    %v5134 = vadd.f32 %v5082, %v5133
    %v5135 = vpop.f32.mrb[0].mxu0
    %5136 = vmatprep.mubr.bf16.mxu0 0
    %5137 = vmatmul.mubr.bf16.gmra.mrb[0].mxu0 %v1796
    %v5138 = vpop.f32.mrb[0].mxu0
    %v5139 = vadd.f32 %v5082, %v5138
    %v5140 = vpop.f32.mrb[0].mxu0
    %v5141 = vpop.f32.mrb[0].mxu0
    %v5142 = vpop.f32.mrb[0].mxu0
    %5143 = vdwg.mxu0
    %v5145 = vlaneseq
    %v5146 = vshrl.u32 %v5145, 7
    %v5147 = vsub.s32 0, %v5146
    %v5148 = vrot.slane %v5007, %v5147
    %v5154 = vunpack.c.l.b16 %v4990
    %v5155 = vunpack.c.l.b16 %v4991
    %v5156 = vunpack.c.l.b16 %v4992
    %v5157 = vunpack.c.l.b16 %v4993
    %v5158 = vpack.c.b16 %v5155, %v5154
    %v5159 = vpack.c.b16 %v5157, %v5156
    %5162 = vmatprep.subr.bf16.mxu0 0
    %5163 = vmatpush1.bf16.msra.mxu0 %v5158
    %5164 = vmatprep.subr.bf16.mxu0 0
    %5165 = vmatpush1.bf16.msra.mxu0 %v5159
    %5166 = vmatprep.subr.bf16.mxu0 0
    %5167 = vmatpush1.bf16.msra.mxu0 0
    %5168 = vmatprep.subr.bf16.mxu0 0
    %5169 = vmatpush1.bf16.msra.mxu0 0
    %5170 = vmatprep.subr.bf16.mxu0 0
    %5171 = vmatpush1.bf16.msra.mxu0 0
    %5172 = vmatprep.subr.bf16.mxu0 0
    %5173 = vmatpush1.bf16.msra.mxu0 0
    %5174 = vmatprep.subr.bf16.mxu0 0
    %5175 = vmatpush1.bf16.msra.mxu0 0
    %5176 = vmatprep.subr.bf16.mxu0 0
    %5177 = vmatpush1.bf16.msra.mxu0 0
    %5178 = vmatprep.subr.bf16.mxu0 0
    %5179 = vmatpush1.bf16.msra.mxu0 0
    %5180 = vmatprep.subr.bf16.mxu0 0
    %5181 = vmatpush1.bf16.msra.mxu0 0
    %5182 = vmatprep.subr.bf16.mxu0 0
    %5183 = vmatpush1.bf16.msra.mxu0 0
    %5184 = vmatprep.subr.bf16.mxu0 0
    %5185 = vmatpush1.bf16.msra.mxu0 0
    %5186 = vmatprep.subr.bf16.mxu0 0
    %5187 = vmatpush1.bf16.msra.mxu0 0
    %5188 = vmatprep.subr.bf16.mxu0 0
    %5189 = vmatpush1.bf16.msra.mxu0 0
    %5190 = vmatprep.subr.bf16.mxu0 0
    %5191 = vmatpush1.bf16.msra.mxu0 0
    %5192 = vmatprep.subr.bf16.mxu0 0
    %5193 = vmatpush1.bf16.msra.mxu0 0
    %5194 = vmatprep.mubr.bf16.mxu0 0
    %5195 = vmatmul.mubr.bf16.gmra.mrb[0].mxu0 %v1793
    %v5196 = vpop.f32.mrb[0].mxu0
    %v5197 = vadd.f32 %v5148, %v5196
    %v5198 = vpop.f32.mrb[0].mxu0
    %v5199 = vpop.f32.mrb[0].mxu0
    %v5200 = vadd.f32 %v5148, %v5199
    %v5201 = vpop.f32.mrb[0].mxu0
    %5202 = vmatprep.mubr.bf16.mxu0 0
    %5203 = vmatmul.mubr.bf16.gmra.mrb[0].mxu0 %v1796
    %v5204 = vpop.f32.mrb[0].mxu0
    %v5205 = vadd.f32 %v5148, %v5204
    %v5206 = vpop.f32.mrb[0].mxu0
    %v5207 = vpop.f32.mrb[0].mxu0
    %v5208 = vpop.f32.mrb[0].mxu0
    %5209 = vdwg.mxu0
    %v5210 = vpack.c.bf16 %v5075, %v5072
    %v5211 = vpack.c.bf16 %v5134, %v5131
    %v5212 = vpack.c.bf16 %v5139, %v5139
    %v5214 = vsel %vm395, %v5210, 0
    %v5217 = vsel %vm395, %v5211, 0
    %v5220 = vsel %vm395, %v5212, 0
    %5222 = vmatprep.subr.bf16.mxu0 0
    %5223 = vmatpush1.bf16.xpose.msra.mxu0 %v5217
    %5224 = vmatprep.subr.bf16.mxu0 0
    %5225 = vmatpush1.bf16.xpose.msra.mxu0 %v5220
    %5226 = vmatprep.subr.bf16.mxu0 0
    %5227 = vmatpush1.bf16.xpose.msra.mxu0 0
    %5228 = vmatprep.subr.bf16.mxu0 0
    %5229 = vmatpush1.bf16.xpose.msra.mxu0 0
    %5230 = vmatprep.subr.bf16.mxu0 0
    %5231 = vmatpush1.bf16.xpose.msra.mxu0 0
    %5232 = vmatprep.subr.bf16.mxu0 0
    %5233 = vmatpush1.bf16.xpose.msra.mxu0 0
    %5234 = vmatprep.subr.bf16.mxu0 0
    %5235 = vmatpush1.bf16.xpose.msra.mxu0 0
    %5236 = vmatprep.subr.bf16.mxu0 0
    %5237 = vmatpush1.bf16.xpose.msra.mxu0 0
    %5238 = vmatprep.subr.bf16.mxu0 0
    %5239 = vmatpush1.bf16.xpose.msra.mxu0 0
    %5240 = vmatprep.subr.bf16.mxu0 0
    %5241 = vmatpush1.bf16.xpose.msra.mxu0 0
    %5242 = vmatprep.subr.bf16.mxu0 0
    %5243 = vmatpush1.bf16.xpose.msra.mxu0 0
    %5244 = vmatprep.subr.bf16.mxu0 0
    %5245 = vmatpush1.bf16.xpose.msra.mxu0 0
    %5246 = vmatprep.subr.bf16.mxu0 0
    %5247 = vmatpush1.bf16.xpose.msra.mxu0 0
    %5248 = vmatprep.subr.bf16.mxu0 0
    %5249 = vmatpush1.bf16.xpose.msra.mxu0 0
    %5250 = vmatprep.subr.bf16.mxu0 0
    %5251 = vmatpush1.bf16.xpose.msra.mxu0 0
    %5252 = vmatprep.subr.bf16.mxu0 0
    %5253 = vmatpush1.bf16.xpose.msra.mxu0 0
    %5254 = vmatprep.mubr.bf16.mxu0 0
    %5255 = vmatmul.mubr.bf16.gmra.mrb[0].mxu0 %v5214
    %v5256 = vpop.f32.mrb[0].mxu0
    %v5257 = vadd.f32 %v140, %v5256
    %v5258 = vpop.f32.mrb[0].mxu0
    %v5259 = vpop.f32.mrb[0].mxu0
    %v5260 = vadd.f32 %v141, %v5259
    %v5261 = vpop.f32.mrb[0].mxu0
    %5262 = vdwg.mxu0
    %v5263 = vsel %vm1965, %v5257, -inf
    %5264 = vmax.xlane.f32.xlu0 %v5263
    %v5265 = vpop.xlane.xlu0 %5264
    %v5266 = vsel %vm1965, %v5260, -inf
    %5267 = vmax.xlane.f32.xlu0 %v5266
    %v5268 = vpop.xlane.xlu0 %5267
    %v5269 = vsub.f32 %v5257, %v5265
    %v5270 = vsub.f32 %v5260, %v5268
    %v5271 = vmul.f32 %v5269, 1.442695
    %v5272 = vpow.pop %v5271
    %v5273 = vmul.f32 %v5270, 1.442695
    %v5274 = vpow.pop %v5273
    %v5275 = vsel %vm1965, %v5272, 0.0
    %5276 = vadd.xlane.f32.xlu0 %v5275
    %v5277 = vpop.xlane.xlu0 %5276
    %v5278 = vsel %vm1965, %v5274, 0.0
    %5279 = vadd.xlane.f32.xlu0 %v5278
    %v5280 = vpop.xlane.xlu0 %5279
    %v5281 = vrcp.pop %v5277
    %v5282 = vrcp.pop %v5280
    %v5283 = vmul.f32 %v5272, %v5281
    %v5284 = vmul.f32 %v5274, %v5282
    %v5285 = vpack.c.bf16 %v5284, %v5283
    %v5286 = vpack.c.bf16 %v5200, %v5197
    %v5287 = vpack.c.bf16 %v5205, %v5205
    %v5289 = vsel %vm1965, %v5285, 0
    %v5292 = vsel %vm1994, %v5287, 0
    %5294 = vmatprep.subr.bf16.mxu0 0
    %5295 = vmatpush1.bf16.msra.mxu0 %v5286
    %5296 = vmatprep.subr.bf16.mxu0 0
    %5297 = vmatpush1.bf16.msra.mxu0 %v5292
    %5298 = vmatprep.subr.bf16.mxu0 0
    %5299 = vmatpush1.bf16.msra.mxu0 0
    %5300 = vmatprep.subr.bf16.mxu0 0
    %5301 = vmatpush1.bf16.msra.mxu0 0
    %5302 = vmatprep.subr.bf16.mxu0 0
    %5303 = vmatpush1.bf16.msra.mxu0 0
    %5304 = vmatprep.subr.bf16.mxu0 0
    %5305 = vmatpush1.bf16.msra.mxu0 0
    %5306 = vmatprep.subr.bf16.mxu0 0
    %5307 = vmatpush1.bf16.msra.mxu0 0
    %5308 = vmatprep.subr.bf16.mxu0 0
    %5309 = vmatpush1.bf16.msra.mxu0 0
    %5310 = vmatprep.subr.bf16.mxu0 0
    %5311 = vmatpush1.bf16.msra.mxu0 0
    %5312 = vmatprep.subr.bf16.mxu0 0
    %5313 = vmatpush1.bf16.msra.mxu0 0
    %5314 = vmatprep.subr.bf16.mxu0 0
    %5315 = vmatpush1.bf16.msra.mxu0 0
    %5316 = vmatprep.subr.bf16.mxu0 0
    %5317 = vmatpush1.bf16.msra.mxu0 0
    %5318 = vmatprep.subr.bf16.mxu0 0
    %5319 = vmatpush1.bf16.msra.mxu0 0
    %5320 = vmatprep.subr.bf16.mxu0 0
    %5321 = vmatpush1.bf16.msra.mxu0 0
    %5322 = vmatprep.subr.bf16.mxu0 0
    %5323 = vmatpush1.bf16.msra.mxu0 0
    %5324 = vmatprep.subr.bf16.mxu0 0
    %5325 = vmatpush1.bf16.msra.mxu0 0
    %5326 = vmatprep.mubr.bf16.mxu0 0
    %5327 = vmatmul.mubr.bf16.gmra.mrb[0].mxu0 %v5289
    %v5328 = vpop.f32.mrb[0].mxu0
    %v5329 = vadd.f32 0.0, %v5328
    %v5330 = vpop.f32.mrb[0].mxu0
    %v5331 = vpop.f32.mrb[0].mxu0
    %v5332 = vadd.f32 0.0, %v5331
    %v5333 = vpop.f32.mrb[0].mxu0
    %5334 = vdwg.mxu0
    %v5335 = vpack.c.bf16 %v5332, %v5329
    %v5337 = vlaneseq
    %v5338 = vshrl.u32 %v5337, 7
    %v5339 = vsub.s32 0, %v5338
    %v5340 = vrot.slane %v4964, %v5339
    %v5346 = vunpack.c.l.b16 %v4950
    %v5347 = vunpack.c.l.b16 %v4951
    %v5348 = vunpack.c.l.b16 %v4952
    %v5349 = vunpack.c.l.b16 %v4953
    %v5350 = vpack.c.b16 %v5347, %v5346
    %v5351 = vpack.c.b16 %v5349, %v5348
    %5354 = vmatprep.subr.bf16.mxu0 0
    %5355 = vmatpush1.bf16.msra.mxu0 %v5350
    %5356 = vmatprep.subr.bf16.mxu0 0
    %5357 = vmatpush1.bf16.msra.mxu0 %v5351
    %5358 = vmatprep.subr.bf16.mxu0 0
    %5359 = vmatpush1.bf16.msra.mxu0 0
    %5360 = vmatprep.subr.bf16.mxu0 0
    %5361 = vmatpush1.bf16.msra.mxu0 0
    %5362 = vmatprep.subr.bf16.mxu0 0
    %5363 = vmatpush1.bf16.msra.mxu0 0
    %5364 = vmatprep.subr.bf16.mxu0 0
    %5365 = vmatpush1.bf16.msra.mxu0 0
    %5366 = vmatprep.subr.bf16.mxu0 0
    %5367 = vmatpush1.bf16.msra.mxu0 0
    %5368 = vmatprep.subr.bf16.mxu0 0
    %5369 = vmatpush1.bf16.msra.mxu0 0
    %5370 = vmatprep.subr.bf16.mxu0 0
    %5371 = vmatpush1.bf16.msra.mxu0 0
    %5372 = vmatprep.subr.bf16.mxu0 0
    %5373 = vmatpush1.bf16.msra.mxu0 0
    %5374 = vmatprep.subr.bf16.mxu0 0
    %5375 = vmatpush1.bf16.msra.mxu0 0
    %5376 = vmatprep.subr.bf16.mxu0 0
    %5377 = vmatpush1.bf16.msra.mxu0 0
    %5378 = vmatprep.subr.bf16.mxu0 0
    %5379 = vmatpush1.bf16.msra.mxu0 0
    %5380 = vmatprep.subr.bf16.mxu0 0
    %5381 = vmatpush1.bf16.msra.mxu0 0
    %5382 = vmatprep.subr.bf16.mxu0 0
    %5383 = vmatpush1.bf16.msra.mxu0 0
    %5384 = vmatprep.subr.bf16.mxu0 0
    %5385 = vmatpush1.bf16.msra.mxu0 0
    %5386 = vmatprep.mubr.bf16.mxu0 0
    %5387 = vmatmul.mubr.bf16.gmra.mrb[0].mxu0 %v5035
    %v5388 = vpop.f32.mrb[0].mxu0
    %v5389 = vadd.f32 %v5340, %v5388
    %v5390 = vpop.f32.mrb[0].mxu0
    %v5391 = vpop.f32.mrb[0].mxu0
    %v5392 = vadd.f32 %v5340, %v5391
    %v5393 = vpop.f32.mrb[0].mxu0
    %5394 = vdwg.mxu0
    %v5396 = vlaneseq
    %v5397 = vshrl.u32 %v5396, 7
    %v5398 = vsub.s32 0, %v5397
    %v5399 = vrot.slane %v4986, %v5398
    %v5405 = vunpack.c.l.b16 %v4972
    %v5406 = vunpack.c.l.b16 %v4973
    %v5407 = vunpack.c.l.b16 %v4974
    %v5408 = vunpack.c.l.b16 %v4975
    %v5409 = vpack.c.b16 %v5406, %v5405
    %v5410 = vpack.c.b16 %v5408, %v5407
    %5413 = vmatprep.subr.bf16.mxu0 0
    %5414 = vmatpush1.bf16.msra.mxu0 %v5409
    %5415 = vmatprep.subr.bf16.mxu0 0
    %5416 = vmatpush1.bf16.msra.mxu0 %v5410
    %5417 = vmatprep.subr.bf16.mxu0 0
    %5418 = vmatpush1.bf16.msra.mxu0 0
    %5419 = vmatprep.subr.bf16.mxu0 0
    %5420 = vmatpush1.bf16.msra.mxu0 0
    %5421 = vmatprep.subr.bf16.mxu0 0
    %5422 = vmatpush1.bf16.msra.mxu0 0
    %5423 = vmatprep.subr.bf16.mxu0 0
    %5424 = vmatpush1.bf16.msra.mxu0 0
    %5425 = vmatprep.subr.bf16.mxu0 0
    %5426 = vmatpush1.bf16.msra.mxu0 0
    %5427 = vmatprep.subr.bf16.mxu0 0
    %5428 = vmatpush1.bf16.msra.mxu0 0
    %5429 = vmatprep.subr.bf16.mxu0 0
    %5430 = vmatpush1.bf16.msra.mxu0 0
    %5431 = vmatprep.subr.bf16.mxu0 0
    %5432 = vmatpush1.bf16.msra.mxu0 0
    %5433 = vmatprep.subr.bf16.mxu0 0
    %5434 = vmatpush1.bf16.msra.mxu0 0
    %5435 = vmatprep.subr.bf16.mxu0 0
    %5436 = vmatpush1.bf16.msra.mxu0 0
    %5437 = vmatprep.subr.bf16.mxu0 0
    %5438 = vmatpush1.bf16.msra.mxu0 0
    %5439 = vmatprep.subr.bf16.mxu0 0
    %5440 = vmatpush1.bf16.msra.mxu0 0
    %5441 = vmatprep.subr.bf16.mxu0 0
    %5442 = vmatpush1.bf16.msra.mxu0 0
    %5443 = vmatprep.subr.bf16.mxu0 0
    %5444 = vmatpush1.bf16.msra.mxu0 0
    %5445 = vmatprep.mubr.bf16.mxu0 0
    %5446 = vmatmul.mubr.bf16.gmra.mrb[0].mxu0 %v1793
    %v5447 = vpop.f32.mrb[0].mxu0
    %v5448 = vadd.f32 %v5399, %v5447
    %v5449 = vpop.f32.mrb[0].mxu0
    %v5450 = vpop.f32.mrb[0].mxu0
    %v5451 = vadd.f32 %v5399, %v5450
    %v5452 = vpop.f32.mrb[0].mxu0
    %5453 = vmatprep.mubr.bf16.mxu0 0
    %5454 = vmatmul.mubr.bf16.gmra.mrb[0].mxu0 %v1796
    %v5455 = vpop.f32.mrb[0].mxu0
    %v5456 = vadd.f32 %v5399, %v5455
    %v5457 = vpop.f32.mrb[0].mxu0
    %v5458 = vpop.f32.mrb[0].mxu0
    %v5459 = vpop.f32.mrb[0].mxu0
    %5460 = vdwg.mxu0
    %v5462 = vlaneseq
    %v5463 = vshrl.u32 %v5462, 7
    %v5464 = vsub.s32 0, %v5463
    %v5465 = vrot.slane %v5008, %v5464
    %v5471 = vunpack.c.l.b16 %v4994
    %v5472 = vunpack.c.l.b16 %v4995
    %v5473 = vunpack.c.l.b16 %v4996
    %v5474 = vunpack.c.l.b16 %v4997
    %v5475 = vpack.c.b16 %v5472, %v5471
    %v5476 = vpack.c.b16 %v5474, %v5473
    %5479 = vmatprep.subr.bf16.mxu0 0
    %5480 = vmatpush1.bf16.msra.mxu0 %v5475
    %5481 = vmatprep.subr.bf16.mxu0 0
    %5482 = vmatpush1.bf16.msra.mxu0 %v5476
    %5483 = vmatprep.subr.bf16.mxu0 0
    %5484 = vmatpush1.bf16.msra.mxu0 0
    %5485 = vmatprep.subr.bf16.mxu0 0
    %5486 = vmatpush1.bf16.msra.mxu0 0
    %5487 = vmatprep.subr.bf16.mxu0 0
    %5488 = vmatpush1.bf16.msra.mxu0 0
    %5489 = vmatprep.subr.bf16.mxu0 0
    %5490 = vmatpush1.bf16.msra.mxu0 0
    %5491 = vmatprep.subr.bf16.mxu0 0
    %5492 = vmatpush1.bf16.msra.mxu0 0
    %5493 = vmatprep.subr.bf16.mxu0 0
    %5494 = vmatpush1.bf16.msra.mxu0 0
    %5495 = vmatprep.subr.bf16.mxu0 0
    %5496 = vmatpush1.bf16.msra.mxu0 0
    %5497 = vmatprep.subr.bf16.mxu0 0
    %5498 = vmatpush1.bf16.msra.mxu0 0
    %5499 = vmatprep.subr.bf16.mxu0 0
    %5500 = vmatpush1.bf16.msra.mxu0 0
    %5501 = vmatprep.subr.bf16.mxu0 0
    %5502 = vmatpush1.bf16.msra.mxu0 0
    %5503 = vmatprep.subr.bf16.mxu0 0
    %5504 = vmatpush1.bf16.msra.mxu0 0
    %5505 = vmatprep.subr.bf16.mxu0 0
    %5506 = vmatpush1.bf16.msra.mxu0 0
    %5507 = vmatprep.subr.bf16.mxu0 0
    %5508 = vmatpush1.bf16.msra.mxu0 0
    %5509 = vmatprep.subr.bf16.mxu0 0
    %5510 = vmatpush1.bf16.msra.mxu0 0
    %5511 = vmatprep.mubr.bf16.mxu0 0
    %5512 = vmatmul.mubr.bf16.gmra.mrb[0].mxu0 %v1793
    %v5513 = vpop.f32.mrb[0].mxu0
    %v5514 = vadd.f32 %v5465, %v5513
    %v5515 = vpop.f32.mrb[0].mxu0
    %v5516 = vpop.f32.mrb[0].mxu0
    %v5517 = vadd.f32 %v5465, %v5516
    %v5518 = vpop.f32.mrb[0].mxu0
    %5519 = vmatprep.mubr.bf16.mxu0 0
    %5520 = vmatmul.mubr.bf16.gmra.mrb[0].mxu0 %v1796
    %v5521 = vpop.f32.mrb[0].mxu0
    %v5522 = vadd.f32 %v5465, %v5521
    %v5523 = vpop.f32.mrb[0].mxu0
    %v5524 = vpop.f32.mrb[0].mxu0
    %v5525 = vpop.f32.mrb[0].mxu0
    %5526 = vdwg.mxu0
    %v5527 = vpack.c.bf16 %v5392, %v5389
    %v5528 = vpack.c.bf16 %v5451, %v5448
    %v5529 = vpack.c.bf16 %v5456, %v5456
    %v5531 = vsel %vm395, %v5527, 0
    %v5534 = vsel %vm395, %v5528, 0
    %v5537 = vsel %vm395, %v5529, 0
    %5539 = vmatprep.subr.bf16.mxu0 0
    %5540 = vmatpush1.bf16.xpose.msra.mxu0 %v5534
    %5541 = vmatprep.subr.bf16.mxu0 0
    %5542 = vmatpush1.bf16.xpose.msra.mxu0 %v5537
    %5543 = vmatprep.subr.bf16.mxu0 0
    %5544 = vmatpush1.bf16.xpose.msra.mxu0 0
    %5545 = vmatprep.subr.bf16.mxu0 0
    %5546 = vmatpush1.bf16.xpose.msra.mxu0 0
    %5547 = vmatprep.subr.bf16.mxu0 0
    %5548 = vmatpush1.bf16.xpose.msra.mxu0 0
    %5549 = vmatprep.subr.bf16.mxu0 0
    %5550 = vmatpush1.bf16.xpose.msra.mxu0 0
    %5551 = vmatprep.subr.bf16.mxu0 0
    %5552 = vmatpush1.bf16.xpose.msra.mxu0 0
    %5553 = vmatprep.subr.bf16.mxu0 0
    %5554 = vmatpush1.bf16.xpose.msra.mxu0 0
    %5555 = vmatprep.subr.bf16.mxu0 0
    %5556 = vmatpush1.bf16.xpose.msra.mxu0 0
    %5557 = vmatprep.subr.bf16.mxu0 0
    %5558 = vmatpush1.bf16.xpose.msra.mxu0 0
    %5559 = vmatprep.subr.bf16.mxu0 0
    %5560 = vmatpush1.bf16.xpose.msra.mxu0 0
    %5561 = vmatprep.subr.bf16.mxu0 0
    %5562 = vmatpush1.bf16.xpose.msra.mxu0 0
    %5563 = vmatprep.subr.bf16.mxu0 0
    %5564 = vmatpush1.bf16.xpose.msra.mxu0 0
    %5565 = vmatprep.subr.bf16.mxu0 0
    %5566 = vmatpush1.bf16.xpose.msra.mxu0 0
    %5567 = vmatprep.subr.bf16.mxu0 0
    %5568 = vmatpush1.bf16.xpose.msra.mxu0 0
    %5569 = vmatprep.subr.bf16.mxu0 0
    %5570 = vmatpush1.bf16.xpose.msra.mxu0 0
    %5571 = vmatprep.mubr.bf16.mxu0 0
    %5572 = vmatmul.mubr.bf16.gmra.mrb[0].mxu0 %v5531
    %v5573 = vpop.f32.mrb[0].mxu0
    %v5574 = vadd.f32 %v140, %v5573
    %v5575 = vpop.f32.mrb[0].mxu0
    %v5576 = vpop.f32.mrb[0].mxu0
    %v5577 = vadd.f32 %v141, %v5576
    %v5578 = vpop.f32.mrb[0].mxu0
    %5579 = vdwg.mxu0
    %v5580 = vsel %vm1965, %v5574, -inf
    %5581 = vmax.xlane.f32.xlu0 %v5580
    %v5582 = vpop.xlane.xlu0 %5581
    %v5583 = vsel %vm1965, %v5577, -inf
    %5584 = vmax.xlane.f32.xlu0 %v5583
    %v5585 = vpop.xlane.xlu0 %5584
    %v5586 = vsub.f32 %v5574, %v5582
    %v5587 = vsub.f32 %v5577, %v5585
    %v5588 = vmul.f32 %v5586, 1.442695
    %v5589 = vpow.pop %v5588
    %v5590 = vmul.f32 %v5587, 1.442695
    %v5591 = vpow.pop %v5590
    %v5592 = vsel %vm1965, %v5589, 0.0
    %5593 = vadd.xlane.f32.xlu0 %v5592
    %v5594 = vpop.xlane.xlu0 %5593
    %v5595 = vsel %vm1965, %v5591, 0.0
    %5596 = vadd.xlane.f32.xlu0 %v5595
    %v5597 = vpop.xlane.xlu0 %5596
    %v5598 = vrcp.pop %v5594
    %v5599 = vrcp.pop %v5597
    %v5600 = vmul.f32 %v5589, %v5598
    %v5601 = vmul.f32 %v5591, %v5599
    %v5602 = vpack.c.bf16 %v5601, %v5600
    %v5603 = vpack.c.bf16 %v5517, %v5514
    %v5604 = vpack.c.bf16 %v5522, %v5522
    %v5606 = vsel %vm1965, %v5602, 0
    %v5609 = vsel %vm1994, %v5604, 0
    %5611 = vmatprep.subr.bf16.mxu0 0
    %5612 = vmatpush1.bf16.msra.mxu0 %v5603
    %5613 = vmatprep.subr.bf16.mxu0 0
    %5614 = vmatpush1.bf16.msra.mxu0 %v5609
    %5615 = vmatprep.subr.bf16.mxu0 0
    %5616 = vmatpush1.bf16.msra.mxu0 0
    %5617 = vmatprep.subr.bf16.mxu0 0
    %5618 = vmatpush1.bf16.msra.mxu0 0
    %5619 = vmatprep.subr.bf16.mxu0 0
    %5620 = vmatpush1.bf16.msra.mxu0 0
    %5621 = vmatprep.subr.bf16.mxu0 0
    %5622 = vmatpush1.bf16.msra.mxu0 0
    %5623 = vmatprep.subr.bf16.mxu0 0
    %5624 = vmatpush1.bf16.msra.mxu0 0
    %5625 = vmatprep.subr.bf16.mxu0 0
    %5626 = vmatpush1.bf16.msra.mxu0 0
    %5627 = vmatprep.subr.bf16.mxu0 0
    %5628 = vmatpush1.bf16.msra.mxu0 0
    %5629 = vmatprep.subr.bf16.mxu0 0
    %5630 = vmatpush1.bf16.msra.mxu0 0
    %5631 = vmatprep.subr.bf16.mxu0 0
    %5632 = vmatpush1.bf16.msra.mxu0 0
    %5633 = vmatprep.subr.bf16.mxu0 0
    %5634 = vmatpush1.bf16.msra.mxu0 0
    %5635 = vmatprep.subr.bf16.mxu0 0
    %5636 = vmatpush1.bf16.msra.mxu0 0
    %5637 = vmatprep.subr.bf16.mxu0 0
    %5638 = vmatpush1.bf16.msra.mxu0 0
    %5639 = vmatprep.subr.bf16.mxu0 0
    %5640 = vmatpush1.bf16.msra.mxu0 0
    %5641 = vmatprep.subr.bf16.mxu0 0
    %5642 = vmatpush1.bf16.msra.mxu0 0
    %5643 = vmatprep.mubr.bf16.mxu0 0
    %5644 = vmatmul.mubr.bf16.gmra.mrb[0].mxu0 %v5606
    %v5645 = vpop.f32.mrb[0].mxu0
    %v5646 = vadd.f32 0.0, %v5645
    %v5647 = vpop.f32.mrb[0].mxu0
    %v5648 = vpop.f32.mrb[0].mxu0
    %v5649 = vadd.f32 0.0, %v5648
    %v5650 = vpop.f32.mrb[0].mxu0
    %5651 = vdwg.mxu0
    %v5652 = vpack.c.bf16 %v5649, %v5646
    %v5654 = vsel %vm395, %v5652, 0
    %v5657 = vsel %vm811, %v5013, 0
    %5659 = vmatprep.subr.bf16.mxu0 0
    %5660 = vmatpush1.bf16.msra.mxu0 %v5657
    %5661 = vmatprep.subr.bf16.mxu0 0
    %5662 = vmatpush1.bf16.msra.mxu0 0
    %5663 = vmatprep.subr.bf16.mxu0 0
    %5664 = vmatpush1.bf16.msra.mxu0 0
    %5665 = vmatprep.subr.bf16.mxu0 0
    %5666 = vmatpush1.bf16.msra.mxu0 0
    %5667 = vmatprep.subr.bf16.mxu0 0
    %5668 = vmatpush1.bf16.msra.mxu0 0
    %5669 = vmatprep.subr.bf16.mxu0 0
    %5670 = vmatpush1.bf16.msra.mxu0 0
    %5671 = vmatprep.subr.bf16.mxu0 0
    %5672 = vmatpush1.bf16.msra.mxu0 0
    %5673 = vmatprep.subr.bf16.mxu0 0
    %5674 = vmatpush1.bf16.msra.mxu0 0
    %5675 = vmatprep.subr.bf16.mxu0 0
    %5676 = vmatpush1.bf16.msra.mxu0 0
    %5677 = vmatprep.subr.bf16.mxu0 0
    %5678 = vmatpush1.bf16.msra.mxu0 0
    %5679 = vmatprep.subr.bf16.mxu0 0
    %5680 = vmatpush1.bf16.msra.mxu0 0
    %5681 = vmatprep.subr.bf16.mxu0 0
    %5682 = vmatpush1.bf16.msra.mxu0 0
    %5683 = vmatprep.subr.bf16.mxu0 0
    %5684 = vmatpush1.bf16.msra.mxu0 0
    %5685 = vmatprep.subr.bf16.mxu0 0
    %5686 = vmatpush1.bf16.msra.mxu0 0
    %5687 = vmatprep.subr.bf16.mxu0 0
    %5688 = vmatpush1.bf16.msra.mxu0 0
    %5689 = vmatprep.subr.bf16.mxu0 0
    %5690 = vmatpush1.bf16.msra.mxu0 0
    %5691 = vmatprep.mubr.bf16.mxu0 0
    %5692 = vmatmul.mubr.bf16.gmra.mrb[0].mxu0 %v5654
    %v5693 = vpop.f32.mrb[0].mxu0
    %v5694 = vadd.f32 0.0, %v5693
    %v5695 = vpop.f32.mrb[0].mxu0
    %v5696 = vpop.f32.mrb[0].mxu0
    %v5697 = vadd.f32 0.0, %v5696
    %v5698 = vpop.f32.mrb[0].mxu0
    %5699 = vdwg.mxu0
    %v5701 = vsel %vm395, %v5335, 0
    %v5704 = vsel %vm811, %v5012, 0
    %5706 = vmatprep.subr.bf16.mxu0 0
    %5707 = vmatpush1.bf16.msra.mxu0 %v5704
    %5708 = vmatprep.subr.bf16.mxu0 0
    %5709 = vmatpush1.bf16.msra.mxu0 0
    %5710 = vmatprep.subr.bf16.mxu0 0
    %5711 = vmatpush1.bf16.msra.mxu0 0
    %5712 = vmatprep.subr.bf16.mxu0 0
    %5713 = vmatpush1.bf16.msra.mxu0 0
    %5714 = vmatprep.subr.bf16.mxu0 0
    %5715 = vmatpush1.bf16.msra.mxu0 0
    %5716 = vmatprep.subr.bf16.mxu0 0
    %5717 = vmatpush1.bf16.msra.mxu0 0
    %5718 = vmatprep.subr.bf16.mxu0 0
    %5719 = vmatpush1.bf16.msra.mxu0 0
    %5720 = vmatprep.subr.bf16.mxu0 0
    %5721 = vmatpush1.bf16.msra.mxu0 0
    %5722 = vmatprep.subr.bf16.mxu0 0
    %5723 = vmatpush1.bf16.msra.mxu0 0
    %5724 = vmatprep.subr.bf16.mxu0 0
    %5725 = vmatpush1.bf16.msra.mxu0 0
    %5726 = vmatprep.subr.bf16.mxu0 0
    %5727 = vmatpush1.bf16.msra.mxu0 0
    %5728 = vmatprep.subr.bf16.mxu0 0
    %5729 = vmatpush1.bf16.msra.mxu0 0
    %5730 = vmatprep.subr.bf16.mxu0 0
    %5731 = vmatpush1.bf16.msra.mxu0 0
    %5732 = vmatprep.subr.bf16.mxu0 0
    %5733 = vmatpush1.bf16.msra.mxu0 0
    %5734 = vmatprep.subr.bf16.mxu0 0
    %5735 = vmatpush1.bf16.msra.mxu0 0
    %5736 = vmatprep.subr.bf16.mxu0 0
    %5737 = vmatpush1.bf16.msra.mxu0 0
    %5738 = vmatprep.mubr.bf16.mxu0 0
    %5739 = vmatmul.mubr.bf16.gmra.mrb[0].mxu0 %v5701
    %v5740 = vpop.f32.mrb[0].mxu0
    %v5741 = vadd.f32 %v5694, %v5740
    %v5742 = vpop.f32.mrb[0].mxu0
    %v5743 = vpop.f32.mrb[0].mxu0
    %v5744 = vadd.f32 %v5697, %v5743
    %v5745 = vpop.f32.mrb[0].mxu0
    %5746 = vdwg.mxu0
    %v5748 = vlaneseq
    %v5749 = vshrl.u32 %v5748, 7
    %v5750 = vsub.s32 0, %v5749
    %v5751 = vrot.slane %v4965, %v5750
    %v5757 = vunpack.c.l.b16 %v4954
    %v5758 = vunpack.c.l.b16 %v4955
    %v5759 = vunpack.c.l.b16 %v4956
    %v5760 = vunpack.c.l.b16 %v4957
    %v5761 = vpack.c.b16 %v5758, %v5757
    %v5762 = vpack.c.b16 %v5760, %v5759
    %5765 = vmatprep.subr.bf16.mxu0 0
    %5766 = vmatpush1.bf16.msra.mxu0 %v5761
    %5767 = vmatprep.subr.bf16.mxu0 0
    %5768 = vmatpush1.bf16.msra.mxu0 %v5762
    %5769 = vmatprep.subr.bf16.mxu0 0
    %5770 = vmatpush1.bf16.msra.mxu0 0
    %5771 = vmatprep.subr.bf16.mxu0 0
    %5772 = vmatpush1.bf16.msra.mxu0 0
    %5773 = vmatprep.subr.bf16.mxu0 0
    %5774 = vmatpush1.bf16.msra.mxu0 0
    %5775 = vmatprep.subr.bf16.mxu0 0
    %5776 = vmatpush1.bf16.msra.mxu0 0
    %5777 = vmatprep.subr.bf16.mxu0 0
    %5778 = vmatpush1.bf16.msra.mxu0 0
    %5779 = vmatprep.subr.bf16.mxu0 0
    %5780 = vmatpush1.bf16.msra.mxu0 0
    %5781 = vmatprep.subr.bf16.mxu0 0
    %5782 = vmatpush1.bf16.msra.mxu0 0
    %5783 = vmatprep.subr.bf16.mxu0 0
    %5784 = vmatpush1.bf16.msra.mxu0 0
    %5785 = vmatprep.subr.bf16.mxu0 0
    %5786 = vmatpush1.bf16.msra.mxu0 0
    %5787 = vmatprep.subr.bf16.mxu0 0
    %5788 = vmatpush1.bf16.msra.mxu0 0
    %5789 = vmatprep.subr.bf16.mxu0 0
    %5790 = vmatpush1.bf16.msra.mxu0 0
    %5791 = vmatprep.subr.bf16.mxu0 0
    %5792 = vmatpush1.bf16.msra.mxu0 0
    %5793 = vmatprep.subr.bf16.mxu0 0
    %5794 = vmatpush1.bf16.msra.mxu0 0
    %5795 = vmatprep.subr.bf16.mxu0 0
    %5796 = vmatpush1.bf16.msra.mxu0 0
    %5797 = vmatprep.mubr.bf16.mxu0 0
    %5798 = vmatmul.mubr.bf16.gmra.mrb[0].mxu0 %v5035
    %v5799 = vpop.f32.mrb[0].mxu0
    %v5800 = vadd.f32 %v5751, %v5799
    %v5801 = vpop.f32.mrb[0].mxu0
    %v5802 = vpop.f32.mrb[0].mxu0
    %v5803 = vadd.f32 %v5751, %v5802
    %v5804 = vpop.f32.mrb[0].mxu0
    %5805 = vdwg.mxu0
    %v5807 = vlaneseq
    %v5808 = vshrl.u32 %v5807, 7
    %v5809 = vsub.s32 0, %v5808
    %v5810 = vrot.slane %v4987, %v5809
    %v5816 = vunpack.c.l.b16 %v4976
    %v5817 = vunpack.c.l.b16 %v4977
    %v5818 = vunpack.c.l.b16 %v4978
    %v5819 = vunpack.c.l.b16 %v4979
    %v5820 = vpack.c.b16 %v5817, %v5816
    %v5821 = vpack.c.b16 %v5819, %v5818
    %5824 = vmatprep.subr.bf16.mxu0 0
    %5825 = vmatpush1.bf16.msra.mxu0 %v5820
    %5826 = vmatprep.subr.bf16.mxu0 0
    %5827 = vmatpush1.bf16.msra.mxu0 %v5821
    %5828 = vmatprep.subr.bf16.mxu0 0
    %5829 = vmatpush1.bf16.msra.mxu0 0
    %5830 = vmatprep.subr.bf16.mxu0 0
    %5831 = vmatpush1.bf16.msra.mxu0 0
    %5832 = vmatprep.subr.bf16.mxu0 0
    %5833 = vmatpush1.bf16.msra.mxu0 0
    %5834 = vmatprep.subr.bf16.mxu0 0
    %5835 = vmatpush1.bf16.msra.mxu0 0
    %5836 = vmatprep.subr.bf16.mxu0 0
    %5837 = vmatpush1.bf16.msra.mxu0 0
    %5838 = vmatprep.subr.bf16.mxu0 0
    %5839 = vmatpush1.bf16.msra.mxu0 0
    %5840 = vmatprep.subr.bf16.mxu0 0
    %5841 = vmatpush1.bf16.msra.mxu0 0
    %5842 = vmatprep.subr.bf16.mxu0 0
    %5843 = vmatpush1.bf16.msra.mxu0 0
    %5844 = vmatprep.subr.bf16.mxu0 0
    %5845 = vmatpush1.bf16.msra.mxu0 0
    %5846 = vmatprep.subr.bf16.mxu0 0
    %5847 = vmatpush1.bf16.msra.mxu0 0
    %5848 = vmatprep.subr.bf16.mxu0 0
    %5849 = vmatpush1.bf16.msra.mxu0 0
    %5850 = vmatprep.subr.bf16.mxu0 0
    %5851 = vmatpush1.bf16.msra.mxu0 0
    %5852 = vmatprep.subr.bf16.mxu0 0
    %5853 = vmatpush1.bf16.msra.mxu0 0
    %5854 = vmatprep.subr.bf16.mxu0 0
    %5855 = vmatpush1.bf16.msra.mxu0 0
    %5856 = vmatprep.mubr.bf16.mxu0 0
    %5857 = vmatmul.mubr.bf16.gmra.mrb[0].mxu0 %v1793
    %v5858 = vpop.f32.mrb[0].mxu0
    %v5859 = vadd.f32 %v5810, %v5858
    %v5860 = vpop.f32.mrb[0].mxu0
    %v5861 = vpop.f32.mrb[0].mxu0
    %v5862 = vadd.f32 %v5810, %v5861
    %v5863 = vpop.f32.mrb[0].mxu0
    %5864 = vmatprep.mubr.bf16.mxu0 0
    %5865 = vmatmul.mubr.bf16.gmra.mrb[0].mxu0 %v1796
    %v5866 = vpop.f32.mrb[0].mxu0
    %v5867 = vadd.f32 %v5810, %v5866
    %v5868 = vpop.f32.mrb[0].mxu0
    %v5869 = vpop.f32.mrb[0].mxu0
    %v5870 = vpop.f32.mrb[0].mxu0
    %5871 = vdwg.mxu0
    %v5873 = vlaneseq
    %v5874 = vshrl.u32 %v5873, 7
    %v5875 = vsub.s32 0, %v5874
    %v5876 = vrot.slane %v5009, %v5875
    %v5882 = vunpack.c.l.b16 %v4998
    %v5883 = vunpack.c.l.b16 %v4999
    %v5884 = vunpack.c.l.b16 %v5000
    %v5885 = vunpack.c.l.b16 %v5001
    %v5886 = vpack.c.b16 %v5883, %v5882
    %v5887 = vpack.c.b16 %v5885, %v5884
    %5890 = vmatprep.subr.bf16.mxu0 0
    %5891 = vmatpush1.bf16.msra.mxu0 %v5886
    %5892 = vmatprep.subr.bf16.mxu0 0
    %5893 = vmatpush1.bf16.msra.mxu0 %v5887
    %5894 = vmatprep.subr.bf16.mxu0 0
    %5895 = vmatpush1.bf16.msra.mxu0 0
    %5896 = vmatprep.subr.bf16.mxu0 0
    %5897 = vmatpush1.bf16.msra.mxu0 0
    %5898 = vmatprep.subr.bf16.mxu0 0
    %5899 = vmatpush1.bf16.msra.mxu0 0
    %5900 = vmatprep.subr.bf16.mxu0 0
    %5901 = vmatpush1.bf16.msra.mxu0 0
    %5902 = vmatprep.subr.bf16.mxu0 0
    %5903 = vmatpush1.bf16.msra.mxu0 0
    %5904 = vmatprep.subr.bf16.mxu0 0
    %5905 = vmatpush1.bf16.msra.mxu0 0
    %5906 = vmatprep.subr.bf16.mxu0 0
    %5907 = vmatpush1.bf16.msra.mxu0 0
    %5908 = vmatprep.subr.bf16.mxu0 0
    %5909 = vmatpush1.bf16.msra.mxu0 0
    %5910 = vmatprep.subr.bf16.mxu0 0
    %5911 = vmatpush1.bf16.msra.mxu0 0
    %5912 = vmatprep.subr.bf16.mxu0 0
    %5913 = vmatpush1.bf16.msra.mxu0 0
    %5914 = vmatprep.subr.bf16.mxu0 0
    %5915 = vmatpush1.bf16.msra.mxu0 0
    %5916 = vmatprep.subr.bf16.mxu0 0
    %5917 = vmatpush1.bf16.msra.mxu0 0
    %5918 = vmatprep.subr.bf16.mxu0 0
    %5919 = vmatpush1.bf16.msra.mxu0 0
    %5920 = vmatprep.subr.bf16.mxu0 0
    %5921 = vmatpush1.bf16.msra.mxu0 0
    %5922 = vmatprep.mubr.bf16.mxu0 0
    %5923 = vmatmul.mubr.bf16.gmra.mrb[0].mxu0 %v1793
    %v5924 = vpop.f32.mrb[0].mxu0
    %v5925 = vadd.f32 %v5876, %v5924
    %v5926 = vpop.f32.mrb[0].mxu0
    %v5927 = vpop.f32.mrb[0].mxu0
    %v5928 = vadd.f32 %v5876, %v5927
    %v5929 = vpop.f32.mrb[0].mxu0
    %5930 = vmatprep.mubr.bf16.mxu0 0
    %5931 = vmatmul.mubr.bf16.gmra.mrb[0].mxu0 %v1796
    %v5932 = vpop.f32.mrb[0].mxu0
    %v5933 = vadd.f32 %v5876, %v5932
    %v5934 = vpop.f32.mrb[0].mxu0
    %v5935 = vpop.f32.mrb[0].mxu0
    %v5936 = vpop.f32.mrb[0].mxu0
    %5937 = vdwg.mxu0
    %v5938 = vpack.c.bf16 %v5803, %v5800
    %v5939 = vpack.c.bf16 %v5862, %v5859
    %v5940 = vpack.c.bf16 %v5867, %v5867
    %v5942 = vsel %vm395, %v5938, 0
    %v5945 = vsel %vm395, %v5939, 0
    %v5948 = vsel %vm395, %v5940, 0
    %5950 = vmatprep.subr.bf16.mxu0 0
    %5951 = vmatpush1.bf16.xpose.msra.mxu0 %v5945
    %5952 = vmatprep.subr.bf16.mxu0 0
    %5953 = vmatpush1.bf16.xpose.msra.mxu0 %v5948
    %5954 = vmatprep.subr.bf16.mxu0 0
    %5955 = vmatpush1.bf16.xpose.msra.mxu0 0
    %5956 = vmatprep.subr.bf16.mxu0 0
    %5957 = vmatpush1.bf16.xpose.msra.mxu0 0
    %5958 = vmatprep.subr.bf16.mxu0 0
    %5959 = vmatpush1.bf16.xpose.msra.mxu0 0
    %5960 = vmatprep.subr.bf16.mxu0 0
    %5961 = vmatpush1.bf16.xpose.msra.mxu0 0
    %5962 = vmatprep.subr.bf16.mxu0 0
    %5963 = vmatpush1.bf16.xpose.msra.mxu0 0
    %5964 = vmatprep.subr.bf16.mxu0 0
    %5965 = vmatpush1.bf16.xpose.msra.mxu0 0
    %5966 = vmatprep.subr.bf16.mxu0 0
    %5967 = vmatpush1.bf16.xpose.msra.mxu0 0
    %5968 = vmatprep.subr.bf16.mxu0 0
    %5969 = vmatpush1.bf16.xpose.msra.mxu0 0
    %5970 = vmatprep.subr.bf16.mxu0 0
    %5971 = vmatpush1.bf16.xpose.msra.mxu0 0
    %5972 = vmatprep.subr.bf16.mxu0 0
    %5973 = vmatpush1.bf16.xpose.msra.mxu0 0
    %5974 = vmatprep.subr.bf16.mxu0 0
    %5975 = vmatpush1.bf16.xpose.msra.mxu0 0
    %5976 = vmatprep.subr.bf16.mxu0 0
    %5977 = vmatpush1.bf16.xpose.msra.mxu0 0
    %5978 = vmatprep.subr.bf16.mxu0 0
    %5979 = vmatpush1.bf16.xpose.msra.mxu0 0
    %5980 = vmatprep.subr.bf16.mxu0 0
    %5981 = vmatpush1.bf16.xpose.msra.mxu0 0
    %5982 = vmatprep.mubr.bf16.mxu0 0
    %5983 = vmatmul.mubr.bf16.gmra.mrb[0].mxu0 %v5942
    %v5984 = vpop.f32.mrb[0].mxu0
    %v5985 = vadd.f32 %v140, %v5984
    %v5986 = vpop.f32.mrb[0].mxu0
    %v5987 = vpop.f32.mrb[0].mxu0
    %v5988 = vadd.f32 %v141, %v5987
    %v5989 = vpop.f32.mrb[0].mxu0
    %5990 = vdwg.mxu0
    %v5991 = vsel %vm1965, %v5985, -inf
    %5992 = vmax.xlane.f32.xlu0 %v5991
    %v5993 = vpop.xlane.xlu0 %5992
    %v5994 = vsel %vm1965, %v5988, -inf
    %5995 = vmax.xlane.f32.xlu0 %v5994
    %v5996 = vpop.xlane.xlu0 %5995
    %v5997 = vsub.f32 %v5985, %v5993
    %v5998 = vsub.f32 %v5988, %v5996
    %v5999 = vmul.f32 %v5997, 1.442695
    %v6000 = vpow.pop %v5999
    %v6001 = vmul.f32 %v5998, 1.442695
    %v6002 = vpow.pop %v6001
    %v6003 = vsel %vm1965, %v6000, 0.0
    %6004 = vadd.xlane.f32.xlu0 %v6003
    %v6005 = vpop.xlane.xlu0 %6004
    %v6006 = vsel %vm1965, %v6002, 0.0
    %6007 = vadd.xlane.f32.xlu0 %v6006
    %v6008 = vpop.xlane.xlu0 %6007
    %v6009 = vrcp.pop %v6005
    %v6010 = vrcp.pop %v6008
    %v6011 = vmul.f32 %v6000, %v6009
    %v6012 = vmul.f32 %v6002, %v6010
    %v6013 = vpack.c.bf16 %v6012, %v6011
    %v6014 = vpack.c.bf16 %v5928, %v5925
    %v6015 = vpack.c.bf16 %v5933, %v5933
    %v6017 = vsel %vm1965, %v6013, 0
    %v6020 = vsel %vm1994, %v6015, 0
    %6022 = vmatprep.subr.bf16.mxu0 0
    %6023 = vmatpush1.bf16.msra.mxu0 %v6014
    %6024 = vmatprep.subr.bf16.mxu0 0
    %6025 = vmatpush1.bf16.msra.mxu0 %v6020
    %6026 = vmatprep.subr.bf16.mxu0 0
    %6027 = vmatpush1.bf16.msra.mxu0 0
    %6028 = vmatprep.subr.bf16.mxu0 0
    %6029 = vmatpush1.bf16.msra.mxu0 0
    %6030 = vmatprep.subr.bf16.mxu0 0
    %6031 = vmatpush1.bf16.msra.mxu0 0
    %6032 = vmatprep.subr.bf16.mxu0 0
    %6033 = vmatpush1.bf16.msra.mxu0 0
    %6034 = vmatprep.subr.bf16.mxu0 0
    %6035 = vmatpush1.bf16.msra.mxu0 0
    %6036 = vmatprep.subr.bf16.mxu0 0
    %6037 = vmatpush1.bf16.msra.mxu0 0
    %6038 = vmatprep.subr.bf16.mxu0 0
    %6039 = vmatpush1.bf16.msra.mxu0 0
    %6040 = vmatprep.subr.bf16.mxu0 0
    %6041 = vmatpush1.bf16.msra.mxu0 0
    %6042 = vmatprep.subr.bf16.mxu0 0
    %6043 = vmatpush1.bf16.msra.mxu0 0
    %6044 = vmatprep.subr.bf16.mxu0 0
    %6045 = vmatpush1.bf16.msra.mxu0 0
    %6046 = vmatprep.subr.bf16.mxu0 0
    %6047 = vmatpush1.bf16.msra.mxu0 0
    %6048 = vmatprep.subr.bf16.mxu0 0
    %6049 = vmatpush1.bf16.msra.mxu0 0
    %6050 = vmatprep.subr.bf16.mxu0 0
    %6051 = vmatpush1.bf16.msra.mxu0 0
    %6052 = vmatprep.subr.bf16.mxu0 0
    %6053 = vmatpush1.bf16.msra.mxu0 0
    %6054 = vmatprep.mubr.bf16.mxu0 0
    %6055 = vmatmul.mubr.bf16.gmra.mrb[0].mxu0 %v6017
    %v6056 = vpop.f32.mrb[0].mxu0
    %v6057 = vadd.f32 0.0, %v6056
    %v6058 = vpop.f32.mrb[0].mxu0
    %v6059 = vpop.f32.mrb[0].mxu0
    %v6060 = vadd.f32 0.0, %v6059
    %v6061 = vpop.f32.mrb[0].mxu0
    %6062 = vdwg.mxu0
    %v6063 = vpack.c.bf16 %v6060, %v6057
    %v6065 = vsel %vm395, %v6063, 0
    %v6068 = vsel %vm811, %v5014, 0
    %6070 = vmatprep.subr.bf16.mxu0 0
    %6071 = vmatpush1.bf16.msra.mxu0 %v6068
    %6072 = vmatprep.subr.bf16.mxu0 0
    %6073 = vmatpush1.bf16.msra.mxu0 0
    %6074 = vmatprep.subr.bf16.mxu0 0
    %6075 = vmatpush1.bf16.msra.mxu0 0
    %6076 = vmatprep.subr.bf16.mxu0 0
    %6077 = vmatpush1.bf16.msra.mxu0 0
    %6078 = vmatprep.subr.bf16.mxu0 0
    %6079 = vmatpush1.bf16.msra.mxu0 0
    %6080 = vmatprep.subr.bf16.mxu0 0
    %6081 = vmatpush1.bf16.msra.mxu0 0
    %6082 = vmatprep.subr.bf16.mxu0 0
    %6083 = vmatpush1.bf16.msra.mxu0 0
    %6084 = vmatprep.subr.bf16.mxu0 0
    %6085 = vmatpush1.bf16.msra.mxu0 0
    %6086 = vmatprep.subr.bf16.mxu0 0
    %6087 = vmatpush1.bf16.msra.mxu0 0
    %6088 = vmatprep.subr.bf16.mxu0 0
    %6089 = vmatpush1.bf16.msra.mxu0 0
    %6090 = vmatprep.subr.bf16.mxu0 0
    %6091 = vmatpush1.bf16.msra.mxu0 0
    %6092 = vmatprep.subr.bf16.mxu0 0
    %6093 = vmatpush1.bf16.msra.mxu0 0
    %6094 = vmatprep.subr.bf16.mxu0 0
    %6095 = vmatpush1.bf16.msra.mxu0 0
    %6096 = vmatprep.subr.bf16.mxu0 0
    %6097 = vmatpush1.bf16.msra.mxu0 0
    %6098 = vmatprep.subr.bf16.mxu0 0
    %6099 = vmatpush1.bf16.msra.mxu0 0
    %6100 = vmatprep.subr.bf16.mxu0 0
    %6101 = vmatpush1.bf16.msra.mxu0 0
    %6102 = vmatprep.mubr.bf16.mxu0 0
    %6103 = vmatmul.mubr.bf16.gmra.mrb[0].mxu0 %v6065
    %v6104 = vpop.f32.mrb[0].mxu0
    %v6105 = vadd.f32 0.0, %v6104
    %v6106 = vpop.f32.mrb[0].mxu0
    %v6107 = vpop.f32.mrb[0].mxu0
    %v6108 = vadd.f32 0.0, %v6107
    %v6109 = vpop.f32.mrb[0].mxu0
    %6110 = vdwg.mxu0
    %v6111 = vadd.f32 %v5741, %v6105
    %v6112 = vadd.f32 %v5744, %v6108
    %v6114 = vlaneseq
    %v6115 = vshrl.u32 %v6114, 7
    %v6116 = vsub.s32 0, %v6115
    %v6117 = vrot.slane %v4966, %v6116
    %v6123 = vunpack.c.l.b16 %v4958
    %v6124 = vunpack.c.l.b16 %v4959
    %v6125 = vunpack.c.l.b16 %v4960
    %v6126 = vunpack.c.l.b16 %v4961
    %v6127 = vpack.c.b16 %v6124, %v6123
    %v6128 = vpack.c.b16 %v6126, %v6125
    %6131 = vmatprep.subr.bf16.mxu0 0
    %6132 = vmatpush1.bf16.msra.mxu0 %v6127
    %6133 = vmatprep.subr.bf16.mxu0 0
    %6134 = vmatpush1.bf16.msra.mxu0 %v6128
    %6135 = vmatprep.subr.bf16.mxu0 0
    %6136 = vmatpush1.bf16.msra.mxu0 0
    %6137 = vmatprep.subr.bf16.mxu0 0
    %6138 = vmatpush1.bf16.msra.mxu0 0
    %6139 = vmatprep.subr.bf16.mxu0 0
    %6140 = vmatpush1.bf16.msra.mxu0 0
    %6141 = vmatprep.subr.bf16.mxu0 0
    %6142 = vmatpush1.bf16.msra.mxu0 0
    %6143 = vmatprep.subr.bf16.mxu0 0
    %6144 = vmatpush1.bf16.msra.mxu0 0
    %6145 = vmatprep.subr.bf16.mxu0 0
    %6146 = vmatpush1.bf16.msra.mxu0 0
    %6147 = vmatprep.subr.bf16.mxu0 0
    %6148 = vmatpush1.bf16.msra.mxu0 0
    %6149 = vmatprep.subr.bf16.mxu0 0
    %6150 = vmatpush1.bf16.msra.mxu0 0
    %6151 = vmatprep.subr.bf16.mxu0 0
    %6152 = vmatpush1.bf16.msra.mxu0 0
    %6153 = vmatprep.subr.bf16.mxu0 0
    %6154 = vmatpush1.bf16.msra.mxu0 0
    %6155 = vmatprep.subr.bf16.mxu0 0
    %6156 = vmatpush1.bf16.msra.mxu0 0
    %6157 = vmatprep.subr.bf16.mxu0 0
    %6158 = vmatpush1.bf16.msra.mxu0 0
    %6159 = vmatprep.subr.bf16.mxu0 0
    %6160 = vmatpush1.bf16.msra.mxu0 0
    %6161 = vmatprep.subr.bf16.mxu0 0
    %6162 = vmatpush1.bf16.msra.mxu0 0
    %6163 = vmatprep.mubr.bf16.mxu0 0
    %6164 = vmatmul.mubr.bf16.gmra.mrb[0].mxu0 %v5035
    %v6165 = vpop.f32.mrb[0].mxu0
    %v6166 = vadd.f32 %v6117, %v6165
    %v6167 = vpop.f32.mrb[0].mxu0
    %v6168 = vpop.f32.mrb[0].mxu0
    %v6169 = vadd.f32 %v6117, %v6168
    %v6170 = vpop.f32.mrb[0].mxu0
    %6171 = vdwg.mxu0
    %v6173 = vlaneseq
    %v6174 = vshrl.u32 %v6173, 7
    %v6175 = vsub.s32 0, %v6174
    %v6176 = vrot.slane %v4988, %v6175
    %v6182 = vunpack.c.l.b16 %v4980
    %v6183 = vunpack.c.l.b16 %v4981
    %v6184 = vunpack.c.l.b16 %v4982
    %v6185 = vunpack.c.l.b16 %v4983
    %v6186 = vpack.c.b16 %v6183, %v6182
    %v6187 = vpack.c.b16 %v6185, %v6184
    %6190 = vmatprep.subr.bf16.mxu0 0
    %6191 = vmatpush1.bf16.msra.mxu0 %v6186
    %6192 = vmatprep.subr.bf16.mxu0 0
    %6193 = vmatpush1.bf16.msra.mxu0 %v6187
    %6194 = vmatprep.subr.bf16.mxu0 0
    %6195 = vmatpush1.bf16.msra.mxu0 0
    %6196 = vmatprep.subr.bf16.mxu0 0
    %6197 = vmatpush1.bf16.msra.mxu0 0
    %6198 = vmatprep.subr.bf16.mxu0 0
    %6199 = vmatpush1.bf16.msra.mxu0 0
    %6200 = vmatprep.subr.bf16.mxu0 0
    %6201 = vmatpush1.bf16.msra.mxu0 0
    %6202 = vmatprep.subr.bf16.mxu0 0
    %6203 = vmatpush1.bf16.msra.mxu0 0
    %6204 = vmatprep.subr.bf16.mxu0 0
    %6205 = vmatpush1.bf16.msra.mxu0 0
    %6206 = vmatprep.subr.bf16.mxu0 0
    %6207 = vmatpush1.bf16.msra.mxu0 0
    %6208 = vmatprep.subr.bf16.mxu0 0
    %6209 = vmatpush1.bf16.msra.mxu0 0
    %6210 = vmatprep.subr.bf16.mxu0 0
    %6211 = vmatpush1.bf16.msra.mxu0 0
    %6212 = vmatprep.subr.bf16.mxu0 0
    %6213 = vmatpush1.bf16.msra.mxu0 0
    %6214 = vmatprep.subr.bf16.mxu0 0
    %6215 = vmatpush1.bf16.msra.mxu0 0
    %6216 = vmatprep.subr.bf16.mxu0 0
    %6217 = vmatpush1.bf16.msra.mxu0 0
    %6218 = vmatprep.subr.bf16.mxu0 0
    %6219 = vmatpush1.bf16.msra.mxu0 0
    %6220 = vmatprep.subr.bf16.mxu0 0
    %6221 = vmatpush1.bf16.msra.mxu0 0
    %6222 = vmatprep.mubr.bf16.mxu0 0
    %6223 = vmatmul.mubr.bf16.gmra.mrb[0].mxu0 %v1793
    %v6224 = vpop.f32.mrb[0].mxu0
    %v6225 = vadd.f32 %v6176, %v6224
    %v6226 = vpop.f32.mrb[0].mxu0
    %v6227 = vpop.f32.mrb[0].mxu0
    %v6228 = vadd.f32 %v6176, %v6227
    %v6229 = vpop.f32.mrb[0].mxu0
    %6230 = vmatprep.mubr.bf16.mxu0 0
    %6231 = vmatmul.mubr.bf16.gmra.mrb[0].mxu0 %v1796
    %v6232 = vpop.f32.mrb[0].mxu0
    %v6233 = vadd.f32 %v6176, %v6232
    %v6234 = vpop.f32.mrb[0].mxu0
    %v6235 = vpop.f32.mrb[0].mxu0
    %v6236 = vpop.f32.mrb[0].mxu0
    %6237 = vdwg.mxu0
    %v6239 = vlaneseq
    %v6240 = vshrl.u32 %v6239, 7
    %v6241 = vsub.s32 0, %v6240
    %v6242 = vrot.slane %v5010, %v6241
    %v6248 = vunpack.c.l.b16 %v5002
    %v6249 = vunpack.c.l.b16 %v5003
    %v6250 = vunpack.c.l.b16 %v5004
    %v6251 = vunpack.c.l.b16 %v5005
    %v6252 = vpack.c.b16 %v6249, %v6248
    %v6253 = vpack.c.b16 %v6251, %v6250
    %6256 = vmatprep.subr.bf16.mxu0 0
    %6257 = vmatpush1.bf16.msra.mxu0 %v6252
    %6258 = vmatprep.subr.bf16.mxu0 0
    %6259 = vmatpush1.bf16.msra.mxu0 %v6253
    %6260 = vmatprep.subr.bf16.mxu0 0
    %6261 = vmatpush1.bf16.msra.mxu0 0
    %6262 = vmatprep.subr.bf16.mxu0 0
    %6263 = vmatpush1.bf16.msra.mxu0 0
    %6264 = vmatprep.subr.bf16.mxu0 0
    %6265 = vmatpush1.bf16.msra.mxu0 0
    %6266 = vmatprep.subr.bf16.mxu0 0
    %6267 = vmatpush1.bf16.msra.mxu0 0
    %6268 = vmatprep.subr.bf16.mxu0 0
    %6269 = vmatpush1.bf16.msra.mxu0 0
    %6270 = vmatprep.subr.bf16.mxu0 0
    %6271 = vmatpush1.bf16.msra.mxu0 0
    %6272 = vmatprep.subr.bf16.mxu0 0
    %6273 = vmatpush1.bf16.msra.mxu0 0
    %6274 = vmatprep.subr.bf16.mxu0 0
    %6275 = vmatpush1.bf16.msra.mxu0 0
    %6276 = vmatprep.subr.bf16.mxu0 0
    %6277 = vmatpush1.bf16.msra.mxu0 0
    %6278 = vmatprep.subr.bf16.mxu0 0
    %6279 = vmatpush1.bf16.msra.mxu0 0
    %6280 = vmatprep.subr.bf16.mxu0 0
    %6281 = vmatpush1.bf16.msra.mxu0 0
    %6282 = vmatprep.subr.bf16.mxu0 0
    %6283 = vmatpush1.bf16.msra.mxu0 0
    %6284 = vmatprep.subr.bf16.mxu0 0
    %6285 = vmatpush1.bf16.msra.mxu0 0
    %6286 = vmatprep.subr.bf16.mxu0 0
    %6287 = vmatpush1.bf16.msra.mxu0 0
    %6288 = vmatprep.mubr.bf16.mxu0 0
    %6289 = vmatmul.mubr.bf16.gmra.mrb[0].mxu0 %v1793
    %v6290 = vpop.f32.mrb[0].mxu0
    %v6291 = vadd.f32 %v6242, %v6290
    %v6292 = vpop.f32.mrb[0].mxu0
    %v6293 = vpop.f32.mrb[0].mxu0
    %v6294 = vadd.f32 %v6242, %v6293
    %v6295 = vpop.f32.mrb[0].mxu0
    %6296 = vmatprep.mubr.bf16.mxu0 0
    %6297 = vmatmul.mubr.bf16.gmra.mrb[0].mxu0 %v1796
    %v6298 = vpop.f32.mrb[0].mxu0
    %v6299 = vadd.f32 %v6242, %v6298
    %v6300 = vpop.f32.mrb[0].mxu0
    %v6301 = vpop.f32.mrb[0].mxu0
    %v6302 = vpop.f32.mrb[0].mxu0
    %6303 = vdwg.mxu0
    %v6304 = vpack.c.bf16 %v6169, %v6166
    %v6305 = vpack.c.bf16 %v6228, %v6225
    %v6306 = vpack.c.bf16 %v6233, %v6233
    %v6308 = vsel %vm395, %v6304, 0
    %v6311 = vsel %vm395, %v6305, 0
    %v6314 = vsel %vm395, %v6306, 0
    %6316 = vmatprep.subr.bf16.mxu0 0
    %6317 = vmatpush1.bf16.xpose.msra.mxu0 %v6311
    %6318 = vmatprep.subr.bf16.mxu0 0
    %6319 = vmatpush1.bf16.xpose.msra.mxu0 %v6314
    %6320 = vmatprep.subr.bf16.mxu0 0
    %6321 = vmatpush1.bf16.xpose.msra.mxu0 0
    %6322 = vmatprep.subr.bf16.mxu0 0
    %6323 = vmatpush1.bf16.xpose.msra.mxu0 0
    %6324 = vmatprep.subr.bf16.mxu0 0
    %6325 = vmatpush1.bf16.xpose.msra.mxu0 0
    %6326 = vmatprep.subr.bf16.mxu0 0
    %6327 = vmatpush1.bf16.xpose.msra.mxu0 0
    %6328 = vmatprep.subr.bf16.mxu0 0
    %6329 = vmatpush1.bf16.xpose.msra.mxu0 0
    %6330 = vmatprep.subr.bf16.mxu0 0
    %6331 = vmatpush1.bf16.xpose.msra.mxu0 0
    %6332 = vmatprep.subr.bf16.mxu0 0
    %6333 = vmatpush1.bf16.xpose.msra.mxu0 0
    %6334 = vmatprep.subr.bf16.mxu0 0
    %6335 = vmatpush1.bf16.xpose.msra.mxu0 0
    %6336 = vmatprep.subr.bf16.mxu0 0
    %6337 = vmatpush1.bf16.xpose.msra.mxu0 0
    %6338 = vmatprep.subr.bf16.mxu0 0
    %6339 = vmatpush1.bf16.xpose.msra.mxu0 0
    %6340 = vmatprep.subr.bf16.mxu0 0
    %6341 = vmatpush1.bf16.xpose.msra.mxu0 0
    %6342 = vmatprep.subr.bf16.mxu0 0
    %6343 = vmatpush1.bf16.xpose.msra.mxu0 0
    %6344 = vmatprep.subr.bf16.mxu0 0
    %6345 = vmatpush1.bf16.xpose.msra.mxu0 0
    %6346 = vmatprep.subr.bf16.mxu0 0
    %6347 = vmatpush1.bf16.xpose.msra.mxu0 0
    %6348 = vmatprep.mubr.bf16.mxu0 0
    %6349 = vmatmul.mubr.bf16.gmra.mrb[0].mxu0 %v6308
    %v6350 = vpop.f32.mrb[0].mxu0
    %v6351 = vadd.f32 %v140, %v6350
    %v6352 = vpop.f32.mrb[0].mxu0
    %v6353 = vpop.f32.mrb[0].mxu0
    %v6354 = vadd.f32 %v141, %v6353
    %v6355 = vpop.f32.mrb[0].mxu0
    %6356 = vdwg.mxu0
    %v6357 = vsel %vm1965, %v6351, -inf
    %6358 = vmax.xlane.f32.xlu0 %v6357
    %v6359 = vpop.xlane.xlu0 %6358
    %v6360 = vsel %vm1965, %v6354, -inf
    %6361 = vmax.xlane.f32.xlu0 %v6360
    %v6362 = vpop.xlane.xlu0 %6361
    %v6363 = vsub.f32 %v6351, %v6359
    %v6364 = vsub.f32 %v6354, %v6362
    %v6365 = vmul.f32 %v6363, 1.442695
    %v6366 = vpow.pop %v6365
    %v6367 = vmul.f32 %v6364, 1.442695
    %v6368 = vpow.pop %v6367
    %v6369 = vsel %vm1965, %v6366, 0.0
    %6370 = vadd.xlane.f32.xlu0 %v6369
    %v6371 = vpop.xlane.xlu0 %6370
    %v6372 = vsel %vm1965, %v6368, 0.0
    %6373 = vadd.xlane.f32.xlu0 %v6372
    %v6374 = vpop.xlane.xlu0 %6373
    %v6375 = vrcp.pop %v6371
    %v6376 = vrcp.pop %v6374
    %v6377 = vmul.f32 %v6366, %v6375
    %v6378 = vmul.f32 %v6368, %v6376
    %v6379 = vpack.c.bf16 %v6378, %v6377
    %v6380 = vpack.c.bf16 %v6294, %v6291
    %v6381 = vpack.c.bf16 %v6299, %v6299
    %v6383 = vsel %vm1965, %v6379, 0
    %v6386 = vsel %vm1994, %v6381, 0
    %6388 = vmatprep.subr.bf16.mxu0 0
    %6389 = vmatpush1.bf16.msra.mxu0 %v6380
    %6390 = vmatprep.subr.bf16.mxu0 0
    %6391 = vmatpush1.bf16.msra.mxu0 %v6386
    %6392 = vmatprep.subr.bf16.mxu0 0
    %6393 = vmatpush1.bf16.msra.mxu0 0
    %6394 = vmatprep.subr.bf16.mxu0 0
    %6395 = vmatpush1.bf16.msra.mxu0 0
    %6396 = vmatprep.subr.bf16.mxu0 0
    %6397 = vmatpush1.bf16.msra.mxu0 0
    %6398 = vmatprep.subr.bf16.mxu0 0
    %6399 = vmatpush1.bf16.msra.mxu0 0
    %6400 = vmatprep.subr.bf16.mxu0 0
    %6401 = vmatpush1.bf16.msra.mxu0 0
    %6402 = vmatprep.subr.bf16.mxu0 0
    %6403 = vmatpush1.bf16.msra.mxu0 0
    %6404 = vmatprep.subr.bf16.mxu0 0
    %6405 = vmatpush1.bf16.msra.mxu0 0
    %6406 = vmatprep.subr.bf16.mxu0 0
    %6407 = vmatpush1.bf16.msra.mxu0 0
    %6408 = vmatprep.subr.bf16.mxu0 0
    %6409 = vmatpush1.bf16.msra.mxu0 0
    %6410 = vmatprep.subr.bf16.mxu0 0
    %6411 = vmatpush1.bf16.msra.mxu0 0
    %6412 = vmatprep.subr.bf16.mxu0 0
    %6413 = vmatpush1.bf16.msra.mxu0 0
    %6414 = vmatprep.subr.bf16.mxu0 0
    %6415 = vmatpush1.bf16.msra.mxu0 0
    %6416 = vmatprep.subr.bf16.mxu0 0
    %6417 = vmatpush1.bf16.msra.mxu0 0
    %6418 = vmatprep.subr.bf16.mxu0 0
    %6419 = vmatpush1.bf16.msra.mxu0 0
    %6420 = vmatprep.mubr.bf16.mxu0 0
    %6421 = vmatmul.mubr.bf16.gmra.mrb[0].mxu0 %v6383
    %v6422 = vpop.f32.mrb[0].mxu0
    %v6423 = vadd.f32 0.0, %v6422
    %v6424 = vpop.f32.mrb[0].mxu0
    %v6425 = vpop.f32.mrb[0].mxu0
    %v6426 = vadd.f32 0.0, %v6425
    %v6427 = vpop.f32.mrb[0].mxu0
    %6428 = vdwg.mxu0
    %v6429 = vpack.c.bf16 %v6426, %v6423
    %v6431 = vsel %vm395, %v6429, 0
    %v6434 = vsel %vm811, %v5015, 0
    %6436 = vmatprep.subr.bf16.mxu0 0
    %6437 = vmatpush1.bf16.msra.mxu0 %v6434
    %6438 = vmatprep.subr.bf16.mxu0 0
    %6439 = vmatpush1.bf16.msra.mxu0 0
    %6440 = vmatprep.subr.bf16.mxu0 0
    %6441 = vmatpush1.bf16.msra.mxu0 0
    %6442 = vmatprep.subr.bf16.mxu0 0
    %6443 = vmatpush1.bf16.msra.mxu0 0
    %6444 = vmatprep.subr.bf16.mxu0 0
    %6445 = vmatpush1.bf16.msra.mxu0 0
    %6446 = vmatprep.subr.bf16.mxu0 0
    %6447 = vmatpush1.bf16.msra.mxu0 0
    %6448 = vmatprep.subr.bf16.mxu0 0
    %6449 = vmatpush1.bf16.msra.mxu0 0
    %6450 = vmatprep.subr.bf16.mxu0 0
    %6451 = vmatpush1.bf16.msra.mxu0 0
    %6452 = vmatprep.subr.bf16.mxu0 0
    %6453 = vmatpush1.bf16.msra.mxu0 0
    %6454 = vmatprep.subr.bf16.mxu0 0
    %6455 = vmatpush1.bf16.msra.mxu0 0
    %6456 = vmatprep.subr.bf16.mxu0 0
    %6457 = vmatpush1.bf16.msra.mxu0 0
    %6458 = vmatprep.subr.bf16.mxu0 0
    %6459 = vmatpush1.bf16.msra.mxu0 0
    %6460 = vmatprep.subr.bf16.mxu0 0
    %6461 = vmatpush1.bf16.msra.mxu0 0
    %6462 = vmatprep.subr.bf16.mxu0 0
    %6463 = vmatpush1.bf16.msra.mxu0 0
    %6464 = vmatprep.subr.bf16.mxu0 0
    %6465 = vmatpush1.bf16.msra.mxu0 0
    %6466 = vmatprep.subr.bf16.mxu0 0
    %6467 = vmatpush1.bf16.msra.mxu0 0
    %6468 = vmatprep.mubr.bf16.mxu0 0
    %6469 = vmatmul.mubr.bf16.gmra.mrb[0].mxu0 %v6431
    %v6470 = vpop.f32.mrb[0].mxu0
    %v6471 = vadd.f32 0.0, %v6470
    %v6472 = vpop.f32.mrb[0].mxu0
    %v6473 = vpop.f32.mrb[0].mxu0
    %v6474 = vadd.f32 0.0, %v6473
    %v6475 = vpop.f32.mrb[0].mxu0
    %6476 = vdwg.mxu0
    %v6477 = vadd.f32 %v6111, %v6471
    %v6478 = vadd.f32 %v6112, %v6474
    %s6479 = scalar_lea.vmem %s39, 1
    %v6480 = vld [vmem:[%s6479] sm:$0x1]
    %v6482 = vlaneseq
    %v6483 = vshrl.u32 %v6482, 7
    %v6484 = vsub.s32 0, %v6483
    %v6485 = vrot.slane %v6480, %v6484
    %v6487 = vadd.f32 %v6477, %v6485
    %v6488 = vadd.f32 %v6478, %v6485
    %v6489 = vadd.f32 %v6487, %v4942
    %v6490 = vadd.f32 %v6488, %v4943
    %s6491 = scalar_lea.vmem %s53, 1
    %v6492 = vld [vmem:[%s6491] sm:$0x1]
    %s6493 = scalar_lea.vmem %s55, 1
    %v6494 = vld [vmem:[%s6493] sm:$0x1]
    %v6495 = vsel %vm230, %v6489, 0.0
    %6496 = vadd.xlane.f32.xlu0 %v6495
    %v6497 = vpop.xlane.xlu0 %6496
    %v6498 = vsel %vm230, %v6490, 0.0
    %6499 = vadd.xlane.f32.xlu0 %v6498
    %v6500 = vpop.xlane.xlu0 %6499
    %v6501 = vmul.f32 %v6497, %v1610
    %v6502 = vmul.f32 %v6500, %v1610
    %v6503 = vsub.f32 %v6489, %v6501
    %v6504 = vsub.f32 %v6490, %v6502
    %v6505 = vmul.f32 %v6503, %v6503
    %v6506 = vmul.f32 %v6504, %v6504
    %v6507 = vsel %vm230, %v6505, 0.0
    %6508 = vadd.xlane.f32.xlu0 %v6507
    %v6509 = vpop.xlane.xlu0 %6508
    %v6510 = vsel %vm230, %v6506, 0.0
    %6511 = vadd.xlane.f32.xlu0 %v6510
    %v6512 = vpop.xlane.xlu0 %6511
    %v6513 = vmul.f32 %v6509, %v1610
    %v6514 = vmul.f32 %v6512, %v1610
    %v6515 = vadd.f32 %v6513, 1e-05
    %v6516 = vadd.f32 %v6514, 1e-05
    %v6517 = vrsqrt.pop %v6515
    %v6518 = vrsqrt.pop %v6516
    %v6519 = vmul.f32 %v6503, %v6517
    %v6520 = vmul.f32 %v6504, %v6518
    %v6522 = vlaneseq
    %v6523 = vshrl.u32 %v6522, 7
    %v6524 = vsub.s32 0, %v6523
    %v6525 = vrot.slane %v6492, %v6524
    %v6527 = vmul.f32 %v6519, %v6525
    %v6528 = vmul.f32 %v6520, %v6525
    %v6530 = vlaneseq
    %v6531 = vshrl.u32 %v6530, 7
    %v6532 = vsub.s32 0, %v6531
    %v6533 = vrot.slane %v6494, %v6532
    %v6535 = vadd.f32 %v6527, %v6533
    %v6536 = vadd.f32 %v6528, %v6533
    %v6537 = vpack.c.bf16 %v6536, %v6535
    %s6538 = scalar_lea.vmem %s41, 16
    %v6539 = vld [vmem:[%s6538] sm:$0xf]
    %v6540 = vld [vmem:[%s6538 + $0x4] sm:$0xf]
    %v6541 = vld [vmem:[%s6538 + $0x8] sm:$0xf]
    %v6542 = vld [vmem:[%s6538 + $0xc] sm:$0xf]
    %s6543 = scalar_lea.vmem %s43, 1
    %v6544 = vld [vmem:[%s6543] sm:$0x1]
    %v6546 = vlaneseq
    %v6547 = vshrl.u32 %v6546, 7
    %v6548 = vsub.s32 0, %v6547
    %v6549 = vrot.slane %v6544, %v6548
    %v6555 = vunpack.c.l.b16 %v6539
    %v6556 = vunpack.c.l.b16 %v6540
    %v6557 = vunpack.c.l.b16 %v6541
    %v6558 = vunpack.c.l.b16 %v6542
    %v6559 = vpack.c.b16 %v6556, %v6555
    %v6560 = vpack.c.b16 %v6558, %v6557
    %v6564 = vsel %vm230, %v6537, 0
    %6566 = vmatprep.subr.bf16.mxu0 0
    %6567 = vmatpush1.bf16.msra.mxu0 %v6559
    %6568 = vmatprep.subr.bf16.mxu0 0
    %6569 = vmatpush1.bf16.msra.mxu0 %v6560
    %6570 = vmatprep.subr.bf16.mxu0 0
    %6571 = vmatpush1.bf16.msra.mxu0 0
    %6572 = vmatprep.subr.bf16.mxu0 0
    %6573 = vmatpush1.bf16.msra.mxu0 0
    %6574 = vmatprep.subr.bf16.mxu0 0
    %6575 = vmatpush1.bf16.msra.mxu0 0
    %6576 = vmatprep.subr.bf16.mxu0 0
    %6577 = vmatpush1.bf16.msra.mxu0 0
    %6578 = vmatprep.subr.bf16.mxu0 0
    %6579 = vmatpush1.bf16.msra.mxu0 0
    %6580 = vmatprep.subr.bf16.mxu0 0
    %6581 = vmatpush1.bf16.msra.mxu0 0
    %6582 = vmatprep.subr.bf16.mxu0 0
    %6583 = vmatpush1.bf16.msra.mxu0 0
    %6584 = vmatprep.subr.bf16.mxu0 0
    %6585 = vmatpush1.bf16.msra.mxu0 0
    %6586 = vmatprep.subr.bf16.mxu0 0
    %6587 = vmatpush1.bf16.msra.mxu0 0
    %6588 = vmatprep.subr.bf16.mxu0 0
    %6589 = vmatpush1.bf16.msra.mxu0 0
    %6590 = vmatprep.subr.bf16.mxu0 0
    %6591 = vmatpush1.bf16.msra.mxu0 0
    %6592 = vmatprep.subr.bf16.mxu0 0
    %6593 = vmatpush1.bf16.msra.mxu0 0
    %6594 = vmatprep.subr.bf16.mxu0 0
    %6595 = vmatpush1.bf16.msra.mxu0 0
    %6596 = vmatprep.subr.bf16.mxu0 0
    %6597 = vmatpush1.bf16.msra.mxu0 0
    %6598 = vmatprep.mubr.bf16.mxu0 0
    %6599 = vmatmul.mubr.bf16.gmra.mrb[0].mxu0 %v6564
    %v6600 = vpop.f32.mrb[0].mxu0
    %v6601 = vadd.f32 %v6549, %v6600
    %v6602 = vpop.f32.mrb[0].mxu0
    %v6603 = vpop.f32.mrb[0].mxu0
    %v6604 = vadd.f32 %v6549, %v6603
    %v6605 = vpop.f32.mrb[0].mxu0
    %6606 = vdwg.mxu0
    %v6607 = vmax.f32 %v6601, 0.0
    %v6608 = vmax.f32 %v6604, 0.0
    %v6609 = vpack.c.bf16 %v6608, %v6607
    %s6610 = scalar_lea.vmem %s45, 32
    %v6611 = vld [vmem:[%s6610] sm:$0xf]
    %v6612 = vld [vmem:[%s6610 + $0x4] sm:$0xf]
    %v6613 = vld [vmem:[%s6610 + $0x8] sm:$0xf]
    %v6614 = vld [vmem:[%s6610 + $0xc] sm:$0xf]
    %v6615 = vld [vmem:[%s6610 + $0x10] sm:$0xf]
    %v6616 = vld [vmem:[%s6610 + $0x14] sm:$0xf]
    %v6617 = vld [vmem:[%s6610 + $0x18] sm:$0xf]
    %v6618 = vld [vmem:[%s6610 + $0x1c] sm:$0xf]
    %s6619 = scalar_lea.vmem %s47, 1
    %v6620 = vld [vmem:[%s6619] sm:$0x1]
    %v6622 = vlaneseq
    %v6623 = vshrl.u32 %v6622, 7
    %v6624 = vsub.s32 0, %v6623
    %v6625 = vrot.slane %v6620, %v6624
    %v6635 = vunpack.c.l.b16 %v6611
    %v6636 = vunpack.c.l.b16 %v6612
    %v6637 = vunpack.c.l.b16 %v6613
    %v6638 = vunpack.c.l.b16 %v6614
    %v6639 = vunpack.c.l.b16 %v6615
    %v6640 = vunpack.c.l.b16 %v6616
    %v6641 = vunpack.c.l.b16 %v6617
    %v6642 = vunpack.c.l.b16 %v6618
    %v6643 = vpack.c.b16 %v6636, %v6635
    %v6644 = vpack.c.b16 %v6638, %v6637
    %v6645 = vpack.c.b16 %v6640, %v6639
    %v6646 = vpack.c.b16 %v6642, %v6641
    %v6652 = vsel %vm3348, %v6609, 0
    %6654 = vmatprep.subr.bf16.mxu0 0
    %6655 = vmatpush1.bf16.msra.mxu0 %v6643
    %6656 = vmatprep.subr.bf16.mxu0 0
    %6657 = vmatpush1.bf16.msra.mxu0 %v6644
    %6658 = vmatprep.subr.bf16.mxu0 0
    %6659 = vmatpush1.bf16.msra.mxu0 %v6645
    %6660 = vmatprep.subr.bf16.mxu0 0
    %6661 = vmatpush1.bf16.msra.mxu0 %v6646
    %6662 = vmatprep.subr.bf16.mxu0 0
    %6663 = vmatpush1.bf16.msra.mxu0 0
    %6664 = vmatprep.subr.bf16.mxu0 0
    %6665 = vmatpush1.bf16.msra.mxu0 0
    %6666 = vmatprep.subr.bf16.mxu0 0
    %6667 = vmatpush1.bf16.msra.mxu0 0
    %6668 = vmatprep.subr.bf16.mxu0 0
    %6669 = vmatpush1.bf16.msra.mxu0 0
    %6670 = vmatprep.subr.bf16.mxu0 0
    %6671 = vmatpush1.bf16.msra.mxu0 0
    %6672 = vmatprep.subr.bf16.mxu0 0
    %6673 = vmatpush1.bf16.msra.mxu0 0
    %6674 = vmatprep.subr.bf16.mxu0 0
    %6675 = vmatpush1.bf16.msra.mxu0 0
    %6676 = vmatprep.subr.bf16.mxu0 0
    %6677 = vmatpush1.bf16.msra.mxu0 0
    %6678 = vmatprep.subr.bf16.mxu0 0
    %6679 = vmatpush1.bf16.msra.mxu0 0
    %6680 = vmatprep.subr.bf16.mxu0 0
    %6681 = vmatpush1.bf16.msra.mxu0 0
    %6682 = vmatprep.subr.bf16.mxu0 0
    %6683 = vmatpush1.bf16.msra.mxu0 0
    %6684 = vmatprep.subr.bf16.mxu0 0
    %6685 = vmatpush1.bf16.msra.mxu0 0
    %6686 = vmatprep.mubr.bf16.mxu0 0
    %6687 = vmatmul.mubr.bf16.gmra.mrb[0].mxu0 %v6652
    %v6688 = vpop.f32.mrb[0].mxu0
    %v6689 = vadd.f32 %v6625, %v6688
    %v6690 = vpop.f32.mrb[0].mxu0
    %v6691 = vpop.f32.mrb[0].mxu0
    %v6692 = vadd.f32 %v6625, %v6691
    %v6693 = vpop.f32.mrb[0].mxu0
    %6694 = vdwg.mxu0
    %v6695 = vadd.f32 %v6689, %v6535
    %v6696 = vadd.f32 %v6692, %v6536
    %s6697 = scalar_lea.vmem %s57, 1
    %v6698 = vld [vmem:[%s6697] sm:$0x1]
    %s6699 = scalar_lea.vmem %s59, 1
    %v6700 = vld [vmem:[%s6699] sm:$0x1]
    %v6701 = vsel %vm230, %v6695, 0.0
    %6702 = vadd.xlane.f32.xlu0 %v6701
    %v6703 = vpop.xlane.xlu0 %6702
    %v6704 = vsel %vm230, %v6696, 0.0
    %6705 = vadd.xlane.f32.xlu0 %v6704
    %v6706 = vpop.xlane.xlu0 %6705
    %v6707 = vmul.f32 %v6703, %v1610
    %v6708 = vmul.f32 %v6706, %v1610
    %v6709 = vsub.f32 %v6695, %v6707
    %v6710 = vsub.f32 %v6696, %v6708
    %v6711 = vmul.f32 %v6709, %v6709
    %v6712 = vmul.f32 %v6710, %v6710
    %v6713 = vsel %vm230, %v6711, 0.0
    %6714 = vadd.xlane.f32.xlu0 %v6713
    %v6715 = vpop.xlane.xlu0 %6714
    %v6716 = vsel %vm230, %v6712, 0.0
    %6717 = vadd.xlane.f32.xlu0 %v6716
    %v6718 = vpop.xlane.xlu0 %6717
    %v6719 = vmul.f32 %v6715, %v1610
    %v6720 = vmul.f32 %v6718, %v1610
    %v6721 = vadd.f32 %v6719, 1e-05
    %v6722 = vadd.f32 %v6720, 1e-05
    %v6723 = vrsqrt.pop %v6721
    %v6724 = vrsqrt.pop %v6722
    %v6725 = vmul.f32 %v6709, %v6723
    %v6726 = vmul.f32 %v6710, %v6724
    %v6728 = vlaneseq
    %v6729 = vshrl.u32 %v6728, 7
    %v6730 = vsub.s32 0, %v6729
    %v6731 = vrot.slane %v6698, %v6730
    %v6733 = vmul.f32 %v6725, %v6731
    %v6734 = vmul.f32 %v6726, %v6731
    %v6736 = vlaneseq
    %v6737 = vshrl.u32 %v6736, 7
    %v6738 = vsub.s32 0, %v6737
    %v6739 = vrot.slane %v6700, %v6738
    %v6741 = vadd.f32 %v6733, %v6739
    %v6742 = vadd.f32 %v6734, %v6739
    %v6743 = vpack.c.bf16 %v6742, %v6741
    %v6744 = vld [vmem:[%s61] sm:$0xf]
    %v6745 = vld [vmem:[%s61 + $0x4] sm:$0xf]
    %v6746 = vld [vmem:[%s61 + $0x8] sm:$0xf]
    %v6747 = vld [vmem:[%s61 + $0xc] sm:$0xf]
    %v6748 = vld [vmem:[%s63] sm:$0x1]
    %v6750 = vlaneseq
    %v6751 = vshrl.u32 %v6750, 7
    %v6752 = vsub.s32 0, %v6751
    %v6753 = vrot.slane %v6748, %v6752
    %v6759 = vunpack.c.l.b16 %v6744
    %v6760 = vunpack.c.l.b16 %v6745
    %v6761 = vunpack.c.l.b16 %v6746
    %v6762 = vunpack.c.l.b16 %v6747
    %v6763 = vpack.c.b16 %v6760, %v6759
    %v6764 = vpack.c.b16 %v6762, %v6761
    %v6768 = vsel %vm230, %v6743, 0
    %6770 = vmatprep.subr.bf16.mxu0 0
    %6771 = vmatpush1.bf16.msra.mxu0 %v6763
    %6772 = vmatprep.subr.bf16.mxu0 0
    %6773 = vmatpush1.bf16.msra.mxu0 %v6764
    %6774 = vmatprep.subr.bf16.mxu0 0
    %6775 = vmatpush1.bf16.msra.mxu0 0
    %6776 = vmatprep.subr.bf16.mxu0 0
    %6777 = vmatpush1.bf16.msra.mxu0 0
    %6778 = vmatprep.subr.bf16.mxu0 0
    %6779 = vmatpush1.bf16.msra.mxu0 0
    %6780 = vmatprep.subr.bf16.mxu0 0
    %6781 = vmatpush1.bf16.msra.mxu0 0
    %6782 = vmatprep.subr.bf16.mxu0 0
    %6783 = vmatpush1.bf16.msra.mxu0 0
    %6784 = vmatprep.subr.bf16.mxu0 0
    %6785 = vmatpush1.bf16.msra.mxu0 0
    %6786 = vmatprep.subr.bf16.mxu0 0
    %6787 = vmatpush1.bf16.msra.mxu0 0
    %6788 = vmatprep.subr.bf16.mxu0 0
    %6789 = vmatpush1.bf16.msra.mxu0 0
    %6790 = vmatprep.subr.bf16.mxu0 0
    %6791 = vmatpush1.bf16.msra.mxu0 0
    %6792 = vmatprep.subr.bf16.mxu0 0
    %6793 = vmatpush1.bf16.msra.mxu0 0
    %6794 = vmatprep.subr.bf16.mxu0 0
    %6795 = vmatpush1.bf16.msra.mxu0 0
    %6796 = vmatprep.subr.bf16.mxu0 0
    %6797 = vmatpush1.bf16.msra.mxu0 0
    %6798 = vmatprep.subr.bf16.mxu0 0
    %6799 = vmatpush1.bf16.msra.mxu0 0
    %6800 = vmatprep.subr.bf16.mxu0 0
    %6801 = vmatpush1.bf16.msra.mxu0 0
    %6802 = vmatprep.mubr.bf16.mxu0 0
    %6803 = vmatmul.mubr.bf16.gmra.mrb[0].mxu0 %v6768
    %v6804 = vpop.f32.mrb[0].mxu0
    %v6805 = vadd.f32 %v6753, %v6804
    %v6806 = vpop.f32.mrb[0].mxu0
    %v6807 = vpop.f32.mrb[0].mxu0
    %v6808 = vadd.f32 %v6753, %v6807
    %v6809 = vpop.f32.mrb[0].mxu0
    %6810 = vdwg.mxu0
    %6811 = vst [vmem:[#allocation2] sm:$0xff] %v6805
    %6812 = vst [vmem:[#allocation2 + $0x8] sm:$0xff] %v6808
    // Predicated region
    $region130: #{decoder_forward.1} parent=1 // pred_check
      _
    $region131: #{decoder_forward.1} parent=1 // pred_check_branch
      %6814 = sbr.rel (0) target = $region133
    $region132: #{decoder_forward.1} parent=1 // pred_region
      %s6816 = ssub.s32 256, 256
      %6817 = vsyncadd [#allocation3], %s6816
      %s6818 = sshll.u32 [#allocation2], 4
      %s6819 = int_to_ptr.vmem [resolvable:$true] %s6818
      %6824 = dma.vmem_to_hbm [thread:$0]  %s6819, 256, %s65, [#allocation3], 128, 128, 8
    $region133: #{decoder_forward.1} parent=1 // pred_fallthru
      _
    // Predicated region
    $region134: #{decoder_forward.1} parent=1 // pred_check
      _
    $region135: #{decoder_forward.1} parent=1 // pred_check_branch
      %6826 = sbr.rel (0) target = $region137
    $region136: #{decoder_forward.1} parent=1 // pred_region
      %6827 = dma.done [#allocation3], 256
    $region137: #{decoder_forward.1} parent=1 // pred_fallthru
      _
    %6828 = vsyncpa [#allocation3], 1

</llo_original>
